<compile_context>
chip_gen: v7x
topology: tpu7x:2x2x1
jax: 0.10.0
libtpu: 0.0.40
codegen_flags: <defaults>
</compile_context>

<pallas_src>
import math

import jax
import jax.numpy as jnp
from jax import lax
from jax.experimental import pallas as pl
from jax.experimental.pallas import tpu as pltpu

# ----------------------------- model config ---------------------------------
BATCH = 2
SRC_LEN = 16
TGT_LEN = 8
VOCAB = 64
HIDDEN = 32
NUM_HEADS = 2
HEAD_DIM = HIDDEN // NUM_HEADS
FFN_DIM = 64
MAX_POS = 32
LN_EPS = 1e-12

SLAB_W = 128          # lane width of the packed weight slab
OUT_W = 128           # lane width of the packed output slab (lane-dense stores)
_NEG_INF = -1e9

# --------------------- packed weight-slab layout (static) -------------------
# Every weight lives in ONE lane-padded f32 slab (SLAB_ROWS, 128). Row offsets
# are 8-aligned so every in-kernel carve is a sublane-aligned static slice.
_SLAB_ENTRIES = (
    ("e_tok", VOCAB, HIDDEN), ("e_pos", MAX_POS, HIDDEN), ("e_ln_emb", 2, HIDDEN),
    ("e_wqkv", HIDDEN, 3 * HIDDEN), ("e_bqkv", 1, 3 * HIDDEN),
    ("e_wo", HIDDEN, HIDDEN), ("e_bo", 1, HIDDEN), ("e_ln_attn", 2, HIDDEN),
    ("e_w1", HIDDEN, FFN_DIM), ("e_b1", 1, FFN_DIM),
    ("e_w2", FFN_DIM, HIDDEN), ("e_b2", 1, HIDDEN), ("e_ln_ffn", 2, HIDDEN),
    ("d_tok", VOCAB, HIDDEN), ("d_pos", MAX_POS, HIDDEN), ("d_ln_emb", 2, HIDDEN),
    ("d_wqkv", HIDDEN, 3 * HIDDEN), ("d_bqkv", 1, 3 * HIDDEN),
    ("d_wo", HIDDEN, HIDDEN), ("d_bo", 1, HIDDEN), ("d_ln_self", 2, HIDDEN),
    ("d_wq", HIDDEN, HIDDEN), ("d_bq", 1, HIDDEN),
    ("d_wkv", HIDDEN, 2 * HIDDEN), ("d_bkv", 1, 2 * HIDDEN),
    ("d_cwo", HIDDEN, HIDDEN), ("d_cbo", 1, HIDDEN), ("d_ln_cross", 2, HIDDEN),
    ("d_w1", HIDDEN, FFN_DIM), ("d_b1", 1, FFN_DIM),
    ("d_w2", FFN_DIM, HIDDEN), ("d_b2", 1, HIDDEN), ("d_ln_ffn", 2, HIDDEN),
)


def _build_layout():
    layout, row = {}, 0
    for name, r, c in _SLAB_ENTRIES:
        layout[name] = (row, r, c)
        row += ((r + 7) // 8) * 8          # 8-row (sublane) alignment
    return layout, row


_LAYOUT, SLAB_ROWS = _build_layout()


# --------------------------- fused Pallas kernel ----------------------------
def _seq2seq_kernel(src_ids_ref, tgt_ids_ref, src_len_ref, tgt_len_ref,
                    slab_ref, out_ref):
    scale = 1.0 / math.sqrt(HEAD_DIM)

    # Static weight carving out of the packed slab; memoized so the unrolled
    # batch loop does not duplicate VMEM loads in the jaxpr.
    _cache = {}

    def w(name, rows=None):
        key = (name, rows)
        if key not in _cache:
            off, r, c = _LAYOUT[name]
            r = rows if rows is not None else r
            _cache[key] = slab_ref[off:off + r, 0:c]
        return _cache[key]

    def layer_norm(x, name):
        ln = w(name)                                   # (2, H): row0=gamma, row1=beta
        mu = jnp.mean(x, axis=-1, keepdims=True)
        var = jnp.mean((x - mu) ** 2, axis=-1, keepdims=True)
        return (x - mu) * lax.rsqrt(var + LN_EPS) * ln[0:1, :] + ln[1:2, :]

    def embed(ids_ref, b, length, tok_name, pos_name):
        # In-kernel token gather: one_hot(ids) @ tok_emb (MXU) + positional add.
        ids = ids_ref[b * length:(b + 1) * length, :]             # (L, 1) int32
        iota_v = lax.broadcasted_iota(jnp.int32, (length, VOCAB), 1)
        onehot = (iota_v == ids).astype(jnp.float32)              # (L, V)
        tok = jnp.dot(onehot, w(tok_name),
                      preferred_element_type=jnp.float32)         # (L, H)
        return tok + w(pos_name, rows=length)

    def attention(q, k, v, bias, wo_name, bo_name):
        """Multi-head attention fused with the output projection:
        out = sum_h softmax(q_h k_h^T * scale + bias) v_h @ Wo[h*hd:(h+1)*hd, :]
        (no lane-domain concat of head contexts). Returns (out + b_o, head-0 probs)."""
        tq, tk = q.shape[0], k.shape[0]
        bias_full = jnp.broadcast_to(bias, (tq, tk))   # hoisted out of the head loop
        wo = w(wo_name)
        out, probs0 = None, None
        for h in range(NUM_HEADS):
            sl = slice(h * HEAD_DIM, (h + 1) * HEAD_DIM)
            # q . k^T without an explicit transpose (contract last dims).
            s = lax.dot_general(q[:, sl], k[:, sl], (((1,), (1,)), ((), ())),
                                preferred_element_type=jnp.float32)
            s = s * scale + bias_full
            s = s - jnp.max(s, axis=-1, keepdims=True)
            e = jnp.exp(s)
            p = e / jnp.sum(e, axis=-1, keepdims=True)   # exact softmax (probs are returned)
            if h == 0:
                probs0 = p
            ctx_h = jnp.dot(p, v[:, sl], preferred_element_type=jnp.float32)
            proj_h = jnp.dot(ctx_h, wo[sl, :], preferred_element_type=jnp.float32)
            out = proj_h if out is None else out + proj_h
        return out + w(bo_name), probs0

    # hoisted constants (shared by both batch elements)
    iota_s = lax.broadcasted_iota(jnp.int32, (1, SRC_LEN), 1)
    iota_t = lax.broadcasted_iota(jnp.int32, (1, TGT_LEN), 1)
    pad = jnp.zeros((TGT_LEN, OUT_W - HIDDEN - SRC_LEN), jnp.float32)

    for b in range(BATCH):                    # static unroll — grid is (1,)
        # sequence_mask built in-kernel from SMEM lengths, as additive biases
        src_bias = jnp.where(iota_s < src_len_ref[b], 0.0, _NEG_INF)   # (1, S)
        tgt_bias = jnp.where(iota_t < tgt_len_ref[b], 0.0, _NEG_INF)   # (1, T)

        # ------------------------------ encoder ------------------------------
        x = layer_norm(embed(src_ids_ref, b, SRC_LEN, "e_tok", "e_pos"), "e_ln_emb")
        qkv = jnp.dot(x, w("e_wqkv"), preferred_element_type=jnp.float32) + w("e_bqkv")
        sa, _ = attention(qkv[:, :HIDDEN], qkv[:, HIDDEN:2 * HIDDEN],
                          qkv[:, 2 * HIDDEN:], src_bias, "e_wo", "e_bo")
        x = layer_norm(sa + x, "e_ln_attn")
        h1 = jax.nn.gelu(jnp.dot(x, w("e_w1"), preferred_element_type=jnp.float32)
                         + w("e_b1"))
        memory = layer_norm(
            jnp.dot(h1, w("e_w2"), preferred_element_type=jnp.float32)
            + w("e_b2") + x, "e_ln_ffn")                                   # (S, H)

        # ------------------------------ decoder ------------------------------
        y = layer_norm(embed(tgt_ids_ref, b, TGT_LEN, "d_tok", "d_pos"), "d_ln_emb")
        # self-attention: padding mask only (non-causal, matches the BERT-style
        # reference decoder which receives attention_mask=tgt_mask)
        qkv = jnp.dot(y, w("d_wqkv"), preferred_element_type=jnp.float32) + w("d_bqkv")
        sa, _ = attention(qkv[:, :HIDDEN], qkv[:, HIDDEN:2 * HIDDEN],
                          qkv[:, 2 * HIDDEN:], tgt_bias, "d_wo", "d_bo")
        y = layer_norm(sa + y, "d_ln_self")
        # cross-attention over encoder memory (fused K/V projection)
        q = jnp.dot(y, w("d_wq"), preferred_element_type=jnp.float32) + w("d_bq")
        kv = jnp.dot(memory, w("d_wkv"), preferred_element_type=jnp.float32) + w("d_bkv")
        ca, cross_p0 = attention(q, kv[:, :HIDDEN], kv[:, HIDDEN:],
                                 src_bias, "d_cwo", "d_cbo")
        y = layer_norm(ca + y, "d_ln_cross")
        h1 = jax.nn.gelu(jnp.dot(y, w("d_w1"), preferred_element_type=jnp.float32)
                         + w("d_b1"))
        y = layer_norm(
            jnp.dot(h1, w("d_w2"), preferred_element_type=jnp.float32)
            + w("d_b2") + y, "d_ln_ffn")                                   # (T, H)

        # lane-dense output slab: [dec_out | head-0 cross-attn | zero pad] -> (T, 128)
        out_ref[b * TGT_LEN:(b + 1) * TGT_LEN, :] = jnp.concatenate(
            [y, cross_p0, pad], axis=-1)


# ----------------------------- wrapper / glue --------------------------------
def pack_params(params):
    """One-time packing of all weights into a single lane-padded f32 slab."""
    slab = jnp.zeros((SLAB_ROWS, SLAB_W), jnp.float32)
    for name, _, _ in _SLAB_ENTRIES:
        off, r, c = _LAYOUT[name]
        slab = slab.at[off:off + r, 0:c].set(params[name].astype(jnp.float32))
    return slab


@jax.jit
def nma_forward(slab, src, tgt, src_lengths, tgt_lengths):
    B, S = src.shape
    T = tgt.shape[1]
    assert (B, S, T) == (BATCH, SRC_LEN, TGT_LEN)

    src_ids = src.astype(jnp.int32).reshape(B * S, 1)
    tgt_ids = tgt.astype(jnp.int32).reshape(B * T, 1)

    out = pl.pallas_call(
        _seq2seq_kernel,
        out_shape=jax.ShapeDtypeStruct((B * T, OUT_W), jnp.float32),
        grid=(1,),
        in_specs=[
            pl.BlockSpec((B * S, 1), lambda i: (0, 0)),               # src token ids
            pl.BlockSpec((B * T, 1), lambda i: (0, 0)),               # tgt token ids
            pl.BlockSpec(memory_space=pltpu.MemorySpace.SMEM),        # src_lengths
            pl.BlockSpec(memory_space=pltpu.MemorySpace.SMEM),        # tgt_lengths
            pl.BlockSpec((SLAB_ROWS, SLAB_W), lambda i: (0, 0)),      # packed weights
        ],
        out_specs=pl.BlockSpec((B * T, OUT_W), lambda i: (0, 0)),
        compiler_params=pltpu.CompilerParams(
            dimension_semantics=("arbitrary",)),
    )(src_ids, tgt_ids,
      src_lengths.astype(jnp.int32), tgt_lengths.astype(jnp.int32),
      slab)

    packed = out.reshape(B, T, OUT_W)
    dec_out = packed[:, :, :HIDDEN]
    attns = packed[:, :, HIDDEN:HIDDEN + S]
    return dec_out, attns


# ------------------------------ param init -----------------------------------
def init_params(key):
    keys = jax.random.split(key, len(_SLAB_ENTRIES))
    params = {}
    for k, (name, r, c) in zip(keys, _SLAB_ENTRIES):
        if "_ln_" in name:           # LayerNorm table: row0 = gamma, row1 = beta
            params[name] = jnp.stack([jnp.ones((c,), jnp.float32),
                                      jnp.zeros((c,), jnp.float32)])
        elif r == 1:                 # biases
            params[name] = jnp.zeros((1, c), jnp.float32)
        else:                        # weights / embeddings
            params[name] = 0.02 * jax.random.normal(k, (r, c), jnp.float32)
    return params


# --------------------------------- main ---------------------------------------
if __name__ == "__main__":
    root = jax.random.PRNGKey(0)
    kp, ks, kt = jax.random.split(root, 3)

    params = init_params(kp)
    slab = pack_params(params)      # one-time packing, outside the jitted forward

    src = jax.random.randint(ks, (BATCH, SRC_LEN), 0, VOCAB, dtype=jnp.int32)
    tgt = jax.random.randint(kt, (BATCH, TGT_LEN), 0, VOCAB, dtype=jnp.int32)
    src_lengths = jnp.array([SRC_LEN, 11], dtype=jnp.int32)
    tgt_lengths = jnp.array([TGT_LEN, 5], dtype=jnp.int32)

    dec_out, attns = nma_forward(slab, src, tgt, src_lengths, tgt_lengths)
    jax.block_until_ready((dec_out, attns))

    assert dec_out.shape == (BATCH, TGT_LEN, HIDDEN), dec_out.shape
    assert attns.shape == (BATCH, TGT_LEN, SRC_LEN), attns.shape
    assert bool(jnp.all(jnp.isfinite(dec_out)))
    # exact softmax: cross-attention rows normalize over source positions
    assert bool(jnp.allclose(jnp.sum(attns, axis=-1), 1.0, atol=1e-5))
    # padded source positions (batch 1, length 11) receive zero cross-attention
    assert bool(jnp.all(attns[1, :, 11:] < 1e-6))

    # TODO(synk): at real BERT dims (H>=768, long seq), re-tile against v7x's
    # 64 MiB VMEM (set vmem_limit_bytes), switch MXU operands to bf16 with f32
    # accumulation, use 256-aligned tiles (128 on v5e), and add
    # pipeline_mode=pl.Buffered(1) on the block-resident weight slab.
    print("KERNEL_OK")
</pallas_src>

<mosaic_0001>
module attributes {stable_mosaic.version = 11 : i64} {
  func.func @_seq2seq_kernel(%arg0: i32, %arg1: memref<32x1xi32, #tpu.memory_space<vmem>>, %arg2: memref<16x1xi32, #tpu.memory_space<vmem>>, %arg3: memref<2xi32, #tpu.memory_space<smem>>, %arg4: memref<2xi32, #tpu.memory_space<smem>>, %arg5: memref<752x128xf32, #tpu.memory_space<vmem>>, %arg6: memref<16x128xf32, #tpu.memory_space<vmem>>) attributes {dimension_semantics = [#tpu.dimension_semantics<arbitrary>], iteration_bounds = array<i64: 1>, scalar_prefetch = 0 : i64, scratch_operands = 0 : i64, tpu.core_type = #tpu.core_type<tc>, window_params = [{pipeline_mode = #tpu.pipeline_mode<synchronous>, transform_indices = @transform_0, window_bounds = array<i64: 32, 1>}, {pipeline_mode = #tpu.pipeline_mode<synchronous>, transform_indices = @transform_1, window_bounds = array<i64: 16, 1>}, {transform_indices = @transform_2, window_bounds = array<i64: 2>}, {transform_indices = @transform_3, window_bounds = array<i64: 2>}, {pipeline_mode = #tpu.pipeline_mode<synchronous>, transform_indices = @transform_4, window_bounds = array<i64: 752, 128>}, {pipeline_mode = #tpu.pipeline_mode<synchronous>, transform_indices = @transform_5, window_bounds = array<i64: 16, 128>}]} {
    %0 = tpu.iota {dimensions = array<i32: 1>} : vector<1x16xi32>
    %1 = tpu.iota {dimensions = array<i32: 1>} : vector<1x8xi32>
    %cst = arith.constant 0.000000e+00 : f32
    %2 = vector.broadcast %cst : f32 to vector<8x80xf32>
    %c0 = arith.constant 0 : index
    %3 = memref.load %arg3[%c0] : memref<2xi32, #tpu.memory_space<smem>>
    %4 = vector.broadcast %3 : i32 to vector<1x16xi32>
    %5 = arith.cmpi slt, %0, %4 : vector<1x16xi32>
    %cst_0 = arith.constant 0.000000e+00 : f32
    %cst_1 = arith.constant -1.000000e+09 : f32
    %6 = vector.broadcast %cst_0 : f32 to vector<1x16xf32>
    %7 = vector.broadcast %cst_1 : f32 to vector<1x16xf32>
    %8 = arith.select %5, %6, %7 : vector<1x16xi1>, vector<1x16xf32>
    %c0_2 = arith.constant 0 : index
    %9 = memref.load %arg4[%c0_2] : memref<2xi32, #tpu.memory_space<smem>>
    %10 = vector.broadcast %9 : i32 to vector<1x8xi32>
    %11 = arith.cmpi slt, %1, %10 : vector<1x8xi32>
    %cst_3 = arith.constant 0.000000e+00 : f32
    %cst_4 = arith.constant -1.000000e+09 : f32
    %12 = vector.broadcast %cst_3 : f32 to vector<1x8xf32>
    %13 = vector.broadcast %cst_4 : f32 to vector<1x8xf32>
    %14 = arith.select %11, %12, %13 : vector<1x8xi1>, vector<1x8xf32>
    %c0_5 = arith.constant 0 : index
    %c0_6 = arith.constant 0 : index
    %15 = vector.load %arg1[%c0_5, %c0_6] : memref<32x1xi32, #tpu.memory_space<vmem>>, vector<16x1xi32>
    %16 = tpu.iota {dimensions = array<i32: 1>} : vector<16x64xi32>
    %17 = vector.broadcast %15 : vector<16x1xi32> to vector<16x64xi32>
    %18 = arith.cmpi eq, %16, %17 : vector<16x64xi32>
    %19 = arith.extui %18 : vector<16x64xi1> to vector<16x64xi32>
    %20 = arith.sitofp %19 : vector<16x64xi32> to vector<16x64xf32>
    %c0_7 = arith.constant 0 : index
    %c0_8 = arith.constant 0 : index
    %21 = vector.load %arg5[%c0_7, %c0_8] : memref<752x128xf32, #tpu.memory_space<vmem>>, vector<64x32xf32>
    %cst_9 = arith.constant dense<0.000000e+00> : vector<16x32xf32>
    %22 = tpu.matmul %20, %21, %cst_9 {dimension_numbers = #tpu.dot_dimension_numbers<[1], [0], [0], [1], [0, 0, 1, 1], [], []>} : vector<16x64xf32>, vector<64x32xf32>, vector<16x32xf32> -> vector<16x32xf32>
    %c64 = arith.constant 64 : index
    %c0_10 = arith.constant 0 : index
    %23 = vector.load %arg5[%c64, %c0_10] : memref<752x128xf32, #tpu.memory_space<vmem>>, vector<16x32xf32>
    %24 = arith.addf %22, %23 : vector<16x32xf32>
    %c96 = arith.constant 96 : index
    %c0_11 = arith.constant 0 : index
    %25 = vector.load %arg5[%c96, %c0_11] : memref<752x128xf32, #tpu.memory_space<vmem>>, vector<2x32xf32>
    %cst_12 = arith.constant dense<0.000000e+00> : vector<16xf32>
    %26 = vector.multi_reduction <add>, %24, %cst_12 [1] : vector<16x32xf32> to vector<16xf32>
    %27 = vector.shape_cast %26 : vector<16xf32> to vector<16x1xf32>
    %cst_13 = arith.constant 3.200000e+01 : f32
    %28 = vector.broadcast %cst_13 : f32 to vector<16x1xf32>
    %29 = arith.divf %27, %28 : vector<16x1xf32>
    %30 = vector.broadcast %29 : vector<16x1xf32> to vector<16x32xf32>
    %31 = arith.subf %24, %30 : vector<16x32xf32>
    %32 = arith.mulf %31, %31 : vector<16x32xf32>
    %cst_14 = arith.constant dense<0.000000e+00> : vector<16xf32>
    %33 = vector.multi_reduction <add>, %32, %cst_14 [1] : vector<16x32xf32> to vector<16xf32>
    %34 = vector.shape_cast %33 : vector<16xf32> to vector<16x1xf32>
    %cst_15 = arith.constant 3.200000e+01 : f32
    %35 = vector.broadcast %cst_15 : f32 to vector<16x1xf32>
    %36 = arith.divf %34, %35 : vector<16x1xf32>
    %37 = vector.broadcast %29 : vector<16x1xf32> to vector<16x32xf32>
    %38 = arith.subf %24, %37 : vector<16x32xf32>
    %cst_16 = arith.constant 9.99999996E-13 : f32
    %39 = vector.broadcast %cst_16 : f32 to vector<16x1xf32>
    %40 = arith.addf %36, %39 : vector<16x1xf32>
    %41 = math.rsqrt %40 : vector<16x1xf32>
    %42 = vector.broadcast %41 : vector<16x1xf32> to vector<16x32xf32>
    %43 = arith.mulf %38, %42 : vector<16x32xf32>
    %44 = vector.extract_strided_slice %25 {offsets = [0, 0], sizes = [1, 32], strides = [1, 1]} : vector<2x32xf32> to vector<1x32xf32>
    %45 = vector.broadcast %44 : vector<1x32xf32> to vector<16x32xf32>
    %46 = arith.mulf %43, %45 : vector<16x32xf32>
    %47 = vector.extract_strided_slice %25 {offsets = [1, 0], sizes = [1, 32], strides = [1, 1]} : vector<2x32xf32> to vector<1x32xf32>
    %48 = vector.broadcast %47 : vector<1x32xf32> to vector<16x32xf32>
    %49 = arith.addf %46, %48 : vector<16x32xf32>
    %c104 = arith.constant 104 : index
    %c0_17 = arith.constant 0 : index
    %50 = vector.load %arg5[%c104, %c0_17] : memref<752x128xf32, #tpu.memory_space<vmem>>, vector<32x96xf32>
    %cst_18 = arith.constant dense<0.000000e+00> : vector<16x96xf32>
    %51 = tpu.matmul %49, %50, %cst_18 {dimension_numbers = #tpu.dot_dimension_numbers<[1], [0], [0], [1], [0, 0, 1, 1], [], []>} : vector<16x32xf32>, vector<32x96xf32>, vector<16x96xf32> -> vector<16x96xf32>
    %c136 = arith.constant 136 : index
    %c0_19 = arith.constant 0 : index
    %52 = vector.load %arg5[%c136, %c0_19] : memref<752x128xf32, #tpu.memory_space<vmem>>, vector<1x96xf32>
    %53 = vector.broadcast %52 : vector<1x96xf32> to vector<16x96xf32>
    %54 = arith.addf %51, %53 : vector<16x96xf32>
    %55 = vector.extract_strided_slice %54 {offsets = [0, 0], sizes = [16, 32], strides = [1, 1]} : vector<16x96xf32> to vector<16x32xf32>
    %56 = vector.extract_strided_slice %54 {offsets = [0, 32], sizes = [16, 32], strides = [1, 1]} : vector<16x96xf32> to vector<16x32xf32>
    %57 = vector.extract_strided_slice %54 {offsets = [0, 64], sizes = [16, 32], strides = [1, 1]} : vector<16x96xf32> to vector<16x32xf32>
    %58 = vector.shape_cast %8 : vector<1x16xf32> to vector<1x16xf32>
    %59 = vector.broadcast %58 : vector<1x16xf32> to vector<16x16xf32>
    %c144 = arith.constant 144 : index
    %c0_20 = arith.constant 0 : index
    %60 = vector.load %arg5[%c144, %c0_20] : memref<752x128xf32, #tpu.memory_space<vmem>>, vector<32x32xf32>
    %61 = vector.extract_strided_slice %55 {offsets = [0, 0], sizes = [16, 16], strides = [1, 1]} : vector<16x32xf32> to vector<16x16xf32>
    %62 = vector.extract_strided_slice %56 {offsets = [0, 0], sizes = [16, 16], strides = [1, 1]} : vector<16x32xf32> to vector<16x16xf32>
    %cst_21 = arith.constant dense<0.000000e+00> : vector<16x16xf32>
    %63 = tpu.matmul %61, %62, %cst_21 {dimension_numbers = #tpu.dot_dimension_numbers<[1], [1], [0], [0], [0, 0, 1, 0], [], []>} : vector<16x16xf32>, vector<16x16xf32>, vector<16x16xf32> -> vector<16x16xf32>
    %cst_22 = arith.constant 2.500000e-01 : f32
    %64 = vector.broadcast %cst_22 : f32 to vector<16x16xf32>
    %65 = arith.mulf %63, %64 : vector<16x16xf32>
    %66 = arith.addf %65, %59 : vector<16x16xf32>
    %cst_23 = arith.constant dense<0xFF800000> : vector<16xf32>
    %67 = vector.multi_reduction <maximumf>, %66, %cst_23 [1] : vector<16x16xf32> to vector<16xf32>
    %68 = vector.shape_cast %67 : vector<16xf32> to vector<16x1xf32>
    %69 = vector.broadcast %68 : vector<16x1xf32> to vector<16x16xf32>
    %70 = arith.subf %66, %69 : vector<16x16xf32>
    %71 = math.exp %70 : vector<16x16xf32>
    %cst_24 = arith.constant dense<0.000000e+00> : vector<16xf32>
    %72 = vector.multi_reduction <add>, %71, %cst_24 [1] : vector<16x16xf32> to vector<16xf32>
    %73 = vector.shape_cast %72 : vector<16xf32> to vector<16x1xf32>
    %74 = vector.broadcast %73 : vector<16x1xf32> to vector<16x16xf32>
    %75 = arith.divf %71, %74 : vector<16x16xf32>
    %76 = vector.extract_strided_slice %57 {offsets = [0, 0], sizes = [16, 16], strides = [1, 1]} : vector<16x32xf32> to vector<16x16xf32>
    %cst_25 = arith.constant dense<0.000000e+00> : vector<16x16xf32>
    %77 = tpu.matmul %75, %76, %cst_25 {dimension_numbers = #tpu.dot_dimension_numbers<[1], [0], [0], [1], [0, 0, 1, 1], [], []>} : vector<16x16xf32>, vector<16x16xf32>, vector<16x16xf32> -> vector<16x16xf32>
    %78 = vector.extract_strided_slice %60 {offsets = [0, 0], sizes = [16, 32], strides = [1, 1]} : vector<32x32xf32> to vector<16x32xf32>
    %cst_26 = arith.constant dense<0.000000e+00> : vector<16x32xf32>
    %79 = tpu.matmul %77, %78, %cst_26 {dimension_numbers = #tpu.dot_dimension_numbers<[1], [0], [0], [1], [0, 0, 1, 1], [], []>} : vector<16x16xf32>, vector<16x32xf32>, vector<16x32xf32> -> vector<16x32xf32>
    %80 = vector.extract_strided_slice %55 {offsets = [0, 16], sizes = [16, 16], strides = [1, 1]} : vector<16x32xf32> to vector<16x16xf32>
    %81 = vector.extract_strided_slice %56 {offsets = [0, 16], sizes = [16, 16], strides = [1, 1]} : vector<16x32xf32> to vector<16x16xf32>
    %cst_27 = arith.constant dense<0.000000e+00> : vector<16x16xf32>
    %82 = tpu.matmul %80, %81, %cst_27 {dimension_numbers = #tpu.dot_dimension_numbers<[1], [1], [0], [0], [0, 0, 1, 0], [], []>} : vector<16x16xf32>, vector<16x16xf32>, vector<16x16xf32> -> vector<16x16xf32>
    %cst_28 = arith.constant 2.500000e-01 : f32
    %83 = vector.broadcast %cst_28 : f32 to vector<16x16xf32>
    %84 = arith.mulf %82, %83 : vector<16x16xf32>
    %85 = arith.addf %84, %59 : vector<16x16xf32>
    %cst_29 = arith.constant dense<0xFF800000> : vector<16xf32>
    %86 = vector.multi_reduction <maximumf>, %85, %cst_29 [1] : vector<16x16xf32> to vector<16xf32>
    %87 = vector.shape_cast %86 : vector<16xf32> to vector<16x1xf32>
    %88 = vector.broadcast %87 : vector<16x1xf32> to vector<16x16xf32>
    %89 = arith.subf %85, %88 : vector<16x16xf32>
    %90 = math.exp %89 : vector<16x16xf32>
    %cst_30 = arith.constant dense<0.000000e+00> : vector<16xf32>
    %91 = vector.multi_reduction <add>, %90, %cst_30 [1] : vector<16x16xf32> to vector<16xf32>
    %92 = vector.shape_cast %91 : vector<16xf32> to vector<16x1xf32>
    %93 = vector.broadcast %92 : vector<16x1xf32> to vector<16x16xf32>
    %94 = arith.divf %90, %93 : vector<16x16xf32>
    %95 = vector.extract_strided_slice %57 {offsets = [0, 16], sizes = [16, 16], strides = [1, 1]} : vector<16x32xf32> to vector<16x16xf32>
    %cst_31 = arith.constant dense<0.000000e+00> : vector<16x16xf32>
    %96 = tpu.matmul %94, %95, %cst_31 {dimension_numbers = #tpu.dot_dimension_numbers<[1], [0], [0], [1], [0, 0, 1, 1], [], []>} : vector<16x16xf32>, vector<16x16xf32>, vector<16x16xf32> -> vector<16x16xf32>
    %97 = vector.extract_strided_slice %60 {offsets = [16, 0], sizes = [16, 32], strides = [1, 1]} : vector<32x32xf32> to vector<16x32xf32>
    %cst_32 = arith.constant dense<0.000000e+00> : vector<16x32xf32>
    %98 = tpu.matmul %96, %97, %cst_32 {dimension_numbers = #tpu.dot_dimension_numbers<[1], [0], [0], [1], [0, 0, 1, 1], [], []>} : vector<16x16xf32>, vector<16x32xf32>, vector<16x32xf32> -> vector<16x32xf32>
    %99 = arith.addf %79, %98 : vector<16x32xf32>
    %c176 = arith.constant 176 : index
    %c0_33 = arith.constant 0 : index
    %100 = vector.load %arg5[%c176, %c0_33] : memref<752x128xf32, #tpu.memory_space<vmem>>, vector<1x32xf32>
    %101 = vector.broadcast %100 : vector<1x32xf32> to vector<16x32xf32>
    %102 = arith.addf %99, %101 : vector<16x32xf32>
    %103 = arith.addf %102, %49 : vector<16x32xf32>
    %c184 = arith.constant 184 : index
    %c0_34 = arith.constant 0 : index
    %104 = vector.load %arg5[%c184, %c0_34] : memref<752x128xf32, #tpu.memory_space<vmem>>, vector<2x32xf32>
    %cst_35 = arith.constant dense<0.000000e+00> : vector<16xf32>
    %105 = vector.multi_reduction <add>, %103, %cst_35 [1] : vector<16x32xf32> to vector<16xf32>
    %106 = vector.shape_cast %105 : vector<16xf32> to vector<16x1xf32>
    %cst_36 = arith.constant 3.200000e+01 : f32
    %107 = vector.broadcast %cst_36 : f32 to vector<16x1xf32>
    %108 = arith.divf %106, %107 : vector<16x1xf32>
    %109 = vector.broadcast %108 : vector<16x1xf32> to vector<16x32xf32>
    %110 = arith.subf %103, %109 : vector<16x32xf32>
    %111 = arith.mulf %110, %110 : vector<16x32xf32>
    %cst_37 = arith.constant dense<0.000000e+00> : vector<16xf32>
    %112 = vector.multi_reduction <add>, %111, %cst_37 [1] : vector<16x32xf32> to vector<16xf32>
    %113 = vector.shape_cast %112 : vector<16xf32> to vector<16x1xf32>
    %cst_38 = arith.constant 3.200000e+01 : f32
    %114 = vector.broadcast %cst_38 : f32 to vector<16x1xf32>
    %115 = arith.divf %113, %114 : vector<16x1xf32>
    %116 = vector.broadcast %108 : vector<16x1xf32> to vector<16x32xf32>
    %117 = arith.subf %103, %116 : vector<16x32xf32>
    %cst_39 = arith.constant 9.99999996E-13 : f32
    %118 = vector.broadcast %cst_39 : f32 to vector<16x1xf32>
    %119 = arith.addf %115, %118 : vector<16x1xf32>
    %120 = math.rsqrt %119 : vector<16x1xf32>
    %121 = vector.broadcast %120 : vector<16x1xf32> to vector<16x32xf32>
    %122 = arith.mulf %117, %121 : vector<16x32xf32>
    %123 = vector.extract_strided_slice %104 {offsets = [0, 0], sizes = [1, 32], strides = [1, 1]} : vector<2x32xf32> to vector<1x32xf32>
    %124 = vector.broadcast %123 : vector<1x32xf32> to vector<16x32xf32>
    %125 = arith.mulf %122, %124 : vector<16x32xf32>
    %126 = vector.extract_strided_slice %104 {offsets = [1, 0], sizes = [1, 32], strides = [1, 1]} : vector<2x32xf32> to vector<1x32xf32>
    %127 = vector.broadcast %126 : vector<1x32xf32> to vector<16x32xf32>
    %128 = arith.addf %125, %127 : vector<16x32xf32>
    %c192 = arith.constant 192 : index
    %c0_40 = arith.constant 0 : index
    %129 = vector.load %arg5[%c192, %c0_40] : memref<752x128xf32, #tpu.memory_space<vmem>>, vector<32x64xf32>
    %cst_41 = arith.constant dense<0.000000e+00> : vector<16x64xf32>
    %130 = tpu.matmul %128, %129, %cst_41 {dimension_numbers = #tpu.dot_dimension_numbers<[1], [0], [0], [1], [0, 0, 1, 1], [], []>} : vector<16x32xf32>, vector<32x64xf32>, vector<16x64xf32> -> vector<16x64xf32>
    %c224 = arith.constant 224 : index
    %c0_42 = arith.constant 0 : index
    %131 = vector.load %arg5[%c224, %c0_42] : memref<752x128xf32, #tpu.memory_space<vmem>>, vector<1x64xf32>
    %132 = vector.broadcast %131 : vector<1x64xf32> to vector<16x64xf32>
    %133 = arith.addf %130, %132 : vector<16x64xf32>
    %134 = arith.mulf %133, %133 : vector<16x64xf32>
    %135 = arith.mulf %133, %134 : vector<16x64xf32>
    %cst_43 = arith.constant 4.471500e-02 : f32
    %136 = vector.broadcast %cst_43 : f32 to vector<16x64xf32>
    %137 = arith.mulf %136, %135 : vector<16x64xf32>
    %138 = arith.addf %133, %137 : vector<16x64xf32>
    %cst_44 = arith.constant 0.797884583 : f32
    %139 = vector.broadcast %cst_44 : f32 to vector<16x64xf32>
    %140 = arith.mulf %139, %138 : vector<16x64xf32>
    %141 = math.tanh %140 : vector<16x64xf32>
    %cst_45 = arith.constant 1.000000e+00 : f32
    %142 = vector.broadcast %cst_45 : f32 to vector<16x64xf32>
    %143 = arith.addf %142, %141 : vector<16x64xf32>
    %cst_46 = arith.constant 5.000000e-01 : f32
    %144 = vector.broadcast %cst_46 : f32 to vector<16x64xf32>
    %145 = arith.mulf %144, %143 : vector<16x64xf32>
    %146 = arith.mulf %133, %145 : vector<16x64xf32>
    %c232 = arith.constant 232 : index
    %c0_47 = arith.constant 0 : index
    %147 = vector.load %arg5[%c232, %c0_47] : memref<752x128xf32, #tpu.memory_space<vmem>>, vector<64x32xf32>
    %cst_48 = arith.constant dense<0.000000e+00> : vector<16x32xf32>
    %148 = tpu.matmul %146, %147, %cst_48 {dimension_numbers = #tpu.dot_dimension_numbers<[1], [0], [0], [1], [0, 0, 1, 1], [], []>} : vector<16x64xf32>, vector<64x32xf32>, vector<16x32xf32> -> vector<16x32xf32>
    %c296 = arith.constant 296 : index
    %c0_49 = arith.constant 0 : index
    %149 = vector.load %arg5[%c296, %c0_49] : memref<752x128xf32, #tpu.memory_space<vmem>>, vector<1x32xf32>
    %150 = vector.broadcast %149 : vector<1x32xf32> to vector<16x32xf32>
    %151 = arith.addf %148, %150 : vector<16x32xf32>
    %152 = arith.addf %151, %128 : vector<16x32xf32>
    %c304 = arith.constant 304 : index
    %c0_50 = arith.constant 0 : index
    %153 = vector.load %arg5[%c304, %c0_50] : memref<752x128xf32, #tpu.memory_space<vmem>>, vector<2x32xf32>
    %cst_51 = arith.constant dense<0.000000e+00> : vector<16xf32>
    %154 = vector.multi_reduction <add>, %152, %cst_51 [1] : vector<16x32xf32> to vector<16xf32>
    %155 = vector.shape_cast %154 : vector<16xf32> to vector<16x1xf32>
    %cst_52 = arith.constant 3.200000e+01 : f32
    %156 = vector.broadcast %cst_52 : f32 to vector<16x1xf32>
    %157 = arith.divf %155, %156 : vector<16x1xf32>
    %158 = vector.broadcast %157 : vector<16x1xf32> to vector<16x32xf32>
    %159 = arith.subf %152, %158 : vector<16x32xf32>
    %160 = arith.mulf %159, %159 : vector<16x32xf32>
    %cst_53 = arith.constant dense<0.000000e+00> : vector<16xf32>
    %161 = vector.multi_reduction <add>, %160, %cst_53 [1] : vector<16x32xf32> to vector<16xf32>
    %162 = vector.shape_cast %161 : vector<16xf32> to vector<16x1xf32>
    %cst_54 = arith.constant 3.200000e+01 : f32
    %163 = vector.broadcast %cst_54 : f32 to vector<16x1xf32>
    %164 = arith.divf %162, %163 : vector<16x1xf32>
    %165 = vector.broadcast %157 : vector<16x1xf32> to vector<16x32xf32>
    %166 = arith.subf %152, %165 : vector<16x32xf32>
    %cst_55 = arith.constant 9.99999996E-13 : f32
    %167 = vector.broadcast %cst_55 : f32 to vector<16x1xf32>
    %168 = arith.addf %164, %167 : vector<16x1xf32>
    %169 = math.rsqrt %168 : vector<16x1xf32>
    %170 = vector.broadcast %169 : vector<16x1xf32> to vector<16x32xf32>
    %171 = arith.mulf %166, %170 : vector<16x32xf32>
    %172 = vector.extract_strided_slice %153 {offsets = [0, 0], sizes = [1, 32], strides = [1, 1]} : vector<2x32xf32> to vector<1x32xf32>
    %173 = vector.broadcast %172 : vector<1x32xf32> to vector<16x32xf32>
    %174 = arith.mulf %171, %173 : vector<16x32xf32>
    %175 = vector.extract_strided_slice %153 {offsets = [1, 0], sizes = [1, 32], strides = [1, 1]} : vector<2x32xf32> to vector<1x32xf32>
    %176 = vector.broadcast %175 : vector<1x32xf32> to vector<16x32xf32>
    %177 = arith.addf %174, %176 : vector<16x32xf32>
    %c0_56 = arith.constant 0 : index
    %c0_57 = arith.constant 0 : index
    %178 = vector.load %arg2[%c0_56, %c0_57] : memref<16x1xi32, #tpu.memory_space<vmem>>, vector<8x1xi32>
    %179 = tpu.iota {dimensions = array<i32: 1>} : vector<8x64xi32>
    %180 = vector.broadcast %178 : vector<8x1xi32> to vector<8x64xi32>
    %181 = arith.cmpi eq, %179, %180 : vector<8x64xi32>
    %182 = arith.extui %181 : vector<8x64xi1> to vector<8x64xi32>
    %183 = arith.sitofp %182 : vector<8x64xi32> to vector<8x64xf32>
    %c312 = arith.constant 312 : index
    %c0_58 = arith.constant 0 : index
    %184 = vector.load %arg5[%c312, %c0_58] : memref<752x128xf32, #tpu.memory_space<vmem>>, vector<64x32xf32>
    %cst_59 = arith.constant dense<0.000000e+00> : vector<8x32xf32>
    %185 = tpu.matmul %183, %184, %cst_59 {dimension_numbers = #tpu.dot_dimension_numbers<[1], [0], [0], [1], [0, 0, 1, 1], [], []>} : vector<8x64xf32>, vector<64x32xf32>, vector<8x32xf32> -> vector<8x32xf32>
    %c376 = arith.constant 376 : index
    %c0_60 = arith.constant 0 : index
    %186 = vector.load %arg5[%c376, %c0_60] : memref<752x128xf32, #tpu.memory_space<vmem>>, vector<8x32xf32>
    %187 = arith.addf %185, %186 : vector<8x32xf32>
    %c408 = arith.constant 408 : index
    %c0_61 = arith.constant 0 : index
    %188 = vector.load %arg5[%c408, %c0_61] : memref<752x128xf32, #tpu.memory_space<vmem>>, vector<2x32xf32>
    %cst_62 = arith.constant dense<0.000000e+00> : vector<8xf32>
    %189 = vector.multi_reduction <add>, %187, %cst_62 [1] : vector<8x32xf32> to vector<8xf32>
    %190 = vector.shape_cast %189 : vector<8xf32> to vector<8x1xf32>
    %cst_63 = arith.constant 3.200000e+01 : f32
    %191 = vector.broadcast %cst_63 : f32 to vector<8x1xf32>
    %192 = arith.divf %190, %191 : vector<8x1xf32>
    %193 = vector.broadcast %192 : vector<8x1xf32> to vector<8x32xf32>
    %194 = arith.subf %187, %193 : vector<8x32xf32>
    %195 = arith.mulf %194, %194 : vector<8x32xf32>
    %cst_64 = arith.constant dense<0.000000e+00> : vector<8xf32>
    %196 = vector.multi_reduction <add>, %195, %cst_64 [1] : vector<8x32xf32> to vector<8xf32>
    %197 = vector.shape_cast %196 : vector<8xf32> to vector<8x1xf32>
    %cst_65 = arith.constant 3.200000e+01 : f32
    %198 = vector.broadcast %cst_65 : f32 to vector<8x1xf32>
    %199 = arith.divf %197, %198 : vector<8x1xf32>
    %200 = vector.broadcast %192 : vector<8x1xf32> to vector<8x32xf32>
    %201 = arith.subf %187, %200 : vector<8x32xf32>
    %cst_66 = arith.constant 9.99999996E-13 : f32
    %202 = vector.broadcast %cst_66 : f32 to vector<8x1xf32>
    %203 = arith.addf %199, %202 : vector<8x1xf32>
    %204 = math.rsqrt %203 : vector<8x1xf32>
    %205 = vector.broadcast %204 : vector<8x1xf32> to vector<8x32xf32>
    %206 = arith.mulf %201, %205 : vector<8x32xf32>
    %207 = vector.extract_strided_slice %188 {offsets = [0, 0], sizes = [1, 32], strides = [1, 1]} : vector<2x32xf32> to vector<1x32xf32>
    %208 = vector.broadcast %207 : vector<1x32xf32> to vector<8x32xf32>
    %209 = arith.mulf %206, %208 : vector<8x32xf32>
    %210 = vector.extract_strided_slice %188 {offsets = [1, 0], sizes = [1, 32], strides = [1, 1]} : vector<2x32xf32> to vector<1x32xf32>
    %211 = vector.broadcast %210 : vector<1x32xf32> to vector<8x32xf32>
    %212 = arith.addf %209, %211 : vector<8x32xf32>
    %c416 = arith.constant 416 : index
    %c0_67 = arith.constant 0 : index
    %213 = vector.load %arg5[%c416, %c0_67] : memref<752x128xf32, #tpu.memory_space<vmem>>, vector<32x96xf32>
    %cst_68 = arith.constant dense<0.000000e+00> : vector<8x96xf32>
    %214 = tpu.matmul %212, %213, %cst_68 {dimension_numbers = #tpu.dot_dimension_numbers<[1], [0], [0], [1], [0, 0, 1, 1], [], []>} : vector<8x32xf32>, vector<32x96xf32>, vector<8x96xf32> -> vector<8x96xf32>
    %c448 = arith.constant 448 : index
    %c0_69 = arith.constant 0 : index
    %215 = vector.load %arg5[%c448, %c0_69] : memref<752x128xf32, #tpu.memory_space<vmem>>, vector<1x96xf32>
    %216 = vector.broadcast %215 : vector<1x96xf32> to vector<8x96xf32>
    %217 = arith.addf %214, %216 : vector<8x96xf32>
    %218 = vector.extract_strided_slice %217 {offsets = [0, 0], sizes = [8, 32], strides = [1, 1]} : vector<8x96xf32> to vector<8x32xf32>
    %219 = vector.extract_strided_slice %217 {offsets = [0, 32], sizes = [8, 32], strides = [1, 1]} : vector<8x96xf32> to vector<8x32xf32>
    %220 = vector.extract_strided_slice %217 {offsets = [0, 64], sizes = [8, 32], strides = [1, 1]} : vector<8x96xf32> to vector<8x32xf32>
    %221 = vector.shape_cast %14 : vector<1x8xf32> to vector<1x8xf32>
    %222 = vector.broadcast %221 : vector<1x8xf32> to vector<8x8xf32>
    %c456 = arith.constant 456 : index
    %c0_70 = arith.constant 0 : index
    %223 = vector.load %arg5[%c456, %c0_70] : memref<752x128xf32, #tpu.memory_space<vmem>>, vector<32x32xf32>
    %224 = vector.extract_strided_slice %218 {offsets = [0, 0], sizes = [8, 16], strides = [1, 1]} : vector<8x32xf32> to vector<8x16xf32>
    %225 = vector.extract_strided_slice %219 {offsets = [0, 0], sizes = [8, 16], strides = [1, 1]} : vector<8x32xf32> to vector<8x16xf32>
    %cst_71 = arith.constant dense<0.000000e+00> : vector<8x8xf32>
    %226 = tpu.matmul %224, %225, %cst_71 {dimension_numbers = #tpu.dot_dimension_numbers<[1], [1], [0], [0], [0, 0, 1, 0], [], []>} : vector<8x16xf32>, vector<8x16xf32>, vector<8x8xf32> -> vector<8x8xf32>
    %cst_72 = arith.constant 2.500000e-01 : f32
    %227 = vector.broadcast %cst_72 : f32 to vector<8x8xf32>
    %228 = arith.mulf %226, %227 : vector<8x8xf32>
    %229 = arith.addf %228, %222 : vector<8x8xf32>
    %cst_73 = arith.constant dense<0xFF800000> : vector<8xf32>
    %230 = vector.multi_reduction <maximumf>, %229, %cst_73 [1] : vector<8x8xf32> to vector<8xf32>
    %231 = vector.shape_cast %230 : vector<8xf32> to vector<8x1xf32>
    %232 = vector.broadcast %231 : vector<8x1xf32> to vector<8x8xf32>
    %233 = arith.subf %229, %232 : vector<8x8xf32>
    %234 = math.exp %233 : vector<8x8xf32>
    %cst_74 = arith.constant dense<0.000000e+00> : vector<8xf32>
    %235 = vector.multi_reduction <add>, %234, %cst_74 [1] : vector<8x8xf32> to vector<8xf32>
    %236 = vector.shape_cast %235 : vector<8xf32> to vector<8x1xf32>
    %237 = vector.broadcast %236 : vector<8x1xf32> to vector<8x8xf32>
    %238 = arith.divf %234, %237 : vector<8x8xf32>
    %239 = vector.extract_strided_slice %220 {offsets = [0, 0], sizes = [8, 16], strides = [1, 1]} : vector<8x32xf32> to vector<8x16xf32>
    %cst_75 = arith.constant dense<0.000000e+00> : vector<8x16xf32>
    %240 = tpu.matmul %238, %239, %cst_75 {dimension_numbers = #tpu.dot_dimension_numbers<[1], [0], [0], [1], [0, 0, 1, 1], [], []>} : vector<8x8xf32>, vector<8x16xf32>, vector<8x16xf32> -> vector<8x16xf32>
    %241 = vector.extract_strided_slice %223 {offsets = [0, 0], sizes = [16, 32], strides = [1, 1]} : vector<32x32xf32> to vector<16x32xf32>
    %cst_76 = arith.constant dense<0.000000e+00> : vector<8x32xf32>
    %242 = tpu.matmul %240, %241, %cst_76 {dimension_numbers = #tpu.dot_dimension_numbers<[1], [0], [0], [1], [0, 0, 1, 1], [], []>} : vector<8x16xf32>, vector<16x32xf32>, vector<8x32xf32> -> vector<8x32xf32>
    %243 = vector.extract_strided_slice %218 {offsets = [0, 16], sizes = [8, 16], strides = [1, 1]} : vector<8x32xf32> to vector<8x16xf32>
    %244 = vector.extract_strided_slice %219 {offsets = [0, 16], sizes = [8, 16], strides = [1, 1]} : vector<8x32xf32> to vector<8x16xf32>
    %cst_77 = arith.constant dense<0.000000e+00> : vector<8x8xf32>
    %245 = tpu.matmul %243, %244, %cst_77 {dimension_numbers = #tpu.dot_dimension_numbers<[1], [1], [0], [0], [0, 0, 1, 0], [], []>} : vector<8x16xf32>, vector<8x16xf32>, vector<8x8xf32> -> vector<8x8xf32>
    %cst_78 = arith.constant 2.500000e-01 : f32
    %246 = vector.broadcast %cst_78 : f32 to vector<8x8xf32>
    %247 = arith.mulf %245, %246 : vector<8x8xf32>
    %248 = arith.addf %247, %222 : vector<8x8xf32>
    %cst_79 = arith.constant dense<0xFF800000> : vector<8xf32>
    %249 = vector.multi_reduction <maximumf>, %248, %cst_79 [1] : vector<8x8xf32> to vector<8xf32>
    %250 = vector.shape_cast %249 : vector<8xf32> to vector<8x1xf32>
    %251 = vector.broadcast %250 : vector<8x1xf32> to vector<8x8xf32>
    %252 = arith.subf %248, %251 : vector<8x8xf32>
    %253 = math.exp %252 : vector<8x8xf32>
    %cst_80 = arith.constant dense<0.000000e+00> : vector<8xf32>
    %254 = vector.multi_reduction <add>, %253, %cst_80 [1] : vector<8x8xf32> to vector<8xf32>
    %255 = vector.shape_cast %254 : vector<8xf32> to vector<8x1xf32>
    %256 = vector.broadcast %255 : vector<8x1xf32> to vector<8x8xf32>
    %257 = arith.divf %253, %256 : vector<8x8xf32>
    %258 = vector.extract_strided_slice %220 {offsets = [0, 16], sizes = [8, 16], strides = [1, 1]} : vector<8x32xf32> to vector<8x16xf32>
    %cst_81 = arith.constant dense<0.000000e+00> : vector<8x16xf32>
    %259 = tpu.matmul %257, %258, %cst_81 {dimension_numbers = #tpu.dot_dimension_numbers<[1], [0], [0], [1], [0, 0, 1, 1], [], []>} : vector<8x8xf32>, vector<8x16xf32>, vector<8x16xf32> -> vector<8x16xf32>
    %260 = vector.extract_strided_slice %223 {offsets = [16, 0], sizes = [16, 32], strides = [1, 1]} : vector<32x32xf32> to vector<16x32xf32>
    %cst_82 = arith.constant dense<0.000000e+00> : vector<8x32xf32>
    %261 = tpu.matmul %259, %260, %cst_82 {dimension_numbers = #tpu.dot_dimension_numbers<[1], [0], [0], [1], [0, 0, 1, 1], [], []>} : vector<8x16xf32>, vector<16x32xf32>, vector<8x32xf32> -> vector<8x32xf32>
    %262 = arith.addf %242, %261 : vector<8x32xf32>
    %c488 = arith.constant 488 : index
    %c0_83 = arith.constant 0 : index
    %263 = vector.load %arg5[%c488, %c0_83] : memref<752x128xf32, #tpu.memory_space<vmem>>, vector<1x32xf32>
    %264 = vector.broadcast %263 : vector<1x32xf32> to vector<8x32xf32>
    %265 = arith.addf %262, %264 : vector<8x32xf32>
    %266 = arith.addf %265, %212 : vector<8x32xf32>
    %c496 = arith.constant 496 : index
    %c0_84 = arith.constant 0 : index
    %267 = vector.load %arg5[%c496, %c0_84] : memref<752x128xf32, #tpu.memory_space<vmem>>, vector<2x32xf32>
    %cst_85 = arith.constant dense<0.000000e+00> : vector<8xf32>
    %268 = vector.multi_reduction <add>, %266, %cst_85 [1] : vector<8x32xf32> to vector<8xf32>
    %269 = vector.shape_cast %268 : vector<8xf32> to vector<8x1xf32>
    %cst_86 = arith.constant 3.200000e+01 : f32
    %270 = vector.broadcast %cst_86 : f32 to vector<8x1xf32>
    %271 = arith.divf %269, %270 : vector<8x1xf32>
    %272 = vector.broadcast %271 : vector<8x1xf32> to vector<8x32xf32>
    %273 = arith.subf %266, %272 : vector<8x32xf32>
    %274 = arith.mulf %273, %273 : vector<8x32xf32>
    %cst_87 = arith.constant dense<0.000000e+00> : vector<8xf32>
    %275 = vector.multi_reduction <add>, %274, %cst_87 [1] : vector<8x32xf32> to vector<8xf32>
    %276 = vector.shape_cast %275 : vector<8xf32> to vector<8x1xf32>
    %cst_88 = arith.constant 3.200000e+01 : f32
    %277 = vector.broadcast %cst_88 : f32 to vector<8x1xf32>
    %278 = arith.divf %276, %277 : vector<8x1xf32>
    %279 = vector.broadcast %271 : vector<8x1xf32> to vector<8x32xf32>
    %280 = arith.subf %266, %279 : vector<8x32xf32>
    %cst_89 = arith.constant 9.99999996E-13 : f32
    %281 = vector.broadcast %cst_89 : f32 to vector<8x1xf32>
    %282 = arith.addf %278, %281 : vector<8x1xf32>
    %283 = math.rsqrt %282 : vector<8x1xf32>
    %284 = vector.broadcast %283 : vector<8x1xf32> to vector<8x32xf32>
    %285 = arith.mulf %280, %284 : vector<8x32xf32>
    %286 = vector.extract_strided_slice %267 {offsets = [0, 0], sizes = [1, 32], strides = [1, 1]} : vector<2x32xf32> to vector<1x32xf32>
    %287 = vector.broadcast %286 : vector<1x32xf32> to vector<8x32xf32>
    %288 = arith.mulf %285, %287 : vector<8x32xf32>
    %289 = vector.extract_strided_slice %267 {offsets = [1, 0], sizes = [1, 32], strides = [1, 1]} : vector<2x32xf32> to vector<1x32xf32>
    %290 = vector.broadcast %289 : vector<1x32xf32> to vector<8x32xf32>
    %291 = arith.addf %288, %290 : vector<8x32xf32>
    %c504 = arith.constant 504 : index
    %c0_90 = arith.constant 0 : index
    %292 = vector.load %arg5[%c504, %c0_90] : memref<752x128xf32, #tpu.memory_space<vmem>>, vector<32x32xf32>
    %cst_91 = arith.constant dense<0.000000e+00> : vector<8x32xf32>
    %293 = tpu.matmul %291, %292, %cst_91 {dimension_numbers = #tpu.dot_dimension_numbers<[1], [0], [0], [1], [0, 0, 1, 1], [], []>} : vector<8x32xf32>, vector<32x32xf32>, vector<8x32xf32> -> vector<8x32xf32>
    %c536 = arith.constant 536 : index
    %c0_92 = arith.constant 0 : index
    %294 = vector.load %arg5[%c536, %c0_92] : memref<752x128xf32, #tpu.memory_space<vmem>>, vector<1x32xf32>
    %295 = vector.broadcast %294 : vector<1x32xf32> to vector<8x32xf32>
    %296 = arith.addf %293, %295 : vector<8x32xf32>
    %c544 = arith.constant 544 : index
    %c0_93 = arith.constant 0 : index
    %297 = vector.load %arg5[%c544, %c0_93] : memref<752x128xf32, #tpu.memory_space<vmem>>, vector<32x64xf32>
    %cst_94 = arith.constant dense<0.000000e+00> : vector<16x64xf32>
    %298 = tpu.matmul %177, %297, %cst_94 {dimension_numbers = #tpu.dot_dimension_numbers<[1], [0], [0], [1], [0, 0, 1, 1], [], []>} : vector<16x32xf32>, vector<32x64xf32>, vector<16x64xf32> -> vector<16x64xf32>
    %c576 = arith.constant 576 : index
    %c0_95 = arith.constant 0 : index
    %299 = vector.load %arg5[%c576, %c0_95] : memref<752x128xf32, #tpu.memory_space<vmem>>, vector<1x64xf32>
    %300 = vector.broadcast %299 : vector<1x64xf32> to vector<16x64xf32>
    %301 = arith.addf %298, %300 : vector<16x64xf32>
    %302 = vector.extract_strided_slice %301 {offsets = [0, 0], sizes = [16, 32], strides = [1, 1]} : vector<16x64xf32> to vector<16x32xf32>
    %303 = vector.extract_strided_slice %301 {offsets = [0, 32], sizes = [16, 32], strides = [1, 1]} : vector<16x64xf32> to vector<16x32xf32>
    %304 = vector.shape_cast %8 : vector<1x16xf32> to vector<1x16xf32>
    %305 = vector.broadcast %304 : vector<1x16xf32> to vector<8x16xf32>
    %c584 = arith.constant 584 : index
    %c0_96 = arith.constant 0 : index
    %306 = vector.load %arg5[%c584, %c0_96] : memref<752x128xf32, #tpu.memory_space<vmem>>, vector<32x32xf32>
    %307 = vector.extract_strided_slice %296 {offsets = [0, 0], sizes = [8, 16], strides = [1, 1]} : vector<8x32xf32> to vector<8x16xf32>
    %308 = vector.extract_strided_slice %302 {offsets = [0, 0], sizes = [16, 16], strides = [1, 1]} : vector<16x32xf32> to vector<16x16xf32>
    %cst_97 = arith.constant dense<0.000000e+00> : vector<8x16xf32>
    %309 = tpu.matmul %307, %308, %cst_97 {dimension_numbers = #tpu.dot_dimension_numbers<[1], [1], [0], [0], [0, 0, 1, 0], [], []>} : vector<8x16xf32>, vector<16x16xf32>, vector<8x16xf32> -> vector<8x16xf32>
    %cst_98 = arith.constant 2.500000e-01 : f32
    %310 = vector.broadcast %cst_98 : f32 to vector<8x16xf32>
    %311 = arith.mulf %309, %310 : vector<8x16xf32>
    %312 = arith.addf %311, %305 : vector<8x16xf32>
    %cst_99 = arith.constant dense<0xFF800000> : vector<8xf32>
    %313 = vector.multi_reduction <maximumf>, %312, %cst_99 [1] : vector<8x16xf32> to vector<8xf32>
    %314 = vector.shape_cast %313 : vector<8xf32> to vector<8x1xf32>
    %315 = vector.broadcast %314 : vector<8x1xf32> to vector<8x16xf32>
    %316 = arith.subf %312, %315 : vector<8x16xf32>
    %317 = math.exp %316 : vector<8x16xf32>
    %cst_100 = arith.constant dense<0.000000e+00> : vector<8xf32>
    %318 = vector.multi_reduction <add>, %317, %cst_100 [1] : vector<8x16xf32> to vector<8xf32>
    %319 = vector.shape_cast %318 : vector<8xf32> to vector<8x1xf32>
    %320 = vector.broadcast %319 : vector<8x1xf32> to vector<8x16xf32>
    %321 = arith.divf %317, %320 : vector<8x16xf32>
    %322 = vector.extract_strided_slice %303 {offsets = [0, 0], sizes = [16, 16], strides = [1, 1]} : vector<16x32xf32> to vector<16x16xf32>
    %cst_101 = arith.constant dense<0.000000e+00> : vector<8x16xf32>
    %323 = tpu.matmul %321, %322, %cst_101 {dimension_numbers = #tpu.dot_dimension_numbers<[1], [0], [0], [1], [0, 0, 1, 1], [], []>} : vector<8x16xf32>, vector<16x16xf32>, vector<8x16xf32> -> vector<8x16xf32>
    %324 = vector.extract_strided_slice %306 {offsets = [0, 0], sizes = [16, 32], strides = [1, 1]} : vector<32x32xf32> to vector<16x32xf32>
    %cst_102 = arith.constant dense<0.000000e+00> : vector<8x32xf32>
    %325 = tpu.matmul %323, %324, %cst_102 {dimension_numbers = #tpu.dot_dimension_numbers<[1], [0], [0], [1], [0, 0, 1, 1], [], []>} : vector<8x16xf32>, vector<16x32xf32>, vector<8x32xf32> -> vector<8x32xf32>
    %326 = vector.extract_strided_slice %296 {offsets = [0, 16], sizes = [8, 16], strides = [1, 1]} : vector<8x32xf32> to vector<8x16xf32>
    %327 = vector.extract_strided_slice %302 {offsets = [0, 16], sizes = [16, 16], strides = [1, 1]} : vector<16x32xf32> to vector<16x16xf32>
    %cst_103 = arith.constant dense<0.000000e+00> : vector<8x16xf32>
    %328 = tpu.matmul %326, %327, %cst_103 {dimension_numbers = #tpu.dot_dimension_numbers<[1], [1], [0], [0], [0, 0, 1, 0], [], []>} : vector<8x16xf32>, vector<16x16xf32>, vector<8x16xf32> -> vector<8x16xf32>
    %cst_104 = arith.constant 2.500000e-01 : f32
    %329 = vector.broadcast %cst_104 : f32 to vector<8x16xf32>
    %330 = arith.mulf %328, %329 : vector<8x16xf32>
    %331 = arith.addf %330, %305 : vector<8x16xf32>
    %cst_105 = arith.constant dense<0xFF800000> : vector<8xf32>
    %332 = vector.multi_reduction <maximumf>, %331, %cst_105 [1] : vector<8x16xf32> to vector<8xf32>
    %333 = vector.shape_cast %332 : vector<8xf32> to vector<8x1xf32>
    %334 = vector.broadcast %333 : vector<8x1xf32> to vector<8x16xf32>
    %335 = arith.subf %331, %334 : vector<8x16xf32>
    %336 = math.exp %335 : vector<8x16xf32>
    %cst_106 = arith.constant dense<0.000000e+00> : vector<8xf32>
    %337 = vector.multi_reduction <add>, %336, %cst_106 [1] : vector<8x16xf32> to vector<8xf32>
    %338 = vector.shape_cast %337 : vector<8xf32> to vector<8x1xf32>
    %339 = vector.broadcast %338 : vector<8x1xf32> to vector<8x16xf32>
    %340 = arith.divf %336, %339 : vector<8x16xf32>
    %341 = vector.extract_strided_slice %303 {offsets = [0, 16], sizes = [16, 16], strides = [1, 1]} : vector<16x32xf32> to vector<16x16xf32>
    %cst_107 = arith.constant dense<0.000000e+00> : vector<8x16xf32>
    %342 = tpu.matmul %340, %341, %cst_107 {dimension_numbers = #tpu.dot_dimension_numbers<[1], [0], [0], [1], [0, 0, 1, 1], [], []>} : vector<8x16xf32>, vector<16x16xf32>, vector<8x16xf32> -> vector<8x16xf32>
    %343 = vector.extract_strided_slice %306 {offsets = [16, 0], sizes = [16, 32], strides = [1, 1]} : vector<32x32xf32> to vector<16x32xf32>
    %cst_108 = arith.constant dense<0.000000e+00> : vector<8x32xf32>
    %344 = tpu.matmul %342, %343, %cst_108 {dimension_numbers = #tpu.dot_dimension_numbers<[1], [0], [0], [1], [0, 0, 1, 1], [], []>} : vector<8x16xf32>, vector<16x32xf32>, vector<8x32xf32> -> vector<8x32xf32>
    %345 = arith.addf %325, %344 : vector<8x32xf32>
    %c616 = arith.constant 616 : index
    %c0_109 = arith.constant 0 : index
    %346 = vector.load %arg5[%c616, %c0_109] : memref<752x128xf32, #tpu.memory_space<vmem>>, vector<1x32xf32>
    %347 = vector.broadcast %346 : vector<1x32xf32> to vector<8x32xf32>
    %348 = arith.addf %345, %347 : vector<8x32xf32>
    %349 = arith.addf %348, %291 : vector<8x32xf32>
    %c624 = arith.constant 624 : index
    %c0_110 = arith.constant 0 : index
    %350 = vector.load %arg5[%c624, %c0_110] : memref<752x128xf32, #tpu.memory_space<vmem>>, vector<2x32xf32>
    %cst_111 = arith.constant dense<0.000000e+00> : vector<8xf32>
    %351 = vector.multi_reduction <add>, %349, %cst_111 [1] : vector<8x32xf32> to vector<8xf32>
    %352 = vector.shape_cast %351 : vector<8xf32> to vector<8x1xf32>
    %cst_112 = arith.constant 3.200000e+01 : f32
    %353 = vector.broadcast %cst_112 : f32 to vector<8x1xf32>
    %354 = arith.divf %352, %353 : vector<8x1xf32>
    %355 = vector.broadcast %354 : vector<8x1xf32> to vector<8x32xf32>
    %356 = arith.subf %349, %355 : vector<8x32xf32>
    %357 = arith.mulf %356, %356 : vector<8x32xf32>
    %cst_113 = arith.constant dense<0.000000e+00> : vector<8xf32>
    %358 = vector.multi_reduction <add>, %357, %cst_113 [1] : vector<8x32xf32> to vector<8xf32>
    %359 = vector.shape_cast %358 : vector<8xf32> to vector<8x1xf32>
    %cst_114 = arith.constant 3.200000e+01 : f32
    %360 = vector.broadcast %cst_114 : f32 to vector<8x1xf32>
    %361 = arith.divf %359, %360 : vector<8x1xf32>
    %362 = vector.broadcast %354 : vector<8x1xf32> to vector<8x32xf32>
    %363 = arith.subf %349, %362 : vector<8x32xf32>
    %cst_115 = arith.constant 9.99999996E-13 : f32
    %364 = vector.broadcast %cst_115 : f32 to vector<8x1xf32>
    %365 = arith.addf %361, %364 : vector<8x1xf32>
    %366 = math.rsqrt %365 : vector<8x1xf32>
    %367 = vector.broadcast %366 : vector<8x1xf32> to vector<8x32xf32>
    %368 = arith.mulf %363, %367 : vector<8x32xf32>
    %369 = vector.extract_strided_slice %350 {offsets = [0, 0], sizes = [1, 32], strides = [1, 1]} : vector<2x32xf32> to vector<1x32xf32>
    %370 = vector.broadcast %369 : vector<1x32xf32> to vector<8x32xf32>
    %371 = arith.mulf %368, %370 : vector<8x32xf32>
    %372 = vector.extract_strided_slice %350 {offsets = [1, 0], sizes = [1, 32], strides = [1, 1]} : vector<2x32xf32> to vector<1x32xf32>
    %373 = vector.broadcast %372 : vector<1x32xf32> to vector<8x32xf32>
    %374 = arith.addf %371, %373 : vector<8x32xf32>
    %c632 = arith.constant 632 : index
    %c0_116 = arith.constant 0 : index
    %375 = vector.load %arg5[%c632, %c0_116] : memref<752x128xf32, #tpu.memory_space<vmem>>, vector<32x64xf32>
    %cst_117 = arith.constant dense<0.000000e+00> : vector<8x64xf32>
    %376 = tpu.matmul %374, %375, %cst_117 {dimension_numbers = #tpu.dot_dimension_numbers<[1], [0], [0], [1], [0, 0, 1, 1], [], []>} : vector<8x32xf32>, vector<32x64xf32>, vector<8x64xf32> -> vector<8x64xf32>
    %c664 = arith.constant 664 : index
    %c0_118 = arith.constant 0 : index
    %377 = vector.load %arg5[%c664, %c0_118] : memref<752x128xf32, #tpu.memory_space<vmem>>, vector<1x64xf32>
    %378 = vector.broadcast %377 : vector<1x64xf32> to vector<8x64xf32>
    %379 = arith.addf %376, %378 : vector<8x64xf32>
    %380 = arith.mulf %379, %379 : vector<8x64xf32>
    %381 = arith.mulf %379, %380 : vector<8x64xf32>
    %cst_119 = arith.constant 4.471500e-02 : f32
    %382 = vector.broadcast %cst_119 : f32 to vector<8x64xf32>
    %383 = arith.mulf %382, %381 : vector<8x64xf32>
    %384 = arith.addf %379, %383 : vector<8x64xf32>
    %cst_120 = arith.constant 0.797884583 : f32
    %385 = vector.broadcast %cst_120 : f32 to vector<8x64xf32>
    %386 = arith.mulf %385, %384 : vector<8x64xf32>
    %387 = math.tanh %386 : vector<8x64xf32>
    %cst_121 = arith.constant 1.000000e+00 : f32
    %388 = vector.broadcast %cst_121 : f32 to vector<8x64xf32>
    %389 = arith.addf %388, %387 : vector<8x64xf32>
    %cst_122 = arith.constant 5.000000e-01 : f32
    %390 = vector.broadcast %cst_122 : f32 to vector<8x64xf32>
    %391 = arith.mulf %390, %389 : vector<8x64xf32>
    %392 = arith.mulf %379, %391 : vector<8x64xf32>
    %c672 = arith.constant 672 : index
    %c0_123 = arith.constant 0 : index
    %393 = vector.load %arg5[%c672, %c0_123] : memref<752x128xf32, #tpu.memory_space<vmem>>, vector<64x32xf32>
    %cst_124 = arith.constant dense<0.000000e+00> : vector<8x32xf32>
    %394 = tpu.matmul %392, %393, %cst_124 {dimension_numbers = #tpu.dot_dimension_numbers<[1], [0], [0], [1], [0, 0, 1, 1], [], []>} : vector<8x64xf32>, vector<64x32xf32>, vector<8x32xf32> -> vector<8x32xf32>
    %c736 = arith.constant 736 : index
    %c0_125 = arith.constant 0 : index
    %395 = vector.load %arg5[%c736, %c0_125] : memref<752x128xf32, #tpu.memory_space<vmem>>, vector<1x32xf32>
    %396 = vector.broadcast %395 : vector<1x32xf32> to vector<8x32xf32>
    %397 = arith.addf %394, %396 : vector<8x32xf32>
    %398 = arith.addf %397, %374 : vector<8x32xf32>
    %c744 = arith.constant 744 : index
    %c0_126 = arith.constant 0 : index
    %399 = vector.load %arg5[%c744, %c0_126] : memref<752x128xf32, #tpu.memory_space<vmem>>, vector<2x32xf32>
    %cst_127 = arith.constant dense<0.000000e+00> : vector<8xf32>
    %400 = vector.multi_reduction <add>, %398, %cst_127 [1] : vector<8x32xf32> to vector<8xf32>
    %401 = vector.shape_cast %400 : vector<8xf32> to vector<8x1xf32>
    %cst_128 = arith.constant 3.200000e+01 : f32
    %402 = vector.broadcast %cst_128 : f32 to vector<8x1xf32>
    %403 = arith.divf %401, %402 : vector<8x1xf32>
    %404 = vector.broadcast %403 : vector<8x1xf32> to vector<8x32xf32>
    %405 = arith.subf %398, %404 : vector<8x32xf32>
    %406 = arith.mulf %405, %405 : vector<8x32xf32>
    %cst_129 = arith.constant dense<0.000000e+00> : vector<8xf32>
    %407 = vector.multi_reduction <add>, %406, %cst_129 [1] : vector<8x32xf32> to vector<8xf32>
    %408 = vector.shape_cast %407 : vector<8xf32> to vector<8x1xf32>
    %cst_130 = arith.constant 3.200000e+01 : f32
    %409 = vector.broadcast %cst_130 : f32 to vector<8x1xf32>
    %410 = arith.divf %408, %409 : vector<8x1xf32>
    %411 = vector.broadcast %403 : vector<8x1xf32> to vector<8x32xf32>
    %412 = arith.subf %398, %411 : vector<8x32xf32>
    %cst_131 = arith.constant 9.99999996E-13 : f32
    %413 = vector.broadcast %cst_131 : f32 to vector<8x1xf32>
    %414 = arith.addf %410, %413 : vector<8x1xf32>
    %415 = math.rsqrt %414 : vector<8x1xf32>
    %416 = vector.broadcast %415 : vector<8x1xf32> to vector<8x32xf32>
    %417 = arith.mulf %412, %416 : vector<8x32xf32>
    %418 = vector.extract_strided_slice %399 {offsets = [0, 0], sizes = [1, 32], strides = [1, 1]} : vector<2x32xf32> to vector<1x32xf32>
    %419 = vector.broadcast %418 : vector<1x32xf32> to vector<8x32xf32>
    %420 = arith.mulf %417, %419 : vector<8x32xf32>
    %421 = vector.extract_strided_slice %399 {offsets = [1, 0], sizes = [1, 32], strides = [1, 1]} : vector<2x32xf32> to vector<1x32xf32>
    %422 = vector.broadcast %421 : vector<1x32xf32> to vector<8x32xf32>
    %423 = arith.addf %420, %422 : vector<8x32xf32>
    %424 = tpu.concatenate %423, %321, %2 in 1 : vector<8x32xf32>, vector<8x16xf32>, vector<8x80xf32> -> vector<8x128xf32>
    %c0_132 = arith.constant 0 : index
    %c0_133 = arith.constant 0 : index
    %425 = vector.load %arg6[%c0_132, %c0_133] : memref<16x128xf32, #tpu.memory_space<vmem>>, vector<8x128xf32>
    tpu.vector_store %arg6[%c0_132, %c0_133], %424 {strides = array<i32>} : memref<16x128xf32, #tpu.memory_space<vmem>>, vector<8x128xf32>,
    %c1 = arith.constant 1 : index
    %426 = memref.load %arg3[%c1] : memref<2xi32, #tpu.memory_space<smem>>
    %427 = vector.broadcast %426 : i32 to vector<1x16xi32>
    %428 = arith.cmpi slt, %0, %427 : vector<1x16xi32>
    %cst_134 = arith.constant 0.000000e+00 : f32
    %cst_135 = arith.constant -1.000000e+09 : f32
    %429 = vector.broadcast %cst_134 : f32 to vector<1x16xf32>
    %430 = vector.broadcast %cst_135 : f32 to vector<1x16xf32>
    %431 = arith.select %428, %429, %430 : vector<1x16xi1>, vector<1x16xf32>
    %c1_136 = arith.constant 1 : index
    %432 = memref.load %arg4[%c1_136] : memref<2xi32, #tpu.memory_space<smem>>
    %433 = vector.broadcast %432 : i32 to vector<1x8xi32>
    %434 = arith.cmpi slt, %1, %433 : vector<1x8xi32>
    %cst_137 = arith.constant 0.000000e+00 : f32
    %cst_138 = arith.constant -1.000000e+09 : f32
    %435 = vector.broadcast %cst_137 : f32 to vector<1x8xf32>
    %436 = vector.broadcast %cst_138 : f32 to vector<1x8xf32>
    %437 = arith.select %434, %435, %436 : vector<1x8xi1>, vector<1x8xf32>
    %c16 = arith.constant 16 : index
    %c0_139 = arith.constant 0 : index
    %438 = vector.load %arg1[%c16, %c0_139] : memref<32x1xi32, #tpu.memory_space<vmem>>, vector<16x1xi32>
    %439 = tpu.iota {dimensions = array<i32: 1>} : vector<16x64xi32>
    %440 = vector.broadcast %438 : vector<16x1xi32> to vector<16x64xi32>
    %441 = arith.cmpi eq, %439, %440 : vector<16x64xi32>
    %442 = arith.extui %441 : vector<16x64xi1> to vector<16x64xi32>
    %443 = arith.sitofp %442 : vector<16x64xi32> to vector<16x64xf32>
    %cst_140 = arith.constant dense<0.000000e+00> : vector<16x32xf32>
    %444 = tpu.matmul %443, %21, %cst_140 {dimension_numbers = #tpu.dot_dimension_numbers<[1], [0], [0], [1], [0, 0, 1, 1], [], []>} : vector<16x64xf32>, vector<64x32xf32>, vector<16x32xf32> -> vector<16x32xf32>
    %445 = arith.addf %444, %23 : vector<16x32xf32>
    %cst_141 = arith.constant dense<0.000000e+00> : vector<16xf32>
    %446 = vector.multi_reduction <add>, %445, %cst_141 [1] : vector<16x32xf32> to vector<16xf32>
    %447 = vector.shape_cast %446 : vector<16xf32> to vector<16x1xf32>
    %cst_142 = arith.constant 3.200000e+01 : f32
    %448 = vector.broadcast %cst_142 : f32 to vector<16x1xf32>
    %449 = arith.divf %447, %448 : vector<16x1xf32>
    %450 = vector.broadcast %449 : vector<16x1xf32> to vector<16x32xf32>
    %451 = arith.subf %445, %450 : vector<16x32xf32>
    %452 = arith.mulf %451, %451 : vector<16x32xf32>
    %cst_143 = arith.constant dense<0.000000e+00> : vector<16xf32>
    %453 = vector.multi_reduction <add>, %452, %cst_143 [1] : vector<16x32xf32> to vector<16xf32>
    %454 = vector.shape_cast %453 : vector<16xf32> to vector<16x1xf32>
    %cst_144 = arith.constant 3.200000e+01 : f32
    %455 = vector.broadcast %cst_144 : f32 to vector<16x1xf32>
    %456 = arith.divf %454, %455 : vector<16x1xf32>
    %457 = vector.broadcast %449 : vector<16x1xf32> to vector<16x32xf32>
    %458 = arith.subf %445, %457 : vector<16x32xf32>
    %cst_145 = arith.constant 9.99999996E-13 : f32
    %459 = vector.broadcast %cst_145 : f32 to vector<16x1xf32>
    %460 = arith.addf %456, %459 : vector<16x1xf32>
    %461 = math.rsqrt %460 : vector<16x1xf32>
    %462 = vector.broadcast %461 : vector<16x1xf32> to vector<16x32xf32>
    %463 = arith.mulf %458, %462 : vector<16x32xf32>
    %464 = vector.extract_strided_slice %25 {offsets = [0, 0], sizes = [1, 32], strides = [1, 1]} : vector<2x32xf32> to vector<1x32xf32>
    %465 = vector.broadcast %464 : vector<1x32xf32> to vector<16x32xf32>
    %466 = arith.mulf %463, %465 : vector<16x32xf32>
    %467 = vector.extract_strided_slice %25 {offsets = [1, 0], sizes = [1, 32], strides = [1, 1]} : vector<2x32xf32> to vector<1x32xf32>
    %468 = vector.broadcast %467 : vector<1x32xf32> to vector<16x32xf32>
    %469 = arith.addf %466, %468 : vector<16x32xf32>
    %cst_146 = arith.constant dense<0.000000e+00> : vector<16x96xf32>
    %470 = tpu.matmul %469, %50, %cst_146 {dimension_numbers = #tpu.dot_dimension_numbers<[1], [0], [0], [1], [0, 0, 1, 1], [], []>} : vector<16x32xf32>, vector<32x96xf32>, vector<16x96xf32> -> vector<16x96xf32>
    %471 = vector.broadcast %52 : vector<1x96xf32> to vector<16x96xf32>
    %472 = arith.addf %470, %471 : vector<16x96xf32>
    %473 = vector.extract_strided_slice %472 {offsets = [0, 0], sizes = [16, 32], strides = [1, 1]} : vector<16x96xf32> to vector<16x32xf32>
    %474 = vector.extract_strided_slice %472 {offsets = [0, 32], sizes = [16, 32], strides = [1, 1]} : vector<16x96xf32> to vector<16x32xf32>
    %475 = vector.extract_strided_slice %472 {offsets = [0, 64], sizes = [16, 32], strides = [1, 1]} : vector<16x96xf32> to vector<16x32xf32>
    %476 = vector.shape_cast %431 : vector<1x16xf32> to vector<1x16xf32>
    %477 = vector.broadcast %476 : vector<1x16xf32> to vector<16x16xf32>
    %478 = vector.extract_strided_slice %473 {offsets = [0, 0], sizes = [16, 16], strides = [1, 1]} : vector<16x32xf32> to vector<16x16xf32>
    %479 = vector.extract_strided_slice %474 {offsets = [0, 0], sizes = [16, 16], strides = [1, 1]} : vector<16x32xf32> to vector<16x16xf32>
    %cst_147 = arith.constant dense<0.000000e+00> : vector<16x16xf32>
    %480 = tpu.matmul %478, %479, %cst_147 {dimension_numbers = #tpu.dot_dimension_numbers<[1], [1], [0], [0], [0, 0, 1, 0], [], []>} : vector<16x16xf32>, vector<16x16xf32>, vector<16x16xf32> -> vector<16x16xf32>
    %cst_148 = arith.constant 2.500000e-01 : f32
    %481 = vector.broadcast %cst_148 : f32 to vector<16x16xf32>
    %482 = arith.mulf %480, %481 : vector<16x16xf32>
    %483 = arith.addf %482, %477 : vector<16x16xf32>
    %cst_149 = arith.constant dense<0xFF800000> : vector<16xf32>
    %484 = vector.multi_reduction <maximumf>, %483, %cst_149 [1] : vector<16x16xf32> to vector<16xf32>
    %485 = vector.shape_cast %484 : vector<16xf32> to vector<16x1xf32>
    %486 = vector.broadcast %485 : vector<16x1xf32> to vector<16x16xf32>
    %487 = arith.subf %483, %486 : vector<16x16xf32>
    %488 = math.exp %487 : vector<16x16xf32>
    %cst_150 = arith.constant dense<0.000000e+00> : vector<16xf32>
    %489 = vector.multi_reduction <add>, %488, %cst_150 [1] : vector<16x16xf32> to vector<16xf32>
    %490 = vector.shape_cast %489 : vector<16xf32> to vector<16x1xf32>
    %491 = vector.broadcast %490 : vector<16x1xf32> to vector<16x16xf32>
    %492 = arith.divf %488, %491 : vector<16x16xf32>
    %493 = vector.extract_strided_slice %475 {offsets = [0, 0], sizes = [16, 16], strides = [1, 1]} : vector<16x32xf32> to vector<16x16xf32>
    %cst_151 = arith.constant dense<0.000000e+00> : vector<16x16xf32>
    %494 = tpu.matmul %492, %493, %cst_151 {dimension_numbers = #tpu.dot_dimension_numbers<[1], [0], [0], [1], [0, 0, 1, 1], [], []>} : vector<16x16xf32>, vector<16x16xf32>, vector<16x16xf32> -> vector<16x16xf32>
    %495 = vector.extract_strided_slice %60 {offsets = [0, 0], sizes = [16, 32], strides = [1, 1]} : vector<32x32xf32> to vector<16x32xf32>
    %cst_152 = arith.constant dense<0.000000e+00> : vector<16x32xf32>
    %496 = tpu.matmul %494, %495, %cst_152 {dimension_numbers = #tpu.dot_dimension_numbers<[1], [0], [0], [1], [0, 0, 1, 1], [], []>} : vector<16x16xf32>, vector<16x32xf32>, vector<16x32xf32> -> vector<16x32xf32>
    %497 = vector.extract_strided_slice %473 {offsets = [0, 16], sizes = [16, 16], strides = [1, 1]} : vector<16x32xf32> to vector<16x16xf32>
    %498 = vector.extract_strided_slice %474 {offsets = [0, 16], sizes = [16, 16], strides = [1, 1]} : vector<16x32xf32> to vector<16x16xf32>
    %cst_153 = arith.constant dense<0.000000e+00> : vector<16x16xf32>
    %499 = tpu.matmul %497, %498, %cst_153 {dimension_numbers = #tpu.dot_dimension_numbers<[1], [1], [0], [0], [0, 0, 1, 0], [], []>} : vector<16x16xf32>, vector<16x16xf32>, vector<16x16xf32> -> vector<16x16xf32>
    %cst_154 = arith.constant 2.500000e-01 : f32
    %500 = vector.broadcast %cst_154 : f32 to vector<16x16xf32>
    %501 = arith.mulf %499, %500 : vector<16x16xf32>
    %502 = arith.addf %501, %477 : vector<16x16xf32>
    %cst_155 = arith.constant dense<0xFF800000> : vector<16xf32>
    %503 = vector.multi_reduction <maximumf>, %502, %cst_155 [1] : vector<16x16xf32> to vector<16xf32>
    %504 = vector.shape_cast %503 : vector<16xf32> to vector<16x1xf32>
    %505 = vector.broadcast %504 : vector<16x1xf32> to vector<16x16xf32>
    %506 = arith.subf %502, %505 : vector<16x16xf32>
    %507 = math.exp %506 : vector<16x16xf32>
    %cst_156 = arith.constant dense<0.000000e+00> : vector<16xf32>
    %508 = vector.multi_reduction <add>, %507, %cst_156 [1] : vector<16x16xf32> to vector<16xf32>
    %509 = vector.shape_cast %508 : vector<16xf32> to vector<16x1xf32>
    %510 = vector.broadcast %509 : vector<16x1xf32> to vector<16x16xf32>
    %511 = arith.divf %507, %510 : vector<16x16xf32>
    %512 = vector.extract_strided_slice %475 {offsets = [0, 16], sizes = [16, 16], strides = [1, 1]} : vector<16x32xf32> to vector<16x16xf32>
    %cst_157 = arith.constant dense<0.000000e+00> : vector<16x16xf32>
    %513 = tpu.matmul %511, %512, %cst_157 {dimension_numbers = #tpu.dot_dimension_numbers<[1], [0], [0], [1], [0, 0, 1, 1], [], []>} : vector<16x16xf32>, vector<16x16xf32>, vector<16x16xf32> -> vector<16x16xf32>
    %514 = vector.extract_strided_slice %60 {offsets = [16, 0], sizes = [16, 32], strides = [1, 1]} : vector<32x32xf32> to vector<16x32xf32>
    %cst_158 = arith.constant dense<0.000000e+00> : vector<16x32xf32>
    %515 = tpu.matmul %513, %514, %cst_158 {dimension_numbers = #tpu.dot_dimension_numbers<[1], [0], [0], [1], [0, 0, 1, 1], [], []>} : vector<16x16xf32>, vector<16x32xf32>, vector<16x32xf32> -> vector<16x32xf32>
    %516 = arith.addf %496, %515 : vector<16x32xf32>
    %517 = vector.broadcast %100 : vector<1x32xf32> to vector<16x32xf32>
    %518 = arith.addf %516, %517 : vector<16x32xf32>
    %519 = arith.addf %518, %469 : vector<16x32xf32>
    %cst_159 = arith.constant dense<0.000000e+00> : vector<16xf32>
    %520 = vector.multi_reduction <add>, %519, %cst_159 [1] : vector<16x32xf32> to vector<16xf32>
    %521 = vector.shape_cast %520 : vector<16xf32> to vector<16x1xf32>
    %cst_160 = arith.constant 3.200000e+01 : f32
    %522 = vector.broadcast %cst_160 : f32 to vector<16x1xf32>
    %523 = arith.divf %521, %522 : vector<16x1xf32>
    %524 = vector.broadcast %523 : vector<16x1xf32> to vector<16x32xf32>
    %525 = arith.subf %519, %524 : vector<16x32xf32>
    %526 = arith.mulf %525, %525 : vector<16x32xf32>
    %cst_161 = arith.constant dense<0.000000e+00> : vector<16xf32>
    %527 = vector.multi_reduction <add>, %526, %cst_161 [1] : vector<16x32xf32> to vector<16xf32>
    %528 = vector.shape_cast %527 : vector<16xf32> to vector<16x1xf32>
    %cst_162 = arith.constant 3.200000e+01 : f32
    %529 = vector.broadcast %cst_162 : f32 to vector<16x1xf32>
    %530 = arith.divf %528, %529 : vector<16x1xf32>
    %531 = vector.broadcast %523 : vector<16x1xf32> to vector<16x32xf32>
    %532 = arith.subf %519, %531 : vector<16x32xf32>
    %cst_163 = arith.constant 9.99999996E-13 : f32
    %533 = vector.broadcast %cst_163 : f32 to vector<16x1xf32>
    %534 = arith.addf %530, %533 : vector<16x1xf32>
    %535 = math.rsqrt %534 : vector<16x1xf32>
    %536 = vector.broadcast %535 : vector<16x1xf32> to vector<16x32xf32>
    %537 = arith.mulf %532, %536 : vector<16x32xf32>
    %538 = vector.extract_strided_slice %104 {offsets = [0, 0], sizes = [1, 32], strides = [1, 1]} : vector<2x32xf32> to vector<1x32xf32>
    %539 = vector.broadcast %538 : vector<1x32xf32> to vector<16x32xf32>
    %540 = arith.mulf %537, %539 : vector<16x32xf32>
    %541 = vector.extract_strided_slice %104 {offsets = [1, 0], sizes = [1, 32], strides = [1, 1]} : vector<2x32xf32> to vector<1x32xf32>
    %542 = vector.broadcast %541 : vector<1x32xf32> to vector<16x32xf32>
    %543 = arith.addf %540, %542 : vector<16x32xf32>
    %cst_164 = arith.constant dense<0.000000e+00> : vector<16x64xf32>
    %544 = tpu.matmul %543, %129, %cst_164 {dimension_numbers = #tpu.dot_dimension_numbers<[1], [0], [0], [1], [0, 0, 1, 1], [], []>} : vector<16x32xf32>, vector<32x64xf32>, vector<16x64xf32> -> vector<16x64xf32>
    %545 = vector.broadcast %131 : vector<1x64xf32> to vector<16x64xf32>
    %546 = arith.addf %544, %545 : vector<16x64xf32>
    %547 = arith.mulf %546, %546 : vector<16x64xf32>
    %548 = arith.mulf %546, %547 : vector<16x64xf32>
    %cst_165 = arith.constant 4.471500e-02 : f32
    %549 = vector.broadcast %cst_165 : f32 to vector<16x64xf32>
    %550 = arith.mulf %549, %548 : vector<16x64xf32>
    %551 = arith.addf %546, %550 : vector<16x64xf32>
    %cst_166 = arith.constant 0.797884583 : f32
    %552 = vector.broadcast %cst_166 : f32 to vector<16x64xf32>
    %553 = arith.mulf %552, %551 : vector<16x64xf32>
    %554 = math.tanh %553 : vector<16x64xf32>
    %cst_167 = arith.constant 1.000000e+00 : f32
    %555 = vector.broadcast %cst_167 : f32 to vector<16x64xf32>
    %556 = arith.addf %555, %554 : vector<16x64xf32>
    %cst_168 = arith.constant 5.000000e-01 : f32
    %557 = vector.broadcast %cst_168 : f32 to vector<16x64xf32>
    %558 = arith.mulf %557, %556 : vector<16x64xf32>
    %559 = arith.mulf %546, %558 : vector<16x64xf32>
    %cst_169 = arith.constant dense<0.000000e+00> : vector<16x32xf32>
    %560 = tpu.matmul %559, %147, %cst_169 {dimension_numbers = #tpu.dot_dimension_numbers<[1], [0], [0], [1], [0, 0, 1, 1], [], []>} : vector<16x64xf32>, vector<64x32xf32>, vector<16x32xf32> -> vector<16x32xf32>
    %561 = vector.broadcast %149 : vector<1x32xf32> to vector<16x32xf32>
    %562 = arith.addf %560, %561 : vector<16x32xf32>
    %563 = arith.addf %562, %543 : vector<16x32xf32>
    %cst_170 = arith.constant dense<0.000000e+00> : vector<16xf32>
    %564 = vector.multi_reduction <add>, %563, %cst_170 [1] : vector<16x32xf32> to vector<16xf32>
    %565 = vector.shape_cast %564 : vector<16xf32> to vector<16x1xf32>
    %cst_171 = arith.constant 3.200000e+01 : f32
    %566 = vector.broadcast %cst_171 : f32 to vector<16x1xf32>
    %567 = arith.divf %565, %566 : vector<16x1xf32>
    %568 = vector.broadcast %567 : vector<16x1xf32> to vector<16x32xf32>
    %569 = arith.subf %563, %568 : vector<16x32xf32>
    %570 = arith.mulf %569, %569 : vector<16x32xf32>
    %cst_172 = arith.constant dense<0.000000e+00> : vector<16xf32>
    %571 = vector.multi_reduction <add>, %570, %cst_172 [1] : vector<16x32xf32> to vector<16xf32>
    %572 = vector.shape_cast %571 : vector<16xf32> to vector<16x1xf32>
    %cst_173 = arith.constant 3.200000e+01 : f32
    %573 = vector.broadcast %cst_173 : f32 to vector<16x1xf32>
    %574 = arith.divf %572, %573 : vector<16x1xf32>
    %575 = vector.broadcast %567 : vector<16x1xf32> to vector<16x32xf32>
    %576 = arith.subf %563, %575 : vector<16x32xf32>
    %cst_174 = arith.constant 9.99999996E-13 : f32
    %577 = vector.broadcast %cst_174 : f32 to vector<16x1xf32>
    %578 = arith.addf %574, %577 : vector<16x1xf32>
    %579 = math.rsqrt %578 : vector<16x1xf32>
    %580 = vector.broadcast %579 : vector<16x1xf32> to vector<16x32xf32>
    %581 = arith.mulf %576, %580 : vector<16x32xf32>
    %582 = vector.extract_strided_slice %153 {offsets = [0, 0], sizes = [1, 32], strides = [1, 1]} : vector<2x32xf32> to vector<1x32xf32>
    %583 = vector.broadcast %582 : vector<1x32xf32> to vector<16x32xf32>
    %584 = arith.mulf %581, %583 : vector<16x32xf32>
    %585 = vector.extract_strided_slice %153 {offsets = [1, 0], sizes = [1, 32], strides = [1, 1]} : vector<2x32xf32> to vector<1x32xf32>
    %586 = vector.broadcast %585 : vector<1x32xf32> to vector<16x32xf32>
    %587 = arith.addf %584, %586 : vector<16x32xf32>
    %c8 = arith.constant 8 : index
    %c0_175 = arith.constant 0 : index
    %588 = vector.load %arg2[%c8, %c0_175] : memref<16x1xi32, #tpu.memory_space<vmem>>, vector<8x1xi32>
    %589 = tpu.iota {dimensions = array<i32: 1>} : vector<8x64xi32>
    %590 = vector.broadcast %588 : vector<8x1xi32> to vector<8x64xi32>
    %591 = arith.cmpi eq, %589, %590 : vector<8x64xi32>
    %592 = arith.extui %591 : vector<8x64xi1> to vector<8x64xi32>
    %593 = arith.sitofp %592 : vector<8x64xi32> to vector<8x64xf32>
    %cst_176 = arith.constant dense<0.000000e+00> : vector<8x32xf32>
    %594 = tpu.matmul %593, %184, %cst_176 {dimension_numbers = #tpu.dot_dimension_numbers<[1], [0], [0], [1], [0, 0, 1, 1], [], []>} : vector<8x64xf32>, vector<64x32xf32>, vector<8x32xf32> -> vector<8x32xf32>
    %595 = arith.addf %594, %186 : vector<8x32xf32>
    %cst_177 = arith.constant dense<0.000000e+00> : vector<8xf32>
    %596 = vector.multi_reduction <add>, %595, %cst_177 [1] : vector<8x32xf32> to vector<8xf32>
    %597 = vector.shape_cast %596 : vector<8xf32> to vector<8x1xf32>
    %cst_178 = arith.constant 3.200000e+01 : f32
    %598 = vector.broadcast %cst_178 : f32 to vector<8x1xf32>
    %599 = arith.divf %597, %598 : vector<8x1xf32>
    %600 = vector.broadcast %599 : vector<8x1xf32> to vector<8x32xf32>
    %601 = arith.subf %595, %600 : vector<8x32xf32>
    %602 = arith.mulf %601, %601 : vector<8x32xf32>
    %cst_179 = arith.constant dense<0.000000e+00> : vector<8xf32>
    %603 = vector.multi_reduction <add>, %602, %cst_179 [1] : vector<8x32xf32> to vector<8xf32>
    %604 = vector.shape_cast %603 : vector<8xf32> to vector<8x1xf32>
    %cst_180 = arith.constant 3.200000e+01 : f32
    %605 = vector.broadcast %cst_180 : f32 to vector<8x1xf32>
    %606 = arith.divf %604, %605 : vector<8x1xf32>
    %607 = vector.broadcast %599 : vector<8x1xf32> to vector<8x32xf32>
    %608 = arith.subf %595, %607 : vector<8x32xf32>
    %cst_181 = arith.constant 9.99999996E-13 : f32
    %609 = vector.broadcast %cst_181 : f32 to vector<8x1xf32>
    %610 = arith.addf %606, %609 : vector<8x1xf32>
    %611 = math.rsqrt %610 : vector<8x1xf32>
    %612 = vector.broadcast %611 : vector<8x1xf32> to vector<8x32xf32>
    %613 = arith.mulf %608, %612 : vector<8x32xf32>
    %614 = vector.extract_strided_slice %188 {offsets = [0, 0], sizes = [1, 32], strides = [1, 1]} : vector<2x32xf32> to vector<1x32xf32>
    %615 = vector.broadcast %614 : vector<1x32xf32> to vector<8x32xf32>
    %616 = arith.mulf %613, %615 : vector<8x32xf32>
    %617 = vector.extract_strided_slice %188 {offsets = [1, 0], sizes = [1, 32], strides = [1, 1]} : vector<2x32xf32> to vector<1x32xf32>
    %618 = vector.broadcast %617 : vector<1x32xf32> to vector<8x32xf32>
    %619 = arith.addf %616, %618 : vector<8x32xf32>
    %cst_182 = arith.constant dense<0.000000e+00> : vector<8x96xf32>
    %620 = tpu.matmul %619, %213, %cst_182 {dimension_numbers = #tpu.dot_dimension_numbers<[1], [0], [0], [1], [0, 0, 1, 1], [], []>} : vector<8x32xf32>, vector<32x96xf32>, vector<8x96xf32> -> vector<8x96xf32>
    %621 = vector.broadcast %215 : vector<1x96xf32> to vector<8x96xf32>
    %622 = arith.addf %620, %621 : vector<8x96xf32>
    %623 = vector.extract_strided_slice %622 {offsets = [0, 0], sizes = [8, 32], strides = [1, 1]} : vector<8x96xf32> to vector<8x32xf32>
    %624 = vector.extract_strided_slice %622 {offsets = [0, 32], sizes = [8, 32], strides = [1, 1]} : vector<8x96xf32> to vector<8x32xf32>
    %625 = vector.extract_strided_slice %622 {offsets = [0, 64], sizes = [8, 32], strides = [1, 1]} : vector<8x96xf32> to vector<8x32xf32>
    %626 = vector.shape_cast %437 : vector<1x8xf32> to vector<1x8xf32>
    %627 = vector.broadcast %626 : vector<1x8xf32> to vector<8x8xf32>
    %628 = vector.extract_strided_slice %623 {offsets = [0, 0], sizes = [8, 16], strides = [1, 1]} : vector<8x32xf32> to vector<8x16xf32>
    %629 = vector.extract_strided_slice %624 {offsets = [0, 0], sizes = [8, 16], strides = [1, 1]} : vector<8x32xf32> to vector<8x16xf32>
    %cst_183 = arith.constant dense<0.000000e+00> : vector<8x8xf32>
    %630 = tpu.matmul %628, %629, %cst_183 {dimension_numbers = #tpu.dot_dimension_numbers<[1], [1], [0], [0], [0, 0, 1, 0], [], []>} : vector<8x16xf32>, vector<8x16xf32>, vector<8x8xf32> -> vector<8x8xf32>
    %cst_184 = arith.constant 2.500000e-01 : f32
    %631 = vector.broadcast %cst_184 : f32 to vector<8x8xf32>
    %632 = arith.mulf %630, %631 : vector<8x8xf32>
    %633 = arith.addf %632, %627 : vector<8x8xf32>
    %cst_185 = arith.constant dense<0xFF800000> : vector<8xf32>
    %634 = vector.multi_reduction <maximumf>, %633, %cst_185 [1] : vector<8x8xf32> to vector<8xf32>
    %635 = vector.shape_cast %634 : vector<8xf32> to vector<8x1xf32>
    %636 = vector.broadcast %635 : vector<8x1xf32> to vector<8x8xf32>
    %637 = arith.subf %633, %636 : vector<8x8xf32>
    %638 = math.exp %637 : vector<8x8xf32>
    %cst_186 = arith.constant dense<0.000000e+00> : vector<8xf32>
    %639 = vector.multi_reduction <add>, %638, %cst_186 [1] : vector<8x8xf32> to vector<8xf32>
    %640 = vector.shape_cast %639 : vector<8xf32> to vector<8x1xf32>
    %641 = vector.broadcast %640 : vector<8x1xf32> to vector<8x8xf32>
    %642 = arith.divf %638, %641 : vector<8x8xf32>
    %643 = vector.extract_strided_slice %625 {offsets = [0, 0], sizes = [8, 16], strides = [1, 1]} : vector<8x32xf32> to vector<8x16xf32>
    %cst_187 = arith.constant dense<0.000000e+00> : vector<8x16xf32>
    %644 = tpu.matmul %642, %643, %cst_187 {dimension_numbers = #tpu.dot_dimension_numbers<[1], [0], [0], [1], [0, 0, 1, 1], [], []>} : vector<8x8xf32>, vector<8x16xf32>, vector<8x16xf32> -> vector<8x16xf32>
    %645 = vector.extract_strided_slice %223 {offsets = [0, 0], sizes = [16, 32], strides = [1, 1]} : vector<32x32xf32> to vector<16x32xf32>
    %cst_188 = arith.constant dense<0.000000e+00> : vector<8x32xf32>
    %646 = tpu.matmul %644, %645, %cst_188 {dimension_numbers = #tpu.dot_dimension_numbers<[1], [0], [0], [1], [0, 0, 1, 1], [], []>} : vector<8x16xf32>, vector<16x32xf32>, vector<8x32xf32> -> vector<8x32xf32>
    %647 = vector.extract_strided_slice %623 {offsets = [0, 16], sizes = [8, 16], strides = [1, 1]} : vector<8x32xf32> to vector<8x16xf32>
    %648 = vector.extract_strided_slice %624 {offsets = [0, 16], sizes = [8, 16], strides = [1, 1]} : vector<8x32xf32> to vector<8x16xf32>
    %cst_189 = arith.constant dense<0.000000e+00> : vector<8x8xf32>
    %649 = tpu.matmul %647, %648, %cst_189 {dimension_numbers = #tpu.dot_dimension_numbers<[1], [1], [0], [0], [0, 0, 1, 0], [], []>} : vector<8x16xf32>, vector<8x16xf32>, vector<8x8xf32> -> vector<8x8xf32>
    %cst_190 = arith.constant 2.500000e-01 : f32
    %650 = vector.broadcast %cst_190 : f32 to vector<8x8xf32>
    %651 = arith.mulf %649, %650 : vector<8x8xf32>
    %652 = arith.addf %651, %627 : vector<8x8xf32>
    %cst_191 = arith.constant dense<0xFF800000> : vector<8xf32>
    %653 = vector.multi_reduction <maximumf>, %652, %cst_191 [1] : vector<8x8xf32> to vector<8xf32>
    %654 = vector.shape_cast %653 : vector<8xf32> to vector<8x1xf32>
    %655 = vector.broadcast %654 : vector<8x1xf32> to vector<8x8xf32>
    %656 = arith.subf %652, %655 : vector<8x8xf32>
    %657 = math.exp %656 : vector<8x8xf32>
    %cst_192 = arith.constant dense<0.000000e+00> : vector<8xf32>
    %658 = vector.multi_reduction <add>, %657, %cst_192 [1] : vector<8x8xf32> to vector<8xf32>
    %659 = vector.shape_cast %658 : vector<8xf32> to vector<8x1xf32>
    %660 = vector.broadcast %659 : vector<8x1xf32> to vector<8x8xf32>
    %661 = arith.divf %657, %660 : vector<8x8xf32>
    %662 = vector.extract_strided_slice %625 {offsets = [0, 16], sizes = [8, 16], strides = [1, 1]} : vector<8x32xf32> to vector<8x16xf32>
    %cst_193 = arith.constant dense<0.000000e+00> : vector<8x16xf32>
    %663 = tpu.matmul %661, %662, %cst_193 {dimension_numbers = #tpu.dot_dimension_numbers<[1], [0], [0], [1], [0, 0, 1, 1], [], []>} : vector<8x8xf32>, vector<8x16xf32>, vector<8x16xf32> -> vector<8x16xf32>
    %664 = vector.extract_strided_slice %223 {offsets = [16, 0], sizes = [16, 32], strides = [1, 1]} : vector<32x32xf32> to vector<16x32xf32>
    %cst_194 = arith.constant dense<0.000000e+00> : vector<8x32xf32>
    %665 = tpu.matmul %663, %664, %cst_194 {dimension_numbers = #tpu.dot_dimension_numbers<[1], [0], [0], [1], [0, 0, 1, 1], [], []>} : vector<8x16xf32>, vector<16x32xf32>, vector<8x32xf32> -> vector<8x32xf32>
    %666 = arith.addf %646, %665 : vector<8x32xf32>
    %667 = vector.broadcast %263 : vector<1x32xf32> to vector<8x32xf32>
    %668 = arith.addf %666, %667 : vector<8x32xf32>
    %669 = arith.addf %668, %619 : vector<8x32xf32>
    %cst_195 = arith.constant dense<0.000000e+00> : vector<8xf32>
    %670 = vector.multi_reduction <add>, %669, %cst_195 [1] : vector<8x32xf32> to vector<8xf32>
    %671 = vector.shape_cast %670 : vector<8xf32> to vector<8x1xf32>
    %cst_196 = arith.constant 3.200000e+01 : f32
    %672 = vector.broadcast %cst_196 : f32 to vector<8x1xf32>
    %673 = arith.divf %671, %672 : vector<8x1xf32>
    %674 = vector.broadcast %673 : vector<8x1xf32> to vector<8x32xf32>
    %675 = arith.subf %669, %674 : vector<8x32xf32>
    %676 = arith.mulf %675, %675 : vector<8x32xf32>
    %cst_197 = arith.constant dense<0.000000e+00> : vector<8xf32>
    %677 = vector.multi_reduction <add>, %676, %cst_197 [1] : vector<8x32xf32> to vector<8xf32>
    %678 = vector.shape_cast %677 : vector<8xf32> to vector<8x1xf32>
    %cst_198 = arith.constant 3.200000e+01 : f32
    %679 = vector.broadcast %cst_198 : f32 to vector<8x1xf32>
    %680 = arith.divf %678, %679 : vector<8x1xf32>
    %681 = vector.broadcast %673 : vector<8x1xf32> to vector<8x32xf32>
    %682 = arith.subf %669, %681 : vector<8x32xf32>
    %cst_199 = arith.constant 9.99999996E-13 : f32
    %683 = vector.broadcast %cst_199 : f32 to vector<8x1xf32>
    %684 = arith.addf %680, %683 : vector<8x1xf32>
    %685 = math.rsqrt %684 : vector<8x1xf32>
    %686 = vector.broadcast %685 : vector<8x1xf32> to vector<8x32xf32>
    %687 = arith.mulf %682, %686 : vector<8x32xf32>
    %688 = vector.extract_strided_slice %267 {offsets = [0, 0], sizes = [1, 32], strides = [1, 1]} : vector<2x32xf32> to vector<1x32xf32>
    %689 = vector.broadcast %688 : vector<1x32xf32> to vector<8x32xf32>
    %690 = arith.mulf %687, %689 : vector<8x32xf32>
    %691 = vector.extract_strided_slice %267 {offsets = [1, 0], sizes = [1, 32], strides = [1, 1]} : vector<2x32xf32> to vector<1x32xf32>
    %692 = vector.broadcast %691 : vector<1x32xf32> to vector<8x32xf32>
    %693 = arith.addf %690, %692 : vector<8x32xf32>
    %cst_200 = arith.constant dense<0.000000e+00> : vector<8x32xf32>
    %694 = tpu.matmul %693, %292, %cst_200 {dimension_numbers = #tpu.dot_dimension_numbers<[1], [0], [0], [1], [0, 0, 1, 1], [], []>} : vector<8x32xf32>, vector<32x32xf32>, vector<8x32xf32> -> vector<8x32xf32>
    %695 = vector.broadcast %294 : vector<1x32xf32> to vector<8x32xf32>
    %696 = arith.addf %694, %695 : vector<8x32xf32>
    %cst_201 = arith.constant dense<0.000000e+00> : vector<16x64xf32>
    %697 = tpu.matmul %587, %297, %cst_201 {dimension_numbers = #tpu.dot_dimension_numbers<[1], [0], [0], [1], [0, 0, 1, 1], [], []>} : vector<16x32xf32>, vector<32x64xf32>, vector<16x64xf32> -> vector<16x64xf32>
    %698 = vector.broadcast %299 : vector<1x64xf32> to vector<16x64xf32>
    %699 = arith.addf %697, %698 : vector<16x64xf32>
    %700 = vector.extract_strided_slice %699 {offsets = [0, 0], sizes = [16, 32], strides = [1, 1]} : vector<16x64xf32> to vector<16x32xf32>
    %701 = vector.extract_strided_slice %699 {offsets = [0, 32], sizes = [16, 32], strides = [1, 1]} : vector<16x64xf32> to vector<16x32xf32>
    %702 = vector.shape_cast %431 : vector<1x16xf32> to vector<1x16xf32>
    %703 = vector.broadcast %702 : vector<1x16xf32> to vector<8x16xf32>
    %704 = vector.extract_strided_slice %696 {offsets = [0, 0], sizes = [8, 16], strides = [1, 1]} : vector<8x32xf32> to vector<8x16xf32>
    %705 = vector.extract_strided_slice %700 {offsets = [0, 0], sizes = [16, 16], strides = [1, 1]} : vector<16x32xf32> to vector<16x16xf32>
    %cst_202 = arith.constant dense<0.000000e+00> : vector<8x16xf32>
    %706 = tpu.matmul %704, %705, %cst_202 {dimension_numbers = #tpu.dot_dimension_numbers<[1], [1], [0], [0], [0, 0, 1, 0], [], []>} : vector<8x16xf32>, vector<16x16xf32>, vector<8x16xf32> -> vector<8x16xf32>
    %cst_203 = arith.constant 2.500000e-01 : f32
    %707 = vector.broadcast %cst_203 : f32 to vector<8x16xf32>
    %708 = arith.mulf %706, %707 : vector<8x16xf32>
    %709 = arith.addf %708, %703 : vector<8x16xf32>
    %cst_204 = arith.constant dense<0xFF800000> : vector<8xf32>
    %710 = vector.multi_reduction <maximumf>, %709, %cst_204 [1] : vector<8x16xf32> to vector<8xf32>
    %711 = vector.shape_cast %710 : vector<8xf32> to vector<8x1xf32>
    %712 = vector.broadcast %711 : vector<8x1xf32> to vector<8x16xf32>
    %713 = arith.subf %709, %712 : vector<8x16xf32>
    %714 = math.exp %713 : vector<8x16xf32>
    %cst_205 = arith.constant dense<0.000000e+00> : vector<8xf32>
    %715 = vector.multi_reduction <add>, %714, %cst_205 [1] : vector<8x16xf32> to vector<8xf32>
    %716 = vector.shape_cast %715 : vector<8xf32> to vector<8x1xf32>
    %717 = vector.broadcast %716 : vector<8x1xf32> to vector<8x16xf32>
    %718 = arith.divf %714, %717 : vector<8x16xf32>
    %719 = vector.extract_strided_slice %701 {offsets = [0, 0], sizes = [16, 16], strides = [1, 1]} : vector<16x32xf32> to vector<16x16xf32>
    %cst_206 = arith.constant dense<0.000000e+00> : vector<8x16xf32>
    %720 = tpu.matmul %718, %719, %cst_206 {dimension_numbers = #tpu.dot_dimension_numbers<[1], [0], [0], [1], [0, 0, 1, 1], [], []>} : vector<8x16xf32>, vector<16x16xf32>, vector<8x16xf32> -> vector<8x16xf32>
    %721 = vector.extract_strided_slice %306 {offsets = [0, 0], sizes = [16, 32], strides = [1, 1]} : vector<32x32xf32> to vector<16x32xf32>
    %cst_207 = arith.constant dense<0.000000e+00> : vector<8x32xf32>
    %722 = tpu.matmul %720, %721, %cst_207 {dimension_numbers = #tpu.dot_dimension_numbers<[1], [0], [0], [1], [0, 0, 1, 1], [], []>} : vector<8x16xf32>, vector<16x32xf32>, vector<8x32xf32> -> vector<8x32xf32>
    %723 = vector.extract_strided_slice %696 {offsets = [0, 16], sizes = [8, 16], strides = [1, 1]} : vector<8x32xf32> to vector<8x16xf32>
    %724 = vector.extract_strided_slice %700 {offsets = [0, 16], sizes = [16, 16], strides = [1, 1]} : vector<16x32xf32> to vector<16x16xf32>
    %cst_208 = arith.constant dense<0.000000e+00> : vector<8x16xf32>
    %725 = tpu.matmul %723, %724, %cst_208 {dimension_numbers = #tpu.dot_dimension_numbers<[1], [1], [0], [0], [0, 0, 1, 0], [], []>} : vector<8x16xf32>, vector<16x16xf32>, vector<8x16xf32> -> vector<8x16xf32>
    %cst_209 = arith.constant 2.500000e-01 : f32
    %726 = vector.broadcast %cst_209 : f32 to vector<8x16xf32>
    %727 = arith.mulf %725, %726 : vector<8x16xf32>
    %728 = arith.addf %727, %703 : vector<8x16xf32>
    %cst_210 = arith.constant dense<0xFF800000> : vector<8xf32>
    %729 = vector.multi_reduction <maximumf>, %728, %cst_210 [1] : vector<8x16xf32> to vector<8xf32>
    %730 = vector.shape_cast %729 : vector<8xf32> to vector<8x1xf32>
    %731 = vector.broadcast %730 : vector<8x1xf32> to vector<8x16xf32>
    %732 = arith.subf %728, %731 : vector<8x16xf32>
    %733 = math.exp %732 : vector<8x16xf32>
    %cst_211 = arith.constant dense<0.000000e+00> : vector<8xf32>
    %734 = vector.multi_reduction <add>, %733, %cst_211 [1] : vector<8x16xf32> to vector<8xf32>
    %735 = vector.shape_cast %734 : vector<8xf32> to vector<8x1xf32>
    %736 = vector.broadcast %735 : vector<8x1xf32> to vector<8x16xf32>
    %737 = arith.divf %733, %736 : vector<8x16xf32>
    %738 = vector.extract_strided_slice %701 {offsets = [0, 16], sizes = [16, 16], strides = [1, 1]} : vector<16x32xf32> to vector<16x16xf32>
    %cst_212 = arith.constant dense<0.000000e+00> : vector<8x16xf32>
    %739 = tpu.matmul %737, %738, %cst_212 {dimension_numbers = #tpu.dot_dimension_numbers<[1], [0], [0], [1], [0, 0, 1, 1], [], []>} : vector<8x16xf32>, vector<16x16xf32>, vector<8x16xf32> -> vector<8x16xf32>
    %740 = vector.extract_strided_slice %306 {offsets = [16, 0], sizes = [16, 32], strides = [1, 1]} : vector<32x32xf32> to vector<16x32xf32>
    %cst_213 = arith.constant dense<0.000000e+00> : vector<8x32xf32>
    %741 = tpu.matmul %739, %740, %cst_213 {dimension_numbers = #tpu.dot_dimension_numbers<[1], [0], [0], [1], [0, 0, 1, 1], [], []>} : vector<8x16xf32>, vector<16x32xf32>, vector<8x32xf32> -> vector<8x32xf32>
    %742 = arith.addf %722, %741 : vector<8x32xf32>
    %743 = vector.broadcast %346 : vector<1x32xf32> to vector<8x32xf32>
    %744 = arith.addf %742, %743 : vector<8x32xf32>
    %745 = arith.addf %744, %693 : vector<8x32xf32>
    %cst_214 = arith.constant dense<0.000000e+00> : vector<8xf32>
    %746 = vector.multi_reduction <add>, %745, %cst_214 [1] : vector<8x32xf32> to vector<8xf32>
    %747 = vector.shape_cast %746 : vector<8xf32> to vector<8x1xf32>
    %cst_215 = arith.constant 3.200000e+01 : f32
    %748 = vector.broadcast %cst_215 : f32 to vector<8x1xf32>
    %749 = arith.divf %747, %748 : vector<8x1xf32>
    %750 = vector.broadcast %749 : vector<8x1xf32> to vector<8x32xf32>
    %751 = arith.subf %745, %750 : vector<8x32xf32>
    %752 = arith.mulf %751, %751 : vector<8x32xf32>
    %cst_216 = arith.constant dense<0.000000e+00> : vector<8xf32>
    %753 = vector.multi_reduction <add>, %752, %cst_216 [1] : vector<8x32xf32> to vector<8xf32>
    %754 = vector.shape_cast %753 : vector<8xf32> to vector<8x1xf32>
    %cst_217 = arith.constant 3.200000e+01 : f32
    %755 = vector.broadcast %cst_217 : f32 to vector<8x1xf32>
    %756 = arith.divf %754, %755 : vector<8x1xf32>
    %757 = vector.broadcast %749 : vector<8x1xf32> to vector<8x32xf32>
    %758 = arith.subf %745, %757 : vector<8x32xf32>
    %cst_218 = arith.constant 9.99999996E-13 : f32
    %759 = vector.broadcast %cst_218 : f32 to vector<8x1xf32>
    %760 = arith.addf %756, %759 : vector<8x1xf32>
    %761 = math.rsqrt %760 : vector<8x1xf32>
    %762 = vector.broadcast %761 : vector<8x1xf32> to vector<8x32xf32>
    %763 = arith.mulf %758, %762 : vector<8x32xf32>
    %764 = vector.extract_strided_slice %350 {offsets = [0, 0], sizes = [1, 32], strides = [1, 1]} : vector<2x32xf32> to vector<1x32xf32>
    %765 = vector.broadcast %764 : vector<1x32xf32> to vector<8x32xf32>
    %766 = arith.mulf %763, %765 : vector<8x32xf32>
    %767 = vector.extract_strided_slice %350 {offsets = [1, 0], sizes = [1, 32], strides = [1, 1]} : vector<2x32xf32> to vector<1x32xf32>
    %768 = vector.broadcast %767 : vector<1x32xf32> to vector<8x32xf32>
    %769 = arith.addf %766, %768 : vector<8x32xf32>
    %cst_219 = arith.constant dense<0.000000e+00> : vector<8x64xf32>
    %770 = tpu.matmul %769, %375, %cst_219 {dimension_numbers = #tpu.dot_dimension_numbers<[1], [0], [0], [1], [0, 0, 1, 1], [], []>} : vector<8x32xf32>, vector<32x64xf32>, vector<8x64xf32> -> vector<8x64xf32>
    %771 = vector.broadcast %377 : vector<1x64xf32> to vector<8x64xf32>
    %772 = arith.addf %770, %771 : vector<8x64xf32>
    %773 = arith.mulf %772, %772 : vector<8x64xf32>
    %774 = arith.mulf %772, %773 : vector<8x64xf32>
    %cst_220 = arith.constant 4.471500e-02 : f32
    %775 = vector.broadcast %cst_220 : f32 to vector<8x64xf32>
    %776 = arith.mulf %775, %774 : vector<8x64xf32>
    %777 = arith.addf %772, %776 : vector<8x64xf32>
    %cst_221 = arith.constant 0.797884583 : f32
    %778 = vector.broadcast %cst_221 : f32 to vector<8x64xf32>
    %779 = arith.mulf %778, %777 : vector<8x64xf32>
    %780 = math.tanh %779 : vector<8x64xf32>
    %cst_222 = arith.constant 1.000000e+00 : f32
    %781 = vector.broadcast %cst_222 : f32 to vector<8x64xf32>
    %782 = arith.addf %781, %780 : vector<8x64xf32>
    %cst_223 = arith.constant 5.000000e-01 : f32
    %783 = vector.broadcast %cst_223 : f32 to vector<8x64xf32>
    %784 = arith.mulf %783, %782 : vector<8x64xf32>
    %785 = arith.mulf %772, %784 : vector<8x64xf32>
    %cst_224 = arith.constant dense<0.000000e+00> : vector<8x32xf32>
    %786 = tpu.matmul %785, %393, %cst_224 {dimension_numbers = #tpu.dot_dimension_numbers<[1], [0], [0], [1], [0, 0, 1, 1], [], []>} : vector<8x64xf32>, vector<64x32xf32>, vector<8x32xf32> -> vector<8x32xf32>
    %787 = vector.broadcast %395 : vector<1x32xf32> to vector<8x32xf32>
    %788 = arith.addf %786, %787 : vector<8x32xf32>
    %789 = arith.addf %788, %769 : vector<8x32xf32>
    %cst_225 = arith.constant dense<0.000000e+00> : vector<8xf32>
    %790 = vector.multi_reduction <add>, %789, %cst_225 [1] : vector<8x32xf32> to vector<8xf32>
    %791 = vector.shape_cast %790 : vector<8xf32> to vector<8x1xf32>
    %cst_226 = arith.constant 3.200000e+01 : f32
    %792 = vector.broadcast %cst_226 : f32 to vector<8x1xf32>
    %793 = arith.divf %791, %792 : vector<8x1xf32>
    %794 = vector.broadcast %793 : vector<8x1xf32> to vector<8x32xf32>
    %795 = arith.subf %789, %794 : vector<8x32xf32>
    %796 = arith.mulf %795, %795 : vector<8x32xf32>
    %cst_227 = arith.constant dense<0.000000e+00> : vector<8xf32>
    %797 = vector.multi_reduction <add>, %796, %cst_227 [1] : vector<8x32xf32> to vector<8xf32>
    %798 = vector.shape_cast %797 : vector<8xf32> to vector<8x1xf32>
    %cst_228 = arith.constant 3.200000e+01 : f32
    %799 = vector.broadcast %cst_228 : f32 to vector<8x1xf32>
    %800 = arith.divf %798, %799 : vector<8x1xf32>
    %801 = vector.broadcast %793 : vector<8x1xf32> to vector<8x32xf32>
    %802 = arith.subf %789, %801 : vector<8x32xf32>
    %cst_229 = arith.constant 9.99999996E-13 : f32
    %803 = vector.broadcast %cst_229 : f32 to vector<8x1xf32>
    %804 = arith.addf %800, %803 : vector<8x1xf32>
    %805 = math.rsqrt %804 : vector<8x1xf32>
    %806 = vector.broadcast %805 : vector<8x1xf32> to vector<8x32xf32>
    %807 = arith.mulf %802, %806 : vector<8x32xf32>
    %808 = vector.extract_strided_slice %399 {offsets = [0, 0], sizes = [1, 32], strides = [1, 1]} : vector<2x32xf32> to vector<1x32xf32>
    %809 = vector.broadcast %808 : vector<1x32xf32> to vector<8x32xf32>
    %810 = arith.mulf %807, %809 : vector<8x32xf32>
    %811 = vector.extract_strided_slice %399 {offsets = [1, 0], sizes = [1, 32], strides = [1, 1]} : vector<2x32xf32> to vector<1x32xf32>
    %812 = vector.broadcast %811 : vector<1x32xf32> to vector<8x32xf32>
    %813 = arith.addf %810, %812 : vector<8x32xf32>
    %814 = tpu.concatenate %813, %718, %2 in 1 : vector<8x32xf32>, vector<8x16xf32>, vector<8x80xf32> -> vector<8x128xf32>
    %c8_230 = arith.constant 8 : index
    %c0_231 = arith.constant 0 : index
    %815 = vector.load %arg6[%c8_230, %c0_231] : memref<16x128xf32, #tpu.memory_space<vmem>>, vector<8x128xf32>
    tpu.vector_store %arg6[%c8_230, %c0_231], %814 {strides = array<i32>} : memref<16x128xf32, #tpu.memory_space<vmem>>, vector<8x128xf32>,
    return
  }
  func.func @transform_0(%arg0: i32) -> (i32, i32) {
    %c0_i32 = arith.constant 0 : i32
    %c0_i32_0 = arith.constant 0 : i32
    %c0_i32_1 = arith.constant 0 : i32
    return %c0_i32, %c0_i32_0 : i32, i32
  }
  func.func @transform_1(%arg0: i32) -> (i32, i32) {
    %c0_i32 = arith.constant 0 : i32
    %c0_i32_0 = arith.constant 0 : i32
    %c0_i32_1 = arith.constant 0 : i32
    return %c0_i32, %c0_i32_0 : i32, i32
  }
  func.func @transform_2(%arg0: i32) -> i32 {
    %c0_i32 = arith.constant 0 : i32
    %c0_i32_0 = arith.constant 0 : i32
    return %c0_i32 : i32
  }
  func.func @transform_3(%arg0: i32) -> i32 {
    %c0_i32 = arith.constant 0 : i32
    %c0_i32_0 = arith.constant 0 : i32
    return %c0_i32 : i32
  }
  func.func @transform_4(%arg0: i32) -> (i32, i32) {
    %c0_i32 = arith.constant 0 : i32
    %c0_i32_0 = arith.constant 0 : i32
    %c0_i32_1 = arith.constant 0 : i32
    return %c0_i32, %c0_i32_0 : i32, i32
  }
  func.func @transform_5(%arg0: i32) -> (i32, i32) {
    %c0_i32 = arith.constant 0 : i32
    %c0_i32_0 = arith.constant 0 : i32
    %c0_i32_1 = arith.constant 0 : i32
    return %c0_i32, %c0_i32_0 : i32, i32
  }
}

</mosaic_0001>

<llo_original>
// kernel: nma_forward.1
$region0: #{nma_forward.1}
  #allocation0 [shape = 'u32[]', space=smem, size = 0x4, offset = 0x4, fixed_abs, tag = 'smem constant byte address 0x4 - core index']
  #allocation1 [shape = 'u32[144,128]{1,0:T(1,128)}', space=vmem, size = 0x12000, scoped, tag = 'internal scratch']
  %s0 = inlined_call_operand.vmem [shape: s32[32,1], index: 0, kind: input, shape index: {}]
  %s1 = inlined_call_operand.vmem [shape: s32[16,1], index: 1, kind: input, shape index: {}]
  %s2 = inlined_call_operand.vmem [shape: s32[2], index: 2, kind: input, shape index: {}]
  %s3 = inlined_call_operand.vmem [shape: s32[2], index: 3, kind: input, shape index: {}]
  %s4 = inlined_call_operand.hbm [shape: f32[752,128], index: 4, kind: input, shape index: {}]
  %s5 = inlined_call_operand.vmem [shape: f32[16,128], index: 5, kind: output, shape index: {}]
  %s6 = sld [smem:[#allocation0]]
  $region42: #{nma_forward.1} parent=0
    _
  %s8 = ssub.s32 1, %s6
  %s9 = scalar_select 0, %s8, %s6
  $region1: #{nma_forward.1} parent=0
    #allocation2 [shape = 'u8[512]{0}', space=smem, size = 0x200, scoped, tag = 'input window, operand 2, single buffered']
    #allocation3 [shape = 's32[1]{0}', space=sflag, size = 0x4, scoped, tag = 'scoped memory for nma_forward.1']
    #allocation4 [shape = 's32[1]{0}', space=sflag, size = 0x4, scoped, tag = 'scoped memory for nma_forward.1']
    #allocation5 [shape = 'u8[512]{0}', space=smem, size = 0x200, scoped, tag = 'input window, operand 3, single buffered']
    #allocation6 [shape = 's32[1]{0}', space=sflag, size = 0x4, scoped, tag = 'scoped memory for nma_forward.1']
    #allocation7 [shape = 'u8[385024]{0}', space=vmem, size = 0x5e000, scoped, tag = 'input window, operand 4, single buffered']
    %10 = vsyncpa [#allocation4], 0
    %11 = vsyncpa [#allocation6], 0
    %12 = vsyncpa [#allocation3], 0
    // Predicated region
    $region2: #{nma_forward.1} parent=1 // pred_check
      _
    $region3: #{nma_forward.1} parent=1 // pred_check_branch
      %14 = sbr.rel (0) target = $region5
    $region4: #{nma_forward.1} parent=1 // pred_region
      _
    $region5: #{nma_forward.1} parent=1 // pred_fallthru
      _
    // Predicated region
    $region6: #{nma_forward.1} parent=1 // pred_check
      _
    $region7: #{nma_forward.1} parent=1 // pred_check_branch
      %16 = sbr.rel (0) target = $region9
    $region8: #{nma_forward.1} parent=1 // pred_region
      _
    $region9: #{nma_forward.1} parent=1 // pred_fallthru
      _
    // Predicated region
    $region10: #{nma_forward.1} parent=1 // pred_check
      _
    $region11: #{nma_forward.1} parent=1 // pred_check_branch
      %18 = sbr.rel (0) target = $region13
    $region12: #{nma_forward.1} parent=1 // pred_region
      %s20 = ssub.s32 16, 16
      %21 = vsyncadd [#allocation4], %s20
      %s23 = sshll.u32 %s2, 4
      %s24 = int_to_ptr.vmem [resolvable:$true] %s23
      %26 = dma.vmem_to_smem %s24, 16, [#allocation2], [#allocation4]
    $region13: #{nma_forward.1} parent=1 // pred_fallthru
      _
    // Predicated region
    $region14: #{nma_forward.1} parent=1 // pred_check
      _
    $region15: #{nma_forward.1} parent=1 // pred_check_branch
      %28 = sbr.rel (0) target = $region17
    $region16: #{nma_forward.1} parent=1 // pred_region
      %s30 = ssub.s32 16, 16
      %31 = vsyncadd [#allocation6], %s30
      %s33 = sshll.u32 %s3, 4
      %s34 = int_to_ptr.vmem [resolvable:$true] %s33
      %36 = dma.vmem_to_smem %s34, 16, [#allocation5], [#allocation6]
    $region17: #{nma_forward.1} parent=1 // pred_fallthru
      _
    // Predicated region
    $region18: #{nma_forward.1} parent=1 // pred_check
      _
    $region19: #{nma_forward.1} parent=1 // pred_check_branch
      %38 = sbr.rel (0) target = $region21
    $region20: #{nma_forward.1} parent=1 // pred_region
      %s40 = ssub.s32 12032, 12032
      %41 = vsyncadd [#allocation3], %s40
      %s42 = sshll.u32 [#allocation7], 4
      %s43 = int_to_ptr.vmem [resolvable:$true] %s42
      %48 = dma.hbm_to_vmem [thread:$0]  %s4, 12032, %s43, [#allocation3], 128, 128, 8
    $region21: #{nma_forward.1} parent=1 // pred_fallthru
      _
    // Predicated region
    $region22: #{nma_forward.1} parent=1 // pred_check
      _
    $region23: #{nma_forward.1} parent=1 // pred_check_branch
      %50 = sbr.rel (0) target = $region25
    $region24: #{nma_forward.1} parent=1 // pred_region
      %51 = dma.done [#allocation4], 16
    $region25: #{nma_forward.1} parent=1 // pred_fallthru
      _
    // Predicated region
    $region26: #{nma_forward.1} parent=1 // pred_check
      _
    $region27: #{nma_forward.1} parent=1 // pred_check_branch
      %53 = sbr.rel (0) target = $region29
    $region28: #{nma_forward.1} parent=1 // pred_region
      %54 = dma.done [#allocation6], 16
    $region29: #{nma_forward.1} parent=1 // pred_fallthru
      _
    // Predicated region
    $region30: #{nma_forward.1} parent=1 // pred_check
      _
    $region31: #{nma_forward.1} parent=1 // pred_check_branch
      %56 = sbr.rel (0) target = $region33
    $region32: #{nma_forward.1} parent=1 // pred_region
      %57 = dma.done [#allocation3], 12032
    $region33: #{nma_forward.1} parent=1 // pred_fallthru
      _
    %58 = sfence
    %v59 = vlaneseq
    %v60 = vand.u32 %v59, 127
    %s61 = sld [smem:[#allocation2]]
    %v62 = vstv %s61
    %vm63 = vcmp.lt.s32.totalorder %v60, %v62
    %v64 = vsel %vm63, 0.0, -1e+09
    %s65 = sld [smem:[#allocation5]]
    %v66 = vstv %s65
    %vm67 = vcmp.lt.s32.totalorder %v60, %v66
    %v68 = vsel %vm67, 0.0, -1e+09
    %v69 = vld [vmem:[%s0] sm:$0xff]
    %v70 = vld [vmem:[%s0 + $0x8] sm:$0xff]
    %71 = vset.pattern.permute.xlu0 0
    %72 = vperm.xlu0 %71, %v69
    %v73 = vpop.permute.xlu0 %72
    %74 = vset.pattern.permute.xlu0 0
    %75 = vperm.xlu0 %74, %v70
    %v76 = vpop.permute.xlu0 %75
    %vm77 = vcmp.eq.s32.totalorder %v60, %v73
    %vm78 = vcmp.eq.s32.totalorder %v60, %v76
    %v79 = vsel %vm77, 1, 0
    %v80 = vsel %vm78, 1, 0
    %v81 = vcvt.s32.f32 %v79
    %v82 = vcvt.s32.f32 %v80
    %v83 = vld [vmem:[#allocation7] sm:$0xff]
    %v84 = vld [vmem:[#allocation7 + $0x8] sm:$0xff]
    %v85 = vld [vmem:[#allocation7 + $0x10] sm:$0xff]
    %v86 = vld [vmem:[#allocation7 + $0x18] sm:$0xff]
    %v87 = vld [vmem:[#allocation7 + $0x20] sm:$0xff]
    %v88 = vld [vmem:[#allocation7 + $0x28] sm:$0xff]
    %v89 = vld [vmem:[#allocation7 + $0x30] sm:$0xff]
    %v90 = vld [vmem:[#allocation7 + $0x38] sm:$0xff]
    %v91 = vld [vmem:[#allocation7 + $0x40] sm:$0xff]
    %v92 = vld [vmem:[#allocation7 + $0x48] sm:$0xff]
    %vm93 = vcmask 523264
    %v95 = vsel %vm93, %v81, 0
    %v98 = vsel %vm93, %v82, 0
    %100 = vmatprep.subr.mxu0 0.0
    %101 = vmatpush1.msra.mxu0 %v83
    %102 = vmatprep.subr.mxu0 0.0
    %103 = vmatpush1.msra.mxu0 %v84
    %104 = vmatprep.subr.mxu0 0.0
    %105 = vmatpush1.msra.mxu0 %v85
    %106 = vmatprep.subr.mxu0 0.0
    %107 = vmatpush1.msra.mxu0 %v86
    %108 = vmatprep.subr.mxu0 0.0
    %109 = vmatpush1.msra.mxu0 %v87
    %110 = vmatprep.subr.mxu0 0.0
    %111 = vmatpush1.msra.mxu0 %v88
    %112 = vmatprep.subr.mxu0 0.0
    %113 = vmatpush1.msra.mxu0 %v89
    %114 = vmatprep.subr.mxu0 0.0
    %115 = vmatpush1.msra.mxu0 %v90
    %116 = vmatprep.subr.mxu0 0.0
    %117 = vmatpush1.msra.mxu0 0.0
    %118 = vmatprep.subr.mxu0 0.0
    %119 = vmatpush1.msra.mxu0 0.0
    %120 = vmatprep.subr.mxu0 0.0
    %121 = vmatpush1.msra.mxu0 0.0
    %122 = vmatprep.subr.mxu0 0.0
    %123 = vmatpush1.msra.mxu0 0.0
    %124 = vmatprep.subr.mxu0 0.0
    %125 = vmatpush1.msra.mxu0 0.0
    %126 = vmatprep.subr.mxu0 0.0
    %127 = vmatpush1.msra.mxu0 0.0
    %128 = vmatprep.subr.mxu0 0.0
    %129 = vmatpush1.msra.mxu0 0.0
    %130 = vmatprep.subr.mxu0 0.0
    %131 = vmatpush1.msra.mxu0 0.0
    %132 = vmatprep.subr.mxu0 0.0
    %133 = vmatpush1.msra.mxu0 0.0
    %134 = vmatprep.subr.mxu0 0.0
    %135 = vmatpush1.msra.mxu0 0.0
    %136 = vmatprep.subr.mxu0 0.0
    %137 = vmatpush1.msra.mxu0 0.0
    %138 = vmatprep.subr.mxu0 0.0
    %139 = vmatpush1.msra.mxu0 0.0
    %140 = vmatprep.subr.mxu0 0.0
    %141 = vmatpush1.msra.mxu0 0.0
    %142 = vmatprep.subr.mxu0 0.0
    %143 = vmatpush1.msra.mxu0 0.0
    %144 = vmatprep.subr.mxu0 0.0
    %145 = vmatpush1.msra.mxu0 0.0
    %146 = vmatprep.subr.mxu0 0.0
    %147 = vmatpush1.msra.mxu0 0.0
    %148 = vmatprep.subr.mxu0 0.0
    %149 = vmatpush1.msra.mxu0 0.0
    %150 = vmatprep.subr.mxu0 0.0
    %151 = vmatpush1.msra.mxu0 0.0
    %152 = vmatprep.subr.mxu0 0.0
    %153 = vmatpush1.msra.mxu0 0.0
    %154 = vmatprep.subr.mxu0 0.0
    %155 = vmatpush1.msra.mxu0 0.0
    %156 = vmatprep.subr.mxu0 0.0
    %157 = vmatpush1.msra.mxu0 0.0
    %158 = vmatprep.subr.mxu0 0.0
    %159 = vmatpush1.msra.mxu0 0.0
    %160 = vmatprep.subr.mxu0 0.0
    %161 = vmatpush1.msra.mxu0 0.0
    %162 = vmatprep.subr.mxu0 0.0
    %163 = vmatpush1.msra.mxu0 0.0
    %164 = vmatprep.mubr.f32.mxu0 0.0
    %165 = vmatmul.mubr.f32.gmra.mrb[0].mxu0 %v95
    %v166 = vpop.f32.mrb[0].mxu0
    %v167 = vadd.f32 %v91, %v166
    %v168 = vpop.f32.mrb[0].mxu0
    %169 = vmatprep.mubr.f32.mxu0 0.0
    %170 = vmatmul.mubr.f32.gmra.mrb[0].mxu0 %v98
    %v171 = vpop.f32.mrb[0].mxu0
    %v172 = vadd.f32 %v92, %v171
    %v173 = vpop.f32.mrb[0].mxu0
    %174 = vdwg.mxu0
    %v175 = vld [vmem:[#allocation7 + $0x60] sm:$0x3]
    %vm176 = vcmask 261120
    %v177 = vsel %vm176, %v167, 0.0
    %178 = vadd.xlane.f32.xlu0 %v177
    %v179 = vpop.xlane.xlu0 %178
    %v180 = vsel %vm176, %v172, 0.0
    %181 = vadd.xlane.f32.xlu0 %v180
    %v182 = vpop.xlane.xlu0 %181
    %v183 = vrcp.pop 32.0
    %v184 = vmul.f32 %v179, %v183
    %v185 = vmul.f32 %v182, %v183
    %v186 = vsub.f32 %v167, %v184
    %v187 = vsub.f32 %v172, %v185
    %v188 = vmul.f32 %v186, %v186
    %v189 = vmul.f32 %v187, %v187
    %v190 = vsel %vm176, %v188, 0.0
    %191 = vadd.xlane.f32.xlu0 %v190
    %v192 = vpop.xlane.xlu0 %191
    %v193 = vsel %vm176, %v189, 0.0
    %194 = vadd.xlane.f32.xlu0 %v193
    %v195 = vpop.xlane.xlu0 %194
    %v196 = vmul.f32 %v192, %v183
    %v197 = vmul.f32 %v195, %v183
    %v198 = vadd.f32 %v196, 1e-12
    %v199 = vadd.f32 %v197, 1e-12
    %v200 = vrsqrt.pop %v198
    %v201 = vrsqrt.pop %v199
    %v202 = vmul.f32 %v186, %v200
    %v203 = vmul.f32 %v187, %v201
    %v204 = vlaneseq
    %v205 = vshrl.u32 %v204, 7
    %v206 = vsub.s32 0, %v205
    %v207 = vrot.slane %v175, %v206
    %v208 = vmul.f32 %v202, %v207
    %v209 = vmul.f32 %v203, %v207
    %v210 = vlaneseq
    %v211 = vshrl.u32 %v210, 7
    %v212 = vsub.s32 1, %v211
    %v213 = vrot.slane %v175, %v212
    %v214 = vadd.f32 %v208, %v213
    %v215 = vadd.f32 %v209, %v213
    %v216 = vld [vmem:[#allocation7 + $0x68] sm:$0xff]
    %v217 = vld [vmem:[#allocation7 + $0x70] sm:$0xff]
    %v218 = vld [vmem:[#allocation7 + $0x78] sm:$0xff]
    %v219 = vld [vmem:[#allocation7 + $0x80] sm:$0xff]
    %v220 = vld [vmem:[#allocation7 + $0x88] sm:$0x1]
    %v221 = vlaneseq
    %v222 = vshrl.u32 %v221, 7
    %v223 = vsub.s32 0, %v222
    %v224 = vrot.slane %v220, %v223
    %v226 = vsel %vm176, %v214, 0
    %v229 = vsel %vm176, %v215, 0
    %231 = vmatprep.subr.mxu0 0.0
    %232 = vmatpush1.msra.mxu0 %v216
    %233 = vmatprep.subr.mxu0 0.0
    %234 = vmatpush1.msra.mxu0 %v217
    %235 = vmatprep.subr.mxu0 0.0
    %236 = vmatpush1.msra.mxu0 %v218
    %237 = vmatprep.subr.mxu0 0.0
    %238 = vmatpush1.msra.mxu0 %v219
    %239 = vmatprep.subr.mxu0 0.0
    %240 = vmatpush1.msra.mxu0 0.0
    %241 = vmatprep.subr.mxu0 0.0
    %242 = vmatpush1.msra.mxu0 0.0
    %243 = vmatprep.subr.mxu0 0.0
    %244 = vmatpush1.msra.mxu0 0.0
    %245 = vmatprep.subr.mxu0 0.0
    %246 = vmatpush1.msra.mxu0 0.0
    %247 = vmatprep.subr.mxu0 0.0
    %248 = vmatpush1.msra.mxu0 0.0
    %249 = vmatprep.subr.mxu0 0.0
    %250 = vmatpush1.msra.mxu0 0.0
    %251 = vmatprep.subr.mxu0 0.0
    %252 = vmatpush1.msra.mxu0 0.0
    %253 = vmatprep.subr.mxu0 0.0
    %254 = vmatpush1.msra.mxu0 0.0
    %255 = vmatprep.subr.mxu0 0.0
    %256 = vmatpush1.msra.mxu0 0.0
    %257 = vmatprep.subr.mxu0 0.0
    %258 = vmatpush1.msra.mxu0 0.0
    %259 = vmatprep.subr.mxu0 0.0
    %260 = vmatpush1.msra.mxu0 0.0
    %261 = vmatprep.subr.mxu0 0.0
    %262 = vmatpush1.msra.mxu0 0.0
    %263 = vmatprep.subr.mxu0 0.0
    %264 = vmatpush1.msra.mxu0 0.0
    %265 = vmatprep.subr.mxu0 0.0
    %266 = vmatpush1.msra.mxu0 0.0
    %267 = vmatprep.subr.mxu0 0.0
    %268 = vmatpush1.msra.mxu0 0.0
    %269 = vmatprep.subr.mxu0 0.0
    %270 = vmatpush1.msra.mxu0 0.0
    %271 = vmatprep.subr.mxu0 0.0
    %272 = vmatpush1.msra.mxu0 0.0
    %273 = vmatprep.subr.mxu0 0.0
    %274 = vmatpush1.msra.mxu0 0.0
    %275 = vmatprep.subr.mxu0 0.0
    %276 = vmatpush1.msra.mxu0 0.0
    %277 = vmatprep.subr.mxu0 0.0
    %278 = vmatpush1.msra.mxu0 0.0
    %279 = vmatprep.subr.mxu0 0.0
    %280 = vmatpush1.msra.mxu0 0.0
    %281 = vmatprep.subr.mxu0 0.0
    %282 = vmatpush1.msra.mxu0 0.0
    %283 = vmatprep.subr.mxu0 0.0
    %284 = vmatpush1.msra.mxu0 0.0
    %285 = vmatprep.subr.mxu0 0.0
    %286 = vmatpush1.msra.mxu0 0.0
    %287 = vmatprep.subr.mxu0 0.0
    %288 = vmatpush1.msra.mxu0 0.0
    %289 = vmatprep.subr.mxu0 0.0
    %290 = vmatpush1.msra.mxu0 0.0
    %291 = vmatprep.subr.mxu0 0.0
    %292 = vmatpush1.msra.mxu0 0.0
    %293 = vmatprep.subr.mxu0 0.0
    %294 = vmatpush1.msra.mxu0 0.0
    %295 = vmatprep.mubr.f32.mxu0 0.0
    %296 = vmatmul.mubr.f32.gmra.mrb[0].mxu0 %v226
    %v297 = vpop.f32.mrb[0].mxu0
    %v298 = vadd.f32 %v224, %v297
    %v299 = vpop.f32.mrb[0].mxu0
    %300 = vmatprep.mubr.f32.mxu0 0.0
    %301 = vmatmul.mubr.f32.gmra.mrb[0].mxu0 %v229
    %v302 = vpop.f32.mrb[0].mxu0
    %v303 = vadd.f32 %v224, %v302
    %v304 = vpop.f32.mrb[0].mxu0
    %305 = vdwg.mxu0
    %v306 = vld [vmem:[#allocation7 + $0x90] sm:$0xff]
    %v307 = vld [vmem:[#allocation7 + $0x98] sm:$0xff]
    %v308 = vld [vmem:[#allocation7 + $0xa0] sm:$0xff]
    %v309 = vld [vmem:[#allocation7 + $0xa8] sm:$0xff]
    %312 = vrot.lane.b32.xlu0 %v298, 96
    %v313 = vpop.permute.xlu0 %312
    %314 = vrot.lane.b32.xlu0 %v303, 96
    %v315 = vpop.permute.xlu0 %314
    %vm316 = vcmask 130048
    %v317 = vsel %vm316, %v298, 0
    %v319 = vsel %vm316, %v303, 0
    %v321 = vsel %vm316, %v313, 0
    %v323 = vsel %vm316, %v315, 0
    %325 = vmatprep.subr.mxu0 0.0
    %326 = vmatpush1.xpose.msra.mxu0 %v321
    %327 = vmatprep.subr.mxu0 0.0
    %328 = vmatpush1.xpose.msra.mxu0 %v323
    %329 = vmatprep.subr.mxu0 0.0
    %330 = vmatpush1.xpose.msra.mxu0 0.0
    %331 = vmatprep.subr.mxu0 0.0
    %332 = vmatpush1.xpose.msra.mxu0 0.0
    %333 = vmatprep.subr.mxu0 0.0
    %334 = vmatpush1.xpose.msra.mxu0 0.0
    %335 = vmatprep.subr.mxu0 0.0
    %336 = vmatpush1.xpose.msra.mxu0 0.0
    %337 = vmatprep.subr.mxu0 0.0
    %338 = vmatpush1.xpose.msra.mxu0 0.0
    %339 = vmatprep.subr.mxu0 0.0
    %340 = vmatpush1.xpose.msra.mxu0 0.0
    %341 = vmatprep.subr.mxu0 0.0
    %342 = vmatpush1.xpose.msra.mxu0 0.0
    %343 = vmatprep.subr.mxu0 0.0
    %344 = vmatpush1.xpose.msra.mxu0 0.0
    %345 = vmatprep.subr.mxu0 0.0
    %346 = vmatpush1.xpose.msra.mxu0 0.0
    %347 = vmatprep.subr.mxu0 0.0
    %348 = vmatpush1.xpose.msra.mxu0 0.0
    %349 = vmatprep.subr.mxu0 0.0
    %350 = vmatpush1.xpose.msra.mxu0 0.0
    %351 = vmatprep.subr.mxu0 0.0
    %352 = vmatpush1.xpose.msra.mxu0 0.0
    %353 = vmatprep.subr.mxu0 0.0
    %354 = vmatpush1.xpose.msra.mxu0 0.0
    %355 = vmatprep.subr.mxu0 0.0
    %356 = vmatpush1.xpose.msra.mxu0 0.0
    %357 = vmatprep.subr.mxu0 0.0
    %358 = vmatpush1.xpose.msra.mxu0 0.0
    %359 = vmatprep.subr.mxu0 0.0
    %360 = vmatpush1.xpose.msra.mxu0 0.0
    %361 = vmatprep.subr.mxu0 0.0
    %362 = vmatpush1.xpose.msra.mxu0 0.0
    %363 = vmatprep.subr.mxu0 0.0
    %364 = vmatpush1.xpose.msra.mxu0 0.0
    %365 = vmatprep.subr.mxu0 0.0
    %366 = vmatpush1.xpose.msra.mxu0 0.0
    %367 = vmatprep.subr.mxu0 0.0
    %368 = vmatpush1.xpose.msra.mxu0 0.0
    %369 = vmatprep.subr.mxu0 0.0
    %370 = vmatpush1.xpose.msra.mxu0 0.0
    %371 = vmatprep.subr.mxu0 0.0
    %372 = vmatpush1.xpose.msra.mxu0 0.0
    %373 = vmatprep.subr.mxu0 0.0
    %374 = vmatpush1.xpose.msra.mxu0 0.0
    %375 = vmatprep.subr.mxu0 0.0
    %376 = vmatpush1.xpose.msra.mxu0 0.0
    %377 = vmatprep.subr.mxu0 0.0
    %378 = vmatpush1.xpose.msra.mxu0 0.0
    %379 = vmatprep.subr.mxu0 0.0
    %380 = vmatpush1.xpose.msra.mxu0 0.0
    %381 = vmatprep.subr.mxu0 0.0
    %382 = vmatpush1.xpose.msra.mxu0 0.0
    %383 = vmatprep.subr.mxu0 0.0
    %384 = vmatpush1.xpose.msra.mxu0 0.0
    %385 = vmatprep.subr.mxu0 0.0
    %386 = vmatpush1.xpose.msra.mxu0 0.0
    %387 = vmatprep.subr.mxu0 0.0
    %388 = vmatpush1.xpose.msra.mxu0 0.0
    %389 = vmatprep.mubr.f32.mxu0 0.0
    %390 = vmatmul.mubr.f32.gmra.mrb[0].mxu0 %v317
    %v391 = vpop.f32.mrb[0].mxu0
    %v392 = vadd.f32 0.0, %v391
    %v393 = vpop.f32.mrb[0].mxu0
    %394 = vmatprep.mubr.f32.mxu0 0.0
    %395 = vmatmul.mubr.f32.gmra.mrb[0].mxu0 %v319
    %v396 = vpop.f32.mrb[0].mxu0
    %v397 = vadd.f32 0.0, %v396
    %v398 = vpop.f32.mrb[0].mxu0
    %399 = vdwg.mxu0
    %v400 = vmul.f32 %v392, 0.25
    %v401 = vmul.f32 %v397, 0.25
    %v402 = vadd.f32 %v400, %v64
    %v403 = vadd.f32 %v401, %v64
    %v404 = vsel %vm316, %v402, -inf
    %405 = vmax.xlane.f32.xlu0 %v404
    %v406 = vpop.xlane.xlu0 %405
    %v407 = vsel %vm316, %v403, -inf
    %408 = vmax.xlane.f32.xlu0 %v407
    %v409 = vpop.xlane.xlu0 %408
    %v410 = vsub.f32 %v402, %v406
    %v411 = vsub.f32 %v403, %v409
    %v412 = vmul.f32 %v410, 1.442695
    %v413 = vpow.pop %v412
    %v414 = vmul.f32 %v411, 1.442695
    %v415 = vpow.pop %v414
    %v416 = vsel %vm316, %v413, 0.0
    %417 = vadd.xlane.f32.xlu0 %v416
    %v418 = vpop.xlane.xlu0 %417
    %v419 = vsel %vm316, %v415, 0.0
    %420 = vadd.xlane.f32.xlu0 %v419
    %v421 = vpop.xlane.xlu0 %420
    %v422 = vrcp.pop %v418
    %v423 = vmul.f32 %v413, %v422
    %v424 = vrcp.pop %v421
    %v425 = vmul.f32 %v415, %v424
    %426 = vrot.lane.b32.xlu0 %v298, 64
    %v427 = vpop.permute.xlu0 %426
    %428 = vrot.lane.b32.xlu0 %v303, 64
    %v429 = vpop.permute.xlu0 %428
    %v433 = vsel %vm316, %v423, 0
    %v436 = vsel %vm316, %v425, 0
    %438 = vmatprep.subr.mxu0 0.0
    %439 = vmatpush1.msra.mxu0 %v427
    %440 = vmatprep.subr.mxu0 0.0
    %441 = vmatpush1.msra.mxu0 %v429
    %442 = vmatprep.subr.mxu0 0.0
    %443 = vmatpush1.msra.mxu0 0.0
    %444 = vmatprep.subr.mxu0 0.0
    %445 = vmatpush1.msra.mxu0 0.0
    %446 = vmatprep.subr.mxu0 0.0
    %447 = vmatpush1.msra.mxu0 0.0
    %448 = vmatprep.subr.mxu0 0.0
    %449 = vmatpush1.msra.mxu0 0.0
    %450 = vmatprep.subr.mxu0 0.0
    %451 = vmatpush1.msra.mxu0 0.0
    %452 = vmatprep.subr.mxu0 0.0
    %453 = vmatpush1.msra.mxu0 0.0
    %454 = vmatprep.subr.mxu0 0.0
    %455 = vmatpush1.msra.mxu0 0.0
    %456 = vmatprep.subr.mxu0 0.0
    %457 = vmatpush1.msra.mxu0 0.0
    %458 = vmatprep.subr.mxu0 0.0
    %459 = vmatpush1.msra.mxu0 0.0
    %460 = vmatprep.subr.mxu0 0.0
    %461 = vmatpush1.msra.mxu0 0.0
    %462 = vmatprep.subr.mxu0 0.0
    %463 = vmatpush1.msra.mxu0 0.0
    %464 = vmatprep.subr.mxu0 0.0
    %465 = vmatpush1.msra.mxu0 0.0
    %466 = vmatprep.subr.mxu0 0.0
    %467 = vmatpush1.msra.mxu0 0.0
    %468 = vmatprep.subr.mxu0 0.0
    %469 = vmatpush1.msra.mxu0 0.0
    %470 = vmatprep.subr.mxu0 0.0
    %471 = vmatpush1.msra.mxu0 0.0
    %472 = vmatprep.subr.mxu0 0.0
    %473 = vmatpush1.msra.mxu0 0.0
    %474 = vmatprep.subr.mxu0 0.0
    %475 = vmatpush1.msra.mxu0 0.0
    %476 = vmatprep.subr.mxu0 0.0
    %477 = vmatpush1.msra.mxu0 0.0
    %478 = vmatprep.subr.mxu0 0.0
    %479 = vmatpush1.msra.mxu0 0.0
    %480 = vmatprep.subr.mxu0 0.0
    %481 = vmatpush1.msra.mxu0 0.0
    %482 = vmatprep.subr.mxu0 0.0
    %483 = vmatpush1.msra.mxu0 0.0
    %484 = vmatprep.subr.mxu0 0.0
    %485 = vmatpush1.msra.mxu0 0.0
    %486 = vmatprep.subr.mxu0 0.0
    %487 = vmatpush1.msra.mxu0 0.0
    %488 = vmatprep.subr.mxu0 0.0
    %489 = vmatpush1.msra.mxu0 0.0
    %490 = vmatprep.subr.mxu0 0.0
    %491 = vmatpush1.msra.mxu0 0.0
    %492 = vmatprep.subr.mxu0 0.0
    %493 = vmatpush1.msra.mxu0 0.0
    %494 = vmatprep.subr.mxu0 0.0
    %495 = vmatpush1.msra.mxu0 0.0
    %496 = vmatprep.subr.mxu0 0.0
    %497 = vmatpush1.msra.mxu0 0.0
    %498 = vmatprep.subr.mxu0 0.0
    %499 = vmatpush1.msra.mxu0 0.0
    %500 = vmatprep.subr.mxu0 0.0
    %501 = vmatpush1.msra.mxu0 0.0
    %502 = vmatprep.mubr.f32.mxu0 0.0
    %503 = vmatmul.mubr.f32.gmra.mrb[0].mxu0 %v433
    %v504 = vpop.f32.mrb[0].mxu0
    %v505 = vadd.f32 0.0, %v504
    %v506 = vpop.f32.mrb[0].mxu0
    %507 = vmatprep.mubr.f32.mxu0 0.0
    %508 = vmatmul.mubr.f32.gmra.mrb[0].mxu0 %v436
    %v509 = vpop.f32.mrb[0].mxu0
    %v510 = vadd.f32 0.0, %v509
    %v511 = vpop.f32.mrb[0].mxu0
    %512 = vdwg.mxu0
    %513 = vrot.lane.b32.xlu0 %v298, 112
    %v514 = vpop.permute.xlu0 %513
    %515 = vrot.lane.b32.xlu0 %v303, 112
    %v516 = vpop.permute.xlu0 %515
    %517 = vrot.lane.b32.xlu0 %v298, 80
    %v518 = vpop.permute.xlu0 %517
    %519 = vrot.lane.b32.xlu0 %v303, 80
    %v520 = vpop.permute.xlu0 %519
    %v521 = vsel %vm316, %v514, 0
    %v523 = vsel %vm316, %v516, 0
    %v525 = vsel %vm316, %v518, 0
    %v527 = vsel %vm316, %v520, 0
    %529 = vmatprep.subr.mxu0 0.0
    %530 = vmatpush1.xpose.msra.mxu0 %v525
    %531 = vmatprep.subr.mxu0 0.0
    %532 = vmatpush1.xpose.msra.mxu0 %v527
    %533 = vmatprep.subr.mxu0 0.0
    %534 = vmatpush1.xpose.msra.mxu0 0.0
    %535 = vmatprep.subr.mxu0 0.0
    %536 = vmatpush1.xpose.msra.mxu0 0.0
    %537 = vmatprep.subr.mxu0 0.0
    %538 = vmatpush1.xpose.msra.mxu0 0.0
    %539 = vmatprep.subr.mxu0 0.0
    %540 = vmatpush1.xpose.msra.mxu0 0.0
    %541 = vmatprep.subr.mxu0 0.0
    %542 = vmatpush1.xpose.msra.mxu0 0.0
    %543 = vmatprep.subr.mxu0 0.0
    %544 = vmatpush1.xpose.msra.mxu0 0.0
    %545 = vmatprep.subr.mxu0 0.0
    %546 = vmatpush1.xpose.msra.mxu0 0.0
    %547 = vmatprep.subr.mxu0 0.0
    %548 = vmatpush1.xpose.msra.mxu0 0.0
    %549 = vmatprep.subr.mxu0 0.0
    %550 = vmatpush1.xpose.msra.mxu0 0.0
    %551 = vmatprep.subr.mxu0 0.0
    %552 = vmatpush1.xpose.msra.mxu0 0.0
    %553 = vmatprep.subr.mxu0 0.0
    %554 = vmatpush1.xpose.msra.mxu0 0.0
    %555 = vmatprep.subr.mxu0 0.0
    %556 = vmatpush1.xpose.msra.mxu0 0.0
    %557 = vmatprep.subr.mxu0 0.0
    %558 = vmatpush1.xpose.msra.mxu0 0.0
    %559 = vmatprep.subr.mxu0 0.0
    %560 = vmatpush1.xpose.msra.mxu0 0.0
    %561 = vmatprep.subr.mxu0 0.0
    %562 = vmatpush1.xpose.msra.mxu0 0.0
    %563 = vmatprep.subr.mxu0 0.0
    %564 = vmatpush1.xpose.msra.mxu0 0.0
    %565 = vmatprep.subr.mxu0 0.0
    %566 = vmatpush1.xpose.msra.mxu0 0.0
    %567 = vmatprep.subr.mxu0 0.0
    %568 = vmatpush1.xpose.msra.mxu0 0.0
    %569 = vmatprep.subr.mxu0 0.0
    %570 = vmatpush1.xpose.msra.mxu0 0.0
    %571 = vmatprep.subr.mxu0 0.0
    %572 = vmatpush1.xpose.msra.mxu0 0.0
    %573 = vmatprep.subr.mxu0 0.0
    %574 = vmatpush1.xpose.msra.mxu0 0.0
    %575 = vmatprep.subr.mxu0 0.0
    %576 = vmatpush1.xpose.msra.mxu0 0.0
    %577 = vmatprep.subr.mxu0 0.0
    %578 = vmatpush1.xpose.msra.mxu0 0.0
    %579 = vmatprep.subr.mxu0 0.0
    %580 = vmatpush1.xpose.msra.mxu0 0.0
    %581 = vmatprep.subr.mxu0 0.0
    %582 = vmatpush1.xpose.msra.mxu0 0.0
    %583 = vmatprep.subr.mxu0 0.0
    %584 = vmatpush1.xpose.msra.mxu0 0.0
    %585 = vmatprep.subr.mxu0 0.0
    %586 = vmatpush1.xpose.msra.mxu0 0.0
    %587 = vmatprep.subr.mxu0 0.0
    %588 = vmatpush1.xpose.msra.mxu0 0.0
    %589 = vmatprep.subr.mxu0 0.0
    %590 = vmatpush1.xpose.msra.mxu0 0.0
    %591 = vmatprep.subr.mxu0 0.0
    %592 = vmatpush1.xpose.msra.mxu0 0.0
    %593 = vmatprep.mubr.f32.mxu0 0.0
    %594 = vmatmul.mubr.f32.gmra.mrb[0].mxu0 %v521
    %v595 = vpop.f32.mrb[0].mxu0
    %v596 = vadd.f32 0.0, %v595
    %v597 = vpop.f32.mrb[0].mxu0
    %598 = vmatprep.mubr.f32.mxu0 0.0
    %599 = vmatmul.mubr.f32.gmra.mrb[0].mxu0 %v523
    %v600 = vpop.f32.mrb[0].mxu0
    %v601 = vadd.f32 0.0, %v600
    %v602 = vpop.f32.mrb[0].mxu0
    %603 = vdwg.mxu0
    %v604 = vmul.f32 %v596, 0.25
    %v605 = vmul.f32 %v601, 0.25
    %v606 = vadd.f32 %v604, %v64
    %v607 = vadd.f32 %v605, %v64
    %v608 = vsel %vm316, %v606, -inf
    %609 = vmax.xlane.f32.xlu0 %v608
    %v610 = vpop.xlane.xlu0 %609
    %v611 = vsel %vm316, %v607, -inf
    %612 = vmax.xlane.f32.xlu0 %v611
    %v613 = vpop.xlane.xlu0 %612
    %v614 = vsub.f32 %v606, %v610
    %v615 = vsub.f32 %v607, %v613
    %v616 = vmul.f32 %v614, 1.442695
    %v617 = vpow.pop %v616
    %v618 = vmul.f32 %v615, 1.442695
    %v619 = vpow.pop %v618
    %v620 = vsel %vm316, %v617, 0.0
    %621 = vadd.xlane.f32.xlu0 %v620
    %v622 = vpop.xlane.xlu0 %621
    %v623 = vsel %vm316, %v619, 0.0
    %624 = vadd.xlane.f32.xlu0 %v623
    %v625 = vpop.xlane.xlu0 %624
    %v626 = vrcp.pop %v622
    %v627 = vmul.f32 %v617, %v626
    %v628 = vrcp.pop %v625
    %v629 = vmul.f32 %v619, %v628
    %630 = vrot.lane.b32.xlu0 %v298, 48
    %v631 = vpop.permute.xlu0 %630
    %632 = vrot.lane.b32.xlu0 %v303, 48
    %v633 = vpop.permute.xlu0 %632
    %v637 = vsel %vm316, %v627, 0
    %v640 = vsel %vm316, %v629, 0
    %642 = vmatprep.subr.mxu0 0.0
    %643 = vmatpush1.msra.mxu0 %v631
    %644 = vmatprep.subr.mxu0 0.0
    %645 = vmatpush1.msra.mxu0 %v633
    %646 = vmatprep.subr.mxu0 0.0
    %647 = vmatpush1.msra.mxu0 0.0
    %648 = vmatprep.subr.mxu0 0.0
    %649 = vmatpush1.msra.mxu0 0.0
    %650 = vmatprep.subr.mxu0 0.0
    %651 = vmatpush1.msra.mxu0 0.0
    %652 = vmatprep.subr.mxu0 0.0
    %653 = vmatpush1.msra.mxu0 0.0
    %654 = vmatprep.subr.mxu0 0.0
    %655 = vmatpush1.msra.mxu0 0.0
    %656 = vmatprep.subr.mxu0 0.0
    %657 = vmatpush1.msra.mxu0 0.0
    %658 = vmatprep.subr.mxu0 0.0
    %659 = vmatpush1.msra.mxu0 0.0
    %660 = vmatprep.subr.mxu0 0.0
    %661 = vmatpush1.msra.mxu0 0.0
    %662 = vmatprep.subr.mxu0 0.0
    %663 = vmatpush1.msra.mxu0 0.0
    %664 = vmatprep.subr.mxu0 0.0
    %665 = vmatpush1.msra.mxu0 0.0
    %666 = vmatprep.subr.mxu0 0.0
    %667 = vmatpush1.msra.mxu0 0.0
    %668 = vmatprep.subr.mxu0 0.0
    %669 = vmatpush1.msra.mxu0 0.0
    %670 = vmatprep.subr.mxu0 0.0
    %671 = vmatpush1.msra.mxu0 0.0
    %672 = vmatprep.subr.mxu0 0.0
    %673 = vmatpush1.msra.mxu0 0.0
    %674 = vmatprep.subr.mxu0 0.0
    %675 = vmatpush1.msra.mxu0 0.0
    %676 = vmatprep.subr.mxu0 0.0
    %677 = vmatpush1.msra.mxu0 0.0
    %678 = vmatprep.subr.mxu0 0.0
    %679 = vmatpush1.msra.mxu0 0.0
    %680 = vmatprep.subr.mxu0 0.0
    %681 = vmatpush1.msra.mxu0 0.0
    %682 = vmatprep.subr.mxu0 0.0
    %683 = vmatpush1.msra.mxu0 0.0
    %684 = vmatprep.subr.mxu0 0.0
    %685 = vmatpush1.msra.mxu0 0.0
    %686 = vmatprep.subr.mxu0 0.0
    %687 = vmatpush1.msra.mxu0 0.0
    %688 = vmatprep.subr.mxu0 0.0
    %689 = vmatpush1.msra.mxu0 0.0
    %690 = vmatprep.subr.mxu0 0.0
    %691 = vmatpush1.msra.mxu0 0.0
    %692 = vmatprep.subr.mxu0 0.0
    %693 = vmatpush1.msra.mxu0 0.0
    %694 = vmatprep.subr.mxu0 0.0
    %695 = vmatpush1.msra.mxu0 0.0
    %696 = vmatprep.subr.mxu0 0.0
    %697 = vmatpush1.msra.mxu0 0.0
    %698 = vmatprep.subr.mxu0 0.0
    %699 = vmatpush1.msra.mxu0 0.0
    %700 = vmatprep.subr.mxu0 0.0
    %701 = vmatpush1.msra.mxu0 0.0
    %702 = vmatprep.subr.mxu0 0.0
    %703 = vmatpush1.msra.mxu0 0.0
    %704 = vmatprep.subr.mxu0 0.0
    %705 = vmatpush1.msra.mxu0 0.0
    %706 = vmatprep.mubr.f32.mxu0 0.0
    %707 = vmatmul.mubr.f32.gmra.mrb[0].mxu0 %v637
    %v708 = vpop.f32.mrb[0].mxu0
    %v709 = vadd.f32 0.0, %v708
    %v710 = vpop.f32.mrb[0].mxu0
    %711 = vmatprep.mubr.f32.mxu0 0.0
    %712 = vmatmul.mubr.f32.gmra.mrb[0].mxu0 %v640
    %v713 = vpop.f32.mrb[0].mxu0
    %v714 = vadd.f32 0.0, %v713
    %v715 = vpop.f32.mrb[0].mxu0
    %716 = vdwg.mxu0
    %v718 = vsel %vm316, %v709, 0
    %v721 = vsel %vm316, %v714, 0
    %723 = vmatprep.subr.mxu0 0.0
    %724 = vmatpush1.msra.mxu0 %v308
    %725 = vmatprep.subr.mxu0 0.0
    %726 = vmatpush1.msra.mxu0 %v309
    %727 = vmatprep.subr.mxu0 0.0
    %728 = vmatpush1.msra.mxu0 0.0
    %729 = vmatprep.subr.mxu0 0.0
    %730 = vmatpush1.msra.mxu0 0.0
    %731 = vmatprep.subr.mxu0 0.0
    %732 = vmatpush1.msra.mxu0 0.0
    %733 = vmatprep.subr.mxu0 0.0
    %734 = vmatpush1.msra.mxu0 0.0
    %735 = vmatprep.subr.mxu0 0.0
    %736 = vmatpush1.msra.mxu0 0.0
    %737 = vmatprep.subr.mxu0 0.0
    %738 = vmatpush1.msra.mxu0 0.0
    %739 = vmatprep.subr.mxu0 0.0
    %740 = vmatpush1.msra.mxu0 0.0
    %741 = vmatprep.subr.mxu0 0.0
    %742 = vmatpush1.msra.mxu0 0.0
    %743 = vmatprep.subr.mxu0 0.0
    %744 = vmatpush1.msra.mxu0 0.0
    %745 = vmatprep.subr.mxu0 0.0
    %746 = vmatpush1.msra.mxu0 0.0
    %747 = vmatprep.subr.mxu0 0.0
    %748 = vmatpush1.msra.mxu0 0.0
    %749 = vmatprep.subr.mxu0 0.0
    %750 = vmatpush1.msra.mxu0 0.0
    %751 = vmatprep.subr.mxu0 0.0
    %752 = vmatpush1.msra.mxu0 0.0
    %753 = vmatprep.subr.mxu0 0.0
    %754 = vmatpush1.msra.mxu0 0.0
    %755 = vmatprep.subr.mxu0 0.0
    %756 = vmatpush1.msra.mxu0 0.0
    %757 = vmatprep.subr.mxu0 0.0
    %758 = vmatpush1.msra.mxu0 0.0
    %759 = vmatprep.subr.mxu0 0.0
    %760 = vmatpush1.msra.mxu0 0.0
    %761 = vmatprep.subr.mxu0 0.0
    %762 = vmatpush1.msra.mxu0 0.0
    %763 = vmatprep.subr.mxu0 0.0
    %764 = vmatpush1.msra.mxu0 0.0
    %765 = vmatprep.subr.mxu0 0.0
    %766 = vmatpush1.msra.mxu0 0.0
    %767 = vmatprep.subr.mxu0 0.0
    %768 = vmatpush1.msra.mxu0 0.0
    %769 = vmatprep.subr.mxu0 0.0
    %770 = vmatpush1.msra.mxu0 0.0
    %771 = vmatprep.subr.mxu0 0.0
    %772 = vmatpush1.msra.mxu0 0.0
    %773 = vmatprep.subr.mxu0 0.0
    %774 = vmatpush1.msra.mxu0 0.0
    %775 = vmatprep.subr.mxu0 0.0
    %776 = vmatpush1.msra.mxu0 0.0
    %777 = vmatprep.subr.mxu0 0.0
    %778 = vmatpush1.msra.mxu0 0.0
    %779 = vmatprep.subr.mxu0 0.0
    %780 = vmatpush1.msra.mxu0 0.0
    %781 = vmatprep.subr.mxu0 0.0
    %782 = vmatpush1.msra.mxu0 0.0
    %783 = vmatprep.subr.mxu0 0.0
    %784 = vmatpush1.msra.mxu0 0.0
    %785 = vmatprep.subr.mxu0 0.0
    %786 = vmatpush1.msra.mxu0 0.0
    %787 = vmatprep.mubr.f32.mxu0 0.0
    %788 = vmatmul.mubr.f32.gmra.mrb[0].mxu0 %v718
    %v789 = vpop.f32.mrb[0].mxu0
    %v790 = vadd.f32 0.0, %v789
    %v791 = vpop.f32.mrb[0].mxu0
    %792 = vmatprep.mubr.f32.mxu0 0.0
    %793 = vmatmul.mubr.f32.gmra.mrb[0].mxu0 %v721
    %v794 = vpop.f32.mrb[0].mxu0
    %v795 = vadd.f32 0.0, %v794
    %v796 = vpop.f32.mrb[0].mxu0
    %797 = vdwg.mxu0
    %v799 = vsel %vm316, %v505, 0
    %v802 = vsel %vm316, %v510, 0
    %804 = vmatprep.subr.mxu0 0.0
    %805 = vmatpush1.msra.mxu0 %v306
    %806 = vmatprep.subr.mxu0 0.0
    %807 = vmatpush1.msra.mxu0 %v307
    %808 = vmatprep.subr.mxu0 0.0
    %809 = vmatpush1.msra.mxu0 0.0
    %810 = vmatprep.subr.mxu0 0.0
    %811 = vmatpush1.msra.mxu0 0.0
    %812 = vmatprep.subr.mxu0 0.0
    %813 = vmatpush1.msra.mxu0 0.0
    %814 = vmatprep.subr.mxu0 0.0
    %815 = vmatpush1.msra.mxu0 0.0
    %816 = vmatprep.subr.mxu0 0.0
    %817 = vmatpush1.msra.mxu0 0.0
    %818 = vmatprep.subr.mxu0 0.0
    %819 = vmatpush1.msra.mxu0 0.0
    %820 = vmatprep.subr.mxu0 0.0
    %821 = vmatpush1.msra.mxu0 0.0
    %822 = vmatprep.subr.mxu0 0.0
    %823 = vmatpush1.msra.mxu0 0.0
    %824 = vmatprep.subr.mxu0 0.0
    %825 = vmatpush1.msra.mxu0 0.0
    %826 = vmatprep.subr.mxu0 0.0
    %827 = vmatpush1.msra.mxu0 0.0
    %828 = vmatprep.subr.mxu0 0.0
    %829 = vmatpush1.msra.mxu0 0.0
    %830 = vmatprep.subr.mxu0 0.0
    %831 = vmatpush1.msra.mxu0 0.0
    %832 = vmatprep.subr.mxu0 0.0
    %833 = vmatpush1.msra.mxu0 0.0
    %834 = vmatprep.subr.mxu0 0.0
    %835 = vmatpush1.msra.mxu0 0.0
    %836 = vmatprep.subr.mxu0 0.0
    %837 = vmatpush1.msra.mxu0 0.0
    %838 = vmatprep.subr.mxu0 0.0
    %839 = vmatpush1.msra.mxu0 0.0
    %840 = vmatprep.subr.mxu0 0.0
    %841 = vmatpush1.msra.mxu0 0.0
    %842 = vmatprep.subr.mxu0 0.0
    %843 = vmatpush1.msra.mxu0 0.0
    %844 = vmatprep.subr.mxu0 0.0
    %845 = vmatpush1.msra.mxu0 0.0
    %846 = vmatprep.subr.mxu0 0.0
    %847 = vmatpush1.msra.mxu0 0.0
    %848 = vmatprep.subr.mxu0 0.0
    %849 = vmatpush1.msra.mxu0 0.0
    %850 = vmatprep.subr.mxu0 0.0
    %851 = vmatpush1.msra.mxu0 0.0
    %852 = vmatprep.subr.mxu0 0.0
    %853 = vmatpush1.msra.mxu0 0.0
    %854 = vmatprep.subr.mxu0 0.0
    %855 = vmatpush1.msra.mxu0 0.0
    %856 = vmatprep.subr.mxu0 0.0
    %857 = vmatpush1.msra.mxu0 0.0
    %858 = vmatprep.subr.mxu0 0.0
    %859 = vmatpush1.msra.mxu0 0.0
    %860 = vmatprep.subr.mxu0 0.0
    %861 = vmatpush1.msra.mxu0 0.0
    %862 = vmatprep.subr.mxu0 0.0
    %863 = vmatpush1.msra.mxu0 0.0
    %864 = vmatprep.subr.mxu0 0.0
    %865 = vmatpush1.msra.mxu0 0.0
    %866 = vmatprep.subr.mxu0 0.0
    %867 = vmatpush1.msra.mxu0 0.0
    %868 = vmatprep.mubr.f32.mxu0 0.0
    %869 = vmatmul.mubr.f32.gmra.mrb[0].mxu0 %v799
    %v870 = vpop.f32.mrb[0].mxu0
    %v871 = vadd.f32 %v790, %v870
    %v872 = vpop.f32.mrb[0].mxu0
    %873 = vmatprep.mubr.f32.mxu0 0.0
    %874 = vmatmul.mubr.f32.gmra.mrb[0].mxu0 %v802
    %v875 = vpop.f32.mrb[0].mxu0
    %v876 = vadd.f32 %v795, %v875
    %v877 = vpop.f32.mrb[0].mxu0
    %878 = vdwg.mxu0
    %v879 = vld [vmem:[#allocation7 + $0xb0] sm:$0x1]
    %v880 = vlaneseq
    %v881 = vshrl.u32 %v880, 7
    %v882 = vsub.s32 0, %v881
    %v883 = vrot.slane %v879, %v882
    %v884 = vadd.f32 %v871, %v883
    %v885 = vadd.f32 %v876, %v883
    %v886 = vadd.f32 %v884, %v214
    %v887 = vadd.f32 %v885, %v215
    %v888 = vld [vmem:[#allocation7 + $0xb8] sm:$0x3]
    %v889 = vsel %vm176, %v886, 0.0
    %890 = vadd.xlane.f32.xlu0 %v889
    %v891 = vpop.xlane.xlu0 %890
    %v892 = vsel %vm176, %v887, 0.0
    %893 = vadd.xlane.f32.xlu0 %v892
    %v894 = vpop.xlane.xlu0 %893
    %v895 = vmul.f32 %v891, %v183
    %v896 = vmul.f32 %v894, %v183
    %v897 = vsub.f32 %v886, %v895
    %v898 = vsub.f32 %v887, %v896
    %v899 = vmul.f32 %v897, %v897
    %v900 = vmul.f32 %v898, %v898
    %v901 = vsel %vm176, %v899, 0.0
    %902 = vadd.xlane.f32.xlu0 %v901
    %v903 = vpop.xlane.xlu0 %902
    %v904 = vsel %vm176, %v900, 0.0
    %905 = vadd.xlane.f32.xlu0 %v904
    %v906 = vpop.xlane.xlu0 %905
    %v907 = vmul.f32 %v903, %v183
    %v908 = vmul.f32 %v906, %v183
    %v909 = vadd.f32 %v907, 1e-12
    %v910 = vadd.f32 %v908, 1e-12
    %v911 = vrsqrt.pop %v909
    %v912 = vrsqrt.pop %v910
    %v913 = vmul.f32 %v897, %v911
    %v914 = vmul.f32 %v898, %v912
    %v915 = vlaneseq
    %v916 = vshrl.u32 %v915, 7
    %v917 = vsub.s32 0, %v916
    %v918 = vrot.slane %v888, %v917
    %v919 = vmul.f32 %v913, %v918
    %v920 = vmul.f32 %v914, %v918
    %v921 = vlaneseq
    %v922 = vshrl.u32 %v921, 7
    %v923 = vsub.s32 1, %v922
    %v924 = vrot.slane %v888, %v923
    %v925 = vadd.f32 %v919, %v924
    %v926 = vadd.f32 %v920, %v924
    %v927 = vld [vmem:[#allocation7 + $0xc0] sm:$0xff]
    %v928 = vld [vmem:[#allocation7 + $0xc8] sm:$0xff]
    %v929 = vld [vmem:[#allocation7 + $0xd0] sm:$0xff]
    %v930 = vld [vmem:[#allocation7 + $0xd8] sm:$0xff]
    %v931 = vld [vmem:[#allocation7 + $0xe0] sm:$0x1]
    %v932 = vlaneseq
    %v933 = vshrl.u32 %v932, 7
    %v934 = vsub.s32 0, %v933
    %v935 = vrot.slane %v931, %v934
    %v937 = vsel %vm176, %v925, 0
    %v940 = vsel %vm176, %v926, 0
    %942 = vmatprep.subr.mxu0 0.0
    %943 = vmatpush1.msra.mxu0 %v927
    %944 = vmatprep.subr.mxu0 0.0
    %945 = vmatpush1.msra.mxu0 %v928
    %946 = vmatprep.subr.mxu0 0.0
    %947 = vmatpush1.msra.mxu0 %v929
    %948 = vmatprep.subr.mxu0 0.0
    %949 = vmatpush1.msra.mxu0 %v930
    %950 = vmatprep.subr.mxu0 0.0
    %951 = vmatpush1.msra.mxu0 0.0
    %952 = vmatprep.subr.mxu0 0.0
    %953 = vmatpush1.msra.mxu0 0.0
    %954 = vmatprep.subr.mxu0 0.0
    %955 = vmatpush1.msra.mxu0 0.0
    %956 = vmatprep.subr.mxu0 0.0
    %957 = vmatpush1.msra.mxu0 0.0
    %958 = vmatprep.subr.mxu0 0.0
    %959 = vmatpush1.msra.mxu0 0.0
    %960 = vmatprep.subr.mxu0 0.0
    %961 = vmatpush1.msra.mxu0 0.0
    %962 = vmatprep.subr.mxu0 0.0
    %963 = vmatpush1.msra.mxu0 0.0
    %964 = vmatprep.subr.mxu0 0.0
    %965 = vmatpush1.msra.mxu0 0.0
    %966 = vmatprep.subr.mxu0 0.0
    %967 = vmatpush1.msra.mxu0 0.0
    %968 = vmatprep.subr.mxu0 0.0
    %969 = vmatpush1.msra.mxu0 0.0
    %970 = vmatprep.subr.mxu0 0.0
    %971 = vmatpush1.msra.mxu0 0.0
    %972 = vmatprep.subr.mxu0 0.0
    %973 = vmatpush1.msra.mxu0 0.0
    %974 = vmatprep.subr.mxu0 0.0
    %975 = vmatpush1.msra.mxu0 0.0
    %976 = vmatprep.subr.mxu0 0.0
    %977 = vmatpush1.msra.mxu0 0.0
    %978 = vmatprep.subr.mxu0 0.0
    %979 = vmatpush1.msra.mxu0 0.0
    %980 = vmatprep.subr.mxu0 0.0
    %981 = vmatpush1.msra.mxu0 0.0
    %982 = vmatprep.subr.mxu0 0.0
    %983 = vmatpush1.msra.mxu0 0.0
    %984 = vmatprep.subr.mxu0 0.0
    %985 = vmatpush1.msra.mxu0 0.0
    %986 = vmatprep.subr.mxu0 0.0
    %987 = vmatpush1.msra.mxu0 0.0
    %988 = vmatprep.subr.mxu0 0.0
    %989 = vmatpush1.msra.mxu0 0.0
    %990 = vmatprep.subr.mxu0 0.0
    %991 = vmatpush1.msra.mxu0 0.0
    %992 = vmatprep.subr.mxu0 0.0
    %993 = vmatpush1.msra.mxu0 0.0
    %994 = vmatprep.subr.mxu0 0.0
    %995 = vmatpush1.msra.mxu0 0.0
    %996 = vmatprep.subr.mxu0 0.0
    %997 = vmatpush1.msra.mxu0 0.0
    %998 = vmatprep.subr.mxu0 0.0
    %999 = vmatpush1.msra.mxu0 0.0
    %1000 = vmatprep.subr.mxu0 0.0
    %1001 = vmatpush1.msra.mxu0 0.0
    %1002 = vmatprep.subr.mxu0 0.0
    %1003 = vmatpush1.msra.mxu0 0.0
    %1004 = vmatprep.subr.mxu0 0.0
    %1005 = vmatpush1.msra.mxu0 0.0
    %1006 = vmatprep.mubr.f32.mxu0 0.0
    %1007 = vmatmul.mubr.f32.gmra.mrb[0].mxu0 %v937
    %v1008 = vpop.f32.mrb[0].mxu0
    %v1009 = vadd.f32 %v935, %v1008
    %v1010 = vpop.f32.mrb[0].mxu0
    %1011 = vmatprep.mubr.f32.mxu0 0.0
    %1012 = vmatmul.mubr.f32.gmra.mrb[0].mxu0 %v940
    %v1013 = vpop.f32.mrb[0].mxu0
    %v1014 = vadd.f32 %v935, %v1013
    %v1015 = vpop.f32.mrb[0].mxu0
    %1016 = vdwg.mxu0
    %v1017 = vmul.f32 %v1009, %v1009
    %v1018 = vmul.f32 %v1014, %v1014
    %v1019 = vmul.f32 %v1009, %v1017
    %v1020 = vmul.f32 %v1014, %v1018
    %v1021 = vmul.f32 %v1019, 0.044715
    %v1022 = vmul.f32 %v1020, 0.044715
    %v1023 = vadd.f32 %v1009, %v1021
    %v1024 = vadd.f32 %v1014, %v1022
    %v1025 = vmul.f32 %v1023, 0.7978846
    %v1026 = vmul.f32 %v1024, 0.7978846
    %v1027 = vtanh.pop %v1025
    %v1028 = vtanh.pop %v1026
    %v1029 = vadd.f32 %v1027, 1.0
    %v1030 = vadd.f32 %v1028, 1.0
    %v1031 = vmul.f32 %v1029, 0.5
    %v1032 = vmul.f32 %v1030, 0.5
    %v1033 = vmul.f32 %v1009, %v1031
    %v1034 = vmul.f32 %v1014, %v1032
    %v1035 = vld [vmem:[#allocation7 + $0xe8] sm:$0xff]
    %v1036 = vld [vmem:[#allocation7 + $0xf0] sm:$0xff]
    %v1037 = vld [vmem:[#allocation7 + $0xf8] sm:$0xff]
    %v1038 = vld [vmem:[#allocation7 + $0x100] sm:$0xff]
    %v1039 = vld [vmem:[#allocation7 + $0x108] sm:$0xff]
    %v1040 = vld [vmem:[#allocation7 + $0x110] sm:$0xff]
    %v1041 = vld [vmem:[#allocation7 + $0x118] sm:$0xff]
    %v1042 = vld [vmem:[#allocation7 + $0x120] sm:$0xff]
    %v1043 = vld [vmem:[#allocation7 + $0x128] sm:$0x1]
    %v1044 = vlaneseq
    %v1045 = vshrl.u32 %v1044, 7
    %v1046 = vsub.s32 0, %v1045
    %v1047 = vrot.slane %v1043, %v1046
    %v1049 = vsel %vm93, %v1033, 0
    %v1052 = vsel %vm93, %v1034, 0
    %1054 = vmatprep.subr.mxu0 0.0
    %1055 = vmatpush1.msra.mxu0 %v1035
    %1056 = vmatprep.subr.mxu0 0.0
    %1057 = vmatpush1.msra.mxu0 %v1036
    %1058 = vmatprep.subr.mxu0 0.0
    %1059 = vmatpush1.msra.mxu0 %v1037
    %1060 = vmatprep.subr.mxu0 0.0
    %1061 = vmatpush1.msra.mxu0 %v1038
    %1062 = vmatprep.subr.mxu0 0.0
    %1063 = vmatpush1.msra.mxu0 %v1039
    %1064 = vmatprep.subr.mxu0 0.0
    %1065 = vmatpush1.msra.mxu0 %v1040
    %1066 = vmatprep.subr.mxu0 0.0
    %1067 = vmatpush1.msra.mxu0 %v1041
    %1068 = vmatprep.subr.mxu0 0.0
    %1069 = vmatpush1.msra.mxu0 %v1042
    %1070 = vmatprep.subr.mxu0 0.0
    %1071 = vmatpush1.msra.mxu0 0.0
    %1072 = vmatprep.subr.mxu0 0.0
    %1073 = vmatpush1.msra.mxu0 0.0
    %1074 = vmatprep.subr.mxu0 0.0
    %1075 = vmatpush1.msra.mxu0 0.0
    %1076 = vmatprep.subr.mxu0 0.0
    %1077 = vmatpush1.msra.mxu0 0.0
    %1078 = vmatprep.subr.mxu0 0.0
    %1079 = vmatpush1.msra.mxu0 0.0
    %1080 = vmatprep.subr.mxu0 0.0
    %1081 = vmatpush1.msra.mxu0 0.0
    %1082 = vmatprep.subr.mxu0 0.0
    %1083 = vmatpush1.msra.mxu0 0.0
    %1084 = vmatprep.subr.mxu0 0.0
    %1085 = vmatpush1.msra.mxu0 0.0
    %1086 = vmatprep.subr.mxu0 0.0
    %1087 = vmatpush1.msra.mxu0 0.0
    %1088 = vmatprep.subr.mxu0 0.0
    %1089 = vmatpush1.msra.mxu0 0.0
    %1090 = vmatprep.subr.mxu0 0.0
    %1091 = vmatpush1.msra.mxu0 0.0
    %1092 = vmatprep.subr.mxu0 0.0
    %1093 = vmatpush1.msra.mxu0 0.0
    %1094 = vmatprep.subr.mxu0 0.0
    %1095 = vmatpush1.msra.mxu0 0.0
    %1096 = vmatprep.subr.mxu0 0.0
    %1097 = vmatpush1.msra.mxu0 0.0
    %1098 = vmatprep.subr.mxu0 0.0
    %1099 = vmatpush1.msra.mxu0 0.0
    %1100 = vmatprep.subr.mxu0 0.0
    %1101 = vmatpush1.msra.mxu0 0.0
    %1102 = vmatprep.subr.mxu0 0.0
    %1103 = vmatpush1.msra.mxu0 0.0
    %1104 = vmatprep.subr.mxu0 0.0
    %1105 = vmatpush1.msra.mxu0 0.0
    %1106 = vmatprep.subr.mxu0 0.0
    %1107 = vmatpush1.msra.mxu0 0.0
    %1108 = vmatprep.subr.mxu0 0.0
    %1109 = vmatpush1.msra.mxu0 0.0
    %1110 = vmatprep.subr.mxu0 0.0
    %1111 = vmatpush1.msra.mxu0 0.0
    %1112 = vmatprep.subr.mxu0 0.0
    %1113 = vmatpush1.msra.mxu0 0.0
    %1114 = vmatprep.subr.mxu0 0.0
    %1115 = vmatpush1.msra.mxu0 0.0
    %1116 = vmatprep.subr.mxu0 0.0
    %1117 = vmatpush1.msra.mxu0 0.0
    %1118 = vmatprep.mubr.f32.mxu0 0.0
    %1119 = vmatmul.mubr.f32.gmra.mrb[0].mxu0 %v1049
    %v1120 = vpop.f32.mrb[0].mxu0
    %v1121 = vadd.f32 %v1047, %v1120
    %v1122 = vpop.f32.mrb[0].mxu0
    %1123 = vmatprep.mubr.f32.mxu0 0.0
    %1124 = vmatmul.mubr.f32.gmra.mrb[0].mxu0 %v1052
    %v1125 = vpop.f32.mrb[0].mxu0
    %v1126 = vadd.f32 %v1047, %v1125
    %v1127 = vpop.f32.mrb[0].mxu0
    %1128 = vdwg.mxu0
    %v1129 = vadd.f32 %v1121, %v925
    %v1130 = vadd.f32 %v1126, %v926
    %v1131 = vld [vmem:[#allocation7 + $0x130] sm:$0x3]
    %v1132 = vsel %vm176, %v1129, 0.0
    %1133 = vadd.xlane.f32.xlu0 %v1132
    %v1134 = vpop.xlane.xlu0 %1133
    %v1135 = vsel %vm176, %v1130, 0.0
    %1136 = vadd.xlane.f32.xlu0 %v1135
    %v1137 = vpop.xlane.xlu0 %1136
    %v1138 = vmul.f32 %v1134, %v183
    %v1139 = vmul.f32 %v1137, %v183
    %v1140 = vsub.f32 %v1129, %v1138
    %v1141 = vsub.f32 %v1130, %v1139
    %v1142 = vmul.f32 %v1140, %v1140
    %v1143 = vmul.f32 %v1141, %v1141
    %v1144 = vsel %vm176, %v1142, 0.0
    %1145 = vadd.xlane.f32.xlu0 %v1144
    %v1146 = vpop.xlane.xlu0 %1145
    %v1147 = vsel %vm176, %v1143, 0.0
    %1148 = vadd.xlane.f32.xlu0 %v1147
    %v1149 = vpop.xlane.xlu0 %1148
    %v1150 = vmul.f32 %v1146, %v183
    %v1151 = vmul.f32 %v1149, %v183
    %v1152 = vadd.f32 %v1150, 1e-12
    %v1153 = vadd.f32 %v1151, 1e-12
    %v1154 = vrsqrt.pop %v1152
    %v1155 = vrsqrt.pop %v1153
    %v1156 = vmul.f32 %v1140, %v1154
    %v1157 = vmul.f32 %v1141, %v1155
    %v1158 = vlaneseq
    %v1159 = vshrl.u32 %v1158, 7
    %v1160 = vsub.s32 0, %v1159
    %v1161 = vrot.slane %v1131, %v1160
    %v1162 = vmul.f32 %v1156, %v1161
    %v1163 = vmul.f32 %v1157, %v1161
    %v1164 = vlaneseq
    %v1165 = vshrl.u32 %v1164, 7
    %v1166 = vsub.s32 1, %v1165
    %v1167 = vrot.slane %v1131, %v1166
    %v1168 = vadd.f32 %v1162, %v1167
    %v1169 = vadd.f32 %v1163, %v1167
    %v1170 = vld [vmem:[%s1] sm:$0xff]
    %1171 = vset.pattern.permute.xlu0 0
    %1172 = vperm.xlu0 %1171, %v1170
    %v1173 = vpop.permute.xlu0 %1172
    %vm1174 = vcmp.eq.s32.totalorder %v60, %v1173
    %v1175 = vsel %vm1174, 1, 0
    %v1176 = vcvt.s32.f32 %v1175
    %v1177 = vld [vmem:[#allocation7 + $0x138] sm:$0xff]
    %v1178 = vld [vmem:[#allocation7 + $0x140] sm:$0xff]
    %v1179 = vld [vmem:[#allocation7 + $0x148] sm:$0xff]
    %v1180 = vld [vmem:[#allocation7 + $0x150] sm:$0xff]
    %v1181 = vld [vmem:[#allocation7 + $0x158] sm:$0xff]
    %v1182 = vld [vmem:[#allocation7 + $0x160] sm:$0xff]
    %v1183 = vld [vmem:[#allocation7 + $0x168] sm:$0xff]
    %v1184 = vld [vmem:[#allocation7 + $0x170] sm:$0xff]
    %v1185 = vld [vmem:[#allocation7 + $0x178] sm:$0xff]
    %v1187 = vsel %vm93, %v1176, 0
    %1189 = vmatprep.subr.mxu0 0.0
    %1190 = vmatpush1.msra.mxu0 %v1177
    %1191 = vmatprep.subr.mxu0 0.0
    %1192 = vmatpush1.msra.mxu0 %v1178
    %1193 = vmatprep.subr.mxu0 0.0
    %1194 = vmatpush1.msra.mxu0 %v1179
    %1195 = vmatprep.subr.mxu0 0.0
    %1196 = vmatpush1.msra.mxu0 %v1180
    %1197 = vmatprep.subr.mxu0 0.0
    %1198 = vmatpush1.msra.mxu0 %v1181
    %1199 = vmatprep.subr.mxu0 0.0
    %1200 = vmatpush1.msra.mxu0 %v1182
    %1201 = vmatprep.subr.mxu0 0.0
    %1202 = vmatpush1.msra.mxu0 %v1183
    %1203 = vmatprep.subr.mxu0 0.0
    %1204 = vmatpush1.msra.mxu0 %v1184
    %1205 = vmatprep.subr.mxu0 0.0
    %1206 = vmatpush1.msra.mxu0 0.0
    %1207 = vmatprep.subr.mxu0 0.0
    %1208 = vmatpush1.msra.mxu0 0.0
    %1209 = vmatprep.subr.mxu0 0.0
    %1210 = vmatpush1.msra.mxu0 0.0
    %1211 = vmatprep.subr.mxu0 0.0
    %1212 = vmatpush1.msra.mxu0 0.0
    %1213 = vmatprep.subr.mxu0 0.0
    %1214 = vmatpush1.msra.mxu0 0.0
    %1215 = vmatprep.subr.mxu0 0.0
    %1216 = vmatpush1.msra.mxu0 0.0
    %1217 = vmatprep.subr.mxu0 0.0
    %1218 = vmatpush1.msra.mxu0 0.0
    %1219 = vmatprep.subr.mxu0 0.0
    %1220 = vmatpush1.msra.mxu0 0.0
    %1221 = vmatprep.subr.mxu0 0.0
    %1222 = vmatpush1.msra.mxu0 0.0
    %1223 = vmatprep.subr.mxu0 0.0
    %1224 = vmatpush1.msra.mxu0 0.0
    %1225 = vmatprep.subr.mxu0 0.0
    %1226 = vmatpush1.msra.mxu0 0.0
    %1227 = vmatprep.subr.mxu0 0.0
    %1228 = vmatpush1.msra.mxu0 0.0
    %1229 = vmatprep.subr.mxu0 0.0
    %1230 = vmatpush1.msra.mxu0 0.0
    %1231 = vmatprep.subr.mxu0 0.0
    %1232 = vmatpush1.msra.mxu0 0.0
    %1233 = vmatprep.subr.mxu0 0.0
    %1234 = vmatpush1.msra.mxu0 0.0
    %1235 = vmatprep.subr.mxu0 0.0
    %1236 = vmatpush1.msra.mxu0 0.0
    %1237 = vmatprep.subr.mxu0 0.0
    %1238 = vmatpush1.msra.mxu0 0.0
    %1239 = vmatprep.subr.mxu0 0.0
    %1240 = vmatpush1.msra.mxu0 0.0
    %1241 = vmatprep.subr.mxu0 0.0
    %1242 = vmatpush1.msra.mxu0 0.0
    %1243 = vmatprep.subr.mxu0 0.0
    %1244 = vmatpush1.msra.mxu0 0.0
    %1245 = vmatprep.subr.mxu0 0.0
    %1246 = vmatpush1.msra.mxu0 0.0
    %1247 = vmatprep.subr.mxu0 0.0
    %1248 = vmatpush1.msra.mxu0 0.0
    %1249 = vmatprep.subr.mxu0 0.0
    %1250 = vmatpush1.msra.mxu0 0.0
    %1251 = vmatprep.subr.mxu0 0.0
    %1252 = vmatpush1.msra.mxu0 0.0
    %1253 = vmatprep.mubr.f32.mxu0 0.0
    %1254 = vmatmul.mubr.f32.gmra.mrb[0].mxu0 %v1187
    %v1255 = vpop.f32.mrb[0].mxu0
    %v1256 = vadd.f32 %v1185, %v1255
    %v1257 = vpop.f32.mrb[0].mxu0
    %1258 = vdwg.mxu0
    %v1259 = vld [vmem:[#allocation7 + $0x198] sm:$0x3]
    %v1260 = vsel %vm176, %v1256, 0.0
    %1261 = vadd.xlane.f32.xlu0 %v1260
    %v1262 = vpop.xlane.xlu0 %1261
    %v1263 = vmul.f32 %v1262, %v183
    %v1264 = vsub.f32 %v1256, %v1263
    %v1265 = vmul.f32 %v1264, %v1264
    %v1266 = vsel %vm176, %v1265, 0.0
    %1267 = vadd.xlane.f32.xlu0 %v1266
    %v1268 = vpop.xlane.xlu0 %1267
    %v1269 = vmul.f32 %v1268, %v183
    %v1270 = vadd.f32 %v1269, 1e-12
    %v1271 = vrsqrt.pop %v1270
    %v1272 = vmul.f32 %v1264, %v1271
    %v1273 = vlaneseq
    %v1274 = vshrl.u32 %v1273, 7
    %v1275 = vsub.s32 0, %v1274
    %v1276 = vrot.slane %v1259, %v1275
    %v1277 = vmul.f32 %v1272, %v1276
    %v1278 = vlaneseq
    %v1279 = vshrl.u32 %v1278, 7
    %v1280 = vsub.s32 1, %v1279
    %v1281 = vrot.slane %v1259, %v1280
    %v1282 = vadd.f32 %v1277, %v1281
    %v1283 = vld [vmem:[#allocation7 + $0x1a0] sm:$0xff]
    %v1284 = vld [vmem:[#allocation7 + $0x1a8] sm:$0xff]
    %v1285 = vld [vmem:[#allocation7 + $0x1b0] sm:$0xff]
    %v1286 = vld [vmem:[#allocation7 + $0x1b8] sm:$0xff]
    %v1287 = vld [vmem:[#allocation7 + $0x1c0] sm:$0x1]
    %v1288 = vlaneseq
    %v1289 = vshrl.u32 %v1288, 7
    %v1290 = vsub.s32 0, %v1289
    %v1291 = vrot.slane %v1287, %v1290
    %v1293 = vsel %vm176, %v1282, 0
    %1295 = vmatprep.subr.mxu0 0.0
    %1296 = vmatpush1.msra.mxu0 %v1283
    %1297 = vmatprep.subr.mxu0 0.0
    %1298 = vmatpush1.msra.mxu0 %v1284
    %1299 = vmatprep.subr.mxu0 0.0
    %1300 = vmatpush1.msra.mxu0 %v1285
    %1301 = vmatprep.subr.mxu0 0.0
    %1302 = vmatpush1.msra.mxu0 %v1286
    %1303 = vmatprep.subr.mxu0 0.0
    %1304 = vmatpush1.msra.mxu0 0.0
    %1305 = vmatprep.subr.mxu0 0.0
    %1306 = vmatpush1.msra.mxu0 0.0
    %1307 = vmatprep.subr.mxu0 0.0
    %1308 = vmatpush1.msra.mxu0 0.0
    %1309 = vmatprep.subr.mxu0 0.0
    %1310 = vmatpush1.msra.mxu0 0.0
    %1311 = vmatprep.subr.mxu0 0.0
    %1312 = vmatpush1.msra.mxu0 0.0
    %1313 = vmatprep.subr.mxu0 0.0
    %1314 = vmatpush1.msra.mxu0 0.0
    %1315 = vmatprep.subr.mxu0 0.0
    %1316 = vmatpush1.msra.mxu0 0.0
    %1317 = vmatprep.subr.mxu0 0.0
    %1318 = vmatpush1.msra.mxu0 0.0
    %1319 = vmatprep.subr.mxu0 0.0
    %1320 = vmatpush1.msra.mxu0 0.0
    %1321 = vmatprep.subr.mxu0 0.0
    %1322 = vmatpush1.msra.mxu0 0.0
    %1323 = vmatprep.subr.mxu0 0.0
    %1324 = vmatpush1.msra.mxu0 0.0
    %1325 = vmatprep.subr.mxu0 0.0
    %1326 = vmatpush1.msra.mxu0 0.0
    %1327 = vmatprep.subr.mxu0 0.0
    %1328 = vmatpush1.msra.mxu0 0.0
    %1329 = vmatprep.subr.mxu0 0.0
    %1330 = vmatpush1.msra.mxu0 0.0
    %1331 = vmatprep.subr.mxu0 0.0
    %1332 = vmatpush1.msra.mxu0 0.0
    %1333 = vmatprep.subr.mxu0 0.0
    %1334 = vmatpush1.msra.mxu0 0.0
    %1335 = vmatprep.subr.mxu0 0.0
    %1336 = vmatpush1.msra.mxu0 0.0
    %1337 = vmatprep.subr.mxu0 0.0
    %1338 = vmatpush1.msra.mxu0 0.0
    %1339 = vmatprep.subr.mxu0 0.0
    %1340 = vmatpush1.msra.mxu0 0.0
    %1341 = vmatprep.subr.mxu0 0.0
    %1342 = vmatpush1.msra.mxu0 0.0
    %1343 = vmatprep.subr.mxu0 0.0
    %1344 = vmatpush1.msra.mxu0 0.0
    %1345 = vmatprep.subr.mxu0 0.0
    %1346 = vmatpush1.msra.mxu0 0.0
    %1347 = vmatprep.subr.mxu0 0.0
    %1348 = vmatpush1.msra.mxu0 0.0
    %1349 = vmatprep.subr.mxu0 0.0
    %1350 = vmatpush1.msra.mxu0 0.0
    %1351 = vmatprep.subr.mxu0 0.0
    %1352 = vmatpush1.msra.mxu0 0.0
    %1353 = vmatprep.subr.mxu0 0.0
    %1354 = vmatpush1.msra.mxu0 0.0
    %1355 = vmatprep.subr.mxu0 0.0
    %1356 = vmatpush1.msra.mxu0 0.0
    %1357 = vmatprep.subr.mxu0 0.0
    %1358 = vmatpush1.msra.mxu0 0.0
    %1359 = vmatprep.mubr.f32.mxu0 0.0
    %1360 = vmatmul.mubr.f32.gmra.mrb[0].mxu0 %v1293
    %v1361 = vpop.f32.mrb[0].mxu0
    %v1362 = vadd.f32 %v1291, %v1361
    %v1363 = vpop.f32.mrb[0].mxu0
    %1364 = vdwg.mxu0
    %v1365 = vld [vmem:[#allocation7 + $0x1c8] sm:$0xff]
    %v1366 = vld [vmem:[#allocation7 + $0x1d0] sm:$0xff]
    %v1367 = vld [vmem:[#allocation7 + $0x1d8] sm:$0xff]
    %v1368 = vld [vmem:[#allocation7 + $0x1e0] sm:$0xff]
    %1370 = vrot.lane.b32.xlu0 %v1362, 96
    %v1371 = vpop.permute.xlu0 %1370
    %v1372 = vsel %vm316, %v1362, 0
    %v1374 = vsel %vm316, %v1371, 0
    %1376 = vmatprep.subr.mxu0 0.0
    %1377 = vmatpush1.xpose.msra.mxu0 %v1374
    %1378 = vmatprep.subr.mxu0 0.0
    %1379 = vmatpush1.xpose.msra.mxu0 0.0
    %1380 = vmatprep.subr.mxu0 0.0
    %1381 = vmatpush1.xpose.msra.mxu0 0.0
    %1382 = vmatprep.subr.mxu0 0.0
    %1383 = vmatpush1.xpose.msra.mxu0 0.0
    %1384 = vmatprep.subr.mxu0 0.0
    %1385 = vmatpush1.xpose.msra.mxu0 0.0
    %1386 = vmatprep.subr.mxu0 0.0
    %1387 = vmatpush1.xpose.msra.mxu0 0.0
    %1388 = vmatprep.subr.mxu0 0.0
    %1389 = vmatpush1.xpose.msra.mxu0 0.0
    %1390 = vmatprep.subr.mxu0 0.0
    %1391 = vmatpush1.xpose.msra.mxu0 0.0
    %1392 = vmatprep.subr.mxu0 0.0
    %1393 = vmatpush1.xpose.msra.mxu0 0.0
    %1394 = vmatprep.subr.mxu0 0.0
    %1395 = vmatpush1.xpose.msra.mxu0 0.0
    %1396 = vmatprep.subr.mxu0 0.0
    %1397 = vmatpush1.xpose.msra.mxu0 0.0
    %1398 = vmatprep.subr.mxu0 0.0
    %1399 = vmatpush1.xpose.msra.mxu0 0.0
    %1400 = vmatprep.subr.mxu0 0.0
    %1401 = vmatpush1.xpose.msra.mxu0 0.0
    %1402 = vmatprep.subr.mxu0 0.0
    %1403 = vmatpush1.xpose.msra.mxu0 0.0
    %1404 = vmatprep.subr.mxu0 0.0
    %1405 = vmatpush1.xpose.msra.mxu0 0.0
    %1406 = vmatprep.subr.mxu0 0.0
    %1407 = vmatpush1.xpose.msra.mxu0 0.0
    %1408 = vmatprep.subr.mxu0 0.0
    %1409 = vmatpush1.xpose.msra.mxu0 0.0
    %1410 = vmatprep.subr.mxu0 0.0
    %1411 = vmatpush1.xpose.msra.mxu0 0.0
    %1412 = vmatprep.subr.mxu0 0.0
    %1413 = vmatpush1.xpose.msra.mxu0 0.0
    %1414 = vmatprep.subr.mxu0 0.0
    %1415 = vmatpush1.xpose.msra.mxu0 0.0
    %1416 = vmatprep.subr.mxu0 0.0
    %1417 = vmatpush1.xpose.msra.mxu0 0.0
    %1418 = vmatprep.subr.mxu0 0.0
    %1419 = vmatpush1.xpose.msra.mxu0 0.0
    %1420 = vmatprep.subr.mxu0 0.0
    %1421 = vmatpush1.xpose.msra.mxu0 0.0
    %1422 = vmatprep.subr.mxu0 0.0
    %1423 = vmatpush1.xpose.msra.mxu0 0.0
    %1424 = vmatprep.subr.mxu0 0.0
    %1425 = vmatpush1.xpose.msra.mxu0 0.0
    %1426 = vmatprep.subr.mxu0 0.0
    %1427 = vmatpush1.xpose.msra.mxu0 0.0
    %1428 = vmatprep.subr.mxu0 0.0
    %1429 = vmatpush1.xpose.msra.mxu0 0.0
    %1430 = vmatprep.subr.mxu0 0.0
    %1431 = vmatpush1.xpose.msra.mxu0 0.0
    %1432 = vmatprep.subr.mxu0 0.0
    %1433 = vmatpush1.xpose.msra.mxu0 0.0
    %1434 = vmatprep.subr.mxu0 0.0
    %1435 = vmatpush1.xpose.msra.mxu0 0.0
    %1436 = vmatprep.subr.mxu0 0.0
    %1437 = vmatpush1.xpose.msra.mxu0 0.0
    %1438 = vmatprep.subr.mxu0 0.0
    %1439 = vmatpush1.xpose.msra.mxu0 0.0
    %1440 = vmatprep.mubr.f32.mxu0 0.0
    %1441 = vmatmul.mubr.f32.gmra.mrb[0].mxu0 %v1372
    %v1442 = vpop.f32.mrb[0].mxu0
    %v1443 = vadd.f32 0.0, %v1442
    %v1444 = vpop.f32.mrb[0].mxu0
    %1445 = vdwg.mxu0
    %v1446 = vmul.f32 %v1443, 0.25
    %v1447 = vadd.f32 %v1446, %v68
    %vm1448 = vcmask 64512
    %v1449 = vsel %vm1448, %v1447, -inf
    %1450 = vmax.xlane.f32.xlu0 %v1449
    %v1451 = vpop.xlane.xlu0 %1450
    %v1452 = vsub.f32 %v1447, %v1451
    %v1453 = vmul.f32 %v1452, 1.442695
    %v1454 = vpow.pop %v1453
    %v1455 = vsel %vm1448, %v1454, 0.0
    %1456 = vadd.xlane.f32.xlu0 %v1455
    %v1457 = vpop.xlane.xlu0 %1456
    %v1458 = vrcp.pop %v1457
    %v1459 = vmul.f32 %v1454, %v1458
    %1460 = vrot.lane.b32.xlu0 %v1362, 64
    %v1461 = vpop.permute.xlu0 %1460
    %v1464 = vsel %vm1448, %v1459, 0
    %1466 = vmatprep.subr.mxu0 0.0
    %1467 = vmatpush1.msra.mxu0 %v1461
    %1468 = vmatprep.subr.mxu0 0.0
    %1469 = vmatpush1.msra.mxu0 0.0
    %1470 = vmatprep.subr.mxu0 0.0
    %1471 = vmatpush1.msra.mxu0 0.0
    %1472 = vmatprep.subr.mxu0 0.0
    %1473 = vmatpush1.msra.mxu0 0.0
    %1474 = vmatprep.subr.mxu0 0.0
    %1475 = vmatpush1.msra.mxu0 0.0
    %1476 = vmatprep.subr.mxu0 0.0
    %1477 = vmatpush1.msra.mxu0 0.0
    %1478 = vmatprep.subr.mxu0 0.0
    %1479 = vmatpush1.msra.mxu0 0.0
    %1480 = vmatprep.subr.mxu0 0.0
    %1481 = vmatpush1.msra.mxu0 0.0
    %1482 = vmatprep.subr.mxu0 0.0
    %1483 = vmatpush1.msra.mxu0 0.0
    %1484 = vmatprep.subr.mxu0 0.0
    %1485 = vmatpush1.msra.mxu0 0.0
    %1486 = vmatprep.subr.mxu0 0.0
    %1487 = vmatpush1.msra.mxu0 0.0
    %1488 = vmatprep.subr.mxu0 0.0
    %1489 = vmatpush1.msra.mxu0 0.0
    %1490 = vmatprep.subr.mxu0 0.0
    %1491 = vmatpush1.msra.mxu0 0.0
    %1492 = vmatprep.subr.mxu0 0.0
    %1493 = vmatpush1.msra.mxu0 0.0
    %1494 = vmatprep.subr.mxu0 0.0
    %1495 = vmatpush1.msra.mxu0 0.0
    %1496 = vmatprep.subr.mxu0 0.0
    %1497 = vmatpush1.msra.mxu0 0.0
    %1498 = vmatprep.subr.mxu0 0.0
    %1499 = vmatpush1.msra.mxu0 0.0
    %1500 = vmatprep.subr.mxu0 0.0
    %1501 = vmatpush1.msra.mxu0 0.0
    %1502 = vmatprep.subr.mxu0 0.0
    %1503 = vmatpush1.msra.mxu0 0.0
    %1504 = vmatprep.subr.mxu0 0.0
    %1505 = vmatpush1.msra.mxu0 0.0
    %1506 = vmatprep.subr.mxu0 0.0
    %1507 = vmatpush1.msra.mxu0 0.0
    %1508 = vmatprep.subr.mxu0 0.0
    %1509 = vmatpush1.msra.mxu0 0.0
    %1510 = vmatprep.subr.mxu0 0.0
    %1511 = vmatpush1.msra.mxu0 0.0
    %1512 = vmatprep.subr.mxu0 0.0
    %1513 = vmatpush1.msra.mxu0 0.0
    %1514 = vmatprep.subr.mxu0 0.0
    %1515 = vmatpush1.msra.mxu0 0.0
    %1516 = vmatprep.subr.mxu0 0.0
    %1517 = vmatpush1.msra.mxu0 0.0
    %1518 = vmatprep.subr.mxu0 0.0
    %1519 = vmatpush1.msra.mxu0 0.0
    %1520 = vmatprep.subr.mxu0 0.0
    %1521 = vmatpush1.msra.mxu0 0.0
    %1522 = vmatprep.subr.mxu0 0.0
    %1523 = vmatpush1.msra.mxu0 0.0
    %1524 = vmatprep.subr.mxu0 0.0
    %1525 = vmatpush1.msra.mxu0 0.0
    %1526 = vmatprep.subr.mxu0 0.0
    %1527 = vmatpush1.msra.mxu0 0.0
    %1528 = vmatprep.subr.mxu0 0.0
    %1529 = vmatpush1.msra.mxu0 0.0
    %1530 = vmatprep.mubr.f32.mxu0 0.0
    %1531 = vmatmul.mubr.f32.gmra.mrb[0].mxu0 %v1464
    %v1532 = vpop.f32.mrb[0].mxu0
    %v1533 = vadd.f32 0.0, %v1532
    %v1534 = vpop.f32.mrb[0].mxu0
    %1535 = vdwg.mxu0
    %1536 = vrot.lane.b32.xlu0 %v1362, 112
    %v1537 = vpop.permute.xlu0 %1536
    %1538 = vrot.lane.b32.xlu0 %v1362, 80
    %v1539 = vpop.permute.xlu0 %1538
    %v1540 = vsel %vm316, %v1537, 0
    %v1542 = vsel %vm316, %v1539, 0
    %1544 = vmatprep.subr.mxu0 0.0
    %1545 = vmatpush1.xpose.msra.mxu0 %v1542
    %1546 = vmatprep.subr.mxu0 0.0
    %1547 = vmatpush1.xpose.msra.mxu0 0.0
    %1548 = vmatprep.subr.mxu0 0.0
    %1549 = vmatpush1.xpose.msra.mxu0 0.0
    %1550 = vmatprep.subr.mxu0 0.0
    %1551 = vmatpush1.xpose.msra.mxu0 0.0
    %1552 = vmatprep.subr.mxu0 0.0
    %1553 = vmatpush1.xpose.msra.mxu0 0.0
    %1554 = vmatprep.subr.mxu0 0.0
    %1555 = vmatpush1.xpose.msra.mxu0 0.0
    %1556 = vmatprep.subr.mxu0 0.0
    %1557 = vmatpush1.xpose.msra.mxu0 0.0
    %1558 = vmatprep.subr.mxu0 0.0
    %1559 = vmatpush1.xpose.msra.mxu0 0.0
    %1560 = vmatprep.subr.mxu0 0.0
    %1561 = vmatpush1.xpose.msra.mxu0 0.0
    %1562 = vmatprep.subr.mxu0 0.0
    %1563 = vmatpush1.xpose.msra.mxu0 0.0
    %1564 = vmatprep.subr.mxu0 0.0
    %1565 = vmatpush1.xpose.msra.mxu0 0.0
    %1566 = vmatprep.subr.mxu0 0.0
    %1567 = vmatpush1.xpose.msra.mxu0 0.0
    %1568 = vmatprep.subr.mxu0 0.0
    %1569 = vmatpush1.xpose.msra.mxu0 0.0
    %1570 = vmatprep.subr.mxu0 0.0
    %1571 = vmatpush1.xpose.msra.mxu0 0.0
    %1572 = vmatprep.subr.mxu0 0.0
    %1573 = vmatpush1.xpose.msra.mxu0 0.0
    %1574 = vmatprep.subr.mxu0 0.0
    %1575 = vmatpush1.xpose.msra.mxu0 0.0
    %1576 = vmatprep.subr.mxu0 0.0
    %1577 = vmatpush1.xpose.msra.mxu0 0.0
    %1578 = vmatprep.subr.mxu0 0.0
    %1579 = vmatpush1.xpose.msra.mxu0 0.0
    %1580 = vmatprep.subr.mxu0 0.0
    %1581 = vmatpush1.xpose.msra.mxu0 0.0
    %1582 = vmatprep.subr.mxu0 0.0
    %1583 = vmatpush1.xpose.msra.mxu0 0.0
    %1584 = vmatprep.subr.mxu0 0.0
    %1585 = vmatpush1.xpose.msra.mxu0 0.0
    %1586 = vmatprep.subr.mxu0 0.0
    %1587 = vmatpush1.xpose.msra.mxu0 0.0
    %1588 = vmatprep.subr.mxu0 0.0
    %1589 = vmatpush1.xpose.msra.mxu0 0.0
    %1590 = vmatprep.subr.mxu0 0.0
    %1591 = vmatpush1.xpose.msra.mxu0 0.0
    %1592 = vmatprep.subr.mxu0 0.0
    %1593 = vmatpush1.xpose.msra.mxu0 0.0
    %1594 = vmatprep.subr.mxu0 0.0
    %1595 = vmatpush1.xpose.msra.mxu0 0.0
    %1596 = vmatprep.subr.mxu0 0.0
    %1597 = vmatpush1.xpose.msra.mxu0 0.0
    %1598 = vmatprep.subr.mxu0 0.0
    %1599 = vmatpush1.xpose.msra.mxu0 0.0
    %1600 = vmatprep.subr.mxu0 0.0
    %1601 = vmatpush1.xpose.msra.mxu0 0.0
    %1602 = vmatprep.subr.mxu0 0.0
    %1603 = vmatpush1.xpose.msra.mxu0 0.0
    %1604 = vmatprep.subr.mxu0 0.0
    %1605 = vmatpush1.xpose.msra.mxu0 0.0
    %1606 = vmatprep.subr.mxu0 0.0
    %1607 = vmatpush1.xpose.msra.mxu0 0.0
    %1608 = vmatprep.mubr.f32.mxu0 0.0
    %1609 = vmatmul.mubr.f32.gmra.mrb[0].mxu0 %v1540
    %v1610 = vpop.f32.mrb[0].mxu0
    %v1611 = vadd.f32 0.0, %v1610
    %v1612 = vpop.f32.mrb[0].mxu0
    %1613 = vdwg.mxu0
    %v1614 = vmul.f32 %v1611, 0.25
    %v1615 = vadd.f32 %v1614, %v68
    %v1616 = vsel %vm1448, %v1615, -inf
    %1617 = vmax.xlane.f32.xlu0 %v1616
    %v1618 = vpop.xlane.xlu0 %1617
    %v1619 = vsub.f32 %v1615, %v1618
    %v1620 = vmul.f32 %v1619, 1.442695
    %v1621 = vpow.pop %v1620
    %v1622 = vsel %vm1448, %v1621, 0.0
    %1623 = vadd.xlane.f32.xlu0 %v1622
    %v1624 = vpop.xlane.xlu0 %1623
    %v1625 = vrcp.pop %v1624
    %v1626 = vmul.f32 %v1621, %v1625
    %1627 = vrot.lane.b32.xlu0 %v1362, 48
    %v1628 = vpop.permute.xlu0 %1627
    %v1631 = vsel %vm1448, %v1626, 0
    %1633 = vmatprep.subr.mxu0 0.0
    %1634 = vmatpush1.msra.mxu0 %v1628
    %1635 = vmatprep.subr.mxu0 0.0
    %1636 = vmatpush1.msra.mxu0 0.0
    %1637 = vmatprep.subr.mxu0 0.0
    %1638 = vmatpush1.msra.mxu0 0.0
    %1639 = vmatprep.subr.mxu0 0.0
    %1640 = vmatpush1.msra.mxu0 0.0
    %1641 = vmatprep.subr.mxu0 0.0
    %1642 = vmatpush1.msra.mxu0 0.0
    %1643 = vmatprep.subr.mxu0 0.0
    %1644 = vmatpush1.msra.mxu0 0.0
    %1645 = vmatprep.subr.mxu0 0.0
    %1646 = vmatpush1.msra.mxu0 0.0
    %1647 = vmatprep.subr.mxu0 0.0
    %1648 = vmatpush1.msra.mxu0 0.0
    %1649 = vmatprep.subr.mxu0 0.0
    %1650 = vmatpush1.msra.mxu0 0.0
    %1651 = vmatprep.subr.mxu0 0.0
    %1652 = vmatpush1.msra.mxu0 0.0
    %1653 = vmatprep.subr.mxu0 0.0
    %1654 = vmatpush1.msra.mxu0 0.0
    %1655 = vmatprep.subr.mxu0 0.0
    %1656 = vmatpush1.msra.mxu0 0.0
    %1657 = vmatprep.subr.mxu0 0.0
    %1658 = vmatpush1.msra.mxu0 0.0
    %1659 = vmatprep.subr.mxu0 0.0
    %1660 = vmatpush1.msra.mxu0 0.0
    %1661 = vmatprep.subr.mxu0 0.0
    %1662 = vmatpush1.msra.mxu0 0.0
    %1663 = vmatprep.subr.mxu0 0.0
    %1664 = vmatpush1.msra.mxu0 0.0
    %1665 = vmatprep.subr.mxu0 0.0
    %1666 = vmatpush1.msra.mxu0 0.0
    %1667 = vmatprep.subr.mxu0 0.0
    %1668 = vmatpush1.msra.mxu0 0.0
    %1669 = vmatprep.subr.mxu0 0.0
    %1670 = vmatpush1.msra.mxu0 0.0
    %1671 = vmatprep.subr.mxu0 0.0
    %1672 = vmatpush1.msra.mxu0 0.0
    %1673 = vmatprep.subr.mxu0 0.0
    %1674 = vmatpush1.msra.mxu0 0.0
    %1675 = vmatprep.subr.mxu0 0.0
    %1676 = vmatpush1.msra.mxu0 0.0
    %1677 = vmatprep.subr.mxu0 0.0
    %1678 = vmatpush1.msra.mxu0 0.0
    %1679 = vmatprep.subr.mxu0 0.0
    %1680 = vmatpush1.msra.mxu0 0.0
    %1681 = vmatprep.subr.mxu0 0.0
    %1682 = vmatpush1.msra.mxu0 0.0
    %1683 = vmatprep.subr.mxu0 0.0
    %1684 = vmatpush1.msra.mxu0 0.0
    %1685 = vmatprep.subr.mxu0 0.0
    %1686 = vmatpush1.msra.mxu0 0.0
    %1687 = vmatprep.subr.mxu0 0.0
    %1688 = vmatpush1.msra.mxu0 0.0
    %1689 = vmatprep.subr.mxu0 0.0
    %1690 = vmatpush1.msra.mxu0 0.0
    %1691 = vmatprep.subr.mxu0 0.0
    %1692 = vmatpush1.msra.mxu0 0.0
    %1693 = vmatprep.subr.mxu0 0.0
    %1694 = vmatpush1.msra.mxu0 0.0
    %1695 = vmatprep.subr.mxu0 0.0
    %1696 = vmatpush1.msra.mxu0 0.0
    %1697 = vmatprep.mubr.f32.mxu0 0.0
    %1698 = vmatmul.mubr.f32.gmra.mrb[0].mxu0 %v1631
    %v1699 = vpop.f32.mrb[0].mxu0
    %v1700 = vadd.f32 0.0, %v1699
    %v1701 = vpop.f32.mrb[0].mxu0
    %1702 = vdwg.mxu0
    %v1704 = vsel %vm316, %v1700, 0
    %1706 = vmatprep.subr.mxu0 0.0
    %1707 = vmatpush1.msra.mxu0 %v1367
    %1708 = vmatprep.subr.mxu0 0.0
    %1709 = vmatpush1.msra.mxu0 %v1368
    %1710 = vmatprep.subr.mxu0 0.0
    %1711 = vmatpush1.msra.mxu0 0.0
    %1712 = vmatprep.subr.mxu0 0.0
    %1713 = vmatpush1.msra.mxu0 0.0
    %1714 = vmatprep.subr.mxu0 0.0
    %1715 = vmatpush1.msra.mxu0 0.0
    %1716 = vmatprep.subr.mxu0 0.0
    %1717 = vmatpush1.msra.mxu0 0.0
    %1718 = vmatprep.subr.mxu0 0.0
    %1719 = vmatpush1.msra.mxu0 0.0
    %1720 = vmatprep.subr.mxu0 0.0
    %1721 = vmatpush1.msra.mxu0 0.0
    %1722 = vmatprep.subr.mxu0 0.0
    %1723 = vmatpush1.msra.mxu0 0.0
    %1724 = vmatprep.subr.mxu0 0.0
    %1725 = vmatpush1.msra.mxu0 0.0
    %1726 = vmatprep.subr.mxu0 0.0
    %1727 = vmatpush1.msra.mxu0 0.0
    %1728 = vmatprep.subr.mxu0 0.0
    %1729 = vmatpush1.msra.mxu0 0.0
    %1730 = vmatprep.subr.mxu0 0.0
    %1731 = vmatpush1.msra.mxu0 0.0
    %1732 = vmatprep.subr.mxu0 0.0
    %1733 = vmatpush1.msra.mxu0 0.0
    %1734 = vmatprep.subr.mxu0 0.0
    %1735 = vmatpush1.msra.mxu0 0.0
    %1736 = vmatprep.subr.mxu0 0.0
    %1737 = vmatpush1.msra.mxu0 0.0
    %1738 = vmatprep.subr.mxu0 0.0
    %1739 = vmatpush1.msra.mxu0 0.0
    %1740 = vmatprep.subr.mxu0 0.0
    %1741 = vmatpush1.msra.mxu0 0.0
    %1742 = vmatprep.subr.mxu0 0.0
    %1743 = vmatpush1.msra.mxu0 0.0
    %1744 = vmatprep.subr.mxu0 0.0
    %1745 = vmatpush1.msra.mxu0 0.0
    %1746 = vmatprep.subr.mxu0 0.0
    %1747 = vmatpush1.msra.mxu0 0.0
    %1748 = vmatprep.subr.mxu0 0.0
    %1749 = vmatpush1.msra.mxu0 0.0
    %1750 = vmatprep.subr.mxu0 0.0
    %1751 = vmatpush1.msra.mxu0 0.0
    %1752 = vmatprep.subr.mxu0 0.0
    %1753 = vmatpush1.msra.mxu0 0.0
    %1754 = vmatprep.subr.mxu0 0.0
    %1755 = vmatpush1.msra.mxu0 0.0
    %1756 = vmatprep.subr.mxu0 0.0
    %1757 = vmatpush1.msra.mxu0 0.0
    %1758 = vmatprep.subr.mxu0 0.0
    %1759 = vmatpush1.msra.mxu0 0.0
    %1760 = vmatprep.subr.mxu0 0.0
    %1761 = vmatpush1.msra.mxu0 0.0
    %1762 = vmatprep.subr.mxu0 0.0
    %1763 = vmatpush1.msra.mxu0 0.0
    %1764 = vmatprep.subr.mxu0 0.0
    %1765 = vmatpush1.msra.mxu0 0.0
    %1766 = vmatprep.subr.mxu0 0.0
    %1767 = vmatpush1.msra.mxu0 0.0
    %1768 = vmatprep.subr.mxu0 0.0
    %1769 = vmatpush1.msra.mxu0 0.0
    %1770 = vmatprep.mubr.f32.mxu0 0.0
    %1771 = vmatmul.mubr.f32.gmra.mrb[0].mxu0 %v1704
    %v1772 = vpop.f32.mrb[0].mxu0
    %v1773 = vadd.f32 0.0, %v1772
    %v1774 = vpop.f32.mrb[0].mxu0
    %1775 = vdwg.mxu0
    %v1777 = vsel %vm316, %v1533, 0
    %1779 = vmatprep.subr.mxu0 0.0
    %1780 = vmatpush1.msra.mxu0 %v1365
    %1781 = vmatprep.subr.mxu0 0.0
    %1782 = vmatpush1.msra.mxu0 %v1366
    %1783 = vmatprep.subr.mxu0 0.0
    %1784 = vmatpush1.msra.mxu0 0.0
    %1785 = vmatprep.subr.mxu0 0.0
    %1786 = vmatpush1.msra.mxu0 0.0
    %1787 = vmatprep.subr.mxu0 0.0
    %1788 = vmatpush1.msra.mxu0 0.0
    %1789 = vmatprep.subr.mxu0 0.0
    %1790 = vmatpush1.msra.mxu0 0.0
    %1791 = vmatprep.subr.mxu0 0.0
    %1792 = vmatpush1.msra.mxu0 0.0
    %1793 = vmatprep.subr.mxu0 0.0
    %1794 = vmatpush1.msra.mxu0 0.0
    %1795 = vmatprep.subr.mxu0 0.0
    %1796 = vmatpush1.msra.mxu0 0.0
    %1797 = vmatprep.subr.mxu0 0.0
    %1798 = vmatpush1.msra.mxu0 0.0
    %1799 = vmatprep.subr.mxu0 0.0
    %1800 = vmatpush1.msra.mxu0 0.0
    %1801 = vmatprep.subr.mxu0 0.0
    %1802 = vmatpush1.msra.mxu0 0.0
    %1803 = vmatprep.subr.mxu0 0.0
    %1804 = vmatpush1.msra.mxu0 0.0
    %1805 = vmatprep.subr.mxu0 0.0
    %1806 = vmatpush1.msra.mxu0 0.0
    %1807 = vmatprep.subr.mxu0 0.0
    %1808 = vmatpush1.msra.mxu0 0.0
    %1809 = vmatprep.subr.mxu0 0.0
    %1810 = vmatpush1.msra.mxu0 0.0
    %1811 = vmatprep.subr.mxu0 0.0
    %1812 = vmatpush1.msra.mxu0 0.0
    %1813 = vmatprep.subr.mxu0 0.0
    %1814 = vmatpush1.msra.mxu0 0.0
    %1815 = vmatprep.subr.mxu0 0.0
    %1816 = vmatpush1.msra.mxu0 0.0
    %1817 = vmatprep.subr.mxu0 0.0
    %1818 = vmatpush1.msra.mxu0 0.0
    %1819 = vmatprep.subr.mxu0 0.0
    %1820 = vmatpush1.msra.mxu0 0.0
    %1821 = vmatprep.subr.mxu0 0.0
    %1822 = vmatpush1.msra.mxu0 0.0
    %1823 = vmatprep.subr.mxu0 0.0
    %1824 = vmatpush1.msra.mxu0 0.0
    %1825 = vmatprep.subr.mxu0 0.0
    %1826 = vmatpush1.msra.mxu0 0.0
    %1827 = vmatprep.subr.mxu0 0.0
    %1828 = vmatpush1.msra.mxu0 0.0
    %1829 = vmatprep.subr.mxu0 0.0
    %1830 = vmatpush1.msra.mxu0 0.0
    %1831 = vmatprep.subr.mxu0 0.0
    %1832 = vmatpush1.msra.mxu0 0.0
    %1833 = vmatprep.subr.mxu0 0.0
    %1834 = vmatpush1.msra.mxu0 0.0
    %1835 = vmatprep.subr.mxu0 0.0
    %1836 = vmatpush1.msra.mxu0 0.0
    %1837 = vmatprep.subr.mxu0 0.0
    %1838 = vmatpush1.msra.mxu0 0.0
    %1839 = vmatprep.subr.mxu0 0.0
    %1840 = vmatpush1.msra.mxu0 0.0
    %1841 = vmatprep.subr.mxu0 0.0
    %1842 = vmatpush1.msra.mxu0 0.0
    %1843 = vmatprep.mubr.f32.mxu0 0.0
    %1844 = vmatmul.mubr.f32.gmra.mrb[0].mxu0 %v1777
    %v1845 = vpop.f32.mrb[0].mxu0
    %v1846 = vadd.f32 %v1773, %v1845
    %v1847 = vpop.f32.mrb[0].mxu0
    %1848 = vdwg.mxu0
    %v1849 = vld [vmem:[#allocation7 + $0x1e8] sm:$0x1]
    %v1850 = vlaneseq
    %v1851 = vshrl.u32 %v1850, 7
    %v1852 = vsub.s32 0, %v1851
    %v1853 = vrot.slane %v1849, %v1852
    %v1854 = vadd.f32 %v1846, %v1853
    %v1855 = vadd.f32 %v1854, %v1282
    %v1856 = vld [vmem:[#allocation7 + $0x1f0] sm:$0x3]
    %v1857 = vsel %vm176, %v1855, 0.0
    %1858 = vadd.xlane.f32.xlu0 %v1857
    %v1859 = vpop.xlane.xlu0 %1858
    %v1860 = vmul.f32 %v1859, %v183
    %v1861 = vsub.f32 %v1855, %v1860
    %v1862 = vmul.f32 %v1861, %v1861
    %v1863 = vsel %vm176, %v1862, 0.0
    %1864 = vadd.xlane.f32.xlu0 %v1863
    %v1865 = vpop.xlane.xlu0 %1864
    %v1866 = vmul.f32 %v1865, %v183
    %v1867 = vadd.f32 %v1866, 1e-12
    %v1868 = vrsqrt.pop %v1867
    %v1869 = vmul.f32 %v1861, %v1868
    %v1870 = vlaneseq
    %v1871 = vshrl.u32 %v1870, 7
    %v1872 = vsub.s32 0, %v1871
    %v1873 = vrot.slane %v1856, %v1872
    %v1874 = vmul.f32 %v1869, %v1873
    %v1875 = vlaneseq
    %v1876 = vshrl.u32 %v1875, 7
    %v1877 = vsub.s32 1, %v1876
    %v1878 = vrot.slane %v1856, %v1877
    %v1879 = vadd.f32 %v1874, %v1878
    %v1880 = vld [vmem:[#allocation7 + $0x1f8] sm:$0xff]
    %v1881 = vld [vmem:[#allocation7 + $0x200] sm:$0xff]
    %v1882 = vld [vmem:[#allocation7 + $0x208] sm:$0xff]
    %v1883 = vld [vmem:[#allocation7 + $0x210] sm:$0xff]
    %v1884 = vld [vmem:[#allocation7 + $0x218] sm:$0x1]
    %v1885 = vlaneseq
    %v1886 = vshrl.u32 %v1885, 7
    %v1887 = vsub.s32 0, %v1886
    %v1888 = vrot.slane %v1884, %v1887
    %v1890 = vsel %vm176, %v1879, 0
    %1892 = vmatprep.subr.mxu0 0.0
    %1893 = vmatpush1.msra.mxu0 %v1880
    %1894 = vmatprep.subr.mxu0 0.0
    %1895 = vmatpush1.msra.mxu0 %v1881
    %1896 = vmatprep.subr.mxu0 0.0
    %1897 = vmatpush1.msra.mxu0 %v1882
    %1898 = vmatprep.subr.mxu0 0.0
    %1899 = vmatpush1.msra.mxu0 %v1883
    %1900 = vmatprep.subr.mxu0 0.0
    %1901 = vmatpush1.msra.mxu0 0.0
    %1902 = vmatprep.subr.mxu0 0.0
    %1903 = vmatpush1.msra.mxu0 0.0
    %1904 = vmatprep.subr.mxu0 0.0
    %1905 = vmatpush1.msra.mxu0 0.0
    %1906 = vmatprep.subr.mxu0 0.0
    %1907 = vmatpush1.msra.mxu0 0.0
    %1908 = vmatprep.subr.mxu0 0.0
    %1909 = vmatpush1.msra.mxu0 0.0
    %1910 = vmatprep.subr.mxu0 0.0
    %1911 = vmatpush1.msra.mxu0 0.0
    %1912 = vmatprep.subr.mxu0 0.0
    %1913 = vmatpush1.msra.mxu0 0.0
    %1914 = vmatprep.subr.mxu0 0.0
    %1915 = vmatpush1.msra.mxu0 0.0
    %1916 = vmatprep.subr.mxu0 0.0
    %1917 = vmatpush1.msra.mxu0 0.0
    %1918 = vmatprep.subr.mxu0 0.0
    %1919 = vmatpush1.msra.mxu0 0.0
    %1920 = vmatprep.subr.mxu0 0.0
    %1921 = vmatpush1.msra.mxu0 0.0
    %1922 = vmatprep.subr.mxu0 0.0
    %1923 = vmatpush1.msra.mxu0 0.0
    %1924 = vmatprep.subr.mxu0 0.0
    %1925 = vmatpush1.msra.mxu0 0.0
    %1926 = vmatprep.subr.mxu0 0.0
    %1927 = vmatpush1.msra.mxu0 0.0
    %1928 = vmatprep.subr.mxu0 0.0
    %1929 = vmatpush1.msra.mxu0 0.0
    %1930 = vmatprep.subr.mxu0 0.0
    %1931 = vmatpush1.msra.mxu0 0.0
    %1932 = vmatprep.subr.mxu0 0.0
    %1933 = vmatpush1.msra.mxu0 0.0
    %1934 = vmatprep.subr.mxu0 0.0
    %1935 = vmatpush1.msra.mxu0 0.0
    %1936 = vmatprep.subr.mxu0 0.0
    %1937 = vmatpush1.msra.mxu0 0.0
    %1938 = vmatprep.subr.mxu0 0.0
    %1939 = vmatpush1.msra.mxu0 0.0
    %1940 = vmatprep.subr.mxu0 0.0
    %1941 = vmatpush1.msra.mxu0 0.0
    %1942 = vmatprep.subr.mxu0 0.0
    %1943 = vmatpush1.msra.mxu0 0.0
    %1944 = vmatprep.subr.mxu0 0.0
    %1945 = vmatpush1.msra.mxu0 0.0
    %1946 = vmatprep.subr.mxu0 0.0
    %1947 = vmatpush1.msra.mxu0 0.0
    %1948 = vmatprep.subr.mxu0 0.0
    %1949 = vmatpush1.msra.mxu0 0.0
    %1950 = vmatprep.subr.mxu0 0.0
    %1951 = vmatpush1.msra.mxu0 0.0
    %1952 = vmatprep.subr.mxu0 0.0
    %1953 = vmatpush1.msra.mxu0 0.0
    %1954 = vmatprep.subr.mxu0 0.0
    %1955 = vmatpush1.msra.mxu0 0.0
    %1956 = vmatprep.mubr.f32.mxu0 0.0
    %1957 = vmatmul.mubr.f32.gmra.mrb[0].mxu0 %v1890
    %v1958 = vpop.f32.mrb[0].mxu0
    %v1959 = vadd.f32 %v1888, %v1958
    %v1960 = vpop.f32.mrb[0].mxu0
    %1961 = vdwg.mxu0
    %v1962 = vld [vmem:[#allocation7 + $0x220] sm:$0xff]
    %v1963 = vld [vmem:[#allocation7 + $0x228] sm:$0xff]
    %v1964 = vld [vmem:[#allocation7 + $0x230] sm:$0xff]
    %v1965 = vld [vmem:[#allocation7 + $0x238] sm:$0xff]
    %v1966 = vld [vmem:[#allocation7 + $0x240] sm:$0x1]
    %v1967 = vlaneseq
    %v1968 = vshrl.u32 %v1967, 7
    %v1969 = vsub.s32 0, %v1968
    %v1970 = vrot.slane %v1966, %v1969
    %v1972 = vsel %vm176, %v1168, 0
    %v1975 = vsel %vm176, %v1169, 0
    %1977 = vmatprep.subr.mxu0 0.0
    %1978 = vmatpush1.msra.mxu0 %v1962
    %1979 = vmatprep.subr.mxu0 0.0
    %1980 = vmatpush1.msra.mxu0 %v1963
    %1981 = vmatprep.subr.mxu0 0.0
    %1982 = vmatpush1.msra.mxu0 %v1964
    %1983 = vmatprep.subr.mxu0 0.0
    %1984 = vmatpush1.msra.mxu0 %v1965
    %1985 = vmatprep.subr.mxu0 0.0
    %1986 = vmatpush1.msra.mxu0 0.0
    %1987 = vmatprep.subr.mxu0 0.0
    %1988 = vmatpush1.msra.mxu0 0.0
    %1989 = vmatprep.subr.mxu0 0.0
    %1990 = vmatpush1.msra.mxu0 0.0
    %1991 = vmatprep.subr.mxu0 0.0
    %1992 = vmatpush1.msra.mxu0 0.0
    %1993 = vmatprep.subr.mxu0 0.0
    %1994 = vmatpush1.msra.mxu0 0.0
    %1995 = vmatprep.subr.mxu0 0.0
    %1996 = vmatpush1.msra.mxu0 0.0
    %1997 = vmatprep.subr.mxu0 0.0
    %1998 = vmatpush1.msra.mxu0 0.0
    %1999 = vmatprep.subr.mxu0 0.0
    %2000 = vmatpush1.msra.mxu0 0.0
    %2001 = vmatprep.subr.mxu0 0.0
    %2002 = vmatpush1.msra.mxu0 0.0
    %2003 = vmatprep.subr.mxu0 0.0
    %2004 = vmatpush1.msra.mxu0 0.0
    %2005 = vmatprep.subr.mxu0 0.0
    %2006 = vmatpush1.msra.mxu0 0.0
    %2007 = vmatprep.subr.mxu0 0.0
    %2008 = vmatpush1.msra.mxu0 0.0
    %2009 = vmatprep.subr.mxu0 0.0
    %2010 = vmatpush1.msra.mxu0 0.0
    %2011 = vmatprep.subr.mxu0 0.0
    %2012 = vmatpush1.msra.mxu0 0.0
    %2013 = vmatprep.subr.mxu0 0.0
    %2014 = vmatpush1.msra.mxu0 0.0
    %2015 = vmatprep.subr.mxu0 0.0
    %2016 = vmatpush1.msra.mxu0 0.0
    %2017 = vmatprep.subr.mxu0 0.0
    %2018 = vmatpush1.msra.mxu0 0.0
    %2019 = vmatprep.subr.mxu0 0.0
    %2020 = vmatpush1.msra.mxu0 0.0
    %2021 = vmatprep.subr.mxu0 0.0
    %2022 = vmatpush1.msra.mxu0 0.0
    %2023 = vmatprep.subr.mxu0 0.0
    %2024 = vmatpush1.msra.mxu0 0.0
    %2025 = vmatprep.subr.mxu0 0.0
    %2026 = vmatpush1.msra.mxu0 0.0
    %2027 = vmatprep.subr.mxu0 0.0
    %2028 = vmatpush1.msra.mxu0 0.0
    %2029 = vmatprep.subr.mxu0 0.0
    %2030 = vmatpush1.msra.mxu0 0.0
    %2031 = vmatprep.subr.mxu0 0.0
    %2032 = vmatpush1.msra.mxu0 0.0
    %2033 = vmatprep.subr.mxu0 0.0
    %2034 = vmatpush1.msra.mxu0 0.0
    %2035 = vmatprep.subr.mxu0 0.0
    %2036 = vmatpush1.msra.mxu0 0.0
    %2037 = vmatprep.subr.mxu0 0.0
    %2038 = vmatpush1.msra.mxu0 0.0
    %2039 = vmatprep.subr.mxu0 0.0
    %2040 = vmatpush1.msra.mxu0 0.0
    %2041 = vmatprep.mubr.f32.mxu0 0.0
    %2042 = vmatmul.mubr.f32.gmra.mrb[0].mxu0 %v1972
    %v2043 = vpop.f32.mrb[0].mxu0
    %v2044 = vadd.f32 %v1970, %v2043
    %v2045 = vpop.f32.mrb[0].mxu0
    %2046 = vmatprep.mubr.f32.mxu0 0.0
    %2047 = vmatmul.mubr.f32.gmra.mrb[0].mxu0 %v1975
    %v2048 = vpop.f32.mrb[0].mxu0
    %v2049 = vadd.f32 %v1970, %v2048
    %v2050 = vpop.f32.mrb[0].mxu0
    %2051 = vdwg.mxu0
    %v2052 = vld [vmem:[#allocation7 + $0x248] sm:$0xff]
    %v2053 = vld [vmem:[#allocation7 + $0x250] sm:$0xff]
    %v2054 = vld [vmem:[#allocation7 + $0x258] sm:$0xff]
    %v2055 = vld [vmem:[#allocation7 + $0x260] sm:$0xff]
    %v2057 = vsel %vm316, %v1959, 0
    %v2060 = vsel %vm316, %v2044, 0
    %v2063 = vsel %vm316, %v2049, 0
    %2065 = vmatprep.subr.mxu0 0.0
    %2066 = vmatpush1.xpose.msra.mxu0 %v2060
    %2067 = vmatprep.subr.mxu0 0.0
    %2068 = vmatpush1.xpose.msra.mxu0 %v2063
    %2069 = vmatprep.subr.mxu0 0.0
    %2070 = vmatpush1.xpose.msra.mxu0 0.0
    %2071 = vmatprep.subr.mxu0 0.0
    %2072 = vmatpush1.xpose.msra.mxu0 0.0
    %2073 = vmatprep.subr.mxu0 0.0
    %2074 = vmatpush1.xpose.msra.mxu0 0.0
    %2075 = vmatprep.subr.mxu0 0.0
    %2076 = vmatpush1.xpose.msra.mxu0 0.0
    %2077 = vmatprep.subr.mxu0 0.0
    %2078 = vmatpush1.xpose.msra.mxu0 0.0
    %2079 = vmatprep.subr.mxu0 0.0
    %2080 = vmatpush1.xpose.msra.mxu0 0.0
    %2081 = vmatprep.subr.mxu0 0.0
    %2082 = vmatpush1.xpose.msra.mxu0 0.0
    %2083 = vmatprep.subr.mxu0 0.0
    %2084 = vmatpush1.xpose.msra.mxu0 0.0
    %2085 = vmatprep.subr.mxu0 0.0
    %2086 = vmatpush1.xpose.msra.mxu0 0.0
    %2087 = vmatprep.subr.mxu0 0.0
    %2088 = vmatpush1.xpose.msra.mxu0 0.0
    %2089 = vmatprep.subr.mxu0 0.0
    %2090 = vmatpush1.xpose.msra.mxu0 0.0
    %2091 = vmatprep.subr.mxu0 0.0
    %2092 = vmatpush1.xpose.msra.mxu0 0.0
    %2093 = vmatprep.subr.mxu0 0.0
    %2094 = vmatpush1.xpose.msra.mxu0 0.0
    %2095 = vmatprep.subr.mxu0 0.0
    %2096 = vmatpush1.xpose.msra.mxu0 0.0
    %2097 = vmatprep.subr.mxu0 0.0
    %2098 = vmatpush1.xpose.msra.mxu0 0.0
    %2099 = vmatprep.subr.mxu0 0.0
    %2100 = vmatpush1.xpose.msra.mxu0 0.0
    %2101 = vmatprep.subr.mxu0 0.0
    %2102 = vmatpush1.xpose.msra.mxu0 0.0
    %2103 = vmatprep.subr.mxu0 0.0
    %2104 = vmatpush1.xpose.msra.mxu0 0.0
    %2105 = vmatprep.subr.mxu0 0.0
    %2106 = vmatpush1.xpose.msra.mxu0 0.0
    %2107 = vmatprep.subr.mxu0 0.0
    %2108 = vmatpush1.xpose.msra.mxu0 0.0
    %2109 = vmatprep.subr.mxu0 0.0
    %2110 = vmatpush1.xpose.msra.mxu0 0.0
    %2111 = vmatprep.subr.mxu0 0.0
    %2112 = vmatpush1.xpose.msra.mxu0 0.0
    %2113 = vmatprep.subr.mxu0 0.0
    %2114 = vmatpush1.xpose.msra.mxu0 0.0
    %2115 = vmatprep.subr.mxu0 0.0
    %2116 = vmatpush1.xpose.msra.mxu0 0.0
    %2117 = vmatprep.subr.mxu0 0.0
    %2118 = vmatpush1.xpose.msra.mxu0 0.0
    %2119 = vmatprep.subr.mxu0 0.0
    %2120 = vmatpush1.xpose.msra.mxu0 0.0
    %2121 = vmatprep.subr.mxu0 0.0
    %2122 = vmatpush1.xpose.msra.mxu0 0.0
    %2123 = vmatprep.subr.mxu0 0.0
    %2124 = vmatpush1.xpose.msra.mxu0 0.0
    %2125 = vmatprep.subr.mxu0 0.0
    %2126 = vmatpush1.xpose.msra.mxu0 0.0
    %2127 = vmatprep.subr.mxu0 0.0
    %2128 = vmatpush1.xpose.msra.mxu0 0.0
    %2129 = vmatprep.mubr.f32.mxu0 0.0
    %2130 = vmatmul.mubr.f32.gmra.mrb[0].mxu0 %v2057
    %v2131 = vpop.f32.mrb[0].mxu0
    %v2132 = vadd.f32 0.0, %v2131
    %v2133 = vpop.f32.mrb[0].mxu0
    %2134 = vdwg.mxu0
    %v2135 = vmul.f32 %v2132, 0.25
    %v2136 = vadd.f32 %v2135, %v64
    %v2137 = vsel %vm316, %v2136, -inf
    %2138 = vmax.xlane.f32.xlu0 %v2137
    %v2139 = vpop.xlane.xlu0 %2138
    %v2140 = vsub.f32 %v2136, %v2139
    %v2141 = vmul.f32 %v2140, 1.442695
    %v2142 = vpow.pop %v2141
    %v2143 = vsel %vm316, %v2142, 0.0
    %2144 = vadd.xlane.f32.xlu0 %v2143
    %v2145 = vpop.xlane.xlu0 %2144
    %v2146 = vrcp.pop %v2145
    %v2147 = vmul.f32 %v2142, %v2146
    %2148 = vrot.lane.b32.xlu0 %v2044, 96
    %v2149 = vpop.permute.xlu0 %2148
    %2150 = vrot.lane.b32.xlu0 %v2049, 96
    %v2151 = vpop.permute.xlu0 %2150
    %v2155 = vsel %vm316, %v2147, 0
    %2157 = vmatprep.subr.mxu0 0.0
    %2158 = vmatpush1.msra.mxu0 %v2149
    %2159 = vmatprep.subr.mxu0 0.0
    %2160 = vmatpush1.msra.mxu0 %v2151
    %2161 = vmatprep.subr.mxu0 0.0
    %2162 = vmatpush1.msra.mxu0 0.0
    %2163 = vmatprep.subr.mxu0 0.0
    %2164 = vmatpush1.msra.mxu0 0.0
    %2165 = vmatprep.subr.mxu0 0.0
    %2166 = vmatpush1.msra.mxu0 0.0
    %2167 = vmatprep.subr.mxu0 0.0
    %2168 = vmatpush1.msra.mxu0 0.0
    %2169 = vmatprep.subr.mxu0 0.0
    %2170 = vmatpush1.msra.mxu0 0.0
    %2171 = vmatprep.subr.mxu0 0.0
    %2172 = vmatpush1.msra.mxu0 0.0
    %2173 = vmatprep.subr.mxu0 0.0
    %2174 = vmatpush1.msra.mxu0 0.0
    %2175 = vmatprep.subr.mxu0 0.0
    %2176 = vmatpush1.msra.mxu0 0.0
    %2177 = vmatprep.subr.mxu0 0.0
    %2178 = vmatpush1.msra.mxu0 0.0
    %2179 = vmatprep.subr.mxu0 0.0
    %2180 = vmatpush1.msra.mxu0 0.0
    %2181 = vmatprep.subr.mxu0 0.0
    %2182 = vmatpush1.msra.mxu0 0.0
    %2183 = vmatprep.subr.mxu0 0.0
    %2184 = vmatpush1.msra.mxu0 0.0
    %2185 = vmatprep.subr.mxu0 0.0
    %2186 = vmatpush1.msra.mxu0 0.0
    %2187 = vmatprep.subr.mxu0 0.0
    %2188 = vmatpush1.msra.mxu0 0.0
    %2189 = vmatprep.subr.mxu0 0.0
    %2190 = vmatpush1.msra.mxu0 0.0
    %2191 = vmatprep.subr.mxu0 0.0
    %2192 = vmatpush1.msra.mxu0 0.0
    %2193 = vmatprep.subr.mxu0 0.0
    %2194 = vmatpush1.msra.mxu0 0.0
    %2195 = vmatprep.subr.mxu0 0.0
    %2196 = vmatpush1.msra.mxu0 0.0
    %2197 = vmatprep.subr.mxu0 0.0
    %2198 = vmatpush1.msra.mxu0 0.0
    %2199 = vmatprep.subr.mxu0 0.0
    %2200 = vmatpush1.msra.mxu0 0.0
    %2201 = vmatprep.subr.mxu0 0.0
    %2202 = vmatpush1.msra.mxu0 0.0
    %2203 = vmatprep.subr.mxu0 0.0
    %2204 = vmatpush1.msra.mxu0 0.0
    %2205 = vmatprep.subr.mxu0 0.0
    %2206 = vmatpush1.msra.mxu0 0.0
    %2207 = vmatprep.subr.mxu0 0.0
    %2208 = vmatpush1.msra.mxu0 0.0
    %2209 = vmatprep.subr.mxu0 0.0
    %2210 = vmatpush1.msra.mxu0 0.0
    %2211 = vmatprep.subr.mxu0 0.0
    %2212 = vmatpush1.msra.mxu0 0.0
    %2213 = vmatprep.subr.mxu0 0.0
    %2214 = vmatpush1.msra.mxu0 0.0
    %2215 = vmatprep.subr.mxu0 0.0
    %2216 = vmatpush1.msra.mxu0 0.0
    %2217 = vmatprep.subr.mxu0 0.0
    %2218 = vmatpush1.msra.mxu0 0.0
    %2219 = vmatprep.subr.mxu0 0.0
    %2220 = vmatpush1.msra.mxu0 0.0
    %2221 = vmatprep.mubr.f32.mxu0 0.0
    %2222 = vmatmul.mubr.f32.gmra.mrb[0].mxu0 %v2155
    %v2223 = vpop.f32.mrb[0].mxu0
    %v2224 = vadd.f32 0.0, %v2223
    %v2225 = vpop.f32.mrb[0].mxu0
    %2226 = vdwg.mxu0
    %2227 = vrot.lane.b32.xlu0 %v1959, 112
    %v2228 = vpop.permute.xlu0 %2227
    %2229 = vrot.lane.b32.xlu0 %v2044, 112
    %v2230 = vpop.permute.xlu0 %2229
    %2231 = vrot.lane.b32.xlu0 %v2049, 112
    %v2232 = vpop.permute.xlu0 %2231
    %v2233 = vsel %vm316, %v2228, 0
    %v2235 = vsel %vm316, %v2230, 0
    %v2237 = vsel %vm316, %v2232, 0
    %2239 = vmatprep.subr.mxu0 0.0
    %2240 = vmatpush1.xpose.msra.mxu0 %v2235
    %2241 = vmatprep.subr.mxu0 0.0
    %2242 = vmatpush1.xpose.msra.mxu0 %v2237
    %2243 = vmatprep.subr.mxu0 0.0
    %2244 = vmatpush1.xpose.msra.mxu0 0.0
    %2245 = vmatprep.subr.mxu0 0.0
    %2246 = vmatpush1.xpose.msra.mxu0 0.0
    %2247 = vmatprep.subr.mxu0 0.0
    %2248 = vmatpush1.xpose.msra.mxu0 0.0
    %2249 = vmatprep.subr.mxu0 0.0
    %2250 = vmatpush1.xpose.msra.mxu0 0.0
    %2251 = vmatprep.subr.mxu0 0.0
    %2252 = vmatpush1.xpose.msra.mxu0 0.0
    %2253 = vmatprep.subr.mxu0 0.0
    %2254 = vmatpush1.xpose.msra.mxu0 0.0
    %2255 = vmatprep.subr.mxu0 0.0
    %2256 = vmatpush1.xpose.msra.mxu0 0.0
    %2257 = vmatprep.subr.mxu0 0.0
    %2258 = vmatpush1.xpose.msra.mxu0 0.0
    %2259 = vmatprep.subr.mxu0 0.0
    %2260 = vmatpush1.xpose.msra.mxu0 0.0
    %2261 = vmatprep.subr.mxu0 0.0
    %2262 = vmatpush1.xpose.msra.mxu0 0.0
    %2263 = vmatprep.subr.mxu0 0.0
    %2264 = vmatpush1.xpose.msra.mxu0 0.0
    %2265 = vmatprep.subr.mxu0 0.0
    %2266 = vmatpush1.xpose.msra.mxu0 0.0
    %2267 = vmatprep.subr.mxu0 0.0
    %2268 = vmatpush1.xpose.msra.mxu0 0.0
    %2269 = vmatprep.subr.mxu0 0.0
    %2270 = vmatpush1.xpose.msra.mxu0 0.0
    %2271 = vmatprep.subr.mxu0 0.0
    %2272 = vmatpush1.xpose.msra.mxu0 0.0
    %2273 = vmatprep.subr.mxu0 0.0
    %2274 = vmatpush1.xpose.msra.mxu0 0.0
    %2275 = vmatprep.subr.mxu0 0.0
    %2276 = vmatpush1.xpose.msra.mxu0 0.0
    %2277 = vmatprep.subr.mxu0 0.0
    %2278 = vmatpush1.xpose.msra.mxu0 0.0
    %2279 = vmatprep.subr.mxu0 0.0
    %2280 = vmatpush1.xpose.msra.mxu0 0.0
    %2281 = vmatprep.subr.mxu0 0.0
    %2282 = vmatpush1.xpose.msra.mxu0 0.0
    %2283 = vmatprep.subr.mxu0 0.0
    %2284 = vmatpush1.xpose.msra.mxu0 0.0
    %2285 = vmatprep.subr.mxu0 0.0
    %2286 = vmatpush1.xpose.msra.mxu0 0.0
    %2287 = vmatprep.subr.mxu0 0.0
    %2288 = vmatpush1.xpose.msra.mxu0 0.0
    %2289 = vmatprep.subr.mxu0 0.0
    %2290 = vmatpush1.xpose.msra.mxu0 0.0
    %2291 = vmatprep.subr.mxu0 0.0
    %2292 = vmatpush1.xpose.msra.mxu0 0.0
    %2293 = vmatprep.subr.mxu0 0.0
    %2294 = vmatpush1.xpose.msra.mxu0 0.0
    %2295 = vmatprep.subr.mxu0 0.0
    %2296 = vmatpush1.xpose.msra.mxu0 0.0
    %2297 = vmatprep.subr.mxu0 0.0
    %2298 = vmatpush1.xpose.msra.mxu0 0.0
    %2299 = vmatprep.subr.mxu0 0.0
    %2300 = vmatpush1.xpose.msra.mxu0 0.0
    %2301 = vmatprep.subr.mxu0 0.0
    %2302 = vmatpush1.xpose.msra.mxu0 0.0
    %2303 = vmatprep.mubr.f32.mxu0 0.0
    %2304 = vmatmul.mubr.f32.gmra.mrb[0].mxu0 %v2233
    %v2305 = vpop.f32.mrb[0].mxu0
    %v2306 = vadd.f32 0.0, %v2305
    %v2307 = vpop.f32.mrb[0].mxu0
    %2308 = vdwg.mxu0
    %v2309 = vmul.f32 %v2306, 0.25
    %v2310 = vadd.f32 %v2309, %v64
    %v2311 = vsel %vm316, %v2310, -inf
    %2312 = vmax.xlane.f32.xlu0 %v2311
    %v2313 = vpop.xlane.xlu0 %2312
    %v2314 = vsub.f32 %v2310, %v2313
    %v2315 = vmul.f32 %v2314, 1.442695
    %v2316 = vpow.pop %v2315
    %v2317 = vsel %vm316, %v2316, 0.0
    %2318 = vadd.xlane.f32.xlu0 %v2317
    %v2319 = vpop.xlane.xlu0 %2318
    %v2320 = vrcp.pop %v2319
    %v2321 = vmul.f32 %v2316, %v2320
    %2322 = vrot.lane.b32.xlu0 %v2044, 80
    %v2323 = vpop.permute.xlu0 %2322
    %2324 = vrot.lane.b32.xlu0 %v2049, 80
    %v2325 = vpop.permute.xlu0 %2324
    %v2329 = vsel %vm316, %v2321, 0
    %2331 = vmatprep.subr.mxu0 0.0
    %2332 = vmatpush1.msra.mxu0 %v2323
    %2333 = vmatprep.subr.mxu0 0.0
    %2334 = vmatpush1.msra.mxu0 %v2325
    %2335 = vmatprep.subr.mxu0 0.0
    %2336 = vmatpush1.msra.mxu0 0.0
    %2337 = vmatprep.subr.mxu0 0.0
    %2338 = vmatpush1.msra.mxu0 0.0
    %2339 = vmatprep.subr.mxu0 0.0
    %2340 = vmatpush1.msra.mxu0 0.0
    %2341 = vmatprep.subr.mxu0 0.0
    %2342 = vmatpush1.msra.mxu0 0.0
    %2343 = vmatprep.subr.mxu0 0.0
    %2344 = vmatpush1.msra.mxu0 0.0
    %2345 = vmatprep.subr.mxu0 0.0
    %2346 = vmatpush1.msra.mxu0 0.0
    %2347 = vmatprep.subr.mxu0 0.0
    %2348 = vmatpush1.msra.mxu0 0.0
    %2349 = vmatprep.subr.mxu0 0.0
    %2350 = vmatpush1.msra.mxu0 0.0
    %2351 = vmatprep.subr.mxu0 0.0
    %2352 = vmatpush1.msra.mxu0 0.0
    %2353 = vmatprep.subr.mxu0 0.0
    %2354 = vmatpush1.msra.mxu0 0.0
    %2355 = vmatprep.subr.mxu0 0.0
    %2356 = vmatpush1.msra.mxu0 0.0
    %2357 = vmatprep.subr.mxu0 0.0
    %2358 = vmatpush1.msra.mxu0 0.0
    %2359 = vmatprep.subr.mxu0 0.0
    %2360 = vmatpush1.msra.mxu0 0.0
    %2361 = vmatprep.subr.mxu0 0.0
    %2362 = vmatpush1.msra.mxu0 0.0
    %2363 = vmatprep.subr.mxu0 0.0
    %2364 = vmatpush1.msra.mxu0 0.0
    %2365 = vmatprep.subr.mxu0 0.0
    %2366 = vmatpush1.msra.mxu0 0.0
    %2367 = vmatprep.subr.mxu0 0.0
    %2368 = vmatpush1.msra.mxu0 0.0
    %2369 = vmatprep.subr.mxu0 0.0
    %2370 = vmatpush1.msra.mxu0 0.0
    %2371 = vmatprep.subr.mxu0 0.0
    %2372 = vmatpush1.msra.mxu0 0.0
    %2373 = vmatprep.subr.mxu0 0.0
    %2374 = vmatpush1.msra.mxu0 0.0
    %2375 = vmatprep.subr.mxu0 0.0
    %2376 = vmatpush1.msra.mxu0 0.0
    %2377 = vmatprep.subr.mxu0 0.0
    %2378 = vmatpush1.msra.mxu0 0.0
    %2379 = vmatprep.subr.mxu0 0.0
    %2380 = vmatpush1.msra.mxu0 0.0
    %2381 = vmatprep.subr.mxu0 0.0
    %2382 = vmatpush1.msra.mxu0 0.0
    %2383 = vmatprep.subr.mxu0 0.0
    %2384 = vmatpush1.msra.mxu0 0.0
    %2385 = vmatprep.subr.mxu0 0.0
    %2386 = vmatpush1.msra.mxu0 0.0
    %2387 = vmatprep.subr.mxu0 0.0
    %2388 = vmatpush1.msra.mxu0 0.0
    %2389 = vmatprep.subr.mxu0 0.0
    %2390 = vmatpush1.msra.mxu0 0.0
    %2391 = vmatprep.subr.mxu0 0.0
    %2392 = vmatpush1.msra.mxu0 0.0
    %2393 = vmatprep.subr.mxu0 0.0
    %2394 = vmatpush1.msra.mxu0 0.0
    %2395 = vmatprep.mubr.f32.mxu0 0.0
    %2396 = vmatmul.mubr.f32.gmra.mrb[0].mxu0 %v2329
    %v2397 = vpop.f32.mrb[0].mxu0
    %v2398 = vadd.f32 0.0, %v2397
    %v2399 = vpop.f32.mrb[0].mxu0
    %2400 = vdwg.mxu0
    %v2402 = vsel %vm316, %v2398, 0
    %2404 = vmatprep.subr.mxu0 0.0
    %2405 = vmatpush1.msra.mxu0 %v2054
    %2406 = vmatprep.subr.mxu0 0.0
    %2407 = vmatpush1.msra.mxu0 %v2055
    %2408 = vmatprep.subr.mxu0 0.0
    %2409 = vmatpush1.msra.mxu0 0.0
    %2410 = vmatprep.subr.mxu0 0.0
    %2411 = vmatpush1.msra.mxu0 0.0
    %2412 = vmatprep.subr.mxu0 0.0
    %2413 = vmatpush1.msra.mxu0 0.0
    %2414 = vmatprep.subr.mxu0 0.0
    %2415 = vmatpush1.msra.mxu0 0.0
    %2416 = vmatprep.subr.mxu0 0.0
    %2417 = vmatpush1.msra.mxu0 0.0
    %2418 = vmatprep.subr.mxu0 0.0
    %2419 = vmatpush1.msra.mxu0 0.0
    %2420 = vmatprep.subr.mxu0 0.0
    %2421 = vmatpush1.msra.mxu0 0.0
    %2422 = vmatprep.subr.mxu0 0.0
    %2423 = vmatpush1.msra.mxu0 0.0
    %2424 = vmatprep.subr.mxu0 0.0
    %2425 = vmatpush1.msra.mxu0 0.0
    %2426 = vmatprep.subr.mxu0 0.0
    %2427 = vmatpush1.msra.mxu0 0.0
    %2428 = vmatprep.subr.mxu0 0.0
    %2429 = vmatpush1.msra.mxu0 0.0
    %2430 = vmatprep.subr.mxu0 0.0
    %2431 = vmatpush1.msra.mxu0 0.0
    %2432 = vmatprep.subr.mxu0 0.0
    %2433 = vmatpush1.msra.mxu0 0.0
    %2434 = vmatprep.subr.mxu0 0.0
    %2435 = vmatpush1.msra.mxu0 0.0
    %2436 = vmatprep.subr.mxu0 0.0
    %2437 = vmatpush1.msra.mxu0 0.0
    %2438 = vmatprep.subr.mxu0 0.0
    %2439 = vmatpush1.msra.mxu0 0.0
    %2440 = vmatprep.subr.mxu0 0.0
    %2441 = vmatpush1.msra.mxu0 0.0
    %2442 = vmatprep.subr.mxu0 0.0
    %2443 = vmatpush1.msra.mxu0 0.0
    %2444 = vmatprep.subr.mxu0 0.0
    %2445 = vmatpush1.msra.mxu0 0.0
    %2446 = vmatprep.subr.mxu0 0.0
    %2447 = vmatpush1.msra.mxu0 0.0
    %2448 = vmatprep.subr.mxu0 0.0
    %2449 = vmatpush1.msra.mxu0 0.0
    %2450 = vmatprep.subr.mxu0 0.0
    %2451 = vmatpush1.msra.mxu0 0.0
    %2452 = vmatprep.subr.mxu0 0.0
    %2453 = vmatpush1.msra.mxu0 0.0
    %2454 = vmatprep.subr.mxu0 0.0
    %2455 = vmatpush1.msra.mxu0 0.0
    %2456 = vmatprep.subr.mxu0 0.0
    %2457 = vmatpush1.msra.mxu0 0.0
    %2458 = vmatprep.subr.mxu0 0.0
    %2459 = vmatpush1.msra.mxu0 0.0
    %2460 = vmatprep.subr.mxu0 0.0
    %2461 = vmatpush1.msra.mxu0 0.0
    %2462 = vmatprep.subr.mxu0 0.0
    %2463 = vmatpush1.msra.mxu0 0.0
    %2464 = vmatprep.subr.mxu0 0.0
    %2465 = vmatpush1.msra.mxu0 0.0
    %2466 = vmatprep.subr.mxu0 0.0
    %2467 = vmatpush1.msra.mxu0 0.0
    %2468 = vmatprep.mubr.f32.mxu0 0.0
    %2469 = vmatmul.mubr.f32.gmra.mrb[0].mxu0 %v2402
    %v2470 = vpop.f32.mrb[0].mxu0
    %v2471 = vadd.f32 0.0, %v2470
    %v2472 = vpop.f32.mrb[0].mxu0
    %2473 = vdwg.mxu0
    %v2475 = vsel %vm316, %v2224, 0
    %2477 = vmatprep.subr.mxu0 0.0
    %2478 = vmatpush1.msra.mxu0 %v2052
    %2479 = vmatprep.subr.mxu0 0.0
    %2480 = vmatpush1.msra.mxu0 %v2053
    %2481 = vmatprep.subr.mxu0 0.0
    %2482 = vmatpush1.msra.mxu0 0.0
    %2483 = vmatprep.subr.mxu0 0.0
    %2484 = vmatpush1.msra.mxu0 0.0
    %2485 = vmatprep.subr.mxu0 0.0
    %2486 = vmatpush1.msra.mxu0 0.0
    %2487 = vmatprep.subr.mxu0 0.0
    %2488 = vmatpush1.msra.mxu0 0.0
    %2489 = vmatprep.subr.mxu0 0.0
    %2490 = vmatpush1.msra.mxu0 0.0
    %2491 = vmatprep.subr.mxu0 0.0
    %2492 = vmatpush1.msra.mxu0 0.0
    %2493 = vmatprep.subr.mxu0 0.0
    %2494 = vmatpush1.msra.mxu0 0.0
    %2495 = vmatprep.subr.mxu0 0.0
    %2496 = vmatpush1.msra.mxu0 0.0
    %2497 = vmatprep.subr.mxu0 0.0
    %2498 = vmatpush1.msra.mxu0 0.0
    %2499 = vmatprep.subr.mxu0 0.0
    %2500 = vmatpush1.msra.mxu0 0.0
    %2501 = vmatprep.subr.mxu0 0.0
    %2502 = vmatpush1.msra.mxu0 0.0
    %2503 = vmatprep.subr.mxu0 0.0
    %2504 = vmatpush1.msra.mxu0 0.0
    %2505 = vmatprep.subr.mxu0 0.0
    %2506 = vmatpush1.msra.mxu0 0.0
    %2507 = vmatprep.subr.mxu0 0.0
    %2508 = vmatpush1.msra.mxu0 0.0
    %2509 = vmatprep.subr.mxu0 0.0
    %2510 = vmatpush1.msra.mxu0 0.0
    %2511 = vmatprep.subr.mxu0 0.0
    %2512 = vmatpush1.msra.mxu0 0.0
    %2513 = vmatprep.subr.mxu0 0.0
    %2514 = vmatpush1.msra.mxu0 0.0
    %2515 = vmatprep.subr.mxu0 0.0
    %2516 = vmatpush1.msra.mxu0 0.0
    %2517 = vmatprep.subr.mxu0 0.0
    %2518 = vmatpush1.msra.mxu0 0.0
    %2519 = vmatprep.subr.mxu0 0.0
    %2520 = vmatpush1.msra.mxu0 0.0
    %2521 = vmatprep.subr.mxu0 0.0
    %2522 = vmatpush1.msra.mxu0 0.0
    %2523 = vmatprep.subr.mxu0 0.0
    %2524 = vmatpush1.msra.mxu0 0.0
    %2525 = vmatprep.subr.mxu0 0.0
    %2526 = vmatpush1.msra.mxu0 0.0
    %2527 = vmatprep.subr.mxu0 0.0
    %2528 = vmatpush1.msra.mxu0 0.0
    %2529 = vmatprep.subr.mxu0 0.0
    %2530 = vmatpush1.msra.mxu0 0.0
    %2531 = vmatprep.subr.mxu0 0.0
    %2532 = vmatpush1.msra.mxu0 0.0
    %2533 = vmatprep.subr.mxu0 0.0
    %2534 = vmatpush1.msra.mxu0 0.0
    %2535 = vmatprep.subr.mxu0 0.0
    %2536 = vmatpush1.msra.mxu0 0.0
    %2537 = vmatprep.subr.mxu0 0.0
    %2538 = vmatpush1.msra.mxu0 0.0
    %2539 = vmatprep.subr.mxu0 0.0
    %2540 = vmatpush1.msra.mxu0 0.0
    %2541 = vmatprep.mubr.f32.mxu0 0.0
    %2542 = vmatmul.mubr.f32.gmra.mrb[0].mxu0 %v2475
    %v2543 = vpop.f32.mrb[0].mxu0
    %v2544 = vadd.f32 %v2471, %v2543
    %v2545 = vpop.f32.mrb[0].mxu0
    %2546 = vdwg.mxu0
    %v2547 = vld [vmem:[#allocation7 + $0x268] sm:$0x1]
    %v2548 = vlaneseq
    %v2549 = vshrl.u32 %v2548, 7
    %v2550 = vsub.s32 0, %v2549
    %v2551 = vrot.slane %v2547, %v2550
    %v2552 = vadd.f32 %v2544, %v2551
    %v2553 = vadd.f32 %v2552, %v1879
    %v2554 = vld [vmem:[#allocation7 + $0x270] sm:$0x3]
    %v2555 = vsel %vm176, %v2553, 0.0
    %2556 = vadd.xlane.f32.xlu0 %v2555
    %v2557 = vpop.xlane.xlu0 %2556
    %v2558 = vmul.f32 %v2557, %v183
    %v2559 = vsub.f32 %v2553, %v2558
    %v2560 = vmul.f32 %v2559, %v2559
    %v2561 = vsel %vm176, %v2560, 0.0
    %2562 = vadd.xlane.f32.xlu0 %v2561
    %v2563 = vpop.xlane.xlu0 %2562
    %v2564 = vmul.f32 %v2563, %v183
    %v2565 = vadd.f32 %v2564, 1e-12
    %v2566 = vrsqrt.pop %v2565
    %v2567 = vmul.f32 %v2559, %v2566
    %v2568 = vlaneseq
    %v2569 = vshrl.u32 %v2568, 7
    %v2570 = vsub.s32 0, %v2569
    %v2571 = vrot.slane %v2554, %v2570
    %v2572 = vmul.f32 %v2567, %v2571
    %v2573 = vlaneseq
    %v2574 = vshrl.u32 %v2573, 7
    %v2575 = vsub.s32 1, %v2574
    %v2576 = vrot.slane %v2554, %v2575
    %v2577 = vadd.f32 %v2572, %v2576
    %v2578 = vld [vmem:[#allocation7 + $0x278] sm:$0xff]
    %v2579 = vld [vmem:[#allocation7 + $0x280] sm:$0xff]
    %v2580 = vld [vmem:[#allocation7 + $0x288] sm:$0xff]
    %v2581 = vld [vmem:[#allocation7 + $0x290] sm:$0xff]
    %v2582 = vld [vmem:[#allocation7 + $0x298] sm:$0x1]
    %v2583 = vlaneseq
    %v2584 = vshrl.u32 %v2583, 7
    %v2585 = vsub.s32 0, %v2584
    %v2586 = vrot.slane %v2582, %v2585
    %v2588 = vsel %vm176, %v2577, 0
    %2590 = vmatprep.subr.mxu0 0.0
    %2591 = vmatpush1.msra.mxu0 %v2578
    %2592 = vmatprep.subr.mxu0 0.0
    %2593 = vmatpush1.msra.mxu0 %v2579
    %2594 = vmatprep.subr.mxu0 0.0
    %2595 = vmatpush1.msra.mxu0 %v2580
    %2596 = vmatprep.subr.mxu0 0.0
    %2597 = vmatpush1.msra.mxu0 %v2581
    %2598 = vmatprep.subr.mxu0 0.0
    %2599 = vmatpush1.msra.mxu0 0.0
    %2600 = vmatprep.subr.mxu0 0.0
    %2601 = vmatpush1.msra.mxu0 0.0
    %2602 = vmatprep.subr.mxu0 0.0
    %2603 = vmatpush1.msra.mxu0 0.0
    %2604 = vmatprep.subr.mxu0 0.0
    %2605 = vmatpush1.msra.mxu0 0.0
    %2606 = vmatprep.subr.mxu0 0.0
    %2607 = vmatpush1.msra.mxu0 0.0
    %2608 = vmatprep.subr.mxu0 0.0
    %2609 = vmatpush1.msra.mxu0 0.0
    %2610 = vmatprep.subr.mxu0 0.0
    %2611 = vmatpush1.msra.mxu0 0.0
    %2612 = vmatprep.subr.mxu0 0.0
    %2613 = vmatpush1.msra.mxu0 0.0
    %2614 = vmatprep.subr.mxu0 0.0
    %2615 = vmatpush1.msra.mxu0 0.0
    %2616 = vmatprep.subr.mxu0 0.0
    %2617 = vmatpush1.msra.mxu0 0.0
    %2618 = vmatprep.subr.mxu0 0.0
    %2619 = vmatpush1.msra.mxu0 0.0
    %2620 = vmatprep.subr.mxu0 0.0
    %2621 = vmatpush1.msra.mxu0 0.0
    %2622 = vmatprep.subr.mxu0 0.0
    %2623 = vmatpush1.msra.mxu0 0.0
    %2624 = vmatprep.subr.mxu0 0.0
    %2625 = vmatpush1.msra.mxu0 0.0
    %2626 = vmatprep.subr.mxu0 0.0
    %2627 = vmatpush1.msra.mxu0 0.0
    %2628 = vmatprep.subr.mxu0 0.0
    %2629 = vmatpush1.msra.mxu0 0.0
    %2630 = vmatprep.subr.mxu0 0.0
    %2631 = vmatpush1.msra.mxu0 0.0
    %2632 = vmatprep.subr.mxu0 0.0
    %2633 = vmatpush1.msra.mxu0 0.0
    %2634 = vmatprep.subr.mxu0 0.0
    %2635 = vmatpush1.msra.mxu0 0.0
    %2636 = vmatprep.subr.mxu0 0.0
    %2637 = vmatpush1.msra.mxu0 0.0
    %2638 = vmatprep.subr.mxu0 0.0
    %2639 = vmatpush1.msra.mxu0 0.0
    %2640 = vmatprep.subr.mxu0 0.0
    %2641 = vmatpush1.msra.mxu0 0.0
    %2642 = vmatprep.subr.mxu0 0.0
    %2643 = vmatpush1.msra.mxu0 0.0
    %2644 = vmatprep.subr.mxu0 0.0
    %2645 = vmatpush1.msra.mxu0 0.0
    %2646 = vmatprep.subr.mxu0 0.0
    %2647 = vmatpush1.msra.mxu0 0.0
    %2648 = vmatprep.subr.mxu0 0.0
    %2649 = vmatpush1.msra.mxu0 0.0
    %2650 = vmatprep.subr.mxu0 0.0
    %2651 = vmatpush1.msra.mxu0 0.0
    %2652 = vmatprep.subr.mxu0 0.0
    %2653 = vmatpush1.msra.mxu0 0.0
    %2654 = vmatprep.mubr.f32.mxu0 0.0
    %2655 = vmatmul.mubr.f32.gmra.mrb[0].mxu0 %v2588
    %v2656 = vpop.f32.mrb[0].mxu0
    %v2657 = vadd.f32 %v2586, %v2656
    %v2658 = vpop.f32.mrb[0].mxu0
    %2659 = vdwg.mxu0
    %v2660 = vmul.f32 %v2657, %v2657
    %v2661 = vmul.f32 %v2657, %v2660
    %v2662 = vmul.f32 %v2661, 0.044715
    %v2663 = vadd.f32 %v2657, %v2662
    %v2664 = vmul.f32 %v2663, 0.7978846
    %v2665 = vtanh.pop %v2664
    %v2666 = vadd.f32 %v2665, 1.0
    %v2667 = vmul.f32 %v2666, 0.5
    %v2668 = vmul.f32 %v2657, %v2667
    %v2669 = vld [vmem:[#allocation7 + $0x2a0] sm:$0xff]
    %v2670 = vld [vmem:[#allocation7 + $0x2a8] sm:$0xff]
    %v2671 = vld [vmem:[#allocation7 + $0x2b0] sm:$0xff]
    %v2672 = vld [vmem:[#allocation7 + $0x2b8] sm:$0xff]
    %v2673 = vld [vmem:[#allocation7 + $0x2c0] sm:$0xff]
    %v2674 = vld [vmem:[#allocation7 + $0x2c8] sm:$0xff]
    %v2675 = vld [vmem:[#allocation7 + $0x2d0] sm:$0xff]
    %v2676 = vld [vmem:[#allocation7 + $0x2d8] sm:$0xff]
    %v2677 = vld [vmem:[#allocation7 + $0x2e0] sm:$0x1]
    %v2678 = vlaneseq
    %v2679 = vshrl.u32 %v2678, 7
    %v2680 = vsub.s32 0, %v2679
    %v2681 = vrot.slane %v2677, %v2680
    %v2683 = vsel %vm93, %v2668, 0
    %2685 = vmatprep.subr.mxu0 0.0
    %2686 = vmatpush1.msra.mxu0 %v2669
    %2687 = vmatprep.subr.mxu0 0.0
    %2688 = vmatpush1.msra.mxu0 %v2670
    %2689 = vmatprep.subr.mxu0 0.0
    %2690 = vmatpush1.msra.mxu0 %v2671
    %2691 = vmatprep.subr.mxu0 0.0
    %2692 = vmatpush1.msra.mxu0 %v2672
    %2693 = vmatprep.subr.mxu0 0.0
    %2694 = vmatpush1.msra.mxu0 %v2673
    %2695 = vmatprep.subr.mxu0 0.0
    %2696 = vmatpush1.msra.mxu0 %v2674
    %2697 = vmatprep.subr.mxu0 0.0
    %2698 = vmatpush1.msra.mxu0 %v2675
    %2699 = vmatprep.subr.mxu0 0.0
    %2700 = vmatpush1.msra.mxu0 %v2676
    %2701 = vmatprep.subr.mxu0 0.0
    %2702 = vmatpush1.msra.mxu0 0.0
    %2703 = vmatprep.subr.mxu0 0.0
    %2704 = vmatpush1.msra.mxu0 0.0
    %2705 = vmatprep.subr.mxu0 0.0
    %2706 = vmatpush1.msra.mxu0 0.0
    %2707 = vmatprep.subr.mxu0 0.0
    %2708 = vmatpush1.msra.mxu0 0.0
    %2709 = vmatprep.subr.mxu0 0.0
    %2710 = vmatpush1.msra.mxu0 0.0
    %2711 = vmatprep.subr.mxu0 0.0
    %2712 = vmatpush1.msra.mxu0 0.0
    %2713 = vmatprep.subr.mxu0 0.0
    %2714 = vmatpush1.msra.mxu0 0.0
    %2715 = vmatprep.subr.mxu0 0.0
    %2716 = vmatpush1.msra.mxu0 0.0
    %2717 = vmatprep.subr.mxu0 0.0
    %2718 = vmatpush1.msra.mxu0 0.0
    %2719 = vmatprep.subr.mxu0 0.0
    %2720 = vmatpush1.msra.mxu0 0.0
    %2721 = vmatprep.subr.mxu0 0.0
    %2722 = vmatpush1.msra.mxu0 0.0
    %2723 = vmatprep.subr.mxu0 0.0
    %2724 = vmatpush1.msra.mxu0 0.0
    %2725 = vmatprep.subr.mxu0 0.0
    %2726 = vmatpush1.msra.mxu0 0.0
    %2727 = vmatprep.subr.mxu0 0.0
    %2728 = vmatpush1.msra.mxu0 0.0
    %2729 = vmatprep.subr.mxu0 0.0
    %2730 = vmatpush1.msra.mxu0 0.0
    %2731 = vmatprep.subr.mxu0 0.0
    %2732 = vmatpush1.msra.mxu0 0.0
    %2733 = vmatprep.subr.mxu0 0.0
    %2734 = vmatpush1.msra.mxu0 0.0
    %2735 = vmatprep.subr.mxu0 0.0
    %2736 = vmatpush1.msra.mxu0 0.0
    %2737 = vmatprep.subr.mxu0 0.0
    %2738 = vmatpush1.msra.mxu0 0.0
    %2739 = vmatprep.subr.mxu0 0.0
    %2740 = vmatpush1.msra.mxu0 0.0
    %2741 = vmatprep.subr.mxu0 0.0
    %2742 = vmatpush1.msra.mxu0 0.0
    %2743 = vmatprep.subr.mxu0 0.0
    %2744 = vmatpush1.msra.mxu0 0.0
    %2745 = vmatprep.subr.mxu0 0.0
    %2746 = vmatpush1.msra.mxu0 0.0
    %2747 = vmatprep.subr.mxu0 0.0
    %2748 = vmatpush1.msra.mxu0 0.0
    %2749 = vmatprep.mubr.f32.mxu0 0.0
    %2750 = vmatmul.mubr.f32.gmra.mrb[0].mxu0 %v2683
    %v2751 = vpop.f32.mrb[0].mxu0
    %v2752 = vadd.f32 %v2681, %v2751
    %v2753 = vpop.f32.mrb[0].mxu0
    %2754 = vdwg.mxu0
    %v2755 = vadd.f32 %v2752, %v2577
    %v2756 = vld [vmem:[#allocation7 + $0x2e8] sm:$0x3]
    %v2757 = vsel %vm176, %v2755, 0.0
    %2758 = vadd.xlane.f32.xlu0 %v2757
    %v2759 = vpop.xlane.xlu0 %2758
    %v2760 = vmul.f32 %v2759, %v183
    %v2761 = vsub.f32 %v2755, %v2760
    %v2762 = vmul.f32 %v2761, %v2761
    %v2763 = vsel %vm176, %v2762, 0.0
    %2764 = vadd.xlane.f32.xlu0 %v2763
    %v2765 = vpop.xlane.xlu0 %2764
    %v2766 = vmul.f32 %v2765, %v183
    %v2767 = vadd.f32 %v2766, 1e-12
    %v2768 = vrsqrt.pop %v2767
    %v2769 = vmul.f32 %v2761, %v2768
    %v2770 = vlaneseq
    %v2771 = vshrl.u32 %v2770, 7
    %v2772 = vsub.s32 0, %v2771
    %v2773 = vrot.slane %v2756, %v2772
    %v2774 = vmul.f32 %v2769, %v2773
    %v2775 = vlaneseq
    %v2776 = vshrl.u32 %v2775, 7
    %v2777 = vsub.s32 1, %v2776
    %v2778 = vrot.slane %v2756, %v2777
    %v2779 = vadd.f32 %v2774, %v2778
    %2780 = vrot.lane.b32.xlu0 %v2147, 32
    %v2781 = vpop.permute.xlu0 %2780
    %v2783 = vsel %vm176, %v2779, %v2781
    %vm2784 = vcmask 392192
    %v2785 = vsel %vm2784, %v2783, 0.0
    %2786 = vst [vmem:[%s5] sm:$0xff] %v2785
    %s2787 = sld [smem:[#allocation2 + $0x1]]
    %v2788 = vstv %s2787
    %vm2789 = vcmp.lt.s32.totalorder %v60, %v2788
    %v2790 = vsel %vm2789, 0.0, -1e+09
    %s2791 = sld [smem:[#allocation5 + $0x1]]
    %v2792 = vstv %s2791
    %vm2793 = vcmp.lt.s32.totalorder %v60, %v2792
    %v2794 = vsel %vm2793, 0.0, -1e+09
    %v2795 = vld [vmem:[%s0 + $0x10] sm:$0xff]
    %v2796 = vld [vmem:[%s0 + $0x18] sm:$0xff]
    %2797 = vset.pattern.permute.xlu0 0
    %2798 = vperm.xlu0 %2797, %v2795
    %v2799 = vpop.permute.xlu0 %2798
    %2800 = vset.pattern.permute.xlu0 0
    %2801 = vperm.xlu0 %2800, %v2796
    %v2802 = vpop.permute.xlu0 %2801
    %vm2803 = vcmp.eq.s32.totalorder %v60, %v2799
    %vm2804 = vcmp.eq.s32.totalorder %v60, %v2802
    %v2805 = vsel %vm2803, 1, 0
    %v2806 = vsel %vm2804, 1, 0
    %v2807 = vcvt.s32.f32 %v2805
    %v2808 = vcvt.s32.f32 %v2806
    %v2810 = vsel %vm93, %v2807, 0
    %v2813 = vsel %vm93, %v2808, 0
    %2815 = vmatprep.subr.mxu0 0.0
    %2816 = vmatpush1.msra.mxu0 %v83
    %2817 = vmatprep.subr.mxu0 0.0
    %2818 = vmatpush1.msra.mxu0 %v84
    %2819 = vmatprep.subr.mxu0 0.0
    %2820 = vmatpush1.msra.mxu0 %v85
    %2821 = vmatprep.subr.mxu0 0.0
    %2822 = vmatpush1.msra.mxu0 %v86
    %2823 = vmatprep.subr.mxu0 0.0
    %2824 = vmatpush1.msra.mxu0 %v87
    %2825 = vmatprep.subr.mxu0 0.0
    %2826 = vmatpush1.msra.mxu0 %v88
    %2827 = vmatprep.subr.mxu0 0.0
    %2828 = vmatpush1.msra.mxu0 %v89
    %2829 = vmatprep.subr.mxu0 0.0
    %2830 = vmatpush1.msra.mxu0 %v90
    %2831 = vmatprep.subr.mxu0 0.0
    %2832 = vmatpush1.msra.mxu0 0.0
    %2833 = vmatprep.subr.mxu0 0.0
    %2834 = vmatpush1.msra.mxu0 0.0
    %2835 = vmatprep.subr.mxu0 0.0
    %2836 = vmatpush1.msra.mxu0 0.0
    %2837 = vmatprep.subr.mxu0 0.0
    %2838 = vmatpush1.msra.mxu0 0.0
    %2839 = vmatprep.subr.mxu0 0.0
    %2840 = vmatpush1.msra.mxu0 0.0
    %2841 = vmatprep.subr.mxu0 0.0
    %2842 = vmatpush1.msra.mxu0 0.0
    %2843 = vmatprep.subr.mxu0 0.0
    %2844 = vmatpush1.msra.mxu0 0.0
    %2845 = vmatprep.subr.mxu0 0.0
    %2846 = vmatpush1.msra.mxu0 0.0
    %2847 = vmatprep.subr.mxu0 0.0
    %2848 = vmatpush1.msra.mxu0 0.0
    %2849 = vmatprep.subr.mxu0 0.0
    %2850 = vmatpush1.msra.mxu0 0.0
    %2851 = vmatprep.subr.mxu0 0.0
    %2852 = vmatpush1.msra.mxu0 0.0
    %2853 = vmatprep.subr.mxu0 0.0
    %2854 = vmatpush1.msra.mxu0 0.0
    %2855 = vmatprep.subr.mxu0 0.0
    %2856 = vmatpush1.msra.mxu0 0.0
    %2857 = vmatprep.subr.mxu0 0.0
    %2858 = vmatpush1.msra.mxu0 0.0
    %2859 = vmatprep.subr.mxu0 0.0
    %2860 = vmatpush1.msra.mxu0 0.0
    %2861 = vmatprep.subr.mxu0 0.0
    %2862 = vmatpush1.msra.mxu0 0.0
    %2863 = vmatprep.subr.mxu0 0.0
    %2864 = vmatpush1.msra.mxu0 0.0
    %2865 = vmatprep.subr.mxu0 0.0
    %2866 = vmatpush1.msra.mxu0 0.0
    %2867 = vmatprep.subr.mxu0 0.0
    %2868 = vmatpush1.msra.mxu0 0.0
    %2869 = vmatprep.subr.mxu0 0.0
    %2870 = vmatpush1.msra.mxu0 0.0
    %2871 = vmatprep.subr.mxu0 0.0
    %2872 = vmatpush1.msra.mxu0 0.0
    %2873 = vmatprep.subr.mxu0 0.0
    %2874 = vmatpush1.msra.mxu0 0.0
    %2875 = vmatprep.subr.mxu0 0.0
    %2876 = vmatpush1.msra.mxu0 0.0
    %2877 = vmatprep.subr.mxu0 0.0
    %2878 = vmatpush1.msra.mxu0 0.0
    %2879 = vmatprep.mubr.f32.mxu0 0.0
    %2880 = vmatmul.mubr.f32.gmra.mrb[0].mxu0 %v2810
    %v2881 = vpop.f32.mrb[0].mxu0
    %v2882 = vadd.f32 %v91, %v2881
    %v2883 = vpop.f32.mrb[0].mxu0
    %2884 = vmatprep.mubr.f32.mxu0 0.0
    %2885 = vmatmul.mubr.f32.gmra.mrb[0].mxu0 %v2813
    %v2886 = vpop.f32.mrb[0].mxu0
    %v2887 = vadd.f32 %v92, %v2886
    %v2888 = vpop.f32.mrb[0].mxu0
    %2889 = vdwg.mxu0
    %v2890 = vsel %vm176, %v2882, 0.0
    %2891 = vadd.xlane.f32.xlu0 %v2890
    %v2892 = vpop.xlane.xlu0 %2891
    %v2893 = vsel %vm176, %v2887, 0.0
    %2894 = vadd.xlane.f32.xlu0 %v2893
    %v2895 = vpop.xlane.xlu0 %2894
    %v2896 = vmul.f32 %v2892, %v183
    %v2897 = vmul.f32 %v2895, %v183
    %v2898 = vsub.f32 %v2882, %v2896
    %v2899 = vsub.f32 %v2887, %v2897
    %v2900 = vmul.f32 %v2898, %v2898
    %v2901 = vmul.f32 %v2899, %v2899
    %v2902 = vsel %vm176, %v2900, 0.0
    %2903 = vadd.xlane.f32.xlu0 %v2902
    %v2904 = vpop.xlane.xlu0 %2903
    %v2905 = vsel %vm176, %v2901, 0.0
    %2906 = vadd.xlane.f32.xlu0 %v2905
    %v2907 = vpop.xlane.xlu0 %2906
    %v2908 = vmul.f32 %v2904, %v183
    %v2909 = vmul.f32 %v2907, %v183
    %v2910 = vadd.f32 %v2908, 1e-12
    %v2911 = vadd.f32 %v2909, 1e-12
    %v2912 = vrsqrt.pop %v2910
    %v2913 = vrsqrt.pop %v2911
    %v2914 = vmul.f32 %v2898, %v2912
    %v2915 = vmul.f32 %v2899, %v2913
    %v2916 = vmul.f32 %v2914, %v207
    %v2917 = vmul.f32 %v2915, %v207
    %v2918 = vadd.f32 %v2916, %v213
    %v2919 = vadd.f32 %v2917, %v213
    %v2921 = vsel %vm176, %v2918, 0
    %v2924 = vsel %vm176, %v2919, 0
    %2926 = vmatprep.subr.mxu0 0.0
    %2927 = vmatpush1.msra.mxu0 %v216
    %2928 = vmatprep.subr.mxu0 0.0
    %2929 = vmatpush1.msra.mxu0 %v217
    %2930 = vmatprep.subr.mxu0 0.0
    %2931 = vmatpush1.msra.mxu0 %v218
    %2932 = vmatprep.subr.mxu0 0.0
    %2933 = vmatpush1.msra.mxu0 %v219
    %2934 = vmatprep.subr.mxu0 0.0
    %2935 = vmatpush1.msra.mxu0 0.0
    %2936 = vmatprep.subr.mxu0 0.0
    %2937 = vmatpush1.msra.mxu0 0.0
    %2938 = vmatprep.subr.mxu0 0.0
    %2939 = vmatpush1.msra.mxu0 0.0
    %2940 = vmatprep.subr.mxu0 0.0
    %2941 = vmatpush1.msra.mxu0 0.0
    %2942 = vmatprep.subr.mxu0 0.0
    %2943 = vmatpush1.msra.mxu0 0.0
    %2944 = vmatprep.subr.mxu0 0.0
    %2945 = vmatpush1.msra.mxu0 0.0
    %2946 = vmatprep.subr.mxu0 0.0
    %2947 = vmatpush1.msra.mxu0 0.0
    %2948 = vmatprep.subr.mxu0 0.0
    %2949 = vmatpush1.msra.mxu0 0.0
    %2950 = vmatprep.subr.mxu0 0.0
    %2951 = vmatpush1.msra.mxu0 0.0
    %2952 = vmatprep.subr.mxu0 0.0
    %2953 = vmatpush1.msra.mxu0 0.0
    %2954 = vmatprep.subr.mxu0 0.0
    %2955 = vmatpush1.msra.mxu0 0.0
    %2956 = vmatprep.subr.mxu0 0.0
    %2957 = vmatpush1.msra.mxu0 0.0
    %2958 = vmatprep.subr.mxu0 0.0
    %2959 = vmatpush1.msra.mxu0 0.0
    %2960 = vmatprep.subr.mxu0 0.0
    %2961 = vmatpush1.msra.mxu0 0.0
    %2962 = vmatprep.subr.mxu0 0.0
    %2963 = vmatpush1.msra.mxu0 0.0
    %2964 = vmatprep.subr.mxu0 0.0
    %2965 = vmatpush1.msra.mxu0 0.0
    %2966 = vmatprep.subr.mxu0 0.0
    %2967 = vmatpush1.msra.mxu0 0.0
    %2968 = vmatprep.subr.mxu0 0.0
    %2969 = vmatpush1.msra.mxu0 0.0
    %2970 = vmatprep.subr.mxu0 0.0
    %2971 = vmatpush1.msra.mxu0 0.0
    %2972 = vmatprep.subr.mxu0 0.0
    %2973 = vmatpush1.msra.mxu0 0.0
    %2974 = vmatprep.subr.mxu0 0.0
    %2975 = vmatpush1.msra.mxu0 0.0
    %2976 = vmatprep.subr.mxu0 0.0
    %2977 = vmatpush1.msra.mxu0 0.0
    %2978 = vmatprep.subr.mxu0 0.0
    %2979 = vmatpush1.msra.mxu0 0.0
    %2980 = vmatprep.subr.mxu0 0.0
    %2981 = vmatpush1.msra.mxu0 0.0
    %2982 = vmatprep.subr.mxu0 0.0
    %2983 = vmatpush1.msra.mxu0 0.0
    %2984 = vmatprep.subr.mxu0 0.0
    %2985 = vmatpush1.msra.mxu0 0.0
    %2986 = vmatprep.subr.mxu0 0.0
    %2987 = vmatpush1.msra.mxu0 0.0
    %2988 = vmatprep.subr.mxu0 0.0
    %2989 = vmatpush1.msra.mxu0 0.0
    %2990 = vmatprep.mubr.f32.mxu0 0.0
    %2991 = vmatmul.mubr.f32.gmra.mrb[0].mxu0 %v2921
    %v2992 = vpop.f32.mrb[0].mxu0
    %v2993 = vadd.f32 %v224, %v2992
    %v2994 = vpop.f32.mrb[0].mxu0
    %2995 = vmatprep.mubr.f32.mxu0 0.0
    %2996 = vmatmul.mubr.f32.gmra.mrb[0].mxu0 %v2924
    %v2997 = vpop.f32.mrb[0].mxu0
    %v2998 = vadd.f32 %v224, %v2997
    %v2999 = vpop.f32.mrb[0].mxu0
    %3000 = vdwg.mxu0
    %3003 = vrot.lane.b32.xlu0 %v2993, 96
    %v3004 = vpop.permute.xlu0 %3003
    %3005 = vrot.lane.b32.xlu0 %v2998, 96
    %v3006 = vpop.permute.xlu0 %3005
    %v3007 = vsel %vm316, %v2993, 0
    %v3009 = vsel %vm316, %v2998, 0
    %v3011 = vsel %vm316, %v3004, 0
    %v3013 = vsel %vm316, %v3006, 0
    %3015 = vmatprep.subr.mxu0 0.0
    %3016 = vmatpush1.xpose.msra.mxu0 %v3011
    %3017 = vmatprep.subr.mxu0 0.0
    %3018 = vmatpush1.xpose.msra.mxu0 %v3013
    %3019 = vmatprep.subr.mxu0 0.0
    %3020 = vmatpush1.xpose.msra.mxu0 0.0
    %3021 = vmatprep.subr.mxu0 0.0
    %3022 = vmatpush1.xpose.msra.mxu0 0.0
    %3023 = vmatprep.subr.mxu0 0.0
    %3024 = vmatpush1.xpose.msra.mxu0 0.0
    %3025 = vmatprep.subr.mxu0 0.0
    %3026 = vmatpush1.xpose.msra.mxu0 0.0
    %3027 = vmatprep.subr.mxu0 0.0
    %3028 = vmatpush1.xpose.msra.mxu0 0.0
    %3029 = vmatprep.subr.mxu0 0.0
    %3030 = vmatpush1.xpose.msra.mxu0 0.0
    %3031 = vmatprep.subr.mxu0 0.0
    %3032 = vmatpush1.xpose.msra.mxu0 0.0
    %3033 = vmatprep.subr.mxu0 0.0
    %3034 = vmatpush1.xpose.msra.mxu0 0.0
    %3035 = vmatprep.subr.mxu0 0.0
    %3036 = vmatpush1.xpose.msra.mxu0 0.0
    %3037 = vmatprep.subr.mxu0 0.0
    %3038 = vmatpush1.xpose.msra.mxu0 0.0
    %3039 = vmatprep.subr.mxu0 0.0
    %3040 = vmatpush1.xpose.msra.mxu0 0.0
    %3041 = vmatprep.subr.mxu0 0.0
    %3042 = vmatpush1.xpose.msra.mxu0 0.0
    %3043 = vmatprep.subr.mxu0 0.0
    %3044 = vmatpush1.xpose.msra.mxu0 0.0
    %3045 = vmatprep.subr.mxu0 0.0
    %3046 = vmatpush1.xpose.msra.mxu0 0.0
    %3047 = vmatprep.subr.mxu0 0.0
    %3048 = vmatpush1.xpose.msra.mxu0 0.0
    %3049 = vmatprep.subr.mxu0 0.0
    %3050 = vmatpush1.xpose.msra.mxu0 0.0
    %3051 = vmatprep.subr.mxu0 0.0
    %3052 = vmatpush1.xpose.msra.mxu0 0.0
    %3053 = vmatprep.subr.mxu0 0.0
    %3054 = vmatpush1.xpose.msra.mxu0 0.0
    %3055 = vmatprep.subr.mxu0 0.0
    %3056 = vmatpush1.xpose.msra.mxu0 0.0
    %3057 = vmatprep.subr.mxu0 0.0
    %3058 = vmatpush1.xpose.msra.mxu0 0.0
    %3059 = vmatprep.subr.mxu0 0.0
    %3060 = vmatpush1.xpose.msra.mxu0 0.0
    %3061 = vmatprep.subr.mxu0 0.0
    %3062 = vmatpush1.xpose.msra.mxu0 0.0
    %3063 = vmatprep.subr.mxu0 0.0
    %3064 = vmatpush1.xpose.msra.mxu0 0.0
    %3065 = vmatprep.subr.mxu0 0.0
    %3066 = vmatpush1.xpose.msra.mxu0 0.0
    %3067 = vmatprep.subr.mxu0 0.0
    %3068 = vmatpush1.xpose.msra.mxu0 0.0
    %3069 = vmatprep.subr.mxu0 0.0
    %3070 = vmatpush1.xpose.msra.mxu0 0.0
    %3071 = vmatprep.subr.mxu0 0.0
    %3072 = vmatpush1.xpose.msra.mxu0 0.0
    %3073 = vmatprep.subr.mxu0 0.0
    %3074 = vmatpush1.xpose.msra.mxu0 0.0
    %3075 = vmatprep.subr.mxu0 0.0
    %3076 = vmatpush1.xpose.msra.mxu0 0.0
    %3077 = vmatprep.subr.mxu0 0.0
    %3078 = vmatpush1.xpose.msra.mxu0 0.0
    %3079 = vmatprep.mubr.f32.mxu0 0.0
    %3080 = vmatmul.mubr.f32.gmra.mrb[0].mxu0 %v3007
    %v3081 = vpop.f32.mrb[0].mxu0
    %v3082 = vadd.f32 0.0, %v3081
    %v3083 = vpop.f32.mrb[0].mxu0
    %3084 = vmatprep.mubr.f32.mxu0 0.0
    %3085 = vmatmul.mubr.f32.gmra.mrb[0].mxu0 %v3009
    %v3086 = vpop.f32.mrb[0].mxu0
    %v3087 = vadd.f32 0.0, %v3086
    %v3088 = vpop.f32.mrb[0].mxu0
    %3089 = vdwg.mxu0
    %v3090 = vmul.f32 %v3082, 0.25
    %v3091 = vmul.f32 %v3087, 0.25
    %v3092 = vadd.f32 %v3090, %v2790
    %v3093 = vadd.f32 %v3091, %v2790
    %v3094 = vsel %vm316, %v3092, -inf
    %3095 = vmax.xlane.f32.xlu0 %v3094
    %v3096 = vpop.xlane.xlu0 %3095
    %v3097 = vsel %vm316, %v3093, -inf
    %3098 = vmax.xlane.f32.xlu0 %v3097
    %v3099 = vpop.xlane.xlu0 %3098
    %v3100 = vsub.f32 %v3092, %v3096
    %v3101 = vsub.f32 %v3093, %v3099
    %v3102 = vmul.f32 %v3100, 1.442695
    %v3103 = vpow.pop %v3102
    %v3104 = vmul.f32 %v3101, 1.442695
    %v3105 = vpow.pop %v3104
    %v3106 = vsel %vm316, %v3103, 0.0
    %3107 = vadd.xlane.f32.xlu0 %v3106
    %v3108 = vpop.xlane.xlu0 %3107
    %v3109 = vsel %vm316, %v3105, 0.0
    %3110 = vadd.xlane.f32.xlu0 %v3109
    %v3111 = vpop.xlane.xlu0 %3110
    %v3112 = vrcp.pop %v3108
    %v3113 = vmul.f32 %v3103, %v3112
    %v3114 = vrcp.pop %v3111
    %v3115 = vmul.f32 %v3105, %v3114
    %3116 = vrot.lane.b32.xlu0 %v2993, 64
    %v3117 = vpop.permute.xlu0 %3116
    %3118 = vrot.lane.b32.xlu0 %v2998, 64
    %v3119 = vpop.permute.xlu0 %3118
    %v3123 = vsel %vm316, %v3113, 0
    %v3126 = vsel %vm316, %v3115, 0
    %3128 = vmatprep.subr.mxu0 0.0
    %3129 = vmatpush1.msra.mxu0 %v3117
    %3130 = vmatprep.subr.mxu0 0.0
    %3131 = vmatpush1.msra.mxu0 %v3119
    %3132 = vmatprep.subr.mxu0 0.0
    %3133 = vmatpush1.msra.mxu0 0.0
    %3134 = vmatprep.subr.mxu0 0.0
    %3135 = vmatpush1.msra.mxu0 0.0
    %3136 = vmatprep.subr.mxu0 0.0
    %3137 = vmatpush1.msra.mxu0 0.0
    %3138 = vmatprep.subr.mxu0 0.0
    %3139 = vmatpush1.msra.mxu0 0.0
    %3140 = vmatprep.subr.mxu0 0.0
    %3141 = vmatpush1.msra.mxu0 0.0
    %3142 = vmatprep.subr.mxu0 0.0
    %3143 = vmatpush1.msra.mxu0 0.0
    %3144 = vmatprep.subr.mxu0 0.0
    %3145 = vmatpush1.msra.mxu0 0.0
    %3146 = vmatprep.subr.mxu0 0.0
    %3147 = vmatpush1.msra.mxu0 0.0
    %3148 = vmatprep.subr.mxu0 0.0
    %3149 = vmatpush1.msra.mxu0 0.0
    %3150 = vmatprep.subr.mxu0 0.0
    %3151 = vmatpush1.msra.mxu0 0.0
    %3152 = vmatprep.subr.mxu0 0.0
    %3153 = vmatpush1.msra.mxu0 0.0
    %3154 = vmatprep.subr.mxu0 0.0
    %3155 = vmatpush1.msra.mxu0 0.0
    %3156 = vmatprep.subr.mxu0 0.0
    %3157 = vmatpush1.msra.mxu0 0.0
    %3158 = vmatprep.subr.mxu0 0.0
    %3159 = vmatpush1.msra.mxu0 0.0
    %3160 = vmatprep.subr.mxu0 0.0
    %3161 = vmatpush1.msra.mxu0 0.0
    %3162 = vmatprep.subr.mxu0 0.0
    %3163 = vmatpush1.msra.mxu0 0.0
    %3164 = vmatprep.subr.mxu0 0.0
    %3165 = vmatpush1.msra.mxu0 0.0
    %3166 = vmatprep.subr.mxu0 0.0
    %3167 = vmatpush1.msra.mxu0 0.0
    %3168 = vmatprep.subr.mxu0 0.0
    %3169 = vmatpush1.msra.mxu0 0.0
    %3170 = vmatprep.subr.mxu0 0.0
    %3171 = vmatpush1.msra.mxu0 0.0
    %3172 = vmatprep.subr.mxu0 0.0
    %3173 = vmatpush1.msra.mxu0 0.0
    %3174 = vmatprep.subr.mxu0 0.0
    %3175 = vmatpush1.msra.mxu0 0.0
    %3176 = vmatprep.subr.mxu0 0.0
    %3177 = vmatpush1.msra.mxu0 0.0
    %3178 = vmatprep.subr.mxu0 0.0
    %3179 = vmatpush1.msra.mxu0 0.0
    %3180 = vmatprep.subr.mxu0 0.0
    %3181 = vmatpush1.msra.mxu0 0.0
    %3182 = vmatprep.subr.mxu0 0.0
    %3183 = vmatpush1.msra.mxu0 0.0
    %3184 = vmatprep.subr.mxu0 0.0
    %3185 = vmatpush1.msra.mxu0 0.0
    %3186 = vmatprep.subr.mxu0 0.0
    %3187 = vmatpush1.msra.mxu0 0.0
    %3188 = vmatprep.subr.mxu0 0.0
    %3189 = vmatpush1.msra.mxu0 0.0
    %3190 = vmatprep.subr.mxu0 0.0
    %3191 = vmatpush1.msra.mxu0 0.0
    %3192 = vmatprep.mubr.f32.mxu0 0.0
    %3193 = vmatmul.mubr.f32.gmra.mrb[0].mxu0 %v3123
    %v3194 = vpop.f32.mrb[0].mxu0
    %v3195 = vadd.f32 0.0, %v3194
    %v3196 = vpop.f32.mrb[0].mxu0
    %3197 = vmatprep.mubr.f32.mxu0 0.0
    %3198 = vmatmul.mubr.f32.gmra.mrb[0].mxu0 %v3126
    %v3199 = vpop.f32.mrb[0].mxu0
    %v3200 = vadd.f32 0.0, %v3199
    %v3201 = vpop.f32.mrb[0].mxu0
    %3202 = vdwg.mxu0
    %3203 = vrot.lane.b32.xlu0 %v2993, 112
    %v3204 = vpop.permute.xlu0 %3203
    %3205 = vrot.lane.b32.xlu0 %v2998, 112
    %v3206 = vpop.permute.xlu0 %3205
    %3207 = vrot.lane.b32.xlu0 %v2993, 80
    %v3208 = vpop.permute.xlu0 %3207
    %3209 = vrot.lane.b32.xlu0 %v2998, 80
    %v3210 = vpop.permute.xlu0 %3209
    %v3211 = vsel %vm316, %v3204, 0
    %v3213 = vsel %vm316, %v3206, 0
    %v3215 = vsel %vm316, %v3208, 0
    %v3217 = vsel %vm316, %v3210, 0
    %3219 = vmatprep.subr.mxu0 0.0
    %3220 = vmatpush1.xpose.msra.mxu0 %v3215
    %3221 = vmatprep.subr.mxu0 0.0
    %3222 = vmatpush1.xpose.msra.mxu0 %v3217
    %3223 = vmatprep.subr.mxu0 0.0
    %3224 = vmatpush1.xpose.msra.mxu0 0.0
    %3225 = vmatprep.subr.mxu0 0.0
    %3226 = vmatpush1.xpose.msra.mxu0 0.0
    %3227 = vmatprep.subr.mxu0 0.0
    %3228 = vmatpush1.xpose.msra.mxu0 0.0
    %3229 = vmatprep.subr.mxu0 0.0
    %3230 = vmatpush1.xpose.msra.mxu0 0.0
    %3231 = vmatprep.subr.mxu0 0.0
    %3232 = vmatpush1.xpose.msra.mxu0 0.0
    %3233 = vmatprep.subr.mxu0 0.0
    %3234 = vmatpush1.xpose.msra.mxu0 0.0
    %3235 = vmatprep.subr.mxu0 0.0
    %3236 = vmatpush1.xpose.msra.mxu0 0.0
    %3237 = vmatprep.subr.mxu0 0.0
    %3238 = vmatpush1.xpose.msra.mxu0 0.0
    %3239 = vmatprep.subr.mxu0 0.0
    %3240 = vmatpush1.xpose.msra.mxu0 0.0
    %3241 = vmatprep.subr.mxu0 0.0
    %3242 = vmatpush1.xpose.msra.mxu0 0.0
    %3243 = vmatprep.subr.mxu0 0.0
    %3244 = vmatpush1.xpose.msra.mxu0 0.0
    %3245 = vmatprep.subr.mxu0 0.0
    %3246 = vmatpush1.xpose.msra.mxu0 0.0
    %3247 = vmatprep.subr.mxu0 0.0
    %3248 = vmatpush1.xpose.msra.mxu0 0.0
    %3249 = vmatprep.subr.mxu0 0.0
    %3250 = vmatpush1.xpose.msra.mxu0 0.0
    %3251 = vmatprep.subr.mxu0 0.0
    %3252 = vmatpush1.xpose.msra.mxu0 0.0
    %3253 = vmatprep.subr.mxu0 0.0
    %3254 = vmatpush1.xpose.msra.mxu0 0.0
    %3255 = vmatprep.subr.mxu0 0.0
    %3256 = vmatpush1.xpose.msra.mxu0 0.0
    %3257 = vmatprep.subr.mxu0 0.0
    %3258 = vmatpush1.xpose.msra.mxu0 0.0
    %3259 = vmatprep.subr.mxu0 0.0
    %3260 = vmatpush1.xpose.msra.mxu0 0.0
    %3261 = vmatprep.subr.mxu0 0.0
    %3262 = vmatpush1.xpose.msra.mxu0 0.0
    %3263 = vmatprep.subr.mxu0 0.0
    %3264 = vmatpush1.xpose.msra.mxu0 0.0
    %3265 = vmatprep.subr.mxu0 0.0
    %3266 = vmatpush1.xpose.msra.mxu0 0.0
    %3267 = vmatprep.subr.mxu0 0.0
    %3268 = vmatpush1.xpose.msra.mxu0 0.0
    %3269 = vmatprep.subr.mxu0 0.0
    %3270 = vmatpush1.xpose.msra.mxu0 0.0
    %3271 = vmatprep.subr.mxu0 0.0
    %3272 = vmatpush1.xpose.msra.mxu0 0.0
    %3273 = vmatprep.subr.mxu0 0.0
    %3274 = vmatpush1.xpose.msra.mxu0 0.0
    %3275 = vmatprep.subr.mxu0 0.0
    %3276 = vmatpush1.xpose.msra.mxu0 0.0
    %3277 = vmatprep.subr.mxu0 0.0
    %3278 = vmatpush1.xpose.msra.mxu0 0.0
    %3279 = vmatprep.subr.mxu0 0.0
    %3280 = vmatpush1.xpose.msra.mxu0 0.0
    %3281 = vmatprep.subr.mxu0 0.0
    %3282 = vmatpush1.xpose.msra.mxu0 0.0
    %3283 = vmatprep.mubr.f32.mxu0 0.0
    %3284 = vmatmul.mubr.f32.gmra.mrb[0].mxu0 %v3211
    %v3285 = vpop.f32.mrb[0].mxu0
    %v3286 = vadd.f32 0.0, %v3285
    %v3287 = vpop.f32.mrb[0].mxu0
    %3288 = vmatprep.mubr.f32.mxu0 0.0
    %3289 = vmatmul.mubr.f32.gmra.mrb[0].mxu0 %v3213
    %v3290 = vpop.f32.mrb[0].mxu0
    %v3291 = vadd.f32 0.0, %v3290
    %v3292 = vpop.f32.mrb[0].mxu0
    %3293 = vdwg.mxu0
    %v3294 = vmul.f32 %v3286, 0.25
    %v3295 = vmul.f32 %v3291, 0.25
    %v3296 = vadd.f32 %v3294, %v2790
    %v3297 = vadd.f32 %v3295, %v2790
    %v3298 = vsel %vm316, %v3296, -inf
    %3299 = vmax.xlane.f32.xlu0 %v3298
    %v3300 = vpop.xlane.xlu0 %3299
    %v3301 = vsel %vm316, %v3297, -inf
    %3302 = vmax.xlane.f32.xlu0 %v3301
    %v3303 = vpop.xlane.xlu0 %3302
    %v3304 = vsub.f32 %v3296, %v3300
    %v3305 = vsub.f32 %v3297, %v3303
    %v3306 = vmul.f32 %v3304, 1.442695
    %v3307 = vpow.pop %v3306
    %v3308 = vmul.f32 %v3305, 1.442695
    %v3309 = vpow.pop %v3308
    %v3310 = vsel %vm316, %v3307, 0.0
    %3311 = vadd.xlane.f32.xlu0 %v3310
    %v3312 = vpop.xlane.xlu0 %3311
    %v3313 = vsel %vm316, %v3309, 0.0
    %3314 = vadd.xlane.f32.xlu0 %v3313
    %v3315 = vpop.xlane.xlu0 %3314
    %v3316 = vrcp.pop %v3312
    %v3317 = vmul.f32 %v3307, %v3316
    %v3318 = vrcp.pop %v3315
    %v3319 = vmul.f32 %v3309, %v3318
    %3320 = vrot.lane.b32.xlu0 %v2993, 48
    %v3321 = vpop.permute.xlu0 %3320
    %3322 = vrot.lane.b32.xlu0 %v2998, 48
    %v3323 = vpop.permute.xlu0 %3322
    %v3327 = vsel %vm316, %v3317, 0
    %v3330 = vsel %vm316, %v3319, 0
    %3332 = vmatprep.subr.mxu0 0.0
    %3333 = vmatpush1.msra.mxu0 %v3321
    %3334 = vmatprep.subr.mxu0 0.0
    %3335 = vmatpush1.msra.mxu0 %v3323
    %3336 = vmatprep.subr.mxu0 0.0
    %3337 = vmatpush1.msra.mxu0 0.0
    %3338 = vmatprep.subr.mxu0 0.0
    %3339 = vmatpush1.msra.mxu0 0.0
    %3340 = vmatprep.subr.mxu0 0.0
    %3341 = vmatpush1.msra.mxu0 0.0
    %3342 = vmatprep.subr.mxu0 0.0
    %3343 = vmatpush1.msra.mxu0 0.0
    %3344 = vmatprep.subr.mxu0 0.0
    %3345 = vmatpush1.msra.mxu0 0.0
    %3346 = vmatprep.subr.mxu0 0.0
    %3347 = vmatpush1.msra.mxu0 0.0
    %3348 = vmatprep.subr.mxu0 0.0
    %3349 = vmatpush1.msra.mxu0 0.0
    %3350 = vmatprep.subr.mxu0 0.0
    %3351 = vmatpush1.msra.mxu0 0.0
    %3352 = vmatprep.subr.mxu0 0.0
    %3353 = vmatpush1.msra.mxu0 0.0
    %3354 = vmatprep.subr.mxu0 0.0
    %3355 = vmatpush1.msra.mxu0 0.0
    %3356 = vmatprep.subr.mxu0 0.0
    %3357 = vmatpush1.msra.mxu0 0.0
    %3358 = vmatprep.subr.mxu0 0.0
    %3359 = vmatpush1.msra.mxu0 0.0
    %3360 = vmatprep.subr.mxu0 0.0
    %3361 = vmatpush1.msra.mxu0 0.0
    %3362 = vmatprep.subr.mxu0 0.0
    %3363 = vmatpush1.msra.mxu0 0.0
    %3364 = vmatprep.subr.mxu0 0.0
    %3365 = vmatpush1.msra.mxu0 0.0
    %3366 = vmatprep.subr.mxu0 0.0
    %3367 = vmatpush1.msra.mxu0 0.0
    %3368 = vmatprep.subr.mxu0 0.0
    %3369 = vmatpush1.msra.mxu0 0.0
    %3370 = vmatprep.subr.mxu0 0.0
    %3371 = vmatpush1.msra.mxu0 0.0
    %3372 = vmatprep.subr.mxu0 0.0
    %3373 = vmatpush1.msra.mxu0 0.0
    %3374 = vmatprep.subr.mxu0 0.0
    %3375 = vmatpush1.msra.mxu0 0.0
    %3376 = vmatprep.subr.mxu0 0.0
    %3377 = vmatpush1.msra.mxu0 0.0
    %3378 = vmatprep.subr.mxu0 0.0
    %3379 = vmatpush1.msra.mxu0 0.0
    %3380 = vmatprep.subr.mxu0 0.0
    %3381 = vmatpush1.msra.mxu0 0.0
    %3382 = vmatprep.subr.mxu0 0.0
    %3383 = vmatpush1.msra.mxu0 0.0
    %3384 = vmatprep.subr.mxu0 0.0
    %3385 = vmatpush1.msra.mxu0 0.0
    %3386 = vmatprep.subr.mxu0 0.0
    %3387 = vmatpush1.msra.mxu0 0.0
    %3388 = vmatprep.subr.mxu0 0.0
    %3389 = vmatpush1.msra.mxu0 0.0
    %3390 = vmatprep.subr.mxu0 0.0
    %3391 = vmatpush1.msra.mxu0 0.0
    %3392 = vmatprep.subr.mxu0 0.0
    %3393 = vmatpush1.msra.mxu0 0.0
    %3394 = vmatprep.subr.mxu0 0.0
    %3395 = vmatpush1.msra.mxu0 0.0
    %3396 = vmatprep.mubr.f32.mxu0 0.0
    %3397 = vmatmul.mubr.f32.gmra.mrb[0].mxu0 %v3327
    %v3398 = vpop.f32.mrb[0].mxu0
    %v3399 = vadd.f32 0.0, %v3398
    %v3400 = vpop.f32.mrb[0].mxu0
    %3401 = vmatprep.mubr.f32.mxu0 0.0
    %3402 = vmatmul.mubr.f32.gmra.mrb[0].mxu0 %v3330
    %v3403 = vpop.f32.mrb[0].mxu0
    %v3404 = vadd.f32 0.0, %v3403
    %v3405 = vpop.f32.mrb[0].mxu0
    %3406 = vdwg.mxu0
    %v3408 = vsel %vm316, %v3399, 0
    %v3411 = vsel %vm316, %v3404, 0
    %3413 = vmatprep.subr.mxu0 0.0
    %3414 = vmatpush1.msra.mxu0 %v308
    %3415 = vmatprep.subr.mxu0 0.0
    %3416 = vmatpush1.msra.mxu0 %v309
    %3417 = vmatprep.subr.mxu0 0.0
    %3418 = vmatpush1.msra.mxu0 0.0
    %3419 = vmatprep.subr.mxu0 0.0
    %3420 = vmatpush1.msra.mxu0 0.0
    %3421 = vmatprep.subr.mxu0 0.0
    %3422 = vmatpush1.msra.mxu0 0.0
    %3423 = vmatprep.subr.mxu0 0.0
    %3424 = vmatpush1.msra.mxu0 0.0
    %3425 = vmatprep.subr.mxu0 0.0
    %3426 = vmatpush1.msra.mxu0 0.0
    %3427 = vmatprep.subr.mxu0 0.0
    %3428 = vmatpush1.msra.mxu0 0.0
    %3429 = vmatprep.subr.mxu0 0.0
    %3430 = vmatpush1.msra.mxu0 0.0
    %3431 = vmatprep.subr.mxu0 0.0
    %3432 = vmatpush1.msra.mxu0 0.0
    %3433 = vmatprep.subr.mxu0 0.0
    %3434 = vmatpush1.msra.mxu0 0.0
    %3435 = vmatprep.subr.mxu0 0.0
    %3436 = vmatpush1.msra.mxu0 0.0
    %3437 = vmatprep.subr.mxu0 0.0
    %3438 = vmatpush1.msra.mxu0 0.0
    %3439 = vmatprep.subr.mxu0 0.0
    %3440 = vmatpush1.msra.mxu0 0.0
    %3441 = vmatprep.subr.mxu0 0.0
    %3442 = vmatpush1.msra.mxu0 0.0
    %3443 = vmatprep.subr.mxu0 0.0
    %3444 = vmatpush1.msra.mxu0 0.0
    %3445 = vmatprep.subr.mxu0 0.0
    %3446 = vmatpush1.msra.mxu0 0.0
    %3447 = vmatprep.subr.mxu0 0.0
    %3448 = vmatpush1.msra.mxu0 0.0
    %3449 = vmatprep.subr.mxu0 0.0
    %3450 = vmatpush1.msra.mxu0 0.0
    %3451 = vmatprep.subr.mxu0 0.0
    %3452 = vmatpush1.msra.mxu0 0.0
    %3453 = vmatprep.subr.mxu0 0.0
    %3454 = vmatpush1.msra.mxu0 0.0
    %3455 = vmatprep.subr.mxu0 0.0
    %3456 = vmatpush1.msra.mxu0 0.0
    %3457 = vmatprep.subr.mxu0 0.0
    %3458 = vmatpush1.msra.mxu0 0.0
    %3459 = vmatprep.subr.mxu0 0.0
    %3460 = vmatpush1.msra.mxu0 0.0
    %3461 = vmatprep.subr.mxu0 0.0
    %3462 = vmatpush1.msra.mxu0 0.0
    %3463 = vmatprep.subr.mxu0 0.0
    %3464 = vmatpush1.msra.mxu0 0.0
    %3465 = vmatprep.subr.mxu0 0.0
    %3466 = vmatpush1.msra.mxu0 0.0
    %3467 = vmatprep.subr.mxu0 0.0
    %3468 = vmatpush1.msra.mxu0 0.0
    %3469 = vmatprep.subr.mxu0 0.0
    %3470 = vmatpush1.msra.mxu0 0.0
    %3471 = vmatprep.subr.mxu0 0.0
    %3472 = vmatpush1.msra.mxu0 0.0
    %3473 = vmatprep.subr.mxu0 0.0
    %3474 = vmatpush1.msra.mxu0 0.0
    %3475 = vmatprep.subr.mxu0 0.0
    %3476 = vmatpush1.msra.mxu0 0.0
    %3477 = vmatprep.mubr.f32.mxu0 0.0
    %3478 = vmatmul.mubr.f32.gmra.mrb[0].mxu0 %v3408
    %v3479 = vpop.f32.mrb[0].mxu0
    %v3480 = vadd.f32 0.0, %v3479
    %v3481 = vpop.f32.mrb[0].mxu0
    %3482 = vmatprep.mubr.f32.mxu0 0.0
    %3483 = vmatmul.mubr.f32.gmra.mrb[0].mxu0 %v3411
    %v3484 = vpop.f32.mrb[0].mxu0
    %v3485 = vadd.f32 0.0, %v3484
    %v3486 = vpop.f32.mrb[0].mxu0
    %3487 = vdwg.mxu0
    %v3489 = vsel %vm316, %v3195, 0
    %v3492 = vsel %vm316, %v3200, 0
    %3494 = vmatprep.subr.mxu0 0.0
    %3495 = vmatpush1.msra.mxu0 %v306
    %3496 = vmatprep.subr.mxu0 0.0
    %3497 = vmatpush1.msra.mxu0 %v307
    %3498 = vmatprep.subr.mxu0 0.0
    %3499 = vmatpush1.msra.mxu0 0.0
    %3500 = vmatprep.subr.mxu0 0.0
    %3501 = vmatpush1.msra.mxu0 0.0
    %3502 = vmatprep.subr.mxu0 0.0
    %3503 = vmatpush1.msra.mxu0 0.0
    %3504 = vmatprep.subr.mxu0 0.0
    %3505 = vmatpush1.msra.mxu0 0.0
    %3506 = vmatprep.subr.mxu0 0.0
    %3507 = vmatpush1.msra.mxu0 0.0
    %3508 = vmatprep.subr.mxu0 0.0
    %3509 = vmatpush1.msra.mxu0 0.0
    %3510 = vmatprep.subr.mxu0 0.0
    %3511 = vmatpush1.msra.mxu0 0.0
    %3512 = vmatprep.subr.mxu0 0.0
    %3513 = vmatpush1.msra.mxu0 0.0
    %3514 = vmatprep.subr.mxu0 0.0
    %3515 = vmatpush1.msra.mxu0 0.0
    %3516 = vmatprep.subr.mxu0 0.0
    %3517 = vmatpush1.msra.mxu0 0.0
    %3518 = vmatprep.subr.mxu0 0.0
    %3519 = vmatpush1.msra.mxu0 0.0
    %3520 = vmatprep.subr.mxu0 0.0
    %3521 = vmatpush1.msra.mxu0 0.0
    %3522 = vmatprep.subr.mxu0 0.0
    %3523 = vmatpush1.msra.mxu0 0.0
    %3524 = vmatprep.subr.mxu0 0.0
    %3525 = vmatpush1.msra.mxu0 0.0
    %3526 = vmatprep.subr.mxu0 0.0
    %3527 = vmatpush1.msra.mxu0 0.0
    %3528 = vmatprep.subr.mxu0 0.0
    %3529 = vmatpush1.msra.mxu0 0.0
    %3530 = vmatprep.subr.mxu0 0.0
    %3531 = vmatpush1.msra.mxu0 0.0
    %3532 = vmatprep.subr.mxu0 0.0
    %3533 = vmatpush1.msra.mxu0 0.0
    %3534 = vmatprep.subr.mxu0 0.0
    %3535 = vmatpush1.msra.mxu0 0.0
    %3536 = vmatprep.subr.mxu0 0.0
    %3537 = vmatpush1.msra.mxu0 0.0
    %3538 = vmatprep.subr.mxu0 0.0
    %3539 = vmatpush1.msra.mxu0 0.0
    %3540 = vmatprep.subr.mxu0 0.0
    %3541 = vmatpush1.msra.mxu0 0.0
    %3542 = vmatprep.subr.mxu0 0.0
    %3543 = vmatpush1.msra.mxu0 0.0
    %3544 = vmatprep.subr.mxu0 0.0
    %3545 = vmatpush1.msra.mxu0 0.0
    %3546 = vmatprep.subr.mxu0 0.0
    %3547 = vmatpush1.msra.mxu0 0.0
    %3548 = vmatprep.subr.mxu0 0.0
    %3549 = vmatpush1.msra.mxu0 0.0
    %3550 = vmatprep.subr.mxu0 0.0
    %3551 = vmatpush1.msra.mxu0 0.0
    %3552 = vmatprep.subr.mxu0 0.0
    %3553 = vmatpush1.msra.mxu0 0.0
    %3554 = vmatprep.subr.mxu0 0.0
    %3555 = vmatpush1.msra.mxu0 0.0
    %3556 = vmatprep.subr.mxu0 0.0
    %3557 = vmatpush1.msra.mxu0 0.0
    %3558 = vmatprep.mubr.f32.mxu0 0.0
    %3559 = vmatmul.mubr.f32.gmra.mrb[0].mxu0 %v3489
    %v3560 = vpop.f32.mrb[0].mxu0
    %v3561 = vadd.f32 %v3480, %v3560
    %v3562 = vpop.f32.mrb[0].mxu0
    %3563 = vmatprep.mubr.f32.mxu0 0.0
    %3564 = vmatmul.mubr.f32.gmra.mrb[0].mxu0 %v3492
    %v3565 = vpop.f32.mrb[0].mxu0
    %v3566 = vadd.f32 %v3485, %v3565
    %v3567 = vpop.f32.mrb[0].mxu0
    %3568 = vdwg.mxu0
    %v3569 = vadd.f32 %v3561, %v883
    %v3570 = vadd.f32 %v3566, %v883
    %v3571 = vadd.f32 %v3569, %v2918
    %v3572 = vadd.f32 %v3570, %v2919
    %v3573 = vsel %vm176, %v3571, 0.0
    %3574 = vadd.xlane.f32.xlu0 %v3573
    %v3575 = vpop.xlane.xlu0 %3574
    %v3576 = vsel %vm176, %v3572, 0.0
    %3577 = vadd.xlane.f32.xlu0 %v3576
    %v3578 = vpop.xlane.xlu0 %3577
    %v3579 = vmul.f32 %v3575, %v183
    %v3580 = vmul.f32 %v3578, %v183
    %v3581 = vsub.f32 %v3571, %v3579
    %v3582 = vsub.f32 %v3572, %v3580
    %v3583 = vmul.f32 %v3581, %v3581
    %v3584 = vmul.f32 %v3582, %v3582
    %v3585 = vsel %vm176, %v3583, 0.0
    %3586 = vadd.xlane.f32.xlu0 %v3585
    %v3587 = vpop.xlane.xlu0 %3586
    %v3588 = vsel %vm176, %v3584, 0.0
    %3589 = vadd.xlane.f32.xlu0 %v3588
    %v3590 = vpop.xlane.xlu0 %3589
    %v3591 = vmul.f32 %v3587, %v183
    %v3592 = vmul.f32 %v3590, %v183
    %v3593 = vadd.f32 %v3591, 1e-12
    %v3594 = vadd.f32 %v3592, 1e-12
    %v3595 = vrsqrt.pop %v3593
    %v3596 = vrsqrt.pop %v3594
    %v3597 = vmul.f32 %v3581, %v3595
    %v3598 = vmul.f32 %v3582, %v3596
    %v3599 = vmul.f32 %v3597, %v918
    %v3600 = vmul.f32 %v3598, %v918
    %v3601 = vadd.f32 %v3599, %v924
    %v3602 = vadd.f32 %v3600, %v924
    %v3604 = vsel %vm176, %v3601, 0
    %v3607 = vsel %vm176, %v3602, 0
    %3609 = vmatprep.subr.mxu0 0.0
    %3610 = vmatpush1.msra.mxu0 %v927
    %3611 = vmatprep.subr.mxu0 0.0
    %3612 = vmatpush1.msra.mxu0 %v928
    %3613 = vmatprep.subr.mxu0 0.0
    %3614 = vmatpush1.msra.mxu0 %v929
    %3615 = vmatprep.subr.mxu0 0.0
    %3616 = vmatpush1.msra.mxu0 %v930
    %3617 = vmatprep.subr.mxu0 0.0
    %3618 = vmatpush1.msra.mxu0 0.0
    %3619 = vmatprep.subr.mxu0 0.0
    %3620 = vmatpush1.msra.mxu0 0.0
    %3621 = vmatprep.subr.mxu0 0.0
    %3622 = vmatpush1.msra.mxu0 0.0
    %3623 = vmatprep.subr.mxu0 0.0
    %3624 = vmatpush1.msra.mxu0 0.0
    %3625 = vmatprep.subr.mxu0 0.0
    %3626 = vmatpush1.msra.mxu0 0.0
    %3627 = vmatprep.subr.mxu0 0.0
    %3628 = vmatpush1.msra.mxu0 0.0
    %3629 = vmatprep.subr.mxu0 0.0
    %3630 = vmatpush1.msra.mxu0 0.0
    %3631 = vmatprep.subr.mxu0 0.0
    %3632 = vmatpush1.msra.mxu0 0.0
    %3633 = vmatprep.subr.mxu0 0.0
    %3634 = vmatpush1.msra.mxu0 0.0
    %3635 = vmatprep.subr.mxu0 0.0
    %3636 = vmatpush1.msra.mxu0 0.0
    %3637 = vmatprep.subr.mxu0 0.0
    %3638 = vmatpush1.msra.mxu0 0.0
    %3639 = vmatprep.subr.mxu0 0.0
    %3640 = vmatpush1.msra.mxu0 0.0
    %3641 = vmatprep.subr.mxu0 0.0
    %3642 = vmatpush1.msra.mxu0 0.0
    %3643 = vmatprep.subr.mxu0 0.0
    %3644 = vmatpush1.msra.mxu0 0.0
    %3645 = vmatprep.subr.mxu0 0.0
    %3646 = vmatpush1.msra.mxu0 0.0
    %3647 = vmatprep.subr.mxu0 0.0
    %3648 = vmatpush1.msra.mxu0 0.0
    %3649 = vmatprep.subr.mxu0 0.0
    %3650 = vmatpush1.msra.mxu0 0.0
    %3651 = vmatprep.subr.mxu0 0.0
    %3652 = vmatpush1.msra.mxu0 0.0
    %3653 = vmatprep.subr.mxu0 0.0
    %3654 = vmatpush1.msra.mxu0 0.0
    %3655 = vmatprep.subr.mxu0 0.0
    %3656 = vmatpush1.msra.mxu0 0.0
    %3657 = vmatprep.subr.mxu0 0.0
    %3658 = vmatpush1.msra.mxu0 0.0
    %3659 = vmatprep.subr.mxu0 0.0
    %3660 = vmatpush1.msra.mxu0 0.0
    %3661 = vmatprep.subr.mxu0 0.0
    %3662 = vmatpush1.msra.mxu0 0.0
    %3663 = vmatprep.subr.mxu0 0.0
    %3664 = vmatpush1.msra.mxu0 0.0
    %3665 = vmatprep.subr.mxu0 0.0
    %3666 = vmatpush1.msra.mxu0 0.0
    %3667 = vmatprep.subr.mxu0 0.0
    %3668 = vmatpush1.msra.mxu0 0.0
    %3669 = vmatprep.subr.mxu0 0.0
    %3670 = vmatpush1.msra.mxu0 0.0
    %3671 = vmatprep.subr.mxu0 0.0
    %3672 = vmatpush1.msra.mxu0 0.0
    %3673 = vmatprep.mubr.f32.mxu0 0.0
    %3674 = vmatmul.mubr.f32.gmra.mrb[0].mxu0 %v3604
    %v3675 = vpop.f32.mrb[0].mxu0
    %v3676 = vadd.f32 %v935, %v3675
    %v3677 = vpop.f32.mrb[0].mxu0
    %3678 = vmatprep.mubr.f32.mxu0 0.0
    %3679 = vmatmul.mubr.f32.gmra.mrb[0].mxu0 %v3607
    %v3680 = vpop.f32.mrb[0].mxu0
    %v3681 = vadd.f32 %v935, %v3680
    %v3682 = vpop.f32.mrb[0].mxu0
    %3683 = vdwg.mxu0
    %v3684 = vmul.f32 %v3676, %v3676
    %v3685 = vmul.f32 %v3681, %v3681
    %v3686 = vmul.f32 %v3676, %v3684
    %v3687 = vmul.f32 %v3681, %v3685
    %v3688 = vmul.f32 %v3686, 0.044715
    %v3689 = vmul.f32 %v3687, 0.044715
    %v3690 = vadd.f32 %v3676, %v3688
    %v3691 = vadd.f32 %v3681, %v3689
    %v3692 = vmul.f32 %v3690, 0.7978846
    %v3693 = vmul.f32 %v3691, 0.7978846
    %v3694 = vtanh.pop %v3692
    %v3695 = vtanh.pop %v3693
    %v3696 = vadd.f32 %v3694, 1.0
    %v3697 = vadd.f32 %v3695, 1.0
    %v3698 = vmul.f32 %v3696, 0.5
    %v3699 = vmul.f32 %v3697, 0.5
    %v3700 = vmul.f32 %v3676, %v3698
    %v3701 = vmul.f32 %v3681, %v3699
    %v3703 = vsel %vm93, %v3700, 0
    %v3706 = vsel %vm93, %v3701, 0
    %3708 = vmatprep.subr.mxu0 0.0
    %3709 = vmatpush1.msra.mxu0 %v1035
    %3710 = vmatprep.subr.mxu0 0.0
    %3711 = vmatpush1.msra.mxu0 %v1036
    %3712 = vmatprep.subr.mxu0 0.0
    %3713 = vmatpush1.msra.mxu0 %v1037
    %3714 = vmatprep.subr.mxu0 0.0
    %3715 = vmatpush1.msra.mxu0 %v1038
    %3716 = vmatprep.subr.mxu0 0.0
    %3717 = vmatpush1.msra.mxu0 %v1039
    %3718 = vmatprep.subr.mxu0 0.0
    %3719 = vmatpush1.msra.mxu0 %v1040
    %3720 = vmatprep.subr.mxu0 0.0
    %3721 = vmatpush1.msra.mxu0 %v1041
    %3722 = vmatprep.subr.mxu0 0.0
    %3723 = vmatpush1.msra.mxu0 %v1042
    %3724 = vmatprep.subr.mxu0 0.0
    %3725 = vmatpush1.msra.mxu0 0.0
    %3726 = vmatprep.subr.mxu0 0.0
    %3727 = vmatpush1.msra.mxu0 0.0
    %3728 = vmatprep.subr.mxu0 0.0
    %3729 = vmatpush1.msra.mxu0 0.0
    %3730 = vmatprep.subr.mxu0 0.0
    %3731 = vmatpush1.msra.mxu0 0.0
    %3732 = vmatprep.subr.mxu0 0.0
    %3733 = vmatpush1.msra.mxu0 0.0
    %3734 = vmatprep.subr.mxu0 0.0
    %3735 = vmatpush1.msra.mxu0 0.0
    %3736 = vmatprep.subr.mxu0 0.0
    %3737 = vmatpush1.msra.mxu0 0.0
    %3738 = vmatprep.subr.mxu0 0.0
    %3739 = vmatpush1.msra.mxu0 0.0
    %3740 = vmatprep.subr.mxu0 0.0
    %3741 = vmatpush1.msra.mxu0 0.0
    %3742 = vmatprep.subr.mxu0 0.0
    %3743 = vmatpush1.msra.mxu0 0.0
    %3744 = vmatprep.subr.mxu0 0.0
    %3745 = vmatpush1.msra.mxu0 0.0
    %3746 = vmatprep.subr.mxu0 0.0
    %3747 = vmatpush1.msra.mxu0 0.0
    %3748 = vmatprep.subr.mxu0 0.0
    %3749 = vmatpush1.msra.mxu0 0.0
    %3750 = vmatprep.subr.mxu0 0.0
    %3751 = vmatpush1.msra.mxu0 0.0
    %3752 = vmatprep.subr.mxu0 0.0
    %3753 = vmatpush1.msra.mxu0 0.0
    %3754 = vmatprep.subr.mxu0 0.0
    %3755 = vmatpush1.msra.mxu0 0.0
    %3756 = vmatprep.subr.mxu0 0.0
    %3757 = vmatpush1.msra.mxu0 0.0
    %3758 = vmatprep.subr.mxu0 0.0
    %3759 = vmatpush1.msra.mxu0 0.0
    %3760 = vmatprep.subr.mxu0 0.0
    %3761 = vmatpush1.msra.mxu0 0.0
    %3762 = vmatprep.subr.mxu0 0.0
    %3763 = vmatpush1.msra.mxu0 0.0
    %3764 = vmatprep.subr.mxu0 0.0
    %3765 = vmatpush1.msra.mxu0 0.0
    %3766 = vmatprep.subr.mxu0 0.0
    %3767 = vmatpush1.msra.mxu0 0.0
    %3768 = vmatprep.subr.mxu0 0.0
    %3769 = vmatpush1.msra.mxu0 0.0
    %3770 = vmatprep.subr.mxu0 0.0
    %3771 = vmatpush1.msra.mxu0 0.0
    %3772 = vmatprep.mubr.f32.mxu0 0.0
    %3773 = vmatmul.mubr.f32.gmra.mrb[0].mxu0 %v3703
    %v3774 = vpop.f32.mrb[0].mxu0
    %v3775 = vadd.f32 %v1047, %v3774
    %v3776 = vpop.f32.mrb[0].mxu0
    %3777 = vmatprep.mubr.f32.mxu0 0.0
    %3778 = vmatmul.mubr.f32.gmra.mrb[0].mxu0 %v3706
    %v3779 = vpop.f32.mrb[0].mxu0
    %v3780 = vadd.f32 %v1047, %v3779
    %v3781 = vpop.f32.mrb[0].mxu0
    %3782 = vdwg.mxu0
    %v3783 = vadd.f32 %v3775, %v3601
    %v3784 = vadd.f32 %v3780, %v3602
    %v3785 = vsel %vm176, %v3783, 0.0
    %3786 = vadd.xlane.f32.xlu0 %v3785
    %v3787 = vpop.xlane.xlu0 %3786
    %v3788 = vsel %vm176, %v3784, 0.0
    %3789 = vadd.xlane.f32.xlu0 %v3788
    %v3790 = vpop.xlane.xlu0 %3789
    %v3791 = vmul.f32 %v3787, %v183
    %v3792 = vmul.f32 %v3790, %v183
    %v3793 = vsub.f32 %v3783, %v3791
    %v3794 = vsub.f32 %v3784, %v3792
    %v3795 = vmul.f32 %v3793, %v3793
    %v3796 = vmul.f32 %v3794, %v3794
    %v3797 = vsel %vm176, %v3795, 0.0
    %3798 = vadd.xlane.f32.xlu0 %v3797
    %v3799 = vpop.xlane.xlu0 %3798
    %v3800 = vsel %vm176, %v3796, 0.0
    %3801 = vadd.xlane.f32.xlu0 %v3800
    %v3802 = vpop.xlane.xlu0 %3801
    %v3803 = vmul.f32 %v3799, %v183
    %v3804 = vmul.f32 %v3802, %v183
    %v3805 = vadd.f32 %v3803, 1e-12
    %v3806 = vadd.f32 %v3804, 1e-12
    %v3807 = vrsqrt.pop %v3805
    %v3808 = vrsqrt.pop %v3806
    %v3809 = vmul.f32 %v3793, %v3807
    %v3810 = vmul.f32 %v3794, %v3808
    %v3811 = vmul.f32 %v3809, %v1161
    %v3812 = vmul.f32 %v3810, %v1161
    %v3813 = vadd.f32 %v3811, %v1167
    %v3814 = vadd.f32 %v3812, %v1167
    %v3815 = vld [vmem:[%s1 + $0x8] sm:$0xff]
    %3816 = vset.pattern.permute.xlu0 0
    %3817 = vperm.xlu0 %3816, %v3815
    %v3818 = vpop.permute.xlu0 %3817
    %vm3819 = vcmp.eq.s32.totalorder %v60, %v3818
    %v3820 = vsel %vm3819, 1, 0
    %v3821 = vcvt.s32.f32 %v3820
    %v3823 = vsel %vm93, %v3821, 0
    %3825 = vmatprep.subr.mxu0 0.0
    %3826 = vmatpush1.msra.mxu0 %v1177
    %3827 = vmatprep.subr.mxu0 0.0
    %3828 = vmatpush1.msra.mxu0 %v1178
    %3829 = vmatprep.subr.mxu0 0.0
    %3830 = vmatpush1.msra.mxu0 %v1179
    %3831 = vmatprep.subr.mxu0 0.0
    %3832 = vmatpush1.msra.mxu0 %v1180
    %3833 = vmatprep.subr.mxu0 0.0
    %3834 = vmatpush1.msra.mxu0 %v1181
    %3835 = vmatprep.subr.mxu0 0.0
    %3836 = vmatpush1.msra.mxu0 %v1182
    %3837 = vmatprep.subr.mxu0 0.0
    %3838 = vmatpush1.msra.mxu0 %v1183
    %3839 = vmatprep.subr.mxu0 0.0
    %3840 = vmatpush1.msra.mxu0 %v1184
    %3841 = vmatprep.subr.mxu0 0.0
    %3842 = vmatpush1.msra.mxu0 0.0
    %3843 = vmatprep.subr.mxu0 0.0
    %3844 = vmatpush1.msra.mxu0 0.0
    %3845 = vmatprep.subr.mxu0 0.0
    %3846 = vmatpush1.msra.mxu0 0.0
    %3847 = vmatprep.subr.mxu0 0.0
    %3848 = vmatpush1.msra.mxu0 0.0
    %3849 = vmatprep.subr.mxu0 0.0
    %3850 = vmatpush1.msra.mxu0 0.0
    %3851 = vmatprep.subr.mxu0 0.0
    %3852 = vmatpush1.msra.mxu0 0.0
    %3853 = vmatprep.subr.mxu0 0.0
    %3854 = vmatpush1.msra.mxu0 0.0
    %3855 = vmatprep.subr.mxu0 0.0
    %3856 = vmatpush1.msra.mxu0 0.0
    %3857 = vmatprep.subr.mxu0 0.0
    %3858 = vmatpush1.msra.mxu0 0.0
    %3859 = vmatprep.subr.mxu0 0.0
    %3860 = vmatpush1.msra.mxu0 0.0
    %3861 = vmatprep.subr.mxu0 0.0
    %3862 = vmatpush1.msra.mxu0 0.0
    %3863 = vmatprep.subr.mxu0 0.0
    %3864 = vmatpush1.msra.mxu0 0.0
    %3865 = vmatprep.subr.mxu0 0.0
    %3866 = vmatpush1.msra.mxu0 0.0
    %3867 = vmatprep.subr.mxu0 0.0
    %3868 = vmatpush1.msra.mxu0 0.0
    %3869 = vmatprep.subr.mxu0 0.0
    %3870 = vmatpush1.msra.mxu0 0.0
    %3871 = vmatprep.subr.mxu0 0.0
    %3872 = vmatpush1.msra.mxu0 0.0
    %3873 = vmatprep.subr.mxu0 0.0
    %3874 = vmatpush1.msra.mxu0 0.0
    %3875 = vmatprep.subr.mxu0 0.0
    %3876 = vmatpush1.msra.mxu0 0.0
    %3877 = vmatprep.subr.mxu0 0.0
    %3878 = vmatpush1.msra.mxu0 0.0
    %3879 = vmatprep.subr.mxu0 0.0
    %3880 = vmatpush1.msra.mxu0 0.0
    %3881 = vmatprep.subr.mxu0 0.0
    %3882 = vmatpush1.msra.mxu0 0.0
    %3883 = vmatprep.subr.mxu0 0.0
    %3884 = vmatpush1.msra.mxu0 0.0
    %3885 = vmatprep.subr.mxu0 0.0
    %3886 = vmatpush1.msra.mxu0 0.0
    %3887 = vmatprep.subr.mxu0 0.0
    %3888 = vmatpush1.msra.mxu0 0.0
    %3889 = vmatprep.mubr.f32.mxu0 0.0
    %3890 = vmatmul.mubr.f32.gmra.mrb[0].mxu0 %v3823
    %v3891 = vpop.f32.mrb[0].mxu0
    %v3892 = vadd.f32 %v1185, %v3891
    %v3893 = vpop.f32.mrb[0].mxu0
    %3894 = vdwg.mxu0
    %v3895 = vsel %vm176, %v3892, 0.0
    %3896 = vadd.xlane.f32.xlu0 %v3895
    %v3897 = vpop.xlane.xlu0 %3896
    %v3898 = vmul.f32 %v3897, %v183
    %v3899 = vsub.f32 %v3892, %v3898
    %v3900 = vmul.f32 %v3899, %v3899
    %v3901 = vsel %vm176, %v3900, 0.0
    %3902 = vadd.xlane.f32.xlu0 %v3901
    %v3903 = vpop.xlane.xlu0 %3902
    %v3904 = vmul.f32 %v3903, %v183
    %v3905 = vadd.f32 %v3904, 1e-12
    %v3906 = vrsqrt.pop %v3905
    %v3907 = vmul.f32 %v3899, %v3906
    %v3908 = vmul.f32 %v3907, %v1276
    %v3909 = vadd.f32 %v3908, %v1281
    %v3911 = vsel %vm176, %v3909, 0
    %3913 = vmatprep.subr.mxu0 0.0
    %3914 = vmatpush1.msra.mxu0 %v1283
    %3915 = vmatprep.subr.mxu0 0.0
    %3916 = vmatpush1.msra.mxu0 %v1284
    %3917 = vmatprep.subr.mxu0 0.0
    %3918 = vmatpush1.msra.mxu0 %v1285
    %3919 = vmatprep.subr.mxu0 0.0
    %3920 = vmatpush1.msra.mxu0 %v1286
    %3921 = vmatprep.subr.mxu0 0.0
    %3922 = vmatpush1.msra.mxu0 0.0
    %3923 = vmatprep.subr.mxu0 0.0
    %3924 = vmatpush1.msra.mxu0 0.0
    %3925 = vmatprep.subr.mxu0 0.0
    %3926 = vmatpush1.msra.mxu0 0.0
    %3927 = vmatprep.subr.mxu0 0.0
    %3928 = vmatpush1.msra.mxu0 0.0
    %3929 = vmatprep.subr.mxu0 0.0
    %3930 = vmatpush1.msra.mxu0 0.0
    %3931 = vmatprep.subr.mxu0 0.0
    %3932 = vmatpush1.msra.mxu0 0.0
    %3933 = vmatprep.subr.mxu0 0.0
    %3934 = vmatpush1.msra.mxu0 0.0
    %3935 = vmatprep.subr.mxu0 0.0
    %3936 = vmatpush1.msra.mxu0 0.0
    %3937 = vmatprep.subr.mxu0 0.0
    %3938 = vmatpush1.msra.mxu0 0.0
    %3939 = vmatprep.subr.mxu0 0.0
    %3940 = vmatpush1.msra.mxu0 0.0
    %3941 = vmatprep.subr.mxu0 0.0
    %3942 = vmatpush1.msra.mxu0 0.0
    %3943 = vmatprep.subr.mxu0 0.0
    %3944 = vmatpush1.msra.mxu0 0.0
    %3945 = vmatprep.subr.mxu0 0.0
    %3946 = vmatpush1.msra.mxu0 0.0
    %3947 = vmatprep.subr.mxu0 0.0
    %3948 = vmatpush1.msra.mxu0 0.0
    %3949 = vmatprep.subr.mxu0 0.0
    %3950 = vmatpush1.msra.mxu0 0.0
    %3951 = vmatprep.subr.mxu0 0.0
    %3952 = vmatpush1.msra.mxu0 0.0
    %3953 = vmatprep.subr.mxu0 0.0
    %3954 = vmatpush1.msra.mxu0 0.0
    %3955 = vmatprep.subr.mxu0 0.0
    %3956 = vmatpush1.msra.mxu0 0.0
    %3957 = vmatprep.subr.mxu0 0.0
    %3958 = vmatpush1.msra.mxu0 0.0
    %3959 = vmatprep.subr.mxu0 0.0
    %3960 = vmatpush1.msra.mxu0 0.0
    %3961 = vmatprep.subr.mxu0 0.0
    %3962 = vmatpush1.msra.mxu0 0.0
    %3963 = vmatprep.subr.mxu0 0.0
    %3964 = vmatpush1.msra.mxu0 0.0
    %3965 = vmatprep.subr.mxu0 0.0
    %3966 = vmatpush1.msra.mxu0 0.0
    %3967 = vmatprep.subr.mxu0 0.0
    %3968 = vmatpush1.msra.mxu0 0.0
    %3969 = vmatprep.subr.mxu0 0.0
    %3970 = vmatpush1.msra.mxu0 0.0
    %3971 = vmatprep.subr.mxu0 0.0
    %3972 = vmatpush1.msra.mxu0 0.0
    %3973 = vmatprep.subr.mxu0 0.0
    %3974 = vmatpush1.msra.mxu0 0.0
    %3975 = vmatprep.subr.mxu0 0.0
    %3976 = vmatpush1.msra.mxu0 0.0
    %3977 = vmatprep.mubr.f32.mxu0 0.0
    %3978 = vmatmul.mubr.f32.gmra.mrb[0].mxu0 %v3911
    %v3979 = vpop.f32.mrb[0].mxu0
    %v3980 = vadd.f32 %v1291, %v3979
    %v3981 = vpop.f32.mrb[0].mxu0
    %3982 = vdwg.mxu0
    %3984 = vrot.lane.b32.xlu0 %v3980, 96
    %v3985 = vpop.permute.xlu0 %3984
    %v3986 = vsel %vm316, %v3980, 0
    %v3988 = vsel %vm316, %v3985, 0
    %3990 = vmatprep.subr.mxu0 0.0
    %3991 = vmatpush1.xpose.msra.mxu0 %v3988
    %3992 = vmatprep.subr.mxu0 0.0
    %3993 = vmatpush1.xpose.msra.mxu0 0.0
    %3994 = vmatprep.subr.mxu0 0.0
    %3995 = vmatpush1.xpose.msra.mxu0 0.0
    %3996 = vmatprep.subr.mxu0 0.0
    %3997 = vmatpush1.xpose.msra.mxu0 0.0
    %3998 = vmatprep.subr.mxu0 0.0
    %3999 = vmatpush1.xpose.msra.mxu0 0.0
    %4000 = vmatprep.subr.mxu0 0.0
    %4001 = vmatpush1.xpose.msra.mxu0 0.0
    %4002 = vmatprep.subr.mxu0 0.0
    %4003 = vmatpush1.xpose.msra.mxu0 0.0
    %4004 = vmatprep.subr.mxu0 0.0
    %4005 = vmatpush1.xpose.msra.mxu0 0.0
    %4006 = vmatprep.subr.mxu0 0.0
    %4007 = vmatpush1.xpose.msra.mxu0 0.0
    %4008 = vmatprep.subr.mxu0 0.0
    %4009 = vmatpush1.xpose.msra.mxu0 0.0
    %4010 = vmatprep.subr.mxu0 0.0
    %4011 = vmatpush1.xpose.msra.mxu0 0.0
    %4012 = vmatprep.subr.mxu0 0.0
    %4013 = vmatpush1.xpose.msra.mxu0 0.0
    %4014 = vmatprep.subr.mxu0 0.0
    %4015 = vmatpush1.xpose.msra.mxu0 0.0
    %4016 = vmatprep.subr.mxu0 0.0
    %4017 = vmatpush1.xpose.msra.mxu0 0.0
    %4018 = vmatprep.subr.mxu0 0.0
    %4019 = vmatpush1.xpose.msra.mxu0 0.0
    %4020 = vmatprep.subr.mxu0 0.0
    %4021 = vmatpush1.xpose.msra.mxu0 0.0
    %4022 = vmatprep.subr.mxu0 0.0
    %4023 = vmatpush1.xpose.msra.mxu0 0.0
    %4024 = vmatprep.subr.mxu0 0.0
    %4025 = vmatpush1.xpose.msra.mxu0 0.0
    %4026 = vmatprep.subr.mxu0 0.0
    %4027 = vmatpush1.xpose.msra.mxu0 0.0
    %4028 = vmatprep.subr.mxu0 0.0
    %4029 = vmatpush1.xpose.msra.mxu0 0.0
    %4030 = vmatprep.subr.mxu0 0.0
    %4031 = vmatpush1.xpose.msra.mxu0 0.0
    %4032 = vmatprep.subr.mxu0 0.0
    %4033 = vmatpush1.xpose.msra.mxu0 0.0
    %4034 = vmatprep.subr.mxu0 0.0
    %4035 = vmatpush1.xpose.msra.mxu0 0.0
    %4036 = vmatprep.subr.mxu0 0.0
    %4037 = vmatpush1.xpose.msra.mxu0 0.0
    %4038 = vmatprep.subr.mxu0 0.0
    %4039 = vmatpush1.xpose.msra.mxu0 0.0
    %4040 = vmatprep.subr.mxu0 0.0
    %4041 = vmatpush1.xpose.msra.mxu0 0.0
    %4042 = vmatprep.subr.mxu0 0.0
    %4043 = vmatpush1.xpose.msra.mxu0 0.0
    %4044 = vmatprep.subr.mxu0 0.0
    %4045 = vmatpush1.xpose.msra.mxu0 0.0
    %4046 = vmatprep.subr.mxu0 0.0
    %4047 = vmatpush1.xpose.msra.mxu0 0.0
    %4048 = vmatprep.subr.mxu0 0.0
    %4049 = vmatpush1.xpose.msra.mxu0 0.0
    %4050 = vmatprep.subr.mxu0 0.0
    %4051 = vmatpush1.xpose.msra.mxu0 0.0
    %4052 = vmatprep.subr.mxu0 0.0
    %4053 = vmatpush1.xpose.msra.mxu0 0.0
    %4054 = vmatprep.mubr.f32.mxu0 0.0
    %4055 = vmatmul.mubr.f32.gmra.mrb[0].mxu0 %v3986
    %v4056 = vpop.f32.mrb[0].mxu0
    %v4057 = vadd.f32 0.0, %v4056
    %v4058 = vpop.f32.mrb[0].mxu0
    %4059 = vdwg.mxu0
    %v4060 = vmul.f32 %v4057, 0.25
    %v4061 = vadd.f32 %v4060, %v2794
    %v4062 = vsel %vm1448, %v4061, -inf
    %4063 = vmax.xlane.f32.xlu0 %v4062
    %v4064 = vpop.xlane.xlu0 %4063
    %v4065 = vsub.f32 %v4061, %v4064
    %v4066 = vmul.f32 %v4065, 1.442695
    %v4067 = vpow.pop %v4066
    %v4068 = vsel %vm1448, %v4067, 0.0
    %4069 = vadd.xlane.f32.xlu0 %v4068
    %v4070 = vpop.xlane.xlu0 %4069
    %v4071 = vrcp.pop %v4070
    %v4072 = vmul.f32 %v4067, %v4071
    %4073 = vrot.lane.b32.xlu0 %v3980, 64
    %v4074 = vpop.permute.xlu0 %4073
    %v4077 = vsel %vm1448, %v4072, 0
    %4079 = vmatprep.subr.mxu0 0.0
    %4080 = vmatpush1.msra.mxu0 %v4074
    %4081 = vmatprep.subr.mxu0 0.0
    %4082 = vmatpush1.msra.mxu0 0.0
    %4083 = vmatprep.subr.mxu0 0.0
    %4084 = vmatpush1.msra.mxu0 0.0
    %4085 = vmatprep.subr.mxu0 0.0
    %4086 = vmatpush1.msra.mxu0 0.0
    %4087 = vmatprep.subr.mxu0 0.0
    %4088 = vmatpush1.msra.mxu0 0.0
    %4089 = vmatprep.subr.mxu0 0.0
    %4090 = vmatpush1.msra.mxu0 0.0
    %4091 = vmatprep.subr.mxu0 0.0
    %4092 = vmatpush1.msra.mxu0 0.0
    %4093 = vmatprep.subr.mxu0 0.0
    %4094 = vmatpush1.msra.mxu0 0.0
    %4095 = vmatprep.subr.mxu0 0.0
    %4096 = vmatpush1.msra.mxu0 0.0
    %4097 = vmatprep.subr.mxu0 0.0
    %4098 = vmatpush1.msra.mxu0 0.0
    %4099 = vmatprep.subr.mxu0 0.0
    %4100 = vmatpush1.msra.mxu0 0.0
    %4101 = vmatprep.subr.mxu0 0.0
    %4102 = vmatpush1.msra.mxu0 0.0
    %4103 = vmatprep.subr.mxu0 0.0
    %4104 = vmatpush1.msra.mxu0 0.0
    %4105 = vmatprep.subr.mxu0 0.0
    %4106 = vmatpush1.msra.mxu0 0.0
    %4107 = vmatprep.subr.mxu0 0.0
    %4108 = vmatpush1.msra.mxu0 0.0
    %4109 = vmatprep.subr.mxu0 0.0
    %4110 = vmatpush1.msra.mxu0 0.0
    %4111 = vmatprep.subr.mxu0 0.0
    %4112 = vmatpush1.msra.mxu0 0.0
    %4113 = vmatprep.subr.mxu0 0.0
    %4114 = vmatpush1.msra.mxu0 0.0
    %4115 = vmatprep.subr.mxu0 0.0
    %4116 = vmatpush1.msra.mxu0 0.0
    %4117 = vmatprep.subr.mxu0 0.0
    %4118 = vmatpush1.msra.mxu0 0.0
    %4119 = vmatprep.subr.mxu0 0.0
    %4120 = vmatpush1.msra.mxu0 0.0
    %4121 = vmatprep.subr.mxu0 0.0
    %4122 = vmatpush1.msra.mxu0 0.0
    %4123 = vmatprep.subr.mxu0 0.0
    %4124 = vmatpush1.msra.mxu0 0.0
    %4125 = vmatprep.subr.mxu0 0.0
    %4126 = vmatpush1.msra.mxu0 0.0
    %4127 = vmatprep.subr.mxu0 0.0
    %4128 = vmatpush1.msra.mxu0 0.0
    %4129 = vmatprep.subr.mxu0 0.0
    %4130 = vmatpush1.msra.mxu0 0.0
    %4131 = vmatprep.subr.mxu0 0.0
    %4132 = vmatpush1.msra.mxu0 0.0
    %4133 = vmatprep.subr.mxu0 0.0
    %4134 = vmatpush1.msra.mxu0 0.0
    %4135 = vmatprep.subr.mxu0 0.0
    %4136 = vmatpush1.msra.mxu0 0.0
    %4137 = vmatprep.subr.mxu0 0.0
    %4138 = vmatpush1.msra.mxu0 0.0
    %4139 = vmatprep.subr.mxu0 0.0
    %4140 = vmatpush1.msra.mxu0 0.0
    %4141 = vmatprep.subr.mxu0 0.0
    %4142 = vmatpush1.msra.mxu0 0.0
    %4143 = vmatprep.mubr.f32.mxu0 0.0
    %4144 = vmatmul.mubr.f32.gmra.mrb[0].mxu0 %v4077
    %v4145 = vpop.f32.mrb[0].mxu0
    %v4146 = vadd.f32 0.0, %v4145
    %v4147 = vpop.f32.mrb[0].mxu0
    %4148 = vdwg.mxu0
    %4149 = vrot.lane.b32.xlu0 %v3980, 112
    %v4150 = vpop.permute.xlu0 %4149
    %4151 = vrot.lane.b32.xlu0 %v3980, 80
    %v4152 = vpop.permute.xlu0 %4151
    %v4153 = vsel %vm316, %v4150, 0
    %v4155 = vsel %vm316, %v4152, 0
    %4157 = vmatprep.subr.mxu0 0.0
    %4158 = vmatpush1.xpose.msra.mxu0 %v4155
    %4159 = vmatprep.subr.mxu0 0.0
    %4160 = vmatpush1.xpose.msra.mxu0 0.0
    %4161 = vmatprep.subr.mxu0 0.0
    %4162 = vmatpush1.xpose.msra.mxu0 0.0
    %4163 = vmatprep.subr.mxu0 0.0
    %4164 = vmatpush1.xpose.msra.mxu0 0.0
    %4165 = vmatprep.subr.mxu0 0.0
    %4166 = vmatpush1.xpose.msra.mxu0 0.0
    %4167 = vmatprep.subr.mxu0 0.0
    %4168 = vmatpush1.xpose.msra.mxu0 0.0
    %4169 = vmatprep.subr.mxu0 0.0
    %4170 = vmatpush1.xpose.msra.mxu0 0.0
    %4171 = vmatprep.subr.mxu0 0.0
    %4172 = vmatpush1.xpose.msra.mxu0 0.0
    %4173 = vmatprep.subr.mxu0 0.0
    %4174 = vmatpush1.xpose.msra.mxu0 0.0
    %4175 = vmatprep.subr.mxu0 0.0
    %4176 = vmatpush1.xpose.msra.mxu0 0.0
    %4177 = vmatprep.subr.mxu0 0.0
    %4178 = vmatpush1.xpose.msra.mxu0 0.0
    %4179 = vmatprep.subr.mxu0 0.0
    %4180 = vmatpush1.xpose.msra.mxu0 0.0
    %4181 = vmatprep.subr.mxu0 0.0
    %4182 = vmatpush1.xpose.msra.mxu0 0.0
    %4183 = vmatprep.subr.mxu0 0.0
    %4184 = vmatpush1.xpose.msra.mxu0 0.0
    %4185 = vmatprep.subr.mxu0 0.0
    %4186 = vmatpush1.xpose.msra.mxu0 0.0
    %4187 = vmatprep.subr.mxu0 0.0
    %4188 = vmatpush1.xpose.msra.mxu0 0.0
    %4189 = vmatprep.subr.mxu0 0.0
    %4190 = vmatpush1.xpose.msra.mxu0 0.0
    %4191 = vmatprep.subr.mxu0 0.0
    %4192 = vmatpush1.xpose.msra.mxu0 0.0
    %4193 = vmatprep.subr.mxu0 0.0
    %4194 = vmatpush1.xpose.msra.mxu0 0.0
    %4195 = vmatprep.subr.mxu0 0.0
    %4196 = vmatpush1.xpose.msra.mxu0 0.0
    %4197 = vmatprep.subr.mxu0 0.0
    %4198 = vmatpush1.xpose.msra.mxu0 0.0
    %4199 = vmatprep.subr.mxu0 0.0
    %4200 = vmatpush1.xpose.msra.mxu0 0.0
    %4201 = vmatprep.subr.mxu0 0.0
    %4202 = vmatpush1.xpose.msra.mxu0 0.0
    %4203 = vmatprep.subr.mxu0 0.0
    %4204 = vmatpush1.xpose.msra.mxu0 0.0
    %4205 = vmatprep.subr.mxu0 0.0
    %4206 = vmatpush1.xpose.msra.mxu0 0.0
    %4207 = vmatprep.subr.mxu0 0.0
    %4208 = vmatpush1.xpose.msra.mxu0 0.0
    %4209 = vmatprep.subr.mxu0 0.0
    %4210 = vmatpush1.xpose.msra.mxu0 0.0
    %4211 = vmatprep.subr.mxu0 0.0
    %4212 = vmatpush1.xpose.msra.mxu0 0.0
    %4213 = vmatprep.subr.mxu0 0.0
    %4214 = vmatpush1.xpose.msra.mxu0 0.0
    %4215 = vmatprep.subr.mxu0 0.0
    %4216 = vmatpush1.xpose.msra.mxu0 0.0
    %4217 = vmatprep.subr.mxu0 0.0
    %4218 = vmatpush1.xpose.msra.mxu0 0.0
    %4219 = vmatprep.subr.mxu0 0.0
    %4220 = vmatpush1.xpose.msra.mxu0 0.0
    %4221 = vmatprep.mubr.f32.mxu0 0.0
    %4222 = vmatmul.mubr.f32.gmra.mrb[0].mxu0 %v4153
    %v4223 = vpop.f32.mrb[0].mxu0
    %v4224 = vadd.f32 0.0, %v4223
    %v4225 = vpop.f32.mrb[0].mxu0
    %4226 = vdwg.mxu0
    %v4227 = vmul.f32 %v4224, 0.25
    %v4228 = vadd.f32 %v4227, %v2794
    %v4229 = vsel %vm1448, %v4228, -inf
    %4230 = vmax.xlane.f32.xlu0 %v4229
    %v4231 = vpop.xlane.xlu0 %4230
    %v4232 = vsub.f32 %v4228, %v4231
    %v4233 = vmul.f32 %v4232, 1.442695
    %v4234 = vpow.pop %v4233
    %v4235 = vsel %vm1448, %v4234, 0.0
    %4236 = vadd.xlane.f32.xlu0 %v4235
    %v4237 = vpop.xlane.xlu0 %4236
    %v4238 = vrcp.pop %v4237
    %v4239 = vmul.f32 %v4234, %v4238
    %4240 = vrot.lane.b32.xlu0 %v3980, 48
    %v4241 = vpop.permute.xlu0 %4240
    %v4244 = vsel %vm1448, %v4239, 0
    %4246 = vmatprep.subr.mxu0 0.0
    %4247 = vmatpush1.msra.mxu0 %v4241
    %4248 = vmatprep.subr.mxu0 0.0
    %4249 = vmatpush1.msra.mxu0 0.0
    %4250 = vmatprep.subr.mxu0 0.0
    %4251 = vmatpush1.msra.mxu0 0.0
    %4252 = vmatprep.subr.mxu0 0.0
    %4253 = vmatpush1.msra.mxu0 0.0
    %4254 = vmatprep.subr.mxu0 0.0
    %4255 = vmatpush1.msra.mxu0 0.0
    %4256 = vmatprep.subr.mxu0 0.0
    %4257 = vmatpush1.msra.mxu0 0.0
    %4258 = vmatprep.subr.mxu0 0.0
    %4259 = vmatpush1.msra.mxu0 0.0
    %4260 = vmatprep.subr.mxu0 0.0
    %4261 = vmatpush1.msra.mxu0 0.0
    %4262 = vmatprep.subr.mxu0 0.0
    %4263 = vmatpush1.msra.mxu0 0.0
    %4264 = vmatprep.subr.mxu0 0.0
    %4265 = vmatpush1.msra.mxu0 0.0
    %4266 = vmatprep.subr.mxu0 0.0
    %4267 = vmatpush1.msra.mxu0 0.0
    %4268 = vmatprep.subr.mxu0 0.0
    %4269 = vmatpush1.msra.mxu0 0.0
    %4270 = vmatprep.subr.mxu0 0.0
    %4271 = vmatpush1.msra.mxu0 0.0
    %4272 = vmatprep.subr.mxu0 0.0
    %4273 = vmatpush1.msra.mxu0 0.0
    %4274 = vmatprep.subr.mxu0 0.0
    %4275 = vmatpush1.msra.mxu0 0.0
    %4276 = vmatprep.subr.mxu0 0.0
    %4277 = vmatpush1.msra.mxu0 0.0
    %4278 = vmatprep.subr.mxu0 0.0
    %4279 = vmatpush1.msra.mxu0 0.0
    %4280 = vmatprep.subr.mxu0 0.0
    %4281 = vmatpush1.msra.mxu0 0.0
    %4282 = vmatprep.subr.mxu0 0.0
    %4283 = vmatpush1.msra.mxu0 0.0
    %4284 = vmatprep.subr.mxu0 0.0
    %4285 = vmatpush1.msra.mxu0 0.0
    %4286 = vmatprep.subr.mxu0 0.0
    %4287 = vmatpush1.msra.mxu0 0.0
    %4288 = vmatprep.subr.mxu0 0.0
    %4289 = vmatpush1.msra.mxu0 0.0
    %4290 = vmatprep.subr.mxu0 0.0
    %4291 = vmatpush1.msra.mxu0 0.0
    %4292 = vmatprep.subr.mxu0 0.0
    %4293 = vmatpush1.msra.mxu0 0.0
    %4294 = vmatprep.subr.mxu0 0.0
    %4295 = vmatpush1.msra.mxu0 0.0
    %4296 = vmatprep.subr.mxu0 0.0
    %4297 = vmatpush1.msra.mxu0 0.0
    %4298 = vmatprep.subr.mxu0 0.0
    %4299 = vmatpush1.msra.mxu0 0.0
    %4300 = vmatprep.subr.mxu0 0.0
    %4301 = vmatpush1.msra.mxu0 0.0
    %4302 = vmatprep.subr.mxu0 0.0
    %4303 = vmatpush1.msra.mxu0 0.0
    %4304 = vmatprep.subr.mxu0 0.0
    %4305 = vmatpush1.msra.mxu0 0.0
    %4306 = vmatprep.subr.mxu0 0.0
    %4307 = vmatpush1.msra.mxu0 0.0
    %4308 = vmatprep.subr.mxu0 0.0
    %4309 = vmatpush1.msra.mxu0 0.0
    %4310 = vmatprep.mubr.f32.mxu0 0.0
    %4311 = vmatmul.mubr.f32.gmra.mrb[0].mxu0 %v4244
    %v4312 = vpop.f32.mrb[0].mxu0
    %v4313 = vadd.f32 0.0, %v4312
    %v4314 = vpop.f32.mrb[0].mxu0
    %4315 = vdwg.mxu0
    %v4317 = vsel %vm316, %v4313, 0
    %4319 = vmatprep.subr.mxu0 0.0
    %4320 = vmatpush1.msra.mxu0 %v1367
    %4321 = vmatprep.subr.mxu0 0.0
    %4322 = vmatpush1.msra.mxu0 %v1368
    %4323 = vmatprep.subr.mxu0 0.0
    %4324 = vmatpush1.msra.mxu0 0.0
    %4325 = vmatprep.subr.mxu0 0.0
    %4326 = vmatpush1.msra.mxu0 0.0
    %4327 = vmatprep.subr.mxu0 0.0
    %4328 = vmatpush1.msra.mxu0 0.0
    %4329 = vmatprep.subr.mxu0 0.0
    %4330 = vmatpush1.msra.mxu0 0.0
    %4331 = vmatprep.subr.mxu0 0.0
    %4332 = vmatpush1.msra.mxu0 0.0
    %4333 = vmatprep.subr.mxu0 0.0
    %4334 = vmatpush1.msra.mxu0 0.0
    %4335 = vmatprep.subr.mxu0 0.0
    %4336 = vmatpush1.msra.mxu0 0.0
    %4337 = vmatprep.subr.mxu0 0.0
    %4338 = vmatpush1.msra.mxu0 0.0
    %4339 = vmatprep.subr.mxu0 0.0
    %4340 = vmatpush1.msra.mxu0 0.0
    %4341 = vmatprep.subr.mxu0 0.0
    %4342 = vmatpush1.msra.mxu0 0.0
    %4343 = vmatprep.subr.mxu0 0.0
    %4344 = vmatpush1.msra.mxu0 0.0
    %4345 = vmatprep.subr.mxu0 0.0
    %4346 = vmatpush1.msra.mxu0 0.0
    %4347 = vmatprep.subr.mxu0 0.0
    %4348 = vmatpush1.msra.mxu0 0.0
    %4349 = vmatprep.subr.mxu0 0.0
    %4350 = vmatpush1.msra.mxu0 0.0
    %4351 = vmatprep.subr.mxu0 0.0
    %4352 = vmatpush1.msra.mxu0 0.0
    %4353 = vmatprep.subr.mxu0 0.0
    %4354 = vmatpush1.msra.mxu0 0.0
    %4355 = vmatprep.subr.mxu0 0.0
    %4356 = vmatpush1.msra.mxu0 0.0
    %4357 = vmatprep.subr.mxu0 0.0
    %4358 = vmatpush1.msra.mxu0 0.0
    %4359 = vmatprep.subr.mxu0 0.0
    %4360 = vmatpush1.msra.mxu0 0.0
    %4361 = vmatprep.subr.mxu0 0.0
    %4362 = vmatpush1.msra.mxu0 0.0
    %4363 = vmatprep.subr.mxu0 0.0
    %4364 = vmatpush1.msra.mxu0 0.0
    %4365 = vmatprep.subr.mxu0 0.0
    %4366 = vmatpush1.msra.mxu0 0.0
    %4367 = vmatprep.subr.mxu0 0.0
    %4368 = vmatpush1.msra.mxu0 0.0
    %4369 = vmatprep.subr.mxu0 0.0
    %4370 = vmatpush1.msra.mxu0 0.0
    %4371 = vmatprep.subr.mxu0 0.0
    %4372 = vmatpush1.msra.mxu0 0.0
    %4373 = vmatprep.subr.mxu0 0.0
    %4374 = vmatpush1.msra.mxu0 0.0
    %4375 = vmatprep.subr.mxu0 0.0
    %4376 = vmatpush1.msra.mxu0 0.0
    %4377 = vmatprep.subr.mxu0 0.0
    %4378 = vmatpush1.msra.mxu0 0.0
    %4379 = vmatprep.subr.mxu0 0.0
    %4380 = vmatpush1.msra.mxu0 0.0
    %4381 = vmatprep.subr.mxu0 0.0
    %4382 = vmatpush1.msra.mxu0 0.0
    %4383 = vmatprep.mubr.f32.mxu0 0.0
    %4384 = vmatmul.mubr.f32.gmra.mrb[0].mxu0 %v4317
    %v4385 = vpop.f32.mrb[0].mxu0
    %v4386 = vadd.f32 0.0, %v4385
    %v4387 = vpop.f32.mrb[0].mxu0
    %4388 = vdwg.mxu0
    %v4390 = vsel %vm316, %v4146, 0
    %4392 = vmatprep.subr.mxu0 0.0
    %4393 = vmatpush1.msra.mxu0 %v1365
    %4394 = vmatprep.subr.mxu0 0.0
    %4395 = vmatpush1.msra.mxu0 %v1366
    %4396 = vmatprep.subr.mxu0 0.0
    %4397 = vmatpush1.msra.mxu0 0.0
    %4398 = vmatprep.subr.mxu0 0.0
    %4399 = vmatpush1.msra.mxu0 0.0
    %4400 = vmatprep.subr.mxu0 0.0
    %4401 = vmatpush1.msra.mxu0 0.0
    %4402 = vmatprep.subr.mxu0 0.0
    %4403 = vmatpush1.msra.mxu0 0.0
    %4404 = vmatprep.subr.mxu0 0.0
    %4405 = vmatpush1.msra.mxu0 0.0
    %4406 = vmatprep.subr.mxu0 0.0
    %4407 = vmatpush1.msra.mxu0 0.0
    %4408 = vmatprep.subr.mxu0 0.0
    %4409 = vmatpush1.msra.mxu0 0.0
    %4410 = vmatprep.subr.mxu0 0.0
    %4411 = vmatpush1.msra.mxu0 0.0
    %4412 = vmatprep.subr.mxu0 0.0
    %4413 = vmatpush1.msra.mxu0 0.0
    %4414 = vmatprep.subr.mxu0 0.0
    %4415 = vmatpush1.msra.mxu0 0.0
    %4416 = vmatprep.subr.mxu0 0.0
    %4417 = vmatpush1.msra.mxu0 0.0
    %4418 = vmatprep.subr.mxu0 0.0
    %4419 = vmatpush1.msra.mxu0 0.0
    %4420 = vmatprep.subr.mxu0 0.0
    %4421 = vmatpush1.msra.mxu0 0.0
    %4422 = vmatprep.subr.mxu0 0.0
    %4423 = vmatpush1.msra.mxu0 0.0
    %4424 = vmatprep.subr.mxu0 0.0
    %4425 = vmatpush1.msra.mxu0 0.0
    %4426 = vmatprep.subr.mxu0 0.0
    %4427 = vmatpush1.msra.mxu0 0.0
    %4428 = vmatprep.subr.mxu0 0.0
    %4429 = vmatpush1.msra.mxu0 0.0
    %4430 = vmatprep.subr.mxu0 0.0
    %4431 = vmatpush1.msra.mxu0 0.0
    %4432 = vmatprep.subr.mxu0 0.0
    %4433 = vmatpush1.msra.mxu0 0.0
    %4434 = vmatprep.subr.mxu0 0.0
    %4435 = vmatpush1.msra.mxu0 0.0
    %4436 = vmatprep.subr.mxu0 0.0
    %4437 = vmatpush1.msra.mxu0 0.0
    %4438 = vmatprep.subr.mxu0 0.0
    %4439 = vmatpush1.msra.mxu0 0.0
    %4440 = vmatprep.subr.mxu0 0.0
    %4441 = vmatpush1.msra.mxu0 0.0
    %4442 = vmatprep.subr.mxu0 0.0
    %4443 = vmatpush1.msra.mxu0 0.0
    %4444 = vmatprep.subr.mxu0 0.0
    %4445 = vmatpush1.msra.mxu0 0.0
    %4446 = vmatprep.subr.mxu0 0.0
    %4447 = vmatpush1.msra.mxu0 0.0
    %4448 = vmatprep.subr.mxu0 0.0
    %4449 = vmatpush1.msra.mxu0 0.0
    %4450 = vmatprep.subr.mxu0 0.0
    %4451 = vmatpush1.msra.mxu0 0.0
    %4452 = vmatprep.subr.mxu0 0.0
    %4453 = vmatpush1.msra.mxu0 0.0
    %4454 = vmatprep.subr.mxu0 0.0
    %4455 = vmatpush1.msra.mxu0 0.0
    %4456 = vmatprep.mubr.f32.mxu0 0.0
    %4457 = vmatmul.mubr.f32.gmra.mrb[0].mxu0 %v4390
    %v4458 = vpop.f32.mrb[0].mxu0
    %v4459 = vadd.f32 %v4386, %v4458
    %v4460 = vpop.f32.mrb[0].mxu0
    %4461 = vdwg.mxu0
    %v4462 = vadd.f32 %v4459, %v1853
    %v4463 = vadd.f32 %v4462, %v3909
    %v4464 = vsel %vm176, %v4463, 0.0
    %4465 = vadd.xlane.f32.xlu0 %v4464
    %v4466 = vpop.xlane.xlu0 %4465
    %v4467 = vmul.f32 %v4466, %v183
    %v4468 = vsub.f32 %v4463, %v4467
    %v4469 = vmul.f32 %v4468, %v4468
    %v4470 = vsel %vm176, %v4469, 0.0
    %4471 = vadd.xlane.f32.xlu0 %v4470
    %v4472 = vpop.xlane.xlu0 %4471
    %v4473 = vmul.f32 %v4472, %v183
    %v4474 = vadd.f32 %v4473, 1e-12
    %v4475 = vrsqrt.pop %v4474
    %v4476 = vmul.f32 %v4468, %v4475
    %v4477 = vmul.f32 %v4476, %v1873
    %v4478 = vadd.f32 %v4477, %v1878
    %v4480 = vsel %vm176, %v4478, 0
    %4482 = vmatprep.subr.mxu0 0.0
    %4483 = vmatpush1.msra.mxu0 %v1880
    %4484 = vmatprep.subr.mxu0 0.0
    %4485 = vmatpush1.msra.mxu0 %v1881
    %4486 = vmatprep.subr.mxu0 0.0
    %4487 = vmatpush1.msra.mxu0 %v1882
    %4488 = vmatprep.subr.mxu0 0.0
    %4489 = vmatpush1.msra.mxu0 %v1883
    %4490 = vmatprep.subr.mxu0 0.0
    %4491 = vmatpush1.msra.mxu0 0.0
    %4492 = vmatprep.subr.mxu0 0.0
    %4493 = vmatpush1.msra.mxu0 0.0
    %4494 = vmatprep.subr.mxu0 0.0
    %4495 = vmatpush1.msra.mxu0 0.0
    %4496 = vmatprep.subr.mxu0 0.0
    %4497 = vmatpush1.msra.mxu0 0.0
    %4498 = vmatprep.subr.mxu0 0.0
    %4499 = vmatpush1.msra.mxu0 0.0
    %4500 = vmatprep.subr.mxu0 0.0
    %4501 = vmatpush1.msra.mxu0 0.0
    %4502 = vmatprep.subr.mxu0 0.0
    %4503 = vmatpush1.msra.mxu0 0.0
    %4504 = vmatprep.subr.mxu0 0.0
    %4505 = vmatpush1.msra.mxu0 0.0
    %4506 = vmatprep.subr.mxu0 0.0
    %4507 = vmatpush1.msra.mxu0 0.0
    %4508 = vmatprep.subr.mxu0 0.0
    %4509 = vmatpush1.msra.mxu0 0.0
    %4510 = vmatprep.subr.mxu0 0.0
    %4511 = vmatpush1.msra.mxu0 0.0
    %4512 = vmatprep.subr.mxu0 0.0
    %4513 = vmatpush1.msra.mxu0 0.0
    %4514 = vmatprep.subr.mxu0 0.0
    %4515 = vmatpush1.msra.mxu0 0.0
    %4516 = vmatprep.subr.mxu0 0.0
    %4517 = vmatpush1.msra.mxu0 0.0
    %4518 = vmatprep.subr.mxu0 0.0
    %4519 = vmatpush1.msra.mxu0 0.0
    %4520 = vmatprep.subr.mxu0 0.0
    %4521 = vmatpush1.msra.mxu0 0.0
    %4522 = vmatprep.subr.mxu0 0.0
    %4523 = vmatpush1.msra.mxu0 0.0
    %4524 = vmatprep.subr.mxu0 0.0
    %4525 = vmatpush1.msra.mxu0 0.0
    %4526 = vmatprep.subr.mxu0 0.0
    %4527 = vmatpush1.msra.mxu0 0.0
    %4528 = vmatprep.subr.mxu0 0.0
    %4529 = vmatpush1.msra.mxu0 0.0
    %4530 = vmatprep.subr.mxu0 0.0
    %4531 = vmatpush1.msra.mxu0 0.0
    %4532 = vmatprep.subr.mxu0 0.0
    %4533 = vmatpush1.msra.mxu0 0.0
    %4534 = vmatprep.subr.mxu0 0.0
    %4535 = vmatpush1.msra.mxu0 0.0
    %4536 = vmatprep.subr.mxu0 0.0
    %4537 = vmatpush1.msra.mxu0 0.0
    %4538 = vmatprep.subr.mxu0 0.0
    %4539 = vmatpush1.msra.mxu0 0.0
    %4540 = vmatprep.subr.mxu0 0.0
    %4541 = vmatpush1.msra.mxu0 0.0
    %4542 = vmatprep.subr.mxu0 0.0
    %4543 = vmatpush1.msra.mxu0 0.0
    %4544 = vmatprep.subr.mxu0 0.0
    %4545 = vmatpush1.msra.mxu0 0.0
    %4546 = vmatprep.mubr.f32.mxu0 0.0
    %4547 = vmatmul.mubr.f32.gmra.mrb[0].mxu0 %v4480
    %v4548 = vpop.f32.mrb[0].mxu0
    %v4549 = vadd.f32 %v1888, %v4548
    %v4550 = vpop.f32.mrb[0].mxu0
    %4551 = vdwg.mxu0
    %v4553 = vsel %vm176, %v3813, 0
    %v4556 = vsel %vm176, %v3814, 0
    %4558 = vmatprep.subr.mxu0 0.0
    %4559 = vmatpush1.msra.mxu0 %v1962
    %4560 = vmatprep.subr.mxu0 0.0
    %4561 = vmatpush1.msra.mxu0 %v1963
    %4562 = vmatprep.subr.mxu0 0.0
    %4563 = vmatpush1.msra.mxu0 %v1964
    %4564 = vmatprep.subr.mxu0 0.0
    %4565 = vmatpush1.msra.mxu0 %v1965
    %4566 = vmatprep.subr.mxu0 0.0
    %4567 = vmatpush1.msra.mxu0 0.0
    %4568 = vmatprep.subr.mxu0 0.0
    %4569 = vmatpush1.msra.mxu0 0.0
    %4570 = vmatprep.subr.mxu0 0.0
    %4571 = vmatpush1.msra.mxu0 0.0
    %4572 = vmatprep.subr.mxu0 0.0
    %4573 = vmatpush1.msra.mxu0 0.0
    %4574 = vmatprep.subr.mxu0 0.0
    %4575 = vmatpush1.msra.mxu0 0.0
    %4576 = vmatprep.subr.mxu0 0.0
    %4577 = vmatpush1.msra.mxu0 0.0
    %4578 = vmatprep.subr.mxu0 0.0
    %4579 = vmatpush1.msra.mxu0 0.0
    %4580 = vmatprep.subr.mxu0 0.0
    %4581 = vmatpush1.msra.mxu0 0.0
    %4582 = vmatprep.subr.mxu0 0.0
    %4583 = vmatpush1.msra.mxu0 0.0
    %4584 = vmatprep.subr.mxu0 0.0
    %4585 = vmatpush1.msra.mxu0 0.0
    %4586 = vmatprep.subr.mxu0 0.0
    %4587 = vmatpush1.msra.mxu0 0.0
    %4588 = vmatprep.subr.mxu0 0.0
    %4589 = vmatpush1.msra.mxu0 0.0
    %4590 = vmatprep.subr.mxu0 0.0
    %4591 = vmatpush1.msra.mxu0 0.0
    %4592 = vmatprep.subr.mxu0 0.0
    %4593 = vmatpush1.msra.mxu0 0.0
    %4594 = vmatprep.subr.mxu0 0.0
    %4595 = vmatpush1.msra.mxu0 0.0
    %4596 = vmatprep.subr.mxu0 0.0
    %4597 = vmatpush1.msra.mxu0 0.0
    %4598 = vmatprep.subr.mxu0 0.0
    %4599 = vmatpush1.msra.mxu0 0.0
    %4600 = vmatprep.subr.mxu0 0.0
    %4601 = vmatpush1.msra.mxu0 0.0
    %4602 = vmatprep.subr.mxu0 0.0
    %4603 = vmatpush1.msra.mxu0 0.0
    %4604 = vmatprep.subr.mxu0 0.0
    %4605 = vmatpush1.msra.mxu0 0.0
    %4606 = vmatprep.subr.mxu0 0.0
    %4607 = vmatpush1.msra.mxu0 0.0
    %4608 = vmatprep.subr.mxu0 0.0
    %4609 = vmatpush1.msra.mxu0 0.0
    %4610 = vmatprep.subr.mxu0 0.0
    %4611 = vmatpush1.msra.mxu0 0.0
    %4612 = vmatprep.subr.mxu0 0.0
    %4613 = vmatpush1.msra.mxu0 0.0
    %4614 = vmatprep.subr.mxu0 0.0
    %4615 = vmatpush1.msra.mxu0 0.0
    %4616 = vmatprep.subr.mxu0 0.0
    %4617 = vmatpush1.msra.mxu0 0.0
    %4618 = vmatprep.subr.mxu0 0.0
    %4619 = vmatpush1.msra.mxu0 0.0
    %4620 = vmatprep.subr.mxu0 0.0
    %4621 = vmatpush1.msra.mxu0 0.0
    %4622 = vmatprep.mubr.f32.mxu0 0.0
    %4623 = vmatmul.mubr.f32.gmra.mrb[0].mxu0 %v4553
    %v4624 = vpop.f32.mrb[0].mxu0
    %v4625 = vadd.f32 %v1970, %v4624
    %v4626 = vpop.f32.mrb[0].mxu0
    %4627 = vmatprep.mubr.f32.mxu0 0.0
    %4628 = vmatmul.mubr.f32.gmra.mrb[0].mxu0 %v4556
    %v4629 = vpop.f32.mrb[0].mxu0
    %v4630 = vadd.f32 %v1970, %v4629
    %v4631 = vpop.f32.mrb[0].mxu0
    %4632 = vdwg.mxu0
    %v4634 = vsel %vm316, %v4549, 0
    %v4637 = vsel %vm316, %v4625, 0
    %v4640 = vsel %vm316, %v4630, 0
    %4642 = vmatprep.subr.mxu0 0.0
    %4643 = vmatpush1.xpose.msra.mxu0 %v4637
    %4644 = vmatprep.subr.mxu0 0.0
    %4645 = vmatpush1.xpose.msra.mxu0 %v4640
    %4646 = vmatprep.subr.mxu0 0.0
    %4647 = vmatpush1.xpose.msra.mxu0 0.0
    %4648 = vmatprep.subr.mxu0 0.0
    %4649 = vmatpush1.xpose.msra.mxu0 0.0
    %4650 = vmatprep.subr.mxu0 0.0
    %4651 = vmatpush1.xpose.msra.mxu0 0.0
    %4652 = vmatprep.subr.mxu0 0.0
    %4653 = vmatpush1.xpose.msra.mxu0 0.0
    %4654 = vmatprep.subr.mxu0 0.0
    %4655 = vmatpush1.xpose.msra.mxu0 0.0
    %4656 = vmatprep.subr.mxu0 0.0
    %4657 = vmatpush1.xpose.msra.mxu0 0.0
    %4658 = vmatprep.subr.mxu0 0.0
    %4659 = vmatpush1.xpose.msra.mxu0 0.0
    %4660 = vmatprep.subr.mxu0 0.0
    %4661 = vmatpush1.xpose.msra.mxu0 0.0
    %4662 = vmatprep.subr.mxu0 0.0
    %4663 = vmatpush1.xpose.msra.mxu0 0.0
    %4664 = vmatprep.subr.mxu0 0.0
    %4665 = vmatpush1.xpose.msra.mxu0 0.0
    %4666 = vmatprep.subr.mxu0 0.0
    %4667 = vmatpush1.xpose.msra.mxu0 0.0
    %4668 = vmatprep.subr.mxu0 0.0
    %4669 = vmatpush1.xpose.msra.mxu0 0.0
    %4670 = vmatprep.subr.mxu0 0.0
    %4671 = vmatpush1.xpose.msra.mxu0 0.0
    %4672 = vmatprep.subr.mxu0 0.0
    %4673 = vmatpush1.xpose.msra.mxu0 0.0
    %4674 = vmatprep.subr.mxu0 0.0
    %4675 = vmatpush1.xpose.msra.mxu0 0.0
    %4676 = vmatprep.subr.mxu0 0.0
    %4677 = vmatpush1.xpose.msra.mxu0 0.0
    %4678 = vmatprep.subr.mxu0 0.0
    %4679 = vmatpush1.xpose.msra.mxu0 0.0
    %4680 = vmatprep.subr.mxu0 0.0
    %4681 = vmatpush1.xpose.msra.mxu0 0.0
    %4682 = vmatprep.subr.mxu0 0.0
    %4683 = vmatpush1.xpose.msra.mxu0 0.0
    %4684 = vmatprep.subr.mxu0 0.0
    %4685 = vmatpush1.xpose.msra.mxu0 0.0
    %4686 = vmatprep.subr.mxu0 0.0
    %4687 = vmatpush1.xpose.msra.mxu0 0.0
    %4688 = vmatprep.subr.mxu0 0.0
    %4689 = vmatpush1.xpose.msra.mxu0 0.0
    %4690 = vmatprep.subr.mxu0 0.0
    %4691 = vmatpush1.xpose.msra.mxu0 0.0
    %4692 = vmatprep.subr.mxu0 0.0
    %4693 = vmatpush1.xpose.msra.mxu0 0.0
    %4694 = vmatprep.subr.mxu0 0.0
    %4695 = vmatpush1.xpose.msra.mxu0 0.0
    %4696 = vmatprep.subr.mxu0 0.0
    %4697 = vmatpush1.xpose.msra.mxu0 0.0
    %4698 = vmatprep.subr.mxu0 0.0
    %4699 = vmatpush1.xpose.msra.mxu0 0.0
    %4700 = vmatprep.subr.mxu0 0.0
    %4701 = vmatpush1.xpose.msra.mxu0 0.0
    %4702 = vmatprep.subr.mxu0 0.0
    %4703 = vmatpush1.xpose.msra.mxu0 0.0
    %4704 = vmatprep.subr.mxu0 0.0
    %4705 = vmatpush1.xpose.msra.mxu0 0.0
    %4706 = vmatprep.mubr.f32.mxu0 0.0
    %4707 = vmatmul.mubr.f32.gmra.mrb[0].mxu0 %v4634
    %v4708 = vpop.f32.mrb[0].mxu0
    %v4709 = vadd.f32 0.0, %v4708
    %v4710 = vpop.f32.mrb[0].mxu0
    %4711 = vdwg.mxu0
    %v4712 = vmul.f32 %v4709, 0.25
    %v4713 = vadd.f32 %v4712, %v2790
    %v4714 = vsel %vm316, %v4713, -inf
    %4715 = vmax.xlane.f32.xlu0 %v4714
    %v4716 = vpop.xlane.xlu0 %4715
    %v4717 = vsub.f32 %v4713, %v4716
    %v4718 = vmul.f32 %v4717, 1.442695
    %v4719 = vpow.pop %v4718
    %v4720 = vsel %vm316, %v4719, 0.0
    %4721 = vadd.xlane.f32.xlu0 %v4720
    %v4722 = vpop.xlane.xlu0 %4721
    %v4723 = vrcp.pop %v4722
    %v4724 = vmul.f32 %v4719, %v4723
    %4725 = vrot.lane.b32.xlu0 %v4625, 96
    %v4726 = vpop.permute.xlu0 %4725
    %4727 = vrot.lane.b32.xlu0 %v4630, 96
    %v4728 = vpop.permute.xlu0 %4727
    %v4732 = vsel %vm316, %v4724, 0
    %4734 = vmatprep.subr.mxu0 0.0
    %4735 = vmatpush1.msra.mxu0 %v4726
    %4736 = vmatprep.subr.mxu0 0.0
    %4737 = vmatpush1.msra.mxu0 %v4728
    %4738 = vmatprep.subr.mxu0 0.0
    %4739 = vmatpush1.msra.mxu0 0.0
    %4740 = vmatprep.subr.mxu0 0.0
    %4741 = vmatpush1.msra.mxu0 0.0
    %4742 = vmatprep.subr.mxu0 0.0
    %4743 = vmatpush1.msra.mxu0 0.0
    %4744 = vmatprep.subr.mxu0 0.0
    %4745 = vmatpush1.msra.mxu0 0.0
    %4746 = vmatprep.subr.mxu0 0.0
    %4747 = vmatpush1.msra.mxu0 0.0
    %4748 = vmatprep.subr.mxu0 0.0
    %4749 = vmatpush1.msra.mxu0 0.0
    %4750 = vmatprep.subr.mxu0 0.0
    %4751 = vmatpush1.msra.mxu0 0.0
    %4752 = vmatprep.subr.mxu0 0.0
    %4753 = vmatpush1.msra.mxu0 0.0
    %4754 = vmatprep.subr.mxu0 0.0
    %4755 = vmatpush1.msra.mxu0 0.0
    %4756 = vmatprep.subr.mxu0 0.0
    %4757 = vmatpush1.msra.mxu0 0.0
    %4758 = vmatprep.subr.mxu0 0.0
    %4759 = vmatpush1.msra.mxu0 0.0
    %4760 = vmatprep.subr.mxu0 0.0
    %4761 = vmatpush1.msra.mxu0 0.0
    %4762 = vmatprep.subr.mxu0 0.0
    %4763 = vmatpush1.msra.mxu0 0.0
    %4764 = vmatprep.subr.mxu0 0.0
    %4765 = vmatpush1.msra.mxu0 0.0
    %4766 = vmatprep.subr.mxu0 0.0
    %4767 = vmatpush1.msra.mxu0 0.0
    %4768 = vmatprep.subr.mxu0 0.0
    %4769 = vmatpush1.msra.mxu0 0.0
    %4770 = vmatprep.subr.mxu0 0.0
    %4771 = vmatpush1.msra.mxu0 0.0
    %4772 = vmatprep.subr.mxu0 0.0
    %4773 = vmatpush1.msra.mxu0 0.0
    %4774 = vmatprep.subr.mxu0 0.0
    %4775 = vmatpush1.msra.mxu0 0.0
    %4776 = vmatprep.subr.mxu0 0.0
    %4777 = vmatpush1.msra.mxu0 0.0
    %4778 = vmatprep.subr.mxu0 0.0
    %4779 = vmatpush1.msra.mxu0 0.0
    %4780 = vmatprep.subr.mxu0 0.0
    %4781 = vmatpush1.msra.mxu0 0.0
    %4782 = vmatprep.subr.mxu0 0.0
    %4783 = vmatpush1.msra.mxu0 0.0
    %4784 = vmatprep.subr.mxu0 0.0
    %4785 = vmatpush1.msra.mxu0 0.0
    %4786 = vmatprep.subr.mxu0 0.0
    %4787 = vmatpush1.msra.mxu0 0.0
    %4788 = vmatprep.subr.mxu0 0.0
    %4789 = vmatpush1.msra.mxu0 0.0
    %4790 = vmatprep.subr.mxu0 0.0
    %4791 = vmatpush1.msra.mxu0 0.0
    %4792 = vmatprep.subr.mxu0 0.0
    %4793 = vmatpush1.msra.mxu0 0.0
    %4794 = vmatprep.subr.mxu0 0.0
    %4795 = vmatpush1.msra.mxu0 0.0
    %4796 = vmatprep.subr.mxu0 0.0
    %4797 = vmatpush1.msra.mxu0 0.0
    %4798 = vmatprep.mubr.f32.mxu0 0.0
    %4799 = vmatmul.mubr.f32.gmra.mrb[0].mxu0 %v4732
    %v4800 = vpop.f32.mrb[0].mxu0
    %v4801 = vadd.f32 0.0, %v4800
    %v4802 = vpop.f32.mrb[0].mxu0
    %4803 = vdwg.mxu0
    %4804 = vrot.lane.b32.xlu0 %v4549, 112
    %v4805 = vpop.permute.xlu0 %4804
    %4806 = vrot.lane.b32.xlu0 %v4625, 112
    %v4807 = vpop.permute.xlu0 %4806
    %4808 = vrot.lane.b32.xlu0 %v4630, 112
    %v4809 = vpop.permute.xlu0 %4808
    %v4810 = vsel %vm316, %v4805, 0
    %v4812 = vsel %vm316, %v4807, 0
    %v4814 = vsel %vm316, %v4809, 0
    %4816 = vmatprep.subr.mxu0 0.0
    %4817 = vmatpush1.xpose.msra.mxu0 %v4812
    %4818 = vmatprep.subr.mxu0 0.0
    %4819 = vmatpush1.xpose.msra.mxu0 %v4814
    %4820 = vmatprep.subr.mxu0 0.0
    %4821 = vmatpush1.xpose.msra.mxu0 0.0
    %4822 = vmatprep.subr.mxu0 0.0
    %4823 = vmatpush1.xpose.msra.mxu0 0.0
    %4824 = vmatprep.subr.mxu0 0.0
    %4825 = vmatpush1.xpose.msra.mxu0 0.0
    %4826 = vmatprep.subr.mxu0 0.0
    %4827 = vmatpush1.xpose.msra.mxu0 0.0
    %4828 = vmatprep.subr.mxu0 0.0
    %4829 = vmatpush1.xpose.msra.mxu0 0.0
    %4830 = vmatprep.subr.mxu0 0.0
    %4831 = vmatpush1.xpose.msra.mxu0 0.0
    %4832 = vmatprep.subr.mxu0 0.0
    %4833 = vmatpush1.xpose.msra.mxu0 0.0
    %4834 = vmatprep.subr.mxu0 0.0
    %4835 = vmatpush1.xpose.msra.mxu0 0.0
    %4836 = vmatprep.subr.mxu0 0.0
    %4837 = vmatpush1.xpose.msra.mxu0 0.0
    %4838 = vmatprep.subr.mxu0 0.0
    %4839 = vmatpush1.xpose.msra.mxu0 0.0
    %4840 = vmatprep.subr.mxu0 0.0
    %4841 = vmatpush1.xpose.msra.mxu0 0.0
    %4842 = vmatprep.subr.mxu0 0.0
    %4843 = vmatpush1.xpose.msra.mxu0 0.0
    %4844 = vmatprep.subr.mxu0 0.0
    %4845 = vmatpush1.xpose.msra.mxu0 0.0
    %4846 = vmatprep.subr.mxu0 0.0
    %4847 = vmatpush1.xpose.msra.mxu0 0.0
    %4848 = vmatprep.subr.mxu0 0.0
    %4849 = vmatpush1.xpose.msra.mxu0 0.0
    %4850 = vmatprep.subr.mxu0 0.0
    %4851 = vmatpush1.xpose.msra.mxu0 0.0
    %4852 = vmatprep.subr.mxu0 0.0
    %4853 = vmatpush1.xpose.msra.mxu0 0.0
    %4854 = vmatprep.subr.mxu0 0.0
    %4855 = vmatpush1.xpose.msra.mxu0 0.0
    %4856 = vmatprep.subr.mxu0 0.0
    %4857 = vmatpush1.xpose.msra.mxu0 0.0
    %4858 = vmatprep.subr.mxu0 0.0
    %4859 = vmatpush1.xpose.msra.mxu0 0.0
    %4860 = vmatprep.subr.mxu0 0.0
    %4861 = vmatpush1.xpose.msra.mxu0 0.0
    %4862 = vmatprep.subr.mxu0 0.0
    %4863 = vmatpush1.xpose.msra.mxu0 0.0
    %4864 = vmatprep.subr.mxu0 0.0
    %4865 = vmatpush1.xpose.msra.mxu0 0.0
    %4866 = vmatprep.subr.mxu0 0.0
    %4867 = vmatpush1.xpose.msra.mxu0 0.0
    %4868 = vmatprep.subr.mxu0 0.0
    %4869 = vmatpush1.xpose.msra.mxu0 0.0
    %4870 = vmatprep.subr.mxu0 0.0
    %4871 = vmatpush1.xpose.msra.mxu0 0.0
    %4872 = vmatprep.subr.mxu0 0.0
    %4873 = vmatpush1.xpose.msra.mxu0 0.0
    %4874 = vmatprep.subr.mxu0 0.0
    %4875 = vmatpush1.xpose.msra.mxu0 0.0
    %4876 = vmatprep.subr.mxu0 0.0
    %4877 = vmatpush1.xpose.msra.mxu0 0.0
    %4878 = vmatprep.subr.mxu0 0.0
    %4879 = vmatpush1.xpose.msra.mxu0 0.0
    %4880 = vmatprep.mubr.f32.mxu0 0.0
    %4881 = vmatmul.mubr.f32.gmra.mrb[0].mxu0 %v4810
    %v4882 = vpop.f32.mrb[0].mxu0
    %v4883 = vadd.f32 0.0, %v4882
    %v4884 = vpop.f32.mrb[0].mxu0
    %4885 = vdwg.mxu0
    %v4886 = vmul.f32 %v4883, 0.25
    %v4887 = vadd.f32 %v4886, %v2790
    %v4888 = vsel %vm316, %v4887, -inf
    %4889 = vmax.xlane.f32.xlu0 %v4888
    %v4890 = vpop.xlane.xlu0 %4889
    %v4891 = vsub.f32 %v4887, %v4890
    %v4892 = vmul.f32 %v4891, 1.442695
    %v4893 = vpow.pop %v4892
    %v4894 = vsel %vm316, %v4893, 0.0
    %4895 = vadd.xlane.f32.xlu0 %v4894
    %v4896 = vpop.xlane.xlu0 %4895
    %v4897 = vrcp.pop %v4896
    %v4898 = vmul.f32 %v4893, %v4897
    %4899 = vrot.lane.b32.xlu0 %v4625, 80
    %v4900 = vpop.permute.xlu0 %4899
    %4901 = vrot.lane.b32.xlu0 %v4630, 80
    %v4902 = vpop.permute.xlu0 %4901
    %v4906 = vsel %vm316, %v4898, 0
    %4908 = vmatprep.subr.mxu0 0.0
    %4909 = vmatpush1.msra.mxu0 %v4900
    %4910 = vmatprep.subr.mxu0 0.0
    %4911 = vmatpush1.msra.mxu0 %v4902
    %4912 = vmatprep.subr.mxu0 0.0
    %4913 = vmatpush1.msra.mxu0 0.0
    %4914 = vmatprep.subr.mxu0 0.0
    %4915 = vmatpush1.msra.mxu0 0.0
    %4916 = vmatprep.subr.mxu0 0.0
    %4917 = vmatpush1.msra.mxu0 0.0
    %4918 = vmatprep.subr.mxu0 0.0
    %4919 = vmatpush1.msra.mxu0 0.0
    %4920 = vmatprep.subr.mxu0 0.0
    %4921 = vmatpush1.msra.mxu0 0.0
    %4922 = vmatprep.subr.mxu0 0.0
    %4923 = vmatpush1.msra.mxu0 0.0
    %4924 = vmatprep.subr.mxu0 0.0
    %4925 = vmatpush1.msra.mxu0 0.0
    %4926 = vmatprep.subr.mxu0 0.0
    %4927 = vmatpush1.msra.mxu0 0.0
    %4928 = vmatprep.subr.mxu0 0.0
    %4929 = vmatpush1.msra.mxu0 0.0
    %4930 = vmatprep.subr.mxu0 0.0
    %4931 = vmatpush1.msra.mxu0 0.0
    %4932 = vmatprep.subr.mxu0 0.0
    %4933 = vmatpush1.msra.mxu0 0.0
    %4934 = vmatprep.subr.mxu0 0.0
    %4935 = vmatpush1.msra.mxu0 0.0
    %4936 = vmatprep.subr.mxu0 0.0
    %4937 = vmatpush1.msra.mxu0 0.0
    %4938 = vmatprep.subr.mxu0 0.0
    %4939 = vmatpush1.msra.mxu0 0.0
    %4940 = vmatprep.subr.mxu0 0.0
    %4941 = vmatpush1.msra.mxu0 0.0
    %4942 = vmatprep.subr.mxu0 0.0
    %4943 = vmatpush1.msra.mxu0 0.0
    %4944 = vmatprep.subr.mxu0 0.0
    %4945 = vmatpush1.msra.mxu0 0.0
    %4946 = vmatprep.subr.mxu0 0.0
    %4947 = vmatpush1.msra.mxu0 0.0
    %4948 = vmatprep.subr.mxu0 0.0
    %4949 = vmatpush1.msra.mxu0 0.0
    %4950 = vmatprep.subr.mxu0 0.0
    %4951 = vmatpush1.msra.mxu0 0.0
    %4952 = vmatprep.subr.mxu0 0.0
    %4953 = vmatpush1.msra.mxu0 0.0
    %4954 = vmatprep.subr.mxu0 0.0
    %4955 = vmatpush1.msra.mxu0 0.0
    %4956 = vmatprep.subr.mxu0 0.0
    %4957 = vmatpush1.msra.mxu0 0.0
    %4958 = vmatprep.subr.mxu0 0.0
    %4959 = vmatpush1.msra.mxu0 0.0
    %4960 = vmatprep.subr.mxu0 0.0
    %4961 = vmatpush1.msra.mxu0 0.0
    %4962 = vmatprep.subr.mxu0 0.0
    %4963 = vmatpush1.msra.mxu0 0.0
    %4964 = vmatprep.subr.mxu0 0.0
    %4965 = vmatpush1.msra.mxu0 0.0
    %4966 = vmatprep.subr.mxu0 0.0
    %4967 = vmatpush1.msra.mxu0 0.0
    %4968 = vmatprep.subr.mxu0 0.0
    %4969 = vmatpush1.msra.mxu0 0.0
    %4970 = vmatprep.subr.mxu0 0.0
    %4971 = vmatpush1.msra.mxu0 0.0
    %4972 = vmatprep.mubr.f32.mxu0 0.0
    %4973 = vmatmul.mubr.f32.gmra.mrb[0].mxu0 %v4906
    %v4974 = vpop.f32.mrb[0].mxu0
    %v4975 = vadd.f32 0.0, %v4974
    %v4976 = vpop.f32.mrb[0].mxu0
    %4977 = vdwg.mxu0
    %v4979 = vsel %vm316, %v4975, 0
    %4981 = vmatprep.subr.mxu0 0.0
    %4982 = vmatpush1.msra.mxu0 %v2054
    %4983 = vmatprep.subr.mxu0 0.0
    %4984 = vmatpush1.msra.mxu0 %v2055
    %4985 = vmatprep.subr.mxu0 0.0
    %4986 = vmatpush1.msra.mxu0 0.0
    %4987 = vmatprep.subr.mxu0 0.0
    %4988 = vmatpush1.msra.mxu0 0.0
    %4989 = vmatprep.subr.mxu0 0.0
    %4990 = vmatpush1.msra.mxu0 0.0
    %4991 = vmatprep.subr.mxu0 0.0
    %4992 = vmatpush1.msra.mxu0 0.0
    %4993 = vmatprep.subr.mxu0 0.0
    %4994 = vmatpush1.msra.mxu0 0.0
    %4995 = vmatprep.subr.mxu0 0.0
    %4996 = vmatpush1.msra.mxu0 0.0
    %4997 = vmatprep.subr.mxu0 0.0
    %4998 = vmatpush1.msra.mxu0 0.0
    %4999 = vmatprep.subr.mxu0 0.0
    %5000 = vmatpush1.msra.mxu0 0.0
    %5001 = vmatprep.subr.mxu0 0.0
    %5002 = vmatpush1.msra.mxu0 0.0
    %5003 = vmatprep.subr.mxu0 0.0
    %5004 = vmatpush1.msra.mxu0 0.0
    %5005 = vmatprep.subr.mxu0 0.0
    %5006 = vmatpush1.msra.mxu0 0.0
    %5007 = vmatprep.subr.mxu0 0.0
    %5008 = vmatpush1.msra.mxu0 0.0
    %5009 = vmatprep.subr.mxu0 0.0
    %5010 = vmatpush1.msra.mxu0 0.0
    %5011 = vmatprep.subr.mxu0 0.0
    %5012 = vmatpush1.msra.mxu0 0.0
    %5013 = vmatprep.subr.mxu0 0.0
    %5014 = vmatpush1.msra.mxu0 0.0
    %5015 = vmatprep.subr.mxu0 0.0
    %5016 = vmatpush1.msra.mxu0 0.0
    %5017 = vmatprep.subr.mxu0 0.0
    %5018 = vmatpush1.msra.mxu0 0.0
    %5019 = vmatprep.subr.mxu0 0.0
    %5020 = vmatpush1.msra.mxu0 0.0
    %5021 = vmatprep.subr.mxu0 0.0
    %5022 = vmatpush1.msra.mxu0 0.0
    %5023 = vmatprep.subr.mxu0 0.0
    %5024 = vmatpush1.msra.mxu0 0.0
    %5025 = vmatprep.subr.mxu0 0.0
    %5026 = vmatpush1.msra.mxu0 0.0
    %5027 = vmatprep.subr.mxu0 0.0
    %5028 = vmatpush1.msra.mxu0 0.0
    %5029 = vmatprep.subr.mxu0 0.0
    %5030 = vmatpush1.msra.mxu0 0.0
    %5031 = vmatprep.subr.mxu0 0.0
    %5032 = vmatpush1.msra.mxu0 0.0
    %5033 = vmatprep.subr.mxu0 0.0
    %5034 = vmatpush1.msra.mxu0 0.0
    %5035 = vmatprep.subr.mxu0 0.0
    %5036 = vmatpush1.msra.mxu0 0.0
    %5037 = vmatprep.subr.mxu0 0.0
    %5038 = vmatpush1.msra.mxu0 0.0
    %5039 = vmatprep.subr.mxu0 0.0
    %5040 = vmatpush1.msra.mxu0 0.0
    %5041 = vmatprep.subr.mxu0 0.0
    %5042 = vmatpush1.msra.mxu0 0.0
    %5043 = vmatprep.subr.mxu0 0.0
    %5044 = vmatpush1.msra.mxu0 0.0
    %5045 = vmatprep.mubr.f32.mxu0 0.0
    %5046 = vmatmul.mubr.f32.gmra.mrb[0].mxu0 %v4979
    %v5047 = vpop.f32.mrb[0].mxu0
    %v5048 = vadd.f32 0.0, %v5047
    %v5049 = vpop.f32.mrb[0].mxu0
    %5050 = vdwg.mxu0
    %v5052 = vsel %vm316, %v4801, 0
    %5054 = vmatprep.subr.mxu0 0.0
    %5055 = vmatpush1.msra.mxu0 %v2052
    %5056 = vmatprep.subr.mxu0 0.0
    %5057 = vmatpush1.msra.mxu0 %v2053
    %5058 = vmatprep.subr.mxu0 0.0
    %5059 = vmatpush1.msra.mxu0 0.0
    %5060 = vmatprep.subr.mxu0 0.0
    %5061 = vmatpush1.msra.mxu0 0.0
    %5062 = vmatprep.subr.mxu0 0.0
    %5063 = vmatpush1.msra.mxu0 0.0
    %5064 = vmatprep.subr.mxu0 0.0
    %5065 = vmatpush1.msra.mxu0 0.0
    %5066 = vmatprep.subr.mxu0 0.0
    %5067 = vmatpush1.msra.mxu0 0.0
    %5068 = vmatprep.subr.mxu0 0.0
    %5069 = vmatpush1.msra.mxu0 0.0
    %5070 = vmatprep.subr.mxu0 0.0
    %5071 = vmatpush1.msra.mxu0 0.0
    %5072 = vmatprep.subr.mxu0 0.0
    %5073 = vmatpush1.msra.mxu0 0.0
    %5074 = vmatprep.subr.mxu0 0.0
    %5075 = vmatpush1.msra.mxu0 0.0
    %5076 = vmatprep.subr.mxu0 0.0
    %5077 = vmatpush1.msra.mxu0 0.0
    %5078 = vmatprep.subr.mxu0 0.0
    %5079 = vmatpush1.msra.mxu0 0.0
    %5080 = vmatprep.subr.mxu0 0.0
    %5081 = vmatpush1.msra.mxu0 0.0
    %5082 = vmatprep.subr.mxu0 0.0
    %5083 = vmatpush1.msra.mxu0 0.0
    %5084 = vmatprep.subr.mxu0 0.0
    %5085 = vmatpush1.msra.mxu0 0.0
    %5086 = vmatprep.subr.mxu0 0.0
    %5087 = vmatpush1.msra.mxu0 0.0
    %5088 = vmatprep.subr.mxu0 0.0
    %5089 = vmatpush1.msra.mxu0 0.0
    %5090 = vmatprep.subr.mxu0 0.0
    %5091 = vmatpush1.msra.mxu0 0.0
    %5092 = vmatprep.subr.mxu0 0.0
    %5093 = vmatpush1.msra.mxu0 0.0
    %5094 = vmatprep.subr.mxu0 0.0
    %5095 = vmatpush1.msra.mxu0 0.0
    %5096 = vmatprep.subr.mxu0 0.0
    %5097 = vmatpush1.msra.mxu0 0.0
    %5098 = vmatprep.subr.mxu0 0.0
    %5099 = vmatpush1.msra.mxu0 0.0
    %5100 = vmatprep.subr.mxu0 0.0
    %5101 = vmatpush1.msra.mxu0 0.0
    %5102 = vmatprep.subr.mxu0 0.0
    %5103 = vmatpush1.msra.mxu0 0.0
    %5104 = vmatprep.subr.mxu0 0.0
    %5105 = vmatpush1.msra.mxu0 0.0
    %5106 = vmatprep.subr.mxu0 0.0
    %5107 = vmatpush1.msra.mxu0 0.0
    %5108 = vmatprep.subr.mxu0 0.0
    %5109 = vmatpush1.msra.mxu0 0.0
    %5110 = vmatprep.subr.mxu0 0.0
    %5111 = vmatpush1.msra.mxu0 0.0
    %5112 = vmatprep.subr.mxu0 0.0
    %5113 = vmatpush1.msra.mxu0 0.0
    %5114 = vmatprep.subr.mxu0 0.0
    %5115 = vmatpush1.msra.mxu0 0.0
    %5116 = vmatprep.subr.mxu0 0.0
    %5117 = vmatpush1.msra.mxu0 0.0
    %5118 = vmatprep.mubr.f32.mxu0 0.0
    %5119 = vmatmul.mubr.f32.gmra.mrb[0].mxu0 %v5052
    %v5120 = vpop.f32.mrb[0].mxu0
    %v5121 = vadd.f32 %v5048, %v5120
    %v5122 = vpop.f32.mrb[0].mxu0
    %5123 = vdwg.mxu0
    %v5124 = vadd.f32 %v5121, %v2551
    %v5125 = vadd.f32 %v5124, %v4478
    %v5126 = vsel %vm176, %v5125, 0.0
    %5127 = vadd.xlane.f32.xlu0 %v5126
    %v5128 = vpop.xlane.xlu0 %5127
    %v5129 = vmul.f32 %v5128, %v183
    %v5130 = vsub.f32 %v5125, %v5129
    %v5131 = vmul.f32 %v5130, %v5130
    %v5132 = vsel %vm176, %v5131, 0.0
    %5133 = vadd.xlane.f32.xlu0 %v5132
    %v5134 = vpop.xlane.xlu0 %5133
    %v5135 = vmul.f32 %v5134, %v183
    %v5136 = vadd.f32 %v5135, 1e-12
    %v5137 = vrsqrt.pop %v5136
    %v5138 = vmul.f32 %v5130, %v5137
    %v5139 = vmul.f32 %v5138, %v2571
    %v5140 = vadd.f32 %v5139, %v2576
    %v5142 = vsel %vm176, %v5140, 0
    %5144 = vmatprep.subr.mxu0 0.0
    %5145 = vmatpush1.msra.mxu0 %v2578
    %5146 = vmatprep.subr.mxu0 0.0
    %5147 = vmatpush1.msra.mxu0 %v2579
    %5148 = vmatprep.subr.mxu0 0.0
    %5149 = vmatpush1.msra.mxu0 %v2580
    %5150 = vmatprep.subr.mxu0 0.0
    %5151 = vmatpush1.msra.mxu0 %v2581
    %5152 = vmatprep.subr.mxu0 0.0
    %5153 = vmatpush1.msra.mxu0 0.0
    %5154 = vmatprep.subr.mxu0 0.0
    %5155 = vmatpush1.msra.mxu0 0.0
    %5156 = vmatprep.subr.mxu0 0.0
    %5157 = vmatpush1.msra.mxu0 0.0
    %5158 = vmatprep.subr.mxu0 0.0
    %5159 = vmatpush1.msra.mxu0 0.0
    %5160 = vmatprep.subr.mxu0 0.0
    %5161 = vmatpush1.msra.mxu0 0.0
    %5162 = vmatprep.subr.mxu0 0.0
    %5163 = vmatpush1.msra.mxu0 0.0
    %5164 = vmatprep.subr.mxu0 0.0
    %5165 = vmatpush1.msra.mxu0 0.0
    %5166 = vmatprep.subr.mxu0 0.0
    %5167 = vmatpush1.msra.mxu0 0.0
    %5168 = vmatprep.subr.mxu0 0.0
    %5169 = vmatpush1.msra.mxu0 0.0
    %5170 = vmatprep.subr.mxu0 0.0
    %5171 = vmatpush1.msra.mxu0 0.0
    %5172 = vmatprep.subr.mxu0 0.0
    %5173 = vmatpush1.msra.mxu0 0.0
    %5174 = vmatprep.subr.mxu0 0.0
    %5175 = vmatpush1.msra.mxu0 0.0
    %5176 = vmatprep.subr.mxu0 0.0
    %5177 = vmatpush1.msra.mxu0 0.0
    %5178 = vmatprep.subr.mxu0 0.0
    %5179 = vmatpush1.msra.mxu0 0.0
    %5180 = vmatprep.subr.mxu0 0.0
    %5181 = vmatpush1.msra.mxu0 0.0
    %5182 = vmatprep.subr.mxu0 0.0
    %5183 = vmatpush1.msra.mxu0 0.0
    %5184 = vmatprep.subr.mxu0 0.0
    %5185 = vmatpush1.msra.mxu0 0.0
    %5186 = vmatprep.subr.mxu0 0.0
    %5187 = vmatpush1.msra.mxu0 0.0
    %5188 = vmatprep.subr.mxu0 0.0
    %5189 = vmatpush1.msra.mxu0 0.0
    %5190 = vmatprep.subr.mxu0 0.0
    %5191 = vmatpush1.msra.mxu0 0.0
    %5192 = vmatprep.subr.mxu0 0.0
    %5193 = vmatpush1.msra.mxu0 0.0
    %5194 = vmatprep.subr.mxu0 0.0
    %5195 = vmatpush1.msra.mxu0 0.0
    %5196 = vmatprep.subr.mxu0 0.0
    %5197 = vmatpush1.msra.mxu0 0.0
    %5198 = vmatprep.subr.mxu0 0.0
    %5199 = vmatpush1.msra.mxu0 0.0
    %5200 = vmatprep.subr.mxu0 0.0
    %5201 = vmatpush1.msra.mxu0 0.0
    %5202 = vmatprep.subr.mxu0 0.0
    %5203 = vmatpush1.msra.mxu0 0.0
    %5204 = vmatprep.subr.mxu0 0.0
    %5205 = vmatpush1.msra.mxu0 0.0
    %5206 = vmatprep.subr.mxu0 0.0
    %5207 = vmatpush1.msra.mxu0 0.0
    %5208 = vmatprep.mubr.f32.mxu0 0.0
    %5209 = vmatmul.mubr.f32.gmra.mrb[0].mxu0 %v5142
    %v5210 = vpop.f32.mrb[0].mxu0
    %v5211 = vadd.f32 %v2586, %v5210
    %v5212 = vpop.f32.mrb[0].mxu0
    %5213 = vdwg.mxu0
    %v5214 = vmul.f32 %v5211, %v5211
    %v5215 = vmul.f32 %v5211, %v5214
    %v5216 = vmul.f32 %v5215, 0.044715
    %v5217 = vadd.f32 %v5211, %v5216
    %v5218 = vmul.f32 %v5217, 0.7978846
    %v5219 = vtanh.pop %v5218
    %v5220 = vadd.f32 %v5219, 1.0
    %v5221 = vmul.f32 %v5220, 0.5
    %v5222 = vmul.f32 %v5211, %v5221
    %v5224 = vsel %vm93, %v5222, 0
    %5226 = vmatprep.subr.mxu0 0.0
    %5227 = vmatpush1.msra.mxu0 %v2669
    %5228 = vmatprep.subr.mxu0 0.0
    %5229 = vmatpush1.msra.mxu0 %v2670
    %5230 = vmatprep.subr.mxu0 0.0
    %5231 = vmatpush1.msra.mxu0 %v2671
    %5232 = vmatprep.subr.mxu0 0.0
    %5233 = vmatpush1.msra.mxu0 %v2672
    %5234 = vmatprep.subr.mxu0 0.0
    %5235 = vmatpush1.msra.mxu0 %v2673
    %5236 = vmatprep.subr.mxu0 0.0
    %5237 = vmatpush1.msra.mxu0 %v2674
    %5238 = vmatprep.subr.mxu0 0.0
    %5239 = vmatpush1.msra.mxu0 %v2675
    %5240 = vmatprep.subr.mxu0 0.0
    %5241 = vmatpush1.msra.mxu0 %v2676
    %5242 = vmatprep.subr.mxu0 0.0
    %5243 = vmatpush1.msra.mxu0 0.0
    %5244 = vmatprep.subr.mxu0 0.0
    %5245 = vmatpush1.msra.mxu0 0.0
    %5246 = vmatprep.subr.mxu0 0.0
    %5247 = vmatpush1.msra.mxu0 0.0
    %5248 = vmatprep.subr.mxu0 0.0
    %5249 = vmatpush1.msra.mxu0 0.0
    %5250 = vmatprep.subr.mxu0 0.0
    %5251 = vmatpush1.msra.mxu0 0.0
    %5252 = vmatprep.subr.mxu0 0.0
    %5253 = vmatpush1.msra.mxu0 0.0
    %5254 = vmatprep.subr.mxu0 0.0
    %5255 = vmatpush1.msra.mxu0 0.0
    %5256 = vmatprep.subr.mxu0 0.0
    %5257 = vmatpush1.msra.mxu0 0.0
    %5258 = vmatprep.subr.mxu0 0.0
    %5259 = vmatpush1.msra.mxu0 0.0
    %5260 = vmatprep.subr.mxu0 0.0
    %5261 = vmatpush1.msra.mxu0 0.0
    %5262 = vmatprep.subr.mxu0 0.0
    %5263 = vmatpush1.msra.mxu0 0.0
    %5264 = vmatprep.subr.mxu0 0.0
    %5265 = vmatpush1.msra.mxu0 0.0
    %5266 = vmatprep.subr.mxu0 0.0
    %5267 = vmatpush1.msra.mxu0 0.0
    %5268 = vmatprep.subr.mxu0 0.0
    %5269 = vmatpush1.msra.mxu0 0.0
    %5270 = vmatprep.subr.mxu0 0.0
    %5271 = vmatpush1.msra.mxu0 0.0
    %5272 = vmatprep.subr.mxu0 0.0
    %5273 = vmatpush1.msra.mxu0 0.0
    %5274 = vmatprep.subr.mxu0 0.0
    %5275 = vmatpush1.msra.mxu0 0.0
    %5276 = vmatprep.subr.mxu0 0.0
    %5277 = vmatpush1.msra.mxu0 0.0
    %5278 = vmatprep.subr.mxu0 0.0
    %5279 = vmatpush1.msra.mxu0 0.0
    %5280 = vmatprep.subr.mxu0 0.0
    %5281 = vmatpush1.msra.mxu0 0.0
    %5282 = vmatprep.subr.mxu0 0.0
    %5283 = vmatpush1.msra.mxu0 0.0
    %5284 = vmatprep.subr.mxu0 0.0
    %5285 = vmatpush1.msra.mxu0 0.0
    %5286 = vmatprep.subr.mxu0 0.0
    %5287 = vmatpush1.msra.mxu0 0.0
    %5288 = vmatprep.subr.mxu0 0.0
    %5289 = vmatpush1.msra.mxu0 0.0
    %5290 = vmatprep.mubr.f32.mxu0 0.0
    %5291 = vmatmul.mubr.f32.gmra.mrb[0].mxu0 %v5224
    %v5292 = vpop.f32.mrb[0].mxu0
    %v5293 = vadd.f32 %v2681, %v5292
    %v5294 = vpop.f32.mrb[0].mxu0
    %5295 = vdwg.mxu0
    %v5296 = vadd.f32 %v5293, %v5140
    %v5297 = vsel %vm176, %v5296, 0.0
    %5298 = vadd.xlane.f32.xlu0 %v5297
    %v5299 = vpop.xlane.xlu0 %5298
    %v5300 = vmul.f32 %v5299, %v183
    %v5301 = vsub.f32 %v5296, %v5300
    %v5302 = vmul.f32 %v5301, %v5301
    %v5303 = vsel %vm176, %v5302, 0.0
    %5304 = vadd.xlane.f32.xlu0 %v5303
    %v5305 = vpop.xlane.xlu0 %5304
    %v5306 = vmul.f32 %v5305, %v183
    %v5307 = vadd.f32 %v5306, 1e-12
    %v5308 = vrsqrt.pop %v5307
    %v5309 = vmul.f32 %v5301, %v5308
    %v5310 = vmul.f32 %v5309, %v2773
    %v5311 = vadd.f32 %v5310, %v2778
    %5312 = vrot.lane.b32.xlu0 %v4724, 32
    %v5313 = vpop.permute.xlu0 %5312
    %v5315 = vsel %vm176, %v5311, %v5313
    %v5316 = vsel %vm2784, %v5315, 0.0
    %5317 = vst [vmem:[%s5 + $0x8] sm:$0xff] %v5316
    // Predicated region
    $region34: #{nma_forward.1} parent=1 // pred_check
      _
    $region35: #{nma_forward.1} parent=1 // pred_check_branch
      %5319 = sbr.rel (0) target = $region37
    $region36: #{nma_forward.1} parent=1 // pred_region
      _
    $region37: #{nma_forward.1} parent=1 // pred_fallthru
      _
    // Predicated region
    $region38: #{nma_forward.1} parent=1 // pred_check
      _
    $region39: #{nma_forward.1} parent=1 // pred_check_branch
      %5321 = sbr.rel (0) target = $region41
    $region40: #{nma_forward.1} parent=1 // pred_region
      _
    $region41: #{nma_forward.1} parent=1 // pred_fallthru
      _
    %5322 = vsyncpa [#allocation3], 1
    %5323 = vsyncpa [#allocation4], 1
    %5324 = vsyncpa [#allocation6], 1

</llo_original>
